<compile_context>
chip_gen: v6e
topology: v6e:2x2x1
jax: 0.10.0
libtpu: 0.0.40
codegen_flags: <defaults>
</compile_context>

<pallas_src>
import functools

import numpy as np
import jax
import jax.numpy as jnp
from jax.experimental import pallas as pl
from jax.experimental.pallas import tpu as pltpu

BN_EPS = 1e-5
COMPUTE_DTYPE = jnp.bfloat16   # MXU operand / inter-layer activation dtype.


def _mish_f32(x):
    # PyTorch Mish: x * tanh(softplus(x)), softplus threshold = 20 (f32 math,
    # also the right choice on v5e where the VPU/EUP have no bf16 path).
    sp = jnp.where(x > 20.0, x, jnp.log1p(jnp.exp(jnp.minimum(x, 20.0))))
    return x * jnp.tanh(sp)


# ------------------------------ Pallas kernel -------------------------------

def _octave_layer_kernel(*refs, cout_h, apply_mish, has_residual):
    if has_residual:
        (a_h_ref, a_l_ref, a_hp_ref, u_ref,
         w_h2h_ref, w_lcat_ref, w_h2l_ref,
         shift_h_ref, shift_l_ref,
         res_h_ref, res_l_ref,
         out_h_ref, out_l_ref) = refs
    else:
        (a_h_ref, a_l_ref, a_hp_ref, u_ref,
         w_h2h_ref, w_lcat_ref, w_h2l_ref,
         shift_h_ref, shift_l_ref,
         out_h_ref, out_l_ref) = refs
        res_h_ref = res_l_ref = None

    # MXU: the four octave convolutions of this layer (bf16 in, f32 accumulate).
    hh = jnp.dot(a_h_ref[...], w_h2h_ref[...], preferred_element_type=jnp.float32)
    lcat = jnp.dot(a_l_ref[...], w_lcat_ref[...], preferred_element_type=jnp.float32)
    l2h = lcat[:, :cout_h]           # low -> high branch
    l2l = lcat[:, cout_h:]           # low -> low  branch
    hl = jnp.dot(a_hp_ref[...], w_h2l_ref[...], preferred_element_type=jnp.float32)

    # Nearest 2x upsample of l2h as a constant 0/1 selection matmul: the
    # 4x-expanded activation never touches HBM and no cross-lane shuffles
    # are needed.
    l2h_up = jnp.dot(u_ref[...], l2h, preferred_element_type=jnp.float32)

    # f32 epilogue: BN shift (scale already folded into weights), optional
    # Bottleneck residual, Mish.
    out_h = hh + l2h_up + shift_h_ref[...]
    out_l = l2l + hl + shift_l_ref[...]
    if has_residual:
        out_h = out_h + res_h_ref[...]
        out_l = out_l + res_l_ref[...]
    if apply_mish:
        out_h = _mish_f32(out_h)
        out_l = _mish_f32(out_l)
    out_h_ref[...] = out_h.astype(out_h_ref.dtype)
    out_l_ref[...] = out_l.astype(out_l_ref.dtype)


# ------------------------------- glue (JAX) ---------------------------------

def im2col(x, k, pad):
    """x: (N, H, W, C) -> (N*H*W, k*k*C), stride 1."""
    N, H, W, C = x.shape
    if k == 1:
        return x.reshape(N * H * W, C)
    xp = jnp.pad(x, ((0, 0), (pad, pad), (pad, pad), (0, 0)))
    cols = [xp[:, dy:dy + H, dx:dx + W, :] for dy in range(k) for dx in range(k)]
    return jnp.concatenate(cols, axis=-1).reshape(N * H * W, k * k * C)


def avg_pool2(x):
    N, H, W, C = x.shape
    return x.reshape(N, H // 2, 2, W // 2, 2, C).mean(axis=(2, 4))


def _upsample_matrix(mh_blk, ml_blk, w_hi, w_lo):
    """Constant 0/1 matrix U so that U @ low_block == nearest-2x-upsampled block."""
    r = np.arange(mh_blk)[:, None]
    c = np.arange(ml_blk)[None, :]
    parent = (r // w_hi // 2) * w_lo + (r % w_hi) // 2
    return jnp.asarray(c == parent, jnp.float32)


def octave_layer(x_h, x_l, p, *, k, apply_act, res_h=None, res_l=None,
                 out_dtype=jnp.float32):
    """OctaveConv(stride=1, groups=1, bias=False) + BN(inference) [+ residual] [+ Mish].

    Fully fused into a single pallas_call per layer.  Returns NHWC outputs.
    """
    N, H, W, _ = x_h.shape
    _, Hl, Wl, _ = x_l.shape
    pad = (k - 1) // 2
    cout_h = p['w_h2h'].shape[-1]
    cout_l = p['w_l2l'].shape[-1]

    # Fold the inference-mode BN scale into the conv weights at trace time:
    # BN(conv(x, w) + y) = conv(x, w*scale) + y*scale + shift; only the shift
    # survives as an in-kernel bias.
    w_h2h = (p['w_h2h'].reshape(-1, cout_h) * p['bn_h_scale']).astype(COMPUTE_DTYPE)
    w_l2h = (p['w_l2h'].reshape(-1, cout_h) * p['bn_h_scale']).astype(COMPUTE_DTYPE)
    w_l2l = (p['w_l2l'].reshape(-1, cout_l) * p['bn_l_scale']).astype(COMPUTE_DTYPE)
    w_h2l = (p['w_h2l'].reshape(-1, cout_l) * p['bn_l_scale']).astype(COMPUTE_DTYPE)
    # Low-frequency input feeds both l2h and l2l: one matmul against the
    # concatenated weight doubles that matmul's output lane occupancy.
    w_lcat = jnp.concatenate([w_l2h, w_l2l], axis=-1)

    xh = x_h.astype(COMPUTE_DTYPE)
    xl = x_l.astype(COMPUTE_DTYPE)

    a_h = im2col(xh, k, pad)                 # (N*H*W,   k*k*Ch)
    a_l = im2col(xl, k, pad)                 # (N*Hl*Wl, k*k*Cl)
    a_hp = im2col(avg_pool2(xh), k, pad)     # (N*Hl*Wl, k*k*Ch)
    # TODO(synk): at large spatial sizes the 3x3 im2col (9x activation traffic)
    # should be replaced by 9 accumulating in-kernel dot taps over a haloed
    # VMEM tile; at these tiny shapes the fused-matmul path dominates.

    mh, kh_dim = a_h.shape
    ml, kl_dim = a_l.shape

    # Row tiling: one grid step handles RP low-res image rows (= 2*RP high-res
    # rows); blocks never straddle a batch boundary and high-res tiles are kept
    # <= 512 rows so they fit comfortably in v7x's smaller VMEM.
    rp = Hl
    while rp > 1 and 2 * rp * W > 512:
        rp -= 1
    while Hl % rp:
        rp -= 1
    mh_blk = 2 * rp * W
    ml_blk = rp * Wl
    assert mh % mh_blk == 0 and ml % ml_blk == 0
    assert mh_blk % 8 == 0 and ml_blk % 8 == 0
    grid = (mh // mh_blk,)

    u = _upsample_matrix(mh_blk, ml_blk, W, Wl)   # (mh_blk, ml_blk) f32 constant
    shift_h = p['bn_h_shift']
    shift_l = p['bn_l_shift']

    has_residual = res_h is not None
    inputs = [a_h, a_l, a_hp, u, w_h2h, w_lcat, w_h2l, shift_h, shift_l]
    in_specs = [
        pl.BlockSpec((mh_blk, kh_dim), lambda g: (g, 0)),
        pl.BlockSpec((ml_blk, kl_dim), lambda g: (g, 0)),
        pl.BlockSpec((ml_blk, kh_dim), lambda g: (g, 0)),
        pl.BlockSpec((mh_blk, ml_blk), lambda g: (0, 0)),
        pl.BlockSpec((kh_dim, cout_h), lambda g: (0, 0)),
        pl.BlockSpec((kl_dim, cout_h + cout_l), lambda g: (0, 0)),
        pl.BlockSpec((kh_dim, cout_l), lambda g: (0, 0)),
        pl.BlockSpec((1, cout_h), lambda g: (0, 0)),
        pl.BlockSpec((1, cout_l), lambda g: (0, 0)),
    ]
    if has_residual:
        inputs += [res_h.reshape(mh, cout_h), res_l.reshape(ml, cout_l)]
        in_specs += [pl.BlockSpec((mh_blk, cout_h), lambda g: (g, 0)),
                     pl.BlockSpec((ml_blk, cout_l), lambda g: (g, 0))]

    # Advisory cost estimate so XLA schedules the surrounding glue sensibly.
    flops = 2 * (mh * kh_dim * cout_h + ml * kl_dim * (cout_h + cout_l)
                 + ml * kh_dim * cout_l + mh * ml_blk * cout_h)
    transcendentals = 3 * (mh * cout_h + ml * cout_l) if apply_act else 0
    bytes_accessed = sum(int(a.size) * a.dtype.itemsize for a in inputs)
    bytes_accessed += (mh * cout_h + ml * cout_l) * jnp.dtype(out_dtype).itemsize

    kern = functools.partial(_octave_layer_kernel, cout_h=cout_h,
                             apply_mish=apply_act, has_residual=has_residual)
    out_h, out_l = pl.pallas_call(
        kern,
        out_shape=(jax.ShapeDtypeStruct((mh, cout_h), out_dtype),
                   jax.ShapeDtypeStruct((ml, cout_l), out_dtype)),
        grid=grid,
        in_specs=in_specs,
        out_specs=(pl.BlockSpec((mh_blk, cout_h), lambda g: (g, 0)),
                   pl.BlockSpec((ml_blk, cout_l), lambda g: (g, 0))),
        compiler_params=pltpu.CompilerParams(
            dimension_semantics=("parallel",),
            vmem_limit_bytes=32 * 1024 * 1024),
        cost_estimate=pl.CostEstimate(flops=flops,
                                      transcendentals=transcendentals,
                                      bytes_accessed=bytes_accessed),
    )(*inputs)

    return (out_h.reshape(N, H, W, cout_h), out_l.reshape(N, Hl, Wl, cout_l))


def bottleneck_forward(x_h, x_l, params):
    # Bottleneck with First=False, stride=1, downsample=None, groups=1.
    # TODO(synk): First=True (FirstOctaveCBR), stride=2 pooling, and the
    # downsample branch are not exercised by this configuration.
    h, l = octave_layer(x_h, x_l, params['ocb1'], k=1, apply_act=True,
                        out_dtype=COMPUTE_DTYPE)                 # OctaveCBR 1x1
    h, l = octave_layer(h, l, params['ocb2'], k=3, apply_act=True,
                        out_dtype=COMPUTE_DTYPE)                 # OctaveCBR 3x3
    # OctaveCB 1x1 (BN, no act) with the residual add + Mish fused in-kernel.
    h, l = octave_layer(h, l, params['ocb3'], k=1, apply_act=True,
                        res_h=x_h, res_l=x_l, out_dtype=jnp.float32)
    return h, l


# ------------------------- deterministic parameters -------------------------

def make_bn(key, c):
    k1, k2, k3, k4 = jax.random.split(key, 4)
    gamma = jax.random.uniform(k1, (c,), jnp.float32, 0.5, 1.5)
    beta = 0.1 * jax.random.normal(k2, (c,), jnp.float32)
    mean = 0.1 * jax.random.normal(k3, (c,), jnp.float32)
    var = jax.random.uniform(k4, (c,), jnp.float32, 0.5, 1.5)
    scale = gamma / jnp.sqrt(var + BN_EPS)          # BatchNorm2d inference mode
    shift = beta - mean * scale
    return scale.reshape(1, c), shift.reshape(1, c)


def make_layer_params(key, cin_h, cin_l, cout_h, cout_l, k):
    keys = jax.random.split(key, 6)

    def w(kk, ci, co):
        return 0.1 * jax.random.normal(kk, (k, k, ci, co), jnp.float32)  # HWIO

    p = {
        'w_h2h': w(keys[0], cin_h, cout_h),
        'w_l2h': w(keys[1], cin_l, cout_h),
        'w_h2l': w(keys[2], cin_h, cout_l),
        'w_l2l': w(keys[3], cin_l, cout_l),
    }
    p['bn_h_scale'], p['bn_h_shift'] = make_bn(keys[4], cout_h)
    p['bn_l_scale'], p['bn_l_shift'] = make_bn(keys[5], cout_l)
    return p


if __name__ == "__main__":
    key = jax.random.PRNGKey(0)
    inplanes = planes = 8
    alpha = 0.5
    ch = inplanes - int(alpha * inplanes)   # high-frequency channels = 4
    cl = int(alpha * inplanes)              # low-frequency channels  = 4
    N, H, W = 2, 16, 16

    k_xh, k_xl, k_p1, k_p2, k_p3 = jax.random.split(key, 5)
    # Inputs generated in PyTorch NCHW, then converted to the kernel's NHWC layout.
    x_h_nchw = jax.random.normal(k_xh, (N, ch, H, W), jnp.float32)
    x_l_nchw = jax.random.normal(k_xl, (N, cl, H // 2, W // 2), jnp.float32)
    x_h = jnp.transpose(x_h_nchw, (0, 2, 3, 1))
    x_l = jnp.transpose(x_l_nchw, (0, 2, 3, 1))

    params = {
        'ocb1': make_layer_params(k_p1, ch, cl, ch, cl, 1),
        'ocb2': make_layer_params(k_p2, ch, cl, ch, cl, 3),
        'ocb3': make_layer_params(k_p3, ch, cl, ch, cl, 1),
    }

    out_h, out_l = jax.jit(bottleneck_forward)(x_h, x_l, params)
    jax.block_until_ready((out_h, out_l))
    assert out_h.shape == (N, H, W, ch) and out_l.shape == (N, H // 2, W // 2, cl)
    assert bool(jnp.all(jnp.isfinite(out_h))) and bool(jnp.all(jnp.isfinite(out_l)))
    print("KERNEL_OK")
</pallas_src>

<mosaic_0001>
module attributes {stable_mosaic.version = 11 : i64} {
  func.func @_octave_layer_kernel(%arg0: i32, %arg1: memref<256x4xbf16, #tpu.memory_space<vmem>>, %arg2: memref<64x4xbf16, #tpu.memory_space<vmem>>, %arg3: memref<64x4xbf16, #tpu.memory_space<vmem>>, %arg4: memref<256x64xf32, #tpu.memory_space<vmem>>, %arg5: memref<4x4xbf16, #tpu.memory_space<vmem>>, %arg6: memref<4x8xbf16, #tpu.memory_space<vmem>>, %arg7: memref<4x4xbf16, #tpu.memory_space<vmem>>, %arg8: memref<1x4xf32, #tpu.memory_space<vmem>>, %arg9: memref<1x4xf32, #tpu.memory_space<vmem>>, %arg10: memref<256x4xbf16, #tpu.memory_space<vmem>>, %arg11: memref<64x4xbf16, #tpu.memory_space<vmem>>) attributes {dimension_semantics = [#tpu.dimension_semantics<parallel>], iteration_bounds = array<i64: 2>, scalar_prefetch = 0 : i64, scratch_operands = 0 : i64, tpu.core_type = #tpu.core_type<tc>, window_params = [{transform_indices = @transform_0, window_bounds = array<i64: 256, 4>}, {transform_indices = @transform_1, window_bounds = array<i64: 64, 4>}, {transform_indices = @transform_2, window_bounds = array<i64: 64, 4>}, {pipeline_mode = #tpu.pipeline_mode<synchronous>, transform_indices = @transform_3, window_bounds = array<i64: 256, 64>}, {pipeline_mode = #tpu.pipeline_mode<synchronous>, transform_indices = @transform_4, window_bounds = array<i64: 4, 4>}, {pipeline_mode = #tpu.pipeline_mode<synchronous>, transform_indices = @transform_5, window_bounds = array<i64: 4, 8>}, {pipeline_mode = #tpu.pipeline_mode<synchronous>, transform_indices = @transform_6, window_bounds = array<i64: 4, 4>}, {pipeline_mode = #tpu.pipeline_mode<synchronous>, transform_indices = @transform_7, window_bounds = array<i64: 1, 4>}, {pipeline_mode = #tpu.pipeline_mode<synchronous>, transform_indices = @transform_8, window_bounds = array<i64: 1, 4>}, {transform_indices = @transform_9, window_bounds = array<i64: 256, 4>}, {transform_indices = @transform_10, window_bounds = array<i64: 64, 4>}]} {
    %c0 = arith.constant 0 : index
    %c0_0 = arith.constant 0 : index
    %0 = vector.load %arg1[%c0, %c0_0] : memref<256x4xbf16, #tpu.memory_space<vmem>>, vector<256x4xbf16>
    %c0_1 = arith.constant 0 : index
    %c0_2 = arith.constant 0 : index
    %1 = vector.load %arg5[%c0_1, %c0_2] : memref<4x4xbf16, #tpu.memory_space<vmem>>, vector<4x4xbf16>
    %cst = arith.constant dense<0.000000e+00> : vector<256x4xf32>
    %2 = tpu.matmul %0, %1, %cst {dimension_numbers = #tpu.dot_dimension_numbers<[1], [0], [0], [1], [0, 0, 1, 1], [], []>} : vector<256x4xbf16>, vector<4x4xbf16>, vector<256x4xf32> -> vector<256x4xf32>
    %c0_3 = arith.constant 0 : index
    %c0_4 = arith.constant 0 : index
    %3 = vector.load %arg2[%c0_3, %c0_4] : memref<64x4xbf16, #tpu.memory_space<vmem>>, vector<64x4xbf16>
    %c0_5 = arith.constant 0 : index
    %c0_6 = arith.constant 0 : index
    %4 = vector.load %arg6[%c0_5, %c0_6] : memref<4x8xbf16, #tpu.memory_space<vmem>>, vector<4x8xbf16>
    %cst_7 = arith.constant dense<0.000000e+00> : vector<64x8xf32>
    %5 = tpu.matmul %3, %4, %cst_7 {dimension_numbers = #tpu.dot_dimension_numbers<[1], [0], [0], [1], [0, 0, 1, 1], [], []>} : vector<64x4xbf16>, vector<4x8xbf16>, vector<64x8xf32> -> vector<64x8xf32>
    %6 = vector.extract_strided_slice %5 {offsets = [0, 0], sizes = [64, 4], strides = [1, 1]} : vector<64x8xf32> to vector<64x4xf32>
    %7 = vector.extract_strided_slice %5 {offsets = [0, 4], sizes = [64, 4], strides = [1, 1]} : vector<64x8xf32> to vector<64x4xf32>
    %c0_8 = arith.constant 0 : index
    %c0_9 = arith.constant 0 : index
    %8 = vector.load %arg3[%c0_8, %c0_9] : memref<64x4xbf16, #tpu.memory_space<vmem>>, vector<64x4xbf16>
    %c0_10 = arith.constant 0 : index
    %c0_11 = arith.constant 0 : index
    %9 = vector.load %arg7[%c0_10, %c0_11] : memref<4x4xbf16, #tpu.memory_space<vmem>>, vector<4x4xbf16>
    %cst_12 = arith.constant dense<0.000000e+00> : vector<64x4xf32>
    %10 = tpu.matmul %8, %9, %cst_12 {dimension_numbers = #tpu.dot_dimension_numbers<[1], [0], [0], [1], [0, 0, 1, 1], [], []>} : vector<64x4xbf16>, vector<4x4xbf16>, vector<64x4xf32> -> vector<64x4xf32>
    %c0_13 = arith.constant 0 : index
    %c0_14 = arith.constant 0 : index
    %11 = vector.load %arg4[%c0_13, %c0_14] : memref<256x64xf32, #tpu.memory_space<vmem>>, vector<256x64xf32>
    %cst_15 = arith.constant dense<0.000000e+00> : vector<256x4xf32>
    %12 = tpu.matmul %11, %6, %cst_15 {dimension_numbers = #tpu.dot_dimension_numbers<[1], [0], [0], [1], [0, 0, 1, 1], [], []>} : vector<256x64xf32>, vector<64x4xf32>, vector<256x4xf32> -> vector<256x4xf32>
    %13 = arith.addf %2, %12 : vector<256x4xf32>
    %c0_16 = arith.constant 0 : index
    %c0_17 = arith.constant 0 : index
    %14 = vector.load %arg8[%c0_16, %c0_17] : memref<1x4xf32, #tpu.memory_space<vmem>>, vector<1x4xf32>
    %15 = vector.broadcast %14 : vector<1x4xf32> to vector<256x4xf32>
    %16 = arith.addf %13, %15 : vector<256x4xf32>
    %17 = arith.addf %7, %10 : vector<64x4xf32>
    %c0_18 = arith.constant 0 : index
    %c0_19 = arith.constant 0 : index
    %18 = vector.load %arg9[%c0_18, %c0_19] : memref<1x4xf32, #tpu.memory_space<vmem>>, vector<1x4xf32>
    %19 = vector.broadcast %18 : vector<1x4xf32> to vector<64x4xf32>
    %20 = arith.addf %17, %19 : vector<64x4xf32>
    %cst_20 = arith.constant 2.000000e+01 : f32
    %21 = vector.broadcast %cst_20 : f32 to vector<256x4xf32>
    %22 = arith.cmpf ogt, %16, %21 : vector<256x4xf32>
    %cst_21 = arith.constant 2.000000e+01 : f32
    %23 = vector.broadcast %cst_21 : f32 to vector<256x4xf32>
    %24 = arith.minimumf %16, %23 : vector<256x4xf32>
    %25 = math.exp %24 : vector<256x4xf32>
    %26 = math.log1p %25 : vector<256x4xf32>
    %27 = arith.select %22, %16, %26 : vector<256x4xi1>, vector<256x4xf32>
    %28 = math.tanh %27 : vector<256x4xf32>
    %29 = arith.mulf %16, %28 : vector<256x4xf32>
    %cst_22 = arith.constant 2.000000e+01 : f32
    %30 = vector.broadcast %cst_22 : f32 to vector<64x4xf32>
    %31 = arith.cmpf ogt, %20, %30 : vector<64x4xf32>
    %cst_23 = arith.constant 2.000000e+01 : f32
    %32 = vector.broadcast %cst_23 : f32 to vector<64x4xf32>
    %33 = arith.minimumf %20, %32 : vector<64x4xf32>
    %34 = math.exp %33 : vector<64x4xf32>
    %35 = math.log1p %34 : vector<64x4xf32>
    %36 = arith.select %31, %20, %35 : vector<64x4xi1>, vector<64x4xf32>
    %37 = math.tanh %36 : vector<64x4xf32>
    %38 = arith.mulf %20, %37 : vector<64x4xf32>
    %39 = arith.truncf %29 : vector<256x4xf32> to vector<256x4xbf16>
    %c0_24 = arith.constant 0 : index
    %c0_25 = arith.constant 0 : index
    %40 = vector.load %arg10[%c0_24, %c0_25] : memref<256x4xbf16, #tpu.memory_space<vmem>>, vector<256x4xbf16>
    tpu.vector_store %arg10[%c0_24, %c0_25], %39 {strides = array<i32>} : memref<256x4xbf16, #tpu.memory_space<vmem>>, vector<256x4xbf16>,
    %41 = arith.truncf %38 : vector<64x4xf32> to vector<64x4xbf16>
    %c0_26 = arith.constant 0 : index
    %c0_27 = arith.constant 0 : index
    %42 = vector.load %arg11[%c0_26, %c0_27] : memref<64x4xbf16, #tpu.memory_space<vmem>>, vector<64x4xbf16>
    tpu.vector_store %arg11[%c0_26, %c0_27], %41 {strides = array<i32>} : memref<64x4xbf16, #tpu.memory_space<vmem>>, vector<64x4xbf16>,
    return
  }
  func.func @transform_0(%arg0: i32) -> (i32, i32) {
    %c0_i32 = arith.constant 0 : i32
    %c0_i32_0 = arith.constant 0 : i32
    return %arg0, %c0_i32 : i32, i32
  }
  func.func @transform_1(%arg0: i32) -> (i32, i32) {
    %c0_i32 = arith.constant 0 : i32
    %c0_i32_0 = arith.constant 0 : i32
    return %arg0, %c0_i32 : i32, i32
  }
  func.func @transform_2(%arg0: i32) -> (i32, i32) {
    %c0_i32 = arith.constant 0 : i32
    %c0_i32_0 = arith.constant 0 : i32
    return %arg0, %c0_i32 : i32, i32
  }
  func.func @transform_3(%arg0: i32) -> (i32, i32) {
    %c0_i32 = arith.constant 0 : i32
    %c0_i32_0 = arith.constant 0 : i32
    %c0_i32_1 = arith.constant 0 : i32
    return %c0_i32, %c0_i32_0 : i32, i32
  }
  func.func @transform_4(%arg0: i32) -> (i32, i32) {
    %c0_i32 = arith.constant 0 : i32
    %c0_i32_0 = arith.constant 0 : i32
    %c0_i32_1 = arith.constant 0 : i32
    return %c0_i32, %c0_i32_0 : i32, i32
  }
  func.func @transform_5(%arg0: i32) -> (i32, i32) {
    %c0_i32 = arith.constant 0 : i32
    %c0_i32_0 = arith.constant 0 : i32
    %c0_i32_1 = arith.constant 0 : i32
    return %c0_i32, %c0_i32_0 : i32, i32
  }
  func.func @transform_6(%arg0: i32) -> (i32, i32) {
    %c0_i32 = arith.constant 0 : i32
    %c0_i32_0 = arith.constant 0 : i32
    %c0_i32_1 = arith.constant 0 : i32
    return %c0_i32, %c0_i32_0 : i32, i32
  }
  func.func @transform_7(%arg0: i32) -> (i32, i32) {
    %c0_i32 = arith.constant 0 : i32
    %c0_i32_0 = arith.constant 0 : i32
    %c0_i32_1 = arith.constant 0 : i32
    return %c0_i32, %c0_i32_0 : i32, i32
  }
  func.func @transform_8(%arg0: i32) -> (i32, i32) {
    %c0_i32 = arith.constant 0 : i32
    %c0_i32_0 = arith.constant 0 : i32
    %c0_i32_1 = arith.constant 0 : i32
    return %c0_i32, %c0_i32_0 : i32, i32
  }
  func.func @transform_9(%arg0: i32) -> (i32, i32) {
    %c0_i32 = arith.constant 0 : i32
    %c0_i32_0 = arith.constant 0 : i32
    return %arg0, %c0_i32 : i32, i32
  }
  func.func @transform_10(%arg0: i32) -> (i32, i32) {
    %c0_i32 = arith.constant 0 : i32
    %c0_i32_0 = arith.constant 0 : i32
    return %arg0, %c0_i32 : i32, i32
  }
}

module attributes {stable_mosaic.version = 11 : i64} {
  func.func @_octave_layer_kernel(%arg0: i32, %arg1: memref<256x36xbf16, #tpu.memory_space<vmem>>, %arg2: memref<64x36xbf16, #tpu.memory_space<vmem>>, %arg3: memref<64x36xbf16, #tpu.memory_space<vmem>>, %arg4: memref<256x64xf32, #tpu.memory_space<vmem>>, %arg5: memref<36x4xbf16, #tpu.memory_space<vmem>>, %arg6: memref<36x8xbf16, #tpu.memory_space<vmem>>, %arg7: memref<36x4xbf16, #tpu.memory_space<vmem>>, %arg8: memref<1x4xf32, #tpu.memory_space<vmem>>, %arg9: memref<1x4xf32, #tpu.memory_space<vmem>>, %arg10: memref<256x4xbf16, #tpu.memory_space<vmem>>, %arg11: memref<64x4xbf16, #tpu.memory_space<vmem>>) attributes {dimension_semantics = [#tpu.dimension_semantics<parallel>], iteration_bounds = array<i64: 2>, scalar_prefetch = 0 : i64, scratch_operands = 0 : i64, tpu.core_type = #tpu.core_type<tc>, window_params = [{transform_indices = @transform_0, window_bounds = array<i64: 256, 36>}, {transform_indices = @transform_1, window_bounds = array<i64: 64, 36>}, {transform_indices = @transform_2, window_bounds = array<i64: 64, 36>}, {pipeline_mode = #tpu.pipeline_mode<synchronous>, transform_indices = @transform_3, window_bounds = array<i64: 256, 64>}, {pipeline_mode = #tpu.pipeline_mode<synchronous>, transform_indices = @transform_4, window_bounds = array<i64: 36, 4>}, {pipeline_mode = #tpu.pipeline_mode<synchronous>, transform_indices = @transform_5, window_bounds = array<i64: 36, 8>}, {pipeline_mode = #tpu.pipeline_mode<synchronous>, transform_indices = @transform_6, window_bounds = array<i64: 36, 4>}, {pipeline_mode = #tpu.pipeline_mode<synchronous>, transform_indices = @transform_7, window_bounds = array<i64: 1, 4>}, {pipeline_mode = #tpu.pipeline_mode<synchronous>, transform_indices = @transform_8, window_bounds = array<i64: 1, 4>}, {transform_indices = @transform_9, window_bounds = array<i64: 256, 4>}, {transform_indices = @transform_10, window_bounds = array<i64: 64, 4>}]} {
    %c0 = arith.constant 0 : index
    %c0_0 = arith.constant 0 : index
    %0 = vector.load %arg1[%c0, %c0_0] : memref<256x36xbf16, #tpu.memory_space<vmem>>, vector<256x36xbf16>
    %c0_1 = arith.constant 0 : index
    %c0_2 = arith.constant 0 : index
    %1 = vector.load %arg5[%c0_1, %c0_2] : memref<36x4xbf16, #tpu.memory_space<vmem>>, vector<36x4xbf16>
    %cst = arith.constant dense<0.000000e+00> : vector<256x4xf32>
    %2 = tpu.matmul %0, %1, %cst {dimension_numbers = #tpu.dot_dimension_numbers<[1], [0], [0], [1], [0, 0, 1, 1], [], []>} : vector<256x36xbf16>, vector<36x4xbf16>, vector<256x4xf32> -> vector<256x4xf32>
    %c0_3 = arith.constant 0 : index
    %c0_4 = arith.constant 0 : index
    %3 = vector.load %arg2[%c0_3, %c0_4] : memref<64x36xbf16, #tpu.memory_space<vmem>>, vector<64x36xbf16>
    %c0_5 = arith.constant 0 : index
    %c0_6 = arith.constant 0 : index
    %4 = vector.load %arg6[%c0_5, %c0_6] : memref<36x8xbf16, #tpu.memory_space<vmem>>, vector<36x8xbf16>
    %cst_7 = arith.constant dense<0.000000e+00> : vector<64x8xf32>
    %5 = tpu.matmul %3, %4, %cst_7 {dimension_numbers = #tpu.dot_dimension_numbers<[1], [0], [0], [1], [0, 0, 1, 1], [], []>} : vector<64x36xbf16>, vector<36x8xbf16>, vector<64x8xf32> -> vector<64x8xf32>
    %6 = vector.extract_strided_slice %5 {offsets = [0, 0], sizes = [64, 4], strides = [1, 1]} : vector<64x8xf32> to vector<64x4xf32>
    %7 = vector.extract_strided_slice %5 {offsets = [0, 4], sizes = [64, 4], strides = [1, 1]} : vector<64x8xf32> to vector<64x4xf32>
    %c0_8 = arith.constant 0 : index
    %c0_9 = arith.constant 0 : index
    %8 = vector.load %arg3[%c0_8, %c0_9] : memref<64x36xbf16, #tpu.memory_space<vmem>>, vector<64x36xbf16>
    %c0_10 = arith.constant 0 : index
    %c0_11 = arith.constant 0 : index
    %9 = vector.load %arg7[%c0_10, %c0_11] : memref<36x4xbf16, #tpu.memory_space<vmem>>, vector<36x4xbf16>
    %cst_12 = arith.constant dense<0.000000e+00> : vector<64x4xf32>
    %10 = tpu.matmul %8, %9, %cst_12 {dimension_numbers = #tpu.dot_dimension_numbers<[1], [0], [0], [1], [0, 0, 1, 1], [], []>} : vector<64x36xbf16>, vector<36x4xbf16>, vector<64x4xf32> -> vector<64x4xf32>
    %c0_13 = arith.constant 0 : index
    %c0_14 = arith.constant 0 : index
    %11 = vector.load %arg4[%c0_13, %c0_14] : memref<256x64xf32, #tpu.memory_space<vmem>>, vector<256x64xf32>
    %cst_15 = arith.constant dense<0.000000e+00> : vector<256x4xf32>
    %12 = tpu.matmul %11, %6, %cst_15 {dimension_numbers = #tpu.dot_dimension_numbers<[1], [0], [0], [1], [0, 0, 1, 1], [], []>} : vector<256x64xf32>, vector<64x4xf32>, vector<256x4xf32> -> vector<256x4xf32>
    %13 = arith.addf %2, %12 : vector<256x4xf32>
    %c0_16 = arith.constant 0 : index
    %c0_17 = arith.constant 0 : index
    %14 = vector.load %arg8[%c0_16, %c0_17] : memref<1x4xf32, #tpu.memory_space<vmem>>, vector<1x4xf32>
    %15 = vector.broadcast %14 : vector<1x4xf32> to vector<256x4xf32>
    %16 = arith.addf %13, %15 : vector<256x4xf32>
    %17 = arith.addf %7, %10 : vector<64x4xf32>
    %c0_18 = arith.constant 0 : index
    %c0_19 = arith.constant 0 : index
    %18 = vector.load %arg9[%c0_18, %c0_19] : memref<1x4xf32, #tpu.memory_space<vmem>>, vector<1x4xf32>
    %19 = vector.broadcast %18 : vector<1x4xf32> to vector<64x4xf32>
    %20 = arith.addf %17, %19 : vector<64x4xf32>
    %cst_20 = arith.constant 2.000000e+01 : f32
    %21 = vector.broadcast %cst_20 : f32 to vector<256x4xf32>
    %22 = arith.cmpf ogt, %16, %21 : vector<256x4xf32>
    %cst_21 = arith.constant 2.000000e+01 : f32
    %23 = vector.broadcast %cst_21 : f32 to vector<256x4xf32>
    %24 = arith.minimumf %16, %23 : vector<256x4xf32>
    %25 = math.exp %24 : vector<256x4xf32>
    %26 = math.log1p %25 : vector<256x4xf32>
    %27 = arith.select %22, %16, %26 : vector<256x4xi1>, vector<256x4xf32>
    %28 = math.tanh %27 : vector<256x4xf32>
    %29 = arith.mulf %16, %28 : vector<256x4xf32>
    %cst_22 = arith.constant 2.000000e+01 : f32
    %30 = vector.broadcast %cst_22 : f32 to vector<64x4xf32>
    %31 = arith.cmpf ogt, %20, %30 : vector<64x4xf32>
    %cst_23 = arith.constant 2.000000e+01 : f32
    %32 = vector.broadcast %cst_23 : f32 to vector<64x4xf32>
    %33 = arith.minimumf %20, %32 : vector<64x4xf32>
    %34 = math.exp %33 : vector<64x4xf32>
    %35 = math.log1p %34 : vector<64x4xf32>
    %36 = arith.select %31, %20, %35 : vector<64x4xi1>, vector<64x4xf32>
    %37 = math.tanh %36 : vector<64x4xf32>
    %38 = arith.mulf %20, %37 : vector<64x4xf32>
    %39 = arith.truncf %29 : vector<256x4xf32> to vector<256x4xbf16>
    %c0_24 = arith.constant 0 : index
    %c0_25 = arith.constant 0 : index
    %40 = vector.load %arg10[%c0_24, %c0_25] : memref<256x4xbf16, #tpu.memory_space<vmem>>, vector<256x4xbf16>
    tpu.vector_store %arg10[%c0_24, %c0_25], %39 {strides = array<i32>} : memref<256x4xbf16, #tpu.memory_space<vmem>>, vector<256x4xbf16>,
    %41 = arith.truncf %38 : vector<64x4xf32> to vector<64x4xbf16>
    %c0_26 = arith.constant 0 : index
    %c0_27 = arith.constant 0 : index
    %42 = vector.load %arg11[%c0_26, %c0_27] : memref<64x4xbf16, #tpu.memory_space<vmem>>, vector<64x4xbf16>
    tpu.vector_store %arg11[%c0_26, %c0_27], %41 {strides = array<i32>} : memref<64x4xbf16, #tpu.memory_space<vmem>>, vector<64x4xbf16>,
    return
  }
  func.func @transform_0(%arg0: i32) -> (i32, i32) {
    %c0_i32 = arith.constant 0 : i32
    %c0_i32_0 = arith.constant 0 : i32
    return %arg0, %c0_i32 : i32, i32
  }
  func.func @transform_1(%arg0: i32) -> (i32, i32) {
    %c0_i32 = arith.constant 0 : i32
    %c0_i32_0 = arith.constant 0 : i32
    return %arg0, %c0_i32 : i32, i32
  }
  func.func @transform_2(%arg0: i32) -> (i32, i32) {
    %c0_i32 = arith.constant 0 : i32
    %c0_i32_0 = arith.constant 0 : i32
    return %arg0, %c0_i32 : i32, i32
  }
  func.func @transform_3(%arg0: i32) -> (i32, i32) {
    %c0_i32 = arith.constant 0 : i32
    %c0_i32_0 = arith.constant 0 : i32
    %c0_i32_1 = arith.constant 0 : i32
    return %c0_i32, %c0_i32_0 : i32, i32
  }
  func.func @transform_4(%arg0: i32) -> (i32, i32) {
    %c0_i32 = arith.constant 0 : i32
    %c0_i32_0 = arith.constant 0 : i32
    %c0_i32_1 = arith.constant 0 : i32
    return %c0_i32, %c0_i32_0 : i32, i32
  }
  func.func @transform_5(%arg0: i32) -> (i32, i32) {
    %c0_i32 = arith.constant 0 : i32
    %c0_i32_0 = arith.constant 0 : i32
    %c0_i32_1 = arith.constant 0 : i32
    return %c0_i32, %c0_i32_0 : i32, i32
  }
  func.func @transform_6(%arg0: i32) -> (i32, i32) {
    %c0_i32 = arith.constant 0 : i32
    %c0_i32_0 = arith.constant 0 : i32
    %c0_i32_1 = arith.constant 0 : i32
    return %c0_i32, %c0_i32_0 : i32, i32
  }
  func.func @transform_7(%arg0: i32) -> (i32, i32) {
    %c0_i32 = arith.constant 0 : i32
    %c0_i32_0 = arith.constant 0 : i32
    %c0_i32_1 = arith.constant 0 : i32
    return %c0_i32, %c0_i32_0 : i32, i32
  }
  func.func @transform_8(%arg0: i32) -> (i32, i32) {
    %c0_i32 = arith.constant 0 : i32
    %c0_i32_0 = arith.constant 0 : i32
    %c0_i32_1 = arith.constant 0 : i32
    return %c0_i32, %c0_i32_0 : i32, i32
  }
  func.func @transform_9(%arg0: i32) -> (i32, i32) {
    %c0_i32 = arith.constant 0 : i32
    %c0_i32_0 = arith.constant 0 : i32
    return %arg0, %c0_i32 : i32, i32
  }
  func.func @transform_10(%arg0: i32) -> (i32, i32) {
    %c0_i32 = arith.constant 0 : i32
    %c0_i32_0 = arith.constant 0 : i32
    return %arg0, %c0_i32 : i32, i32
  }
}

module attributes {stable_mosaic.version = 11 : i64} {
  func.func @_octave_layer_kernel(%arg0: i32, %arg1: memref<256x4xbf16, #tpu.memory_space<vmem>>, %arg2: memref<64x4xbf16, #tpu.memory_space<vmem>>, %arg3: memref<64x4xbf16, #tpu.memory_space<vmem>>, %arg4: memref<256x64xf32, #tpu.memory_space<vmem>>, %arg5: memref<4x4xbf16, #tpu.memory_space<vmem>>, %arg6: memref<4x8xbf16, #tpu.memory_space<vmem>>, %arg7: memref<4x4xbf16, #tpu.memory_space<vmem>>, %arg8: memref<1x4xf32, #tpu.memory_space<vmem>>, %arg9: memref<1x4xf32, #tpu.memory_space<vmem>>, %arg10: memref<256x4xf32, #tpu.memory_space<vmem>>, %arg11: memref<64x4xf32, #tpu.memory_space<vmem>>, %arg12: memref<256x4xf32, #tpu.memory_space<vmem>>, %arg13: memref<64x4xf32, #tpu.memory_space<vmem>>) attributes {dimension_semantics = [#tpu.dimension_semantics<parallel>], iteration_bounds = array<i64: 2>, scalar_prefetch = 0 : i64, scratch_operands = 0 : i64, tpu.core_type = #tpu.core_type<tc>, window_params = [{transform_indices = @transform_0, window_bounds = array<i64: 256, 4>}, {transform_indices = @transform_1, window_bounds = array<i64: 64, 4>}, {transform_indices = @transform_2, window_bounds = array<i64: 64, 4>}, {pipeline_mode = #tpu.pipeline_mode<synchronous>, transform_indices = @transform_3, window_bounds = array<i64: 256, 64>}, {pipeline_mode = #tpu.pipeline_mode<synchronous>, transform_indices = @transform_4, window_bounds = array<i64: 4, 4>}, {pipeline_mode = #tpu.pipeline_mode<synchronous>, transform_indices = @transform_5, window_bounds = array<i64: 4, 8>}, {pipeline_mode = #tpu.pipeline_mode<synchronous>, transform_indices = @transform_6, window_bounds = array<i64: 4, 4>}, {pipeline_mode = #tpu.pipeline_mode<synchronous>, transform_indices = @transform_7, window_bounds = array<i64: 1, 4>}, {pipeline_mode = #tpu.pipeline_mode<synchronous>, transform_indices = @transform_8, window_bounds = array<i64: 1, 4>}, {transform_indices = @transform_9, window_bounds = array<i64: 256, 4>}, {transform_indices = @transform_10, window_bounds = array<i64: 64, 4>}, {transform_indices = @transform_11, window_bounds = array<i64: 256, 4>}, {transform_indices = @transform_12, window_bounds = array<i64: 64, 4>}]} {
    %c0 = arith.constant 0 : index
    %c0_0 = arith.constant 0 : index
    %0 = vector.load %arg1[%c0, %c0_0] : memref<256x4xbf16, #tpu.memory_space<vmem>>, vector<256x4xbf16>
    %c0_1 = arith.constant 0 : index
    %c0_2 = arith.constant 0 : index
    %1 = vector.load %arg5[%c0_1, %c0_2] : memref<4x4xbf16, #tpu.memory_space<vmem>>, vector<4x4xbf16>
    %cst = arith.constant dense<0.000000e+00> : vector<256x4xf32>
    %2 = tpu.matmul %0, %1, %cst {dimension_numbers = #tpu.dot_dimension_numbers<[1], [0], [0], [1], [0, 0, 1, 1], [], []>} : vector<256x4xbf16>, vector<4x4xbf16>, vector<256x4xf32> -> vector<256x4xf32>
    %c0_3 = arith.constant 0 : index
    %c0_4 = arith.constant 0 : index
    %3 = vector.load %arg2[%c0_3, %c0_4] : memref<64x4xbf16, #tpu.memory_space<vmem>>, vector<64x4xbf16>
    %c0_5 = arith.constant 0 : index
    %c0_6 = arith.constant 0 : index
    %4 = vector.load %arg6[%c0_5, %c0_6] : memref<4x8xbf16, #tpu.memory_space<vmem>>, vector<4x8xbf16>
    %cst_7 = arith.constant dense<0.000000e+00> : vector<64x8xf32>
    %5 = tpu.matmul %3, %4, %cst_7 {dimension_numbers = #tpu.dot_dimension_numbers<[1], [0], [0], [1], [0, 0, 1, 1], [], []>} : vector<64x4xbf16>, vector<4x8xbf16>, vector<64x8xf32> -> vector<64x8xf32>
    %6 = vector.extract_strided_slice %5 {offsets = [0, 0], sizes = [64, 4], strides = [1, 1]} : vector<64x8xf32> to vector<64x4xf32>
    %7 = vector.extract_strided_slice %5 {offsets = [0, 4], sizes = [64, 4], strides = [1, 1]} : vector<64x8xf32> to vector<64x4xf32>
    %c0_8 = arith.constant 0 : index
    %c0_9 = arith.constant 0 : index
    %8 = vector.load %arg3[%c0_8, %c0_9] : memref<64x4xbf16, #tpu.memory_space<vmem>>, vector<64x4xbf16>
    %c0_10 = arith.constant 0 : index
    %c0_11 = arith.constant 0 : index
    %9 = vector.load %arg7[%c0_10, %c0_11] : memref<4x4xbf16, #tpu.memory_space<vmem>>, vector<4x4xbf16>
    %cst_12 = arith.constant dense<0.000000e+00> : vector<64x4xf32>
    %10 = tpu.matmul %8, %9, %cst_12 {dimension_numbers = #tpu.dot_dimension_numbers<[1], [0], [0], [1], [0, 0, 1, 1], [], []>} : vector<64x4xbf16>, vector<4x4xbf16>, vector<64x4xf32> -> vector<64x4xf32>
    %c0_13 = arith.constant 0 : index
    %c0_14 = arith.constant 0 : index
    %11 = vector.load %arg4[%c0_13, %c0_14] : memref<256x64xf32, #tpu.memory_space<vmem>>, vector<256x64xf32>
    %cst_15 = arith.constant dense<0.000000e+00> : vector<256x4xf32>
    %12 = tpu.matmul %11, %6, %cst_15 {dimension_numbers = #tpu.dot_dimension_numbers<[1], [0], [0], [1], [0, 0, 1, 1], [], []>} : vector<256x64xf32>, vector<64x4xf32>, vector<256x4xf32> -> vector<256x4xf32>
    %13 = arith.addf %2, %12 : vector<256x4xf32>
    %c0_16 = arith.constant 0 : index
    %c0_17 = arith.constant 0 : index
    %14 = vector.load %arg8[%c0_16, %c0_17] : memref<1x4xf32, #tpu.memory_space<vmem>>, vector<1x4xf32>
    %15 = vector.broadcast %14 : vector<1x4xf32> to vector<256x4xf32>
    %16 = arith.addf %13, %15 : vector<256x4xf32>
    %17 = arith.addf %7, %10 : vector<64x4xf32>
    %c0_18 = arith.constant 0 : index
    %c0_19 = arith.constant 0 : index
    %18 = vector.load %arg9[%c0_18, %c0_19] : memref<1x4xf32, #tpu.memory_space<vmem>>, vector<1x4xf32>
    %19 = vector.broadcast %18 : vector<1x4xf32> to vector<64x4xf32>
    %20 = arith.addf %17, %19 : vector<64x4xf32>
    %c0_20 = arith.constant 0 : index
    %c0_21 = arith.constant 0 : index
    %21 = vector.load %arg10[%c0_20, %c0_21] : memref<256x4xf32, #tpu.memory_space<vmem>>, vector<256x4xf32>
    %22 = arith.addf %16, %21 : vector<256x4xf32>
    %c0_22 = arith.constant 0 : index
    %c0_23 = arith.constant 0 : index
    %23 = vector.load %arg11[%c0_22, %c0_23] : memref<64x4xf32, #tpu.memory_space<vmem>>, vector<64x4xf32>
    %24 = arith.addf %20, %23 : vector<64x4xf32>
    %cst_24 = arith.constant 2.000000e+01 : f32
    %25 = vector.broadcast %cst_24 : f32 to vector<256x4xf32>
    %26 = arith.cmpf ogt, %22, %25 : vector<256x4xf32>
    %cst_25 = arith.constant 2.000000e+01 : f32
    %27 = vector.broadcast %cst_25 : f32 to vector<256x4xf32>
    %28 = arith.minimumf %22, %27 : vector<256x4xf32>
    %29 = math.exp %28 : vector<256x4xf32>
    %30 = math.log1p %29 : vector<256x4xf32>
    %31 = arith.select %26, %22, %30 : vector<256x4xi1>, vector<256x4xf32>
    %32 = math.tanh %31 : vector<256x4xf32>
    %33 = arith.mulf %22, %32 : vector<256x4xf32>
    %cst_26 = arith.constant 2.000000e+01 : f32
    %34 = vector.broadcast %cst_26 : f32 to vector<64x4xf32>
    %35 = arith.cmpf ogt, %24, %34 : vector<64x4xf32>
    %cst_27 = arith.constant 2.000000e+01 : f32
    %36 = vector.broadcast %cst_27 : f32 to vector<64x4xf32>
    %37 = arith.minimumf %24, %36 : vector<64x4xf32>
    %38 = math.exp %37 : vector<64x4xf32>
    %39 = math.log1p %38 : vector<64x4xf32>
    %40 = arith.select %35, %24, %39 : vector<64x4xi1>, vector<64x4xf32>
    %41 = math.tanh %40 : vector<64x4xf32>
    %42 = arith.mulf %24, %41 : vector<64x4xf32>
    %c0_28 = arith.constant 0 : index
    %c0_29 = arith.constant 0 : index
    %43 = vector.load %arg12[%c0_28, %c0_29] : memref<256x4xf32, #tpu.memory_space<vmem>>, vector<256x4xf32>
    tpu.vector_store %arg12[%c0_28, %c0_29], %33 {strides = array<i32>} : memref<256x4xf32, #tpu.memory_space<vmem>>, vector<256x4xf32>,
    %c0_30 = arith.constant 0 : index
    %c0_31 = arith.constant 0 : index
    %44 = vector.load %arg13[%c0_30, %c0_31] : memref<64x4xf32, #tpu.memory_space<vmem>>, vector<64x4xf32>
    tpu.vector_store %arg13[%c0_30, %c0_31], %42 {strides = array<i32>} : memref<64x4xf32, #tpu.memory_space<vmem>>, vector<64x4xf32>,
    return
  }
  func.func @transform_0(%arg0: i32) -> (i32, i32) {
    %c0_i32 = arith.constant 0 : i32
    %c0_i32_0 = arith.constant 0 : i32
    return %arg0, %c0_i32 : i32, i32
  }
  func.func @transform_1(%arg0: i32) -> (i32, i32) {
    %c0_i32 = arith.constant 0 : i32
    %c0_i32_0 = arith.constant 0 : i32
    return %arg0, %c0_i32 : i32, i32
  }
  func.func @transform_2(%arg0: i32) -> (i32, i32) {
    %c0_i32 = arith.constant 0 : i32
    %c0_i32_0 = arith.constant 0 : i32
    return %arg0, %c0_i32 : i32, i32
  }
  func.func @transform_3(%arg0: i32) -> (i32, i32) {
    %c0_i32 = arith.constant 0 : i32
    %c0_i32_0 = arith.constant 0 : i32
    %c0_i32_1 = arith.constant 0 : i32
    return %c0_i32, %c0_i32_0 : i32, i32
  }
  func.func @transform_4(%arg0: i32) -> (i32, i32) {
    %c0_i32 = arith.constant 0 : i32
    %c0_i32_0 = arith.constant 0 : i32
    %c0_i32_1 = arith.constant 0 : i32
    return %c0_i32, %c0_i32_0 : i32, i32
  }
  func.func @transform_5(%arg0: i32) -> (i32, i32) {
    %c0_i32 = arith.constant 0 : i32
    %c0_i32_0 = arith.constant 0 : i32
    %c0_i32_1 = arith.constant 0 : i32
    return %c0_i32, %c0_i32_0 : i32, i32
  }
  func.func @transform_6(%arg0: i32) -> (i32, i32) {
    %c0_i32 = arith.constant 0 : i32
    %c0_i32_0 = arith.constant 0 : i32
    %c0_i32_1 = arith.constant 0 : i32
    return %c0_i32, %c0_i32_0 : i32, i32
  }
  func.func @transform_7(%arg0: i32) -> (i32, i32) {
    %c0_i32 = arith.constant 0 : i32
    %c0_i32_0 = arith.constant 0 : i32
    %c0_i32_1 = arith.constant 0 : i32
    return %c0_i32, %c0_i32_0 : i32, i32
  }
  func.func @transform_8(%arg0: i32) -> (i32, i32) {
    %c0_i32 = arith.constant 0 : i32
    %c0_i32_0 = arith.constant 0 : i32
    %c0_i32_1 = arith.constant 0 : i32
    return %c0_i32, %c0_i32_0 : i32, i32
  }
  func.func @transform_9(%arg0: i32) -> (i32, i32) {
    %c0_i32 = arith.constant 0 : i32
    %c0_i32_0 = arith.constant 0 : i32
    return %arg0, %c0_i32 : i32, i32
  }
  func.func @transform_10(%arg0: i32) -> (i32, i32) {
    %c0_i32 = arith.constant 0 : i32
    %c0_i32_0 = arith.constant 0 : i32
    return %arg0, %c0_i32 : i32, i32
  }
  func.func @transform_11(%arg0: i32) -> (i32, i32) {
    %c0_i32 = arith.constant 0 : i32
    %c0_i32_0 = arith.constant 0 : i32
    return %arg0, %c0_i32 : i32, i32
  }
  func.func @transform_12(%arg0: i32) -> (i32, i32) {
    %c0_i32 = arith.constant 0 : i32
    %c0_i32_0 = arith.constant 0 : i32
    return %arg0, %c0_i32 : i32, i32
  }
}

</mosaic_0001>

<llo_original>
// kernel: bottleneck_forward.3
$region0: #{bottleneck_forward.3}
  #allocation0 [shape = 'u32[]', space=smem, size = 0x4, offset = 0x4, fixed_abs, tag = 'smem constant byte address 0x4 - core index']
  #allocation1 [shape = 'u32[144,128]{1,0:T(1,128)}', space=vmem, size = 0x12000, scoped, tag = 'internal scratch']
  %s0 = inlined_call_operand.vmem [shape: bf16[512,4], index: 0, kind: input, shape index: {}]
  %s1 = inlined_call_operand.vmem [shape: bf16[128,4], index: 1, kind: input, shape index: {}]
  %s2 = inlined_call_operand.vmem [shape: bf16[128,4], index: 2, kind: input, shape index: {}]
  %s3 = inlined_call_operand.vmem [shape: f32[256,64], index: 3, kind: input, shape index: {}]
  %s4 = inlined_call_operand.vmem [shape: bf16[4,4], index: 4, kind: input, shape index: {}]
  %s5 = inlined_call_operand.vmem [shape: bf16[4,8], index: 5, kind: input, shape index: {}]
  %s6 = inlined_call_operand.vmem [shape: bf16[4,4], index: 6, kind: input, shape index: {}]
  %s7 = inlined_call_operand.vmem [shape: f32[1,4], index: 7, kind: input, shape index: {}]
  %s8 = inlined_call_operand.vmem [shape: f32[1,4], index: 8, kind: input, shape index: {}]
  %s9 = inlined_call_operand.vmem [shape: bf16[512,4], index: 9, kind: output, shape index: {0}]
  %s10 = inlined_call_operand.vmem [shape: bf16[128,4], index: 10, kind: output, shape index: {1}]
  %11 = xla_tuple %s9, %s10
  %s12 = sld [smem:[#allocation0]]
  $region77: #{bottleneck_forward.3} parent=0
    _
  %s14 = ssub.s32 1, %s12
  %s15 = scalar_select 0, %s14, %s12
  loop: start=0, step=1, limit=4
  $region2: #{bottleneck_forward.3} parent=0 // loop_pre_header
    _
  $region3: #{bottleneck_forward.3} parent=0 // loop_header
    %s17 = sphi 0, %s21
    %p18 = scmp.ge.s32.totalorder %s17, 4
    %s27 = sphi 0, %s29
    %s30 = sphi 0, %s27
    %s31 = sphi 0, %s30
    %s47 = sphi 0, %s31
    %s53 = sphi 0, %s55
    %s56 = sphi 0, %s53
    %s57 = sphi 0, %s56
    %s73 = sphi 0, %s57
    %s79 = sphi 0, %s81
    %s82 = sphi 0, %s79
    %s83 = sphi 0, %s82
    %s99 = sphi 0, %s83
    %s103 = sphi 0, %s103
    %s105 = sphi 0, %s103
    %s106 = sphi 0, %s105
    %s120 = sphi 0, %s106
    %s124 = sphi 0, %s124
    %s126 = sphi 0, %s124
    %s127 = sphi 0, %s126
    %s141 = sphi 0, %s127
    %s145 = sphi 0, %s145
    %s147 = sphi 0, %s145
    %s148 = sphi 0, %s147
    %s162 = sphi 0, %s148
    %s166 = sphi 0, %s166
    %s168 = sphi 0, %s166
    %s169 = sphi 0, %s168
    %s183 = sphi 0, %s169
    %s187 = sphi 0, %s187
    %s189 = sphi 0, %s187
    %s190 = sphi 0, %s189
    %s204 = sphi 0, %s190
    %s208 = sphi 0, %s208
    %s210 = sphi 0, %s208
    %s211 = sphi 0, %s210
    %s225 = sphi 0, %s211
    %s231 = sphi 0, %s233
    %s234 = sphi 0, %s231
    %s235 = sphi 0, %s234
    %s251 = sphi 0, %s235
    %s257 = sphi 0, %s259
    %s260 = sphi 0, %s257
    %s261 = sphi 0, %s260
    %s277 = sphi 0, %s261
  $region4: #{bottleneck_forward.3} parent=0 // loop_header_branch
    %20 = sbr.rel (%p18) target = $region8
  $region5: #{bottleneck_forward.3} parent=0 // loop_body
    %s22 = ssub.s32 %s17, 1
    %s23 = ssub.s32 %s17, 2
    %s24 = sadd.s32 %s17, 1
    %s25 = ssub.s32 %s17, %s24
    %p26 = scmp.eq.s32.totalorder %s25, 0
    %s28 = sadd.s32 %s27, 1
    %s29 = scalar_select %p26, %s27, %s28
    %p32 = pneg %p26
    %p33 = scmp.eq.s32.totalorder %s17, 1
    %p34 = por %p32, %p33
    %p35 = scmp.ne.s32.totalorder %s27, %s30
    %p36 = scmp.eq.s32.totalorder %s17, 0
    %p37 = por %p35, %p36
    %p38 = scmp.ne.s32.totalorder %s27, %s30
    %p39 = scmp.eq.s32.totalorder %s22, 1
    %p40 = por %p38, %p39
    %p41 = scmp.ne.s32.totalorder %s30, %s31
    %p42 = scmp.eq.s32.totalorder %s22, 0
    %p43 = por %p41, %p42
    %p44 = scmp.ne.s32.totalorder %s30, %s31
    %p45 = scmp.eq.s32.totalorder %s23, 1
    %p46 = por %p44, %p45
    %p48 = scmp.ne.s32.totalorder %s31, %s47
    %p49 = scmp.eq.s32.totalorder %s23, 0
    %p50 = por %p48, %p49
    %s51 = ssub.s32 %s17, %s24
    %p52 = scmp.eq.s32.totalorder %s51, 0
    %s54 = sadd.s32 %s53, 1
    %s55 = scalar_select %p52, %s53, %s54
    %p58 = pneg %p52
    %p59 = scmp.eq.s32.totalorder %s17, 1
    %p60 = por %p58, %p59
    %p61 = scmp.ne.s32.totalorder %s53, %s56
    %p62 = scmp.eq.s32.totalorder %s17, 0
    %p63 = por %p61, %p62
    %p64 = scmp.ne.s32.totalorder %s53, %s56
    %p65 = scmp.eq.s32.totalorder %s22, 1
    %p66 = por %p64, %p65
    %p67 = scmp.ne.s32.totalorder %s56, %s57
    %p68 = scmp.eq.s32.totalorder %s22, 0
    %p69 = por %p67, %p68
    %p70 = scmp.ne.s32.totalorder %s56, %s57
    %p71 = scmp.eq.s32.totalorder %s23, 1
    %p72 = por %p70, %p71
    %p74 = scmp.ne.s32.totalorder %s57, %s73
    %p75 = scmp.eq.s32.totalorder %s23, 0
    %p76 = por %p74, %p75
    %s77 = ssub.s32 %s17, %s24
    %p78 = scmp.eq.s32.totalorder %s77, 0
    %s80 = sadd.s32 %s79, 1
    %s81 = scalar_select %p78, %s79, %s80
    %p84 = pneg %p78
    %p85 = scmp.eq.s32.totalorder %s17, 1
    %p86 = por %p84, %p85
    %p87 = scmp.ne.s32.totalorder %s79, %s82
    %p88 = scmp.eq.s32.totalorder %s17, 0
    %p89 = por %p87, %p88
    %p90 = scmp.ne.s32.totalorder %s79, %s82
    %p91 = scmp.eq.s32.totalorder %s22, 1
    %p92 = por %p90, %p91
    %p93 = scmp.ne.s32.totalorder %s82, %s83
    %p94 = scmp.eq.s32.totalorder %s22, 0
    %p95 = por %p93, %p94
    %p96 = scmp.ne.s32.totalorder %s82, %s83
    %p97 = scmp.eq.s32.totalorder %s23, 1
    %p98 = por %p96, %p97
    %p100 = scmp.ne.s32.totalorder %s83, %s99
    %p101 = scmp.eq.s32.totalorder %s23, 0
    %p102 = por %p100, %p101
    %s104 = sadd.s32 %s103, 1
    %p107 = scmp.eq.s32.totalorder %s17, 1
    %p108 = scmp.ne.s32.totalorder %s103, %s105
    %p109 = scmp.eq.s32.totalorder %s17, 0
    %p110 = por %p108, %p109
    %p111 = scmp.ne.s32.totalorder %s103, %s105
    %p112 = scmp.eq.s32.totalorder %s22, 1
    %p113 = por %p111, %p112
    %p114 = scmp.ne.s32.totalorder %s105, %s106
    %p115 = scmp.eq.s32.totalorder %s22, 0
    %p116 = por %p114, %p115
    %p117 = scmp.ne.s32.totalorder %s105, %s106
    %p118 = scmp.eq.s32.totalorder %s23, 1
    %p119 = por %p117, %p118
    %p121 = scmp.ne.s32.totalorder %s106, %s120
    %p122 = scmp.eq.s32.totalorder %s23, 0
    %p123 = por %p121, %p122
    %s125 = sadd.s32 %s124, 1
    %p128 = scmp.eq.s32.totalorder %s17, 1
    %p129 = scmp.ne.s32.totalorder %s124, %s126
    %p130 = scmp.eq.s32.totalorder %s17, 0
    %p131 = por %p129, %p130
    %p132 = scmp.ne.s32.totalorder %s124, %s126
    %p133 = scmp.eq.s32.totalorder %s22, 1
    %p134 = por %p132, %p133
    %p135 = scmp.ne.s32.totalorder %s126, %s127
    %p136 = scmp.eq.s32.totalorder %s22, 0
    %p137 = por %p135, %p136
    %p138 = scmp.ne.s32.totalorder %s126, %s127
    %p139 = scmp.eq.s32.totalorder %s23, 1
    %p140 = por %p138, %p139
    %p142 = scmp.ne.s32.totalorder %s127, %s141
    %p143 = scmp.eq.s32.totalorder %s23, 0
    %p144 = por %p142, %p143
    %s146 = sadd.s32 %s145, 1
    %p149 = scmp.eq.s32.totalorder %s17, 1
    %p150 = scmp.ne.s32.totalorder %s145, %s147
    %p151 = scmp.eq.s32.totalorder %s17, 0
    %p152 = por %p150, %p151
    %p153 = scmp.ne.s32.totalorder %s145, %s147
    %p154 = scmp.eq.s32.totalorder %s22, 1
    %p155 = por %p153, %p154
    %p156 = scmp.ne.s32.totalorder %s147, %s148
    %p157 = scmp.eq.s32.totalorder %s22, 0
    %p158 = por %p156, %p157
    %p159 = scmp.ne.s32.totalorder %s147, %s148
    %p160 = scmp.eq.s32.totalorder %s23, 1
    %p161 = por %p159, %p160
    %p163 = scmp.ne.s32.totalorder %s148, %s162
    %p164 = scmp.eq.s32.totalorder %s23, 0
    %p165 = por %p163, %p164
    %s167 = sadd.s32 %s166, 1
    %p170 = scmp.eq.s32.totalorder %s17, 1
    %p171 = scmp.ne.s32.totalorder %s166, %s168
    %p172 = scmp.eq.s32.totalorder %s17, 0
    %p173 = por %p171, %p172
    %p174 = scmp.ne.s32.totalorder %s166, %s168
    %p175 = scmp.eq.s32.totalorder %s22, 1
    %p176 = por %p174, %p175
    %p177 = scmp.ne.s32.totalorder %s168, %s169
    %p178 = scmp.eq.s32.totalorder %s22, 0
    %p179 = por %p177, %p178
    %p180 = scmp.ne.s32.totalorder %s168, %s169
    %p181 = scmp.eq.s32.totalorder %s23, 1
    %p182 = por %p180, %p181
    %p184 = scmp.ne.s32.totalorder %s169, %s183
    %p185 = scmp.eq.s32.totalorder %s23, 0
    %p186 = por %p184, %p185
    %s188 = sadd.s32 %s187, 1
    %p191 = scmp.eq.s32.totalorder %s17, 1
    %p192 = scmp.ne.s32.totalorder %s187, %s189
    %p193 = scmp.eq.s32.totalorder %s17, 0
    %p194 = por %p192, %p193
    %p195 = scmp.ne.s32.totalorder %s187, %s189
    %p196 = scmp.eq.s32.totalorder %s22, 1
    %p197 = por %p195, %p196
    %p198 = scmp.ne.s32.totalorder %s189, %s190
    %p199 = scmp.eq.s32.totalorder %s22, 0
    %p200 = por %p198, %p199
    %p201 = scmp.ne.s32.totalorder %s189, %s190
    %p202 = scmp.eq.s32.totalorder %s23, 1
    %p203 = por %p201, %p202
    %p205 = scmp.ne.s32.totalorder %s190, %s204
    %p206 = scmp.eq.s32.totalorder %s23, 0
    %p207 = por %p205, %p206
    %s209 = sadd.s32 %s208, 1
    %p212 = scmp.eq.s32.totalorder %s17, 1
    %p213 = scmp.ne.s32.totalorder %s208, %s210
    %p214 = scmp.eq.s32.totalorder %s17, 0
    %p215 = por %p213, %p214
    %p216 = scmp.ne.s32.totalorder %s208, %s210
    %p217 = scmp.eq.s32.totalorder %s22, 1
    %p218 = por %p216, %p217
    %p219 = scmp.ne.s32.totalorder %s210, %s211
    %p220 = scmp.eq.s32.totalorder %s22, 0
    %p221 = por %p219, %p220
    %p222 = scmp.ne.s32.totalorder %s210, %s211
    %p223 = scmp.eq.s32.totalorder %s23, 1
    %p224 = por %p222, %p223
    %p226 = scmp.ne.s32.totalorder %s211, %s225
    %p227 = scmp.eq.s32.totalorder %s23, 0
    %p228 = por %p226, %p227
    %s229 = ssub.s32 %s17, %s24
    %p230 = scmp.eq.s32.totalorder %s229, 0
    %s232 = sadd.s32 %s231, 1
    %s233 = scalar_select %p230, %s231, %s232
    %p236 = pneg %p230
    %p237 = scmp.eq.s32.totalorder %s17, 1
    %p238 = por %p236, %p237
    %p239 = scmp.ne.s32.totalorder %s231, %s234
    %p240 = scmp.eq.s32.totalorder %s17, 0
    %p241 = por %p239, %p240
    %p242 = scmp.ne.s32.totalorder %s231, %s234
    %p243 = scmp.eq.s32.totalorder %s22, 1
    %p244 = por %p242, %p243
    %p245 = scmp.ne.s32.totalorder %s234, %s235
    %p246 = scmp.eq.s32.totalorder %s22, 0
    %p247 = por %p245, %p246
    %p248 = scmp.ne.s32.totalorder %s234, %s235
    %p249 = scmp.eq.s32.totalorder %s23, 1
    %p250 = por %p248, %p249
    %p252 = scmp.ne.s32.totalorder %s235, %s251
    %p253 = scmp.eq.s32.totalorder %s23, 0
    %p254 = por %p252, %p253
    %s255 = ssub.s32 %s17, %s24
    %p256 = scmp.eq.s32.totalorder %s255, 0
    %s258 = sadd.s32 %s257, 1
    %s259 = scalar_select %p256, %s257, %s258
    %p262 = pneg %p256
    %p263 = scmp.eq.s32.totalorder %s17, 1
    %p264 = por %p262, %p263
    %p265 = scmp.ne.s32.totalorder %s257, %s260
    %p266 = scmp.eq.s32.totalorder %s17, 0
    %p267 = por %p265, %p266
    %p268 = scmp.ne.s32.totalorder %s257, %s260
    %p269 = scmp.eq.s32.totalorder %s22, 1
    %p270 = por %p268, %p269
    %p271 = scmp.ne.s32.totalorder %s260, %s261
    %p272 = scmp.eq.s32.totalorder %s22, 0
    %p273 = por %p271, %p272
    %p274 = scmp.ne.s32.totalorder %s260, %s261
    %p275 = scmp.eq.s32.totalorder %s23, 1
    %p276 = por %p274, %p275
    %p278 = scmp.ne.s32.totalorder %s261, %s277
    %p279 = scmp.eq.s32.totalorder %s23, 0
    %p280 = por %p278, %p279
    %p281 = scmp.le.s32.totalorder 1, %s17
    %p282 = scmp.lt.s32.totalorder %s17, 3
    %p283 = pnand %p281, %p282
    %p284 = pneg %p283
    // Predicated region
    $region9: #{bottleneck_forward.3} parent=5 // pred_check
      _
    $region10: #{bottleneck_forward.3} parent=5 // pred_check_branch
      %286 = sbr.rel (%p283) target = $region12
    $region11: #{bottleneck_forward.3} parent=5 // pred_region
      %s287 = ssub.s32 %s17, 1
      // Predicated region
      $region13: #{bottleneck_forward.3} parent=11 // pred_check
        %p288 = pneg %p116
      $region14: #{bottleneck_forward.3} parent=11 // pred_check_branch
        %290 = sbr.rel (%p288) target = $region16
      $region15: #{bottleneck_forward.3} parent=11 // pred_region
        _
      $region16: #{bottleneck_forward.3} parent=11 // pred_fallthru
        _
      // Predicated region
      $region17: #{bottleneck_forward.3} parent=11 // pred_check
        %p291 = pneg %p137
      $region18: #{bottleneck_forward.3} parent=11 // pred_check_branch
        %293 = sbr.rel (%p291) target = $region20
      $region19: #{bottleneck_forward.3} parent=11 // pred_region
        _
      $region20: #{bottleneck_forward.3} parent=11 // pred_fallthru
        _
      // Predicated region
      $region21: #{bottleneck_forward.3} parent=11 // pred_check
        %p294 = pneg %p158
      $region22: #{bottleneck_forward.3} parent=11 // pred_check_branch
        %296 = sbr.rel (%p294) target = $region24
      $region23: #{bottleneck_forward.3} parent=11 // pred_region
        _
      $region24: #{bottleneck_forward.3} parent=11 // pred_fallthru
        _
      // Predicated region
      $region25: #{bottleneck_forward.3} parent=11 // pred_check
        %p297 = pneg %p179
      $region26: #{bottleneck_forward.3} parent=11 // pred_check_branch
        %299 = sbr.rel (%p297) target = $region28
      $region27: #{bottleneck_forward.3} parent=11 // pred_region
        _
      $region28: #{bottleneck_forward.3} parent=11 // pred_fallthru
        _
      // Predicated region
      $region29: #{bottleneck_forward.3} parent=11 // pred_check
        %p300 = pneg %p200
      $region30: #{bottleneck_forward.3} parent=11 // pred_check_branch
        %302 = sbr.rel (%p300) target = $region32
      $region31: #{bottleneck_forward.3} parent=11 // pred_region
        _
      $region32: #{bottleneck_forward.3} parent=11 // pred_fallthru
        _
      // Predicated region
      $region33: #{bottleneck_forward.3} parent=11 // pred_check
        %p303 = pneg %p221
      $region34: #{bottleneck_forward.3} parent=11 // pred_check_branch
        %305 = sbr.rel (%p303) target = $region36
      $region35: #{bottleneck_forward.3} parent=11 // pred_region
        _
      $region36: #{bottleneck_forward.3} parent=11 // pred_fallthru
        _
    $region12: #{bottleneck_forward.3} parent=5 // pred_fallthru
      _
    %p306 = scmp.lt.s32.totalorder %s17, 2
    // Predicated region
    $region37: #{bottleneck_forward.3} parent=5 // pred_check
      %p307 = pneg %p306
    $region38: #{bottleneck_forward.3} parent=5 // pred_check_branch
      %309 = sbr.rel (%p307) target = $region40
    $region39: #{bottleneck_forward.3} parent=5 // pred_region
      // Predicated region
      $region41: #{bottleneck_forward.3} parent=39 // pred_check
        %p310 = pneg %p37
      $region42: #{bottleneck_forward.3} parent=39 // pred_check_branch
        %312 = sbr.rel (%p310) target = $region44
      $region43: #{bottleneck_forward.3} parent=39 // pred_region
        %s313 = smul.u32 32, %s17
        %p314 = scmp.lt.s32.totalorder %s313, 63
        %s315 = scalar_select %p314, %s313, 63
        %s316 = smul.addr %s315, 4
        %s317 = scalar_lea.vmem %s0, %s316
        %s318 = smul.u32 32, %s17
      $region44: #{bottleneck_forward.3} parent=39 // pred_fallthru
        _
      // Predicated region
      $region45: #{bottleneck_forward.3} parent=39 // pred_check
        %p319 = pneg %p63
      $region46: #{bottleneck_forward.3} parent=39 // pred_check_branch
        %321 = sbr.rel (%p319) target = $region48
      $region47: #{bottleneck_forward.3} parent=39 // pred_region
        %s322 = smul.u32 8, %s17
        %p323 = scmp.lt.s32.totalorder %s322, 15
        %s324 = scalar_select %p323, %s322, 15
        %s325 = smul.addr %s324, 4
        %s326 = scalar_lea.vmem %s1, %s325
        %s327 = smul.u32 8, %s17
      $region48: #{bottleneck_forward.3} parent=39 // pred_fallthru
        _
      // Predicated region
      $region49: #{bottleneck_forward.3} parent=39 // pred_check
        %p328 = pneg %p89
      $region50: #{bottleneck_forward.3} parent=39 // pred_check_branch
        %330 = sbr.rel (%p328) target = $region52
      $region51: #{bottleneck_forward.3} parent=39 // pred_region
        %s331 = smul.u32 8, %s17
        %p332 = scmp.lt.s32.totalorder %s331, 15
        %s333 = scalar_select %p332, %s331, 15
        %s334 = smul.addr %s333, 4
        %s335 = scalar_lea.vmem %s2, %s334
        %s336 = smul.u32 8, %s17
      $region52: #{bottleneck_forward.3} parent=39 // pred_fallthru
        _
    $region40: #{bottleneck_forward.3} parent=5 // pred_fallthru
      _
    %p337 = scmp.le.s32.totalorder 1, %s17
    %p338 = scmp.lt.s32.totalorder %s17, 3
    %p339 = pnand %p337, %p338
    %p340 = pneg %p339
    // Predicated region
    $region53: #{bottleneck_forward.3} parent=5 // pred_check
      _
    $region54: #{bottleneck_forward.3} parent=5 // pred_check_branch
      %342 = sbr.rel (%p339) target = $region56
    $region55: #{bottleneck_forward.3} parent=5 // pred_region
      %s343 = ssub.s32 %s17, 1
      %s344 = smul.u32 32, %s22
      %p345 = scmp.lt.s32.totalorder %s344, 63
      %s346 = scalar_select %p345, %s344, 63
      %s347 = smul.addr %s346, 4
      %s348 = scalar_lea.vmem %s0, %s347
      %p349 = pneg %p43
      %p350 = pneg %p40
      %s351 = smul.u32 8, %s22
      %p352 = scmp.lt.s32.totalorder %s351, 15
      %s353 = scalar_select %p352, %s351, 15
      %s354 = smul.addr %s353, 4
      %s355 = scalar_lea.vmem %s1, %s354
      %p356 = pneg %p69
      %p357 = pneg %p66
      %s358 = smul.u32 8, %s22
      %p359 = scmp.lt.s32.totalorder %s358, 15
      %s360 = scalar_select %p359, %s358, 15
      %s361 = smul.addr %s360, 4
      %s362 = scalar_lea.vmem %s2, %s361
      %p363 = pneg %p95
      %p364 = pneg %p92
      %p365 = pneg %p116
      %p366 = pneg %p113
      %p367 = pneg %p137
      %p368 = pneg %p134
      %p369 = pneg %p158
      %p370 = pneg %p155
      %p371 = pneg %p179
      %p372 = pneg %p176
      %p373 = pneg %p200
      %p374 = pneg %p197
      %p375 = pneg %p221
      %p376 = pneg %p218
      %p377 = pneg %p247
      %p378 = pneg %p244
      %s379 = smul.u32 32, %s22
      %p380 = scmp.lt.s32.totalorder %s379, 63
      %s381 = scalar_select %p380, %s379, 63
      %s382 = smul.addr %s381, 4
      %s383 = scalar_lea.vmem %s9, %s382
      %p384 = pneg %p273
      %p385 = pneg %p270
      %s386 = smul.u32 8, %s22
      %p387 = scmp.lt.s32.totalorder %s386, 15
      %s388 = scalar_select %p387, %s386, 15
      %s389 = smul.addr %s388, 4
      %s390 = scalar_lea.vmem %s10, %s389
      %s391 = smul.u32 32, %s22
      %p392 = scmp.lt.s32.totalorder %s391, 63
      %s393 = scalar_select %p392, %s391, 63
      %s394 = smul.addr %s393, 4
      %s395 = scalar_lea.vmem %s0, %s394
      %s396 = smul.u32 32, %s22
      %s397 = smul.u32 8, %s22
      %p398 = scmp.lt.s32.totalorder %s397, 15
      %s399 = scalar_select %p398, %s397, 15
      %s400 = smul.addr %s399, 4
      %s401 = scalar_lea.vmem %s1, %s400
      %s402 = smul.u32 8, %s22
      %s403 = smul.u32 8, %s22
      %p404 = scmp.lt.s32.totalorder %s403, 15
      %s405 = scalar_select %p404, %s403, 15
      %s406 = smul.addr %s405, 4
      %s407 = scalar_lea.vmem %s2, %s406
      %s408 = smul.u32 8, %s22
      %s409 = smul.u32 32, %s22
      %p410 = scmp.lt.s32.totalorder %s409, 63
      %s411 = scalar_select %p410, %s409, 63
      %s412 = smul.addr %s411, 4
      %s413 = scalar_lea.vmem %s9, %s412
      %s414 = smul.u32 32, %s22
      %s415 = smul.u32 8, %s22
      %p416 = scmp.lt.s32.totalorder %s415, 15
      %s417 = scalar_select %p416, %s415, 15
      %s418 = smul.addr %s417, 4
      %s419 = scalar_lea.vmem %s10, %s418
      %s420 = smul.u32 8, %s22
      %v422 = vld [vmem:[%s395] sm:$0xf]
      %v423 = vld [vmem:[%s395 + $0x4] sm:$0xf]
      %v424 = vld [vmem:[%s395 + $0x8] sm:$0xf]
      %v425 = vld [vmem:[%s395 + $0xc] sm:$0xf]
      %v426 = vld [vmem:[%s395 + $0x10] sm:$0xf]
      %v427 = vld [vmem:[%s395 + $0x14] sm:$0xf]
      %v428 = vld [vmem:[%s395 + $0x18] sm:$0xf]
      %v429 = vld [vmem:[%s395 + $0x1c] sm:$0xf]
      %v430 = vld [vmem:[%s395 + $0x20] sm:$0xf]
      %v431 = vld [vmem:[%s395 + $0x24] sm:$0xf]
      %v432 = vld [vmem:[%s395 + $0x28] sm:$0xf]
      %v433 = vld [vmem:[%s395 + $0x2c] sm:$0xf]
      %v434 = vld [vmem:[%s395 + $0x30] sm:$0xf]
      %v435 = vld [vmem:[%s395 + $0x34] sm:$0xf]
      %v436 = vld [vmem:[%s395 + $0x38] sm:$0xf]
      %v437 = vld [vmem:[%s395 + $0x3c] sm:$0xf]
      %v438 = vld [vmem:[%s395 + $0x40] sm:$0xf]
      %v439 = vld [vmem:[%s395 + $0x44] sm:$0xf]
      %v440 = vld [vmem:[%s395 + $0x48] sm:$0xf]
      %v441 = vld [vmem:[%s395 + $0x4c] sm:$0xf]
      %v442 = vld [vmem:[%s395 + $0x50] sm:$0xf]
      %v443 = vld [vmem:[%s395 + $0x54] sm:$0xf]
      %v444 = vld [vmem:[%s395 + $0x58] sm:$0xf]
      %v445 = vld [vmem:[%s395 + $0x5c] sm:$0xf]
      %v446 = vld [vmem:[%s395 + $0x60] sm:$0xf]
      %v447 = vld [vmem:[%s395 + $0x64] sm:$0xf]
      %v448 = vld [vmem:[%s395 + $0x68] sm:$0xf]
      %v449 = vld [vmem:[%s395 + $0x6c] sm:$0xf]
      %v450 = vld [vmem:[%s395 + $0x70] sm:$0xf]
      %v451 = vld [vmem:[%s395 + $0x74] sm:$0xf]
      %v452 = vld [vmem:[%s395 + $0x78] sm:$0xf]
      %v453 = vld [vmem:[%s395 + $0x7c] sm:$0xf]
      %v454 = vld [vmem:[%s4] sm:$0x3]
      %v455 = vld [vmem:[%s401] sm:$0xf]
      %v456 = vld [vmem:[%s401 + $0x4] sm:$0xf]
      %v457 = vld [vmem:[%s401 + $0x8] sm:$0xf]
      %v458 = vld [vmem:[%s401 + $0xc] sm:$0xf]
      %v459 = vld [vmem:[%s401 + $0x10] sm:$0xf]
      %v460 = vld [vmem:[%s401 + $0x14] sm:$0xf]
      %v461 = vld [vmem:[%s401 + $0x18] sm:$0xf]
      %v462 = vld [vmem:[%s401 + $0x1c] sm:$0xf]
      %v463 = vld [vmem:[%s5] sm:$0x3]
      %v472 = vunpack.c.l.b16 %v455
      %v473 = vunpack.c.l.b16 %v456
      %v474 = vunpack.c.l.b16 %v457
      %v475 = vunpack.c.l.b16 %v458
      %v476 = vunpack.c.l.b16 %v459
      %v477 = vunpack.c.l.b16 %v460
      %v478 = vunpack.c.l.b16 %v461
      %v479 = vunpack.c.l.b16 %v462
      %v480 = vpack.c.b16 %v473, %v472
      %v481 = vpack.c.b16 %v475, %v474
      %v482 = vpack.c.b16 %v477, %v476
      %v483 = vpack.c.b16 %v479, %v478
      %vm484 = vcmask 31744
      %v486 = vsel %vm484, %v480, 0
      %v489 = vsel %vm484, %v481, 0
      %v492 = vsel %vm484, %v482, 0
      %v495 = vsel %vm484, %v483, 0
      %vm497 = vcmask 1041408
      %v499 = vsel %vm497, %v463, 0
      %501 = vmatprep.subr.bf16.mxu0 0
      %502 = vmatpush1.bf16.msra.mxu0 0
      %503 = vmatprep.subr.bf16.mxu0 0
      %504 = vmatpush1.bf16.msra.mxu0 0
      %505 = vmatprep.subr.bf16.mxu0 0
      %506 = vmatpush1.bf16.msra.mxu0 0
      %507 = vmatprep.subr.bf16.mxu0 0
      %508 = vmatpush1.bf16.msra.mxu0 0
      %509 = vmatprep.subr.bf16.mxu0 0
      %510 = vmatpush1.bf16.msra.mxu0 0
      %511 = vmatprep.subr.bf16.mxu0 0
      %512 = vmatpush1.bf16.msra.mxu0 0
      %513 = vmatprep.subr.bf16.mxu0 0
      %514 = vmatpush1.bf16.msra.mxu0 0
      %515 = vmatprep.subr.bf16.mxu0 0
      %516 = vmatpush1.bf16.msra.mxu0 %v499
      %517 = vmatprep.subr.bf16.mxu0 0
      %518 = vmatpush2.bf16.msra.mxu0 0
      %519 = vmatprep.subr.bf16.mxu0 0
      %520 = vmatpush2.bf16.msra.mxu0 0
      %521 = vmatprep.subr.bf16.mxu0 0
      %522 = vmatpush2.bf16.msra.mxu0 0
      %523 = vmatprep.subr.bf16.mxu0 0
      %524 = vmatpush2.bf16.msra.mxu0 0
      %525 = vmatprep.subr.bf16.mxu0 0
      %526 = vmatpush2.bf16.msra.mxu0 0
      %527 = vmatprep.subr.bf16.mxu0 0
      %528 = vmatpush2.bf16.msra.mxu0 0
      %529 = vmatprep.subr.bf16.mxu0 0
      %530 = vmatpush2.bf16.msra.mxu0 0
      %531 = vmatprep.subr.bf16.mxu0 0
      %532 = vmatpush2.bf16.msra.mxu0 0
      %533 = vmatprep.mubr.bf16.mxu0 0
      %534 = vmatmul.mubr.bf16.gmra.mxu0 %v486
      %v535 = vpop.f32.mrf.mxu0
      %v536 = vadd.f32 0.0, %v535
      %v537 = vpop.f32.mrf.mxu0
      %v538 = vpop.f32.mrf.mxu0
      %v539 = vadd.f32 0.0, %v538
      %v540 = vpop.f32.mrf.mxu0
      %541 = vmatprep.mubr.bf16.mxu0 0
      %542 = vmatmul.mubr.bf16.gmra.mxu0 %v489
      %v543 = vpop.f32.mrf.mxu0
      %v544 = vadd.f32 0.0, %v543
      %v545 = vpop.f32.mrf.mxu0
      %v546 = vpop.f32.mrf.mxu0
      %v547 = vadd.f32 0.0, %v546
      %v548 = vpop.f32.mrf.mxu0
      %549 = vmatprep.mubr.bf16.mxu0 0
      %550 = vmatmul.mubr.bf16.gmra.mxu0 %v492
      %v551 = vpop.f32.mrf.mxu0
      %v552 = vadd.f32 0.0, %v551
      %v553 = vpop.f32.mrf.mxu0
      %v554 = vpop.f32.mrf.mxu0
      %v555 = vadd.f32 0.0, %v554
      %v556 = vpop.f32.mrf.mxu0
      %557 = vmatprep.mubr.bf16.mxu0 0
      %558 = vmatmul.mubr.bf16.gmra.mxu0 %v495
      %v559 = vpop.f32.mrf.mxu0
      %v560 = vadd.f32 0.0, %v559
      %v561 = vpop.f32.mrf.mxu0
      %v562 = vpop.f32.mrf.mxu0
      %v563 = vadd.f32 0.0, %v562
      %v564 = vpop.f32.mrf.mxu0
      %565 = vdwg.mxu0
      %v566 = vld [vmem:[%s407] sm:$0xf]
      %v567 = vld [vmem:[%s407 + $0x4] sm:$0xf]
      %v568 = vld [vmem:[%s407 + $0x8] sm:$0xf]
      %v569 = vld [vmem:[%s407 + $0xc] sm:$0xf]
      %v570 = vld [vmem:[%s407 + $0x10] sm:$0xf]
      %v571 = vld [vmem:[%s407 + $0x14] sm:$0xf]
      %v572 = vld [vmem:[%s407 + $0x18] sm:$0xf]
      %v573 = vld [vmem:[%s407 + $0x1c] sm:$0xf]
      %v574 = vld [vmem:[%s6] sm:$0x3]
      %v583 = vunpack.c.l.b16 %v566
      %v584 = vunpack.c.l.b16 %v567
      %v585 = vunpack.c.l.b16 %v568
      %v586 = vunpack.c.l.b16 %v569
      %v587 = vunpack.c.l.b16 %v570
      %v588 = vunpack.c.l.b16 %v571
      %v589 = vunpack.c.l.b16 %v572
      %v590 = vunpack.c.l.b16 %v573
      %v591 = vpack.c.b16 %v584, %v583
      %v592 = vpack.c.b16 %v586, %v585
      %v593 = vpack.c.b16 %v588, %v587
      %v594 = vpack.c.b16 %v590, %v589
      %v596 = vsel %vm484, %v591, 0
      %v599 = vsel %vm484, %v592, 0
      %v602 = vsel %vm484, %v593, 0
      %v605 = vsel %vm484, %v594, 0
      %v608 = vsel %vm497, %v574, 0
      %610 = vmatprep.subr.bf16.mxu0 0
      %611 = vmatpush1.bf16.msra.mxu0 0
      %612 = vmatprep.subr.bf16.mxu0 0
      %613 = vmatpush1.bf16.msra.mxu0 0
      %614 = vmatprep.subr.bf16.mxu0 0
      %615 = vmatpush1.bf16.msra.mxu0 0
      %616 = vmatprep.subr.bf16.mxu0 0
      %617 = vmatpush1.bf16.msra.mxu0 0
      %618 = vmatprep.subr.bf16.mxu0 0
      %619 = vmatpush1.bf16.msra.mxu0 0
      %620 = vmatprep.subr.bf16.mxu0 0
      %621 = vmatpush1.bf16.msra.mxu0 0
      %622 = vmatprep.subr.bf16.mxu0 0
      %623 = vmatpush1.bf16.msra.mxu0 0
      %624 = vmatprep.subr.bf16.mxu0 0
      %625 = vmatpush1.bf16.msra.mxu0 %v608
      %626 = vmatprep.subr.bf16.mxu0 0
      %627 = vmatpush2.bf16.msra.mxu0 0
      %628 = vmatprep.subr.bf16.mxu0 0
      %629 = vmatpush2.bf16.msra.mxu0 0
      %630 = vmatprep.subr.bf16.mxu0 0
      %631 = vmatpush2.bf16.msra.mxu0 0
      %632 = vmatprep.subr.bf16.mxu0 0
      %633 = vmatpush2.bf16.msra.mxu0 0
      %634 = vmatprep.subr.bf16.mxu0 0
      %635 = vmatpush2.bf16.msra.mxu0 0
      %636 = vmatprep.subr.bf16.mxu0 0
      %637 = vmatpush2.bf16.msra.mxu0 0
      %638 = vmatprep.subr.bf16.mxu0 0
      %639 = vmatpush2.bf16.msra.mxu0 0
      %640 = vmatprep.subr.bf16.mxu0 0
      %641 = vmatpush2.bf16.msra.mxu0 0
      %642 = vmatprep.mubr.bf16.mxu0 0
      %643 = vmatmul.mubr.bf16.gmra.mxu0 %v596
      %v644 = vpop.f32.mrf.mxu0
      %v645 = vadd.f32 0.0, %v644
      %v646 = vpop.f32.mrf.mxu0
      %v647 = vpop.f32.mrf.mxu0
      %v648 = vadd.f32 0.0, %v647
      %v649 = vpop.f32.mrf.mxu0
      %650 = vmatprep.mubr.bf16.mxu0 0
      %651 = vmatmul.mubr.bf16.gmra.mxu0 %v599
      %v652 = vpop.f32.mrf.mxu0
      %v653 = vadd.f32 0.0, %v652
      %v654 = vpop.f32.mrf.mxu0
      %v655 = vpop.f32.mrf.mxu0
      %v656 = vadd.f32 0.0, %v655
      %v657 = vpop.f32.mrf.mxu0
      %658 = vmatprep.mubr.bf16.mxu0 0
      %659 = vmatmul.mubr.bf16.gmra.mxu0 %v602
      %v660 = vpop.f32.mrf.mxu0
      %v661 = vadd.f32 0.0, %v660
      %v662 = vpop.f32.mrf.mxu0
      %v663 = vpop.f32.mrf.mxu0
      %v664 = vadd.f32 0.0, %v663
      %v665 = vpop.f32.mrf.mxu0
      %666 = vmatprep.mubr.bf16.mxu0 0
      %667 = vmatmul.mubr.bf16.gmra.mxu0 %v605
      %v668 = vpop.f32.mrf.mxu0
      %v669 = vadd.f32 0.0, %v668
      %v670 = vpop.f32.mrf.mxu0
      %v671 = vpop.f32.mrf.mxu0
      %v672 = vadd.f32 0.0, %v671
      %v673 = vpop.f32.mrf.mxu0
      %674 = vdwg.mxu0
      %v675 = vld [vmem:[%s3] sm:$0xff]
      %v676 = vld [vmem:[%s3 + $0x8] sm:$0xff]
      %v677 = vld [vmem:[%s3 + $0x10] sm:$0xff]
      %v678 = vld [vmem:[%s3 + $0x18] sm:$0xff]
      %v679 = vld [vmem:[%s3 + $0x20] sm:$0xff]
      %v680 = vld [vmem:[%s3 + $0x28] sm:$0xff]
      %v681 = vld [vmem:[%s3 + $0x30] sm:$0xff]
      %v682 = vld [vmem:[%s3 + $0x38] sm:$0xff]
      %v683 = vld [vmem:[%s3 + $0x40] sm:$0xff]
      %v684 = vld [vmem:[%s3 + $0x48] sm:$0xff]
      %v685 = vld [vmem:[%s3 + $0x50] sm:$0xff]
      %v686 = vld [vmem:[%s3 + $0x58] sm:$0xff]
      %v687 = vld [vmem:[%s3 + $0x60] sm:$0xff]
      %v688 = vld [vmem:[%s3 + $0x68] sm:$0xff]
      %v689 = vld [vmem:[%s3 + $0x70] sm:$0xff]
      %v690 = vld [vmem:[%s3 + $0x78] sm:$0xff]
      %v691 = vld [vmem:[%s3 + $0x80] sm:$0xff]
      %v692 = vld [vmem:[%s3 + $0x88] sm:$0xff]
      %v693 = vld [vmem:[%s3 + $0x90] sm:$0xff]
      %v694 = vld [vmem:[%s3 + $0x98] sm:$0xff]
      %v695 = vld [vmem:[%s3 + $0xa0] sm:$0xff]
      %v696 = vld [vmem:[%s3 + $0xa8] sm:$0xff]
      %v697 = vld [vmem:[%s3 + $0xb0] sm:$0xff]
      %v698 = vld [vmem:[%s3 + $0xb8] sm:$0xff]
      %v699 = vld [vmem:[%s3 + $0xc0] sm:$0xff]
      %v700 = vld [vmem:[%s3 + $0xc8] sm:$0xff]
      %v701 = vld [vmem:[%s3 + $0xd0] sm:$0xff]
      %v702 = vld [vmem:[%s3 + $0xd8] sm:$0xff]
      %v703 = vld [vmem:[%s3 + $0xe0] sm:$0xff]
      %v704 = vld [vmem:[%s3 + $0xe8] sm:$0xff]
      %v705 = vld [vmem:[%s3 + $0xf0] sm:$0xff]
      %v706 = vld [vmem:[%s3 + $0xf8] sm:$0xff]
      %vm707 = vcmask 523264
      %v709 = vsel %vm707, %v675, 0
      %v712 = vsel %vm707, %v676, 0
      %v715 = vsel %vm707, %v677, 0
      %v718 = vsel %vm707, %v678, 0
      %v721 = vsel %vm707, %v679, 0
      %v724 = vsel %vm707, %v680, 0
      %v727 = vsel %vm707, %v681, 0
      %v730 = vsel %vm707, %v682, 0
      %v733 = vsel %vm707, %v683, 0
      %v736 = vsel %vm707, %v684, 0
      %v739 = vsel %vm707, %v685, 0
      %v742 = vsel %vm707, %v686, 0
      %v745 = vsel %vm707, %v687, 0
      %v748 = vsel %vm707, %v688, 0
      %v751 = vsel %vm707, %v689, 0
      %v754 = vsel %vm707, %v690, 0
      %v757 = vsel %vm707, %v691, 0
      %v760 = vsel %vm707, %v692, 0
      %v763 = vsel %vm707, %v693, 0
      %v766 = vsel %vm707, %v694, 0
      %v769 = vsel %vm707, %v695, 0
      %v772 = vsel %vm707, %v696, 0
      %v775 = vsel %vm707, %v697, 0
      %v778 = vsel %vm707, %v698, 0
      %v781 = vsel %vm707, %v699, 0
      %v784 = vsel %vm707, %v700, 0
      %v787 = vsel %vm707, %v701, 0
      %v790 = vsel %vm707, %v702, 0
      %v793 = vsel %vm707, %v703, 0
      %v796 = vsel %vm707, %v704, 0
      %v799 = vsel %vm707, %v705, 0
      %v802 = vsel %vm707, %v706, 0
      %804 = vmatprep.subr.mxu0 0.0
      %805 = vmatpush1.msra.mxu0 0.0
      %806 = vmatprep.subr.mxu0 0.0
      %807 = vmatpush1.msra.mxu0 0.0
      %808 = vmatprep.subr.mxu0 0.0
      %809 = vmatpush1.msra.mxu0 0.0
      %810 = vmatprep.subr.mxu0 0.0
      %811 = vmatpush1.msra.mxu0 0.0
      %812 = vmatprep.subr.mxu0 0.0
      %813 = vmatpush1.msra.mxu0 0.0
      %814 = vmatprep.subr.mxu0 0.0
      %815 = vmatpush1.msra.mxu0 0.0
      %816 = vmatprep.subr.mxu0 0.0
      %817 = vmatpush1.msra.mxu0 0.0
      %818 = vmatprep.subr.mxu0 0.0
      %819 = vmatpush1.msra.mxu0 0.0
      %820 = vmatprep.subr.mxu0 0.0
      %821 = vmatpush1.msra.mxu0 %v563
      %822 = vmatprep.subr.mxu0 0.0
      %823 = vmatpush1.msra.mxu0 %v560
      %824 = vmatprep.subr.mxu0 0.0
      %825 = vmatpush1.msra.mxu0 %v555
      %826 = vmatprep.subr.mxu0 0.0
      %827 = vmatpush1.msra.mxu0 %v552
      %828 = vmatprep.subr.mxu0 0.0
      %829 = vmatpush1.msra.mxu0 %v547
      %830 = vmatprep.subr.mxu0 0.0
      %831 = vmatpush1.msra.mxu0 %v544
      %832 = vmatprep.subr.mxu0 0.0
      %833 = vmatpush1.msra.mxu0 %v539
      %834 = vmatprep.subr.mxu0 0.0
      %835 = vmatpush1.msra.mxu0 %v536
      %836 = vmatprep.subr.mxu0 0.0
      %837 = vmatpush2.msra.mxu0 0.0
      %838 = vmatprep.subr.mxu0 0.0
      %839 = vmatpush2.msra.mxu0 0.0
      %840 = vmatprep.subr.mxu0 0.0
      %841 = vmatpush2.msra.mxu0 0.0
      %842 = vmatprep.subr.mxu0 0.0
      %843 = vmatpush2.msra.mxu0 0.0
      %844 = vmatprep.subr.mxu0 0.0
      %845 = vmatpush2.msra.mxu0 0.0
      %846 = vmatprep.subr.mxu0 0.0
      %847 = vmatpush2.msra.mxu0 0.0
      %848 = vmatprep.subr.mxu0 0.0
      %849 = vmatpush2.msra.mxu0 0.0
      %850 = vmatprep.subr.mxu0 0.0
      %851 = vmatpush2.msra.mxu0 0.0
      %852 = vmatprep.subr.mxu0 0.0
      %853 = vmatpush2.msra.mxu0 0.0
      %854 = vmatprep.subr.mxu0 0.0
      %855 = vmatpush2.msra.mxu0 0.0
      %856 = vmatprep.subr.mxu0 0.0
      %857 = vmatpush2.msra.mxu0 0.0
      %858 = vmatprep.subr.mxu0 0.0
      %859 = vmatpush2.msra.mxu0 0.0
      %860 = vmatprep.subr.mxu0 0.0
      %861 = vmatpush2.msra.mxu0 0.0
      %862 = vmatprep.subr.mxu0 0.0
      %863 = vmatpush2.msra.mxu0 0.0
      %864 = vmatprep.subr.mxu0 0.0
      %865 = vmatpush2.msra.mxu0 0.0
      %866 = vmatprep.subr.mxu0 0.0
      %867 = vmatpush2.msra.mxu0 0.0
      %868 = vmatprep.mubr.f32.mxu0 0.0
      %869 = vmatmul.mubr.f32.gmra.mxu0 %v709
      %v870 = vpop.f32.mrf.mxu0
      %v871 = vadd.f32 0.0, %v870
      %v872 = vpop.f32.mrf.mxu0
      %873 = vmatprep.mubr.f32.mxu0 0.0
      %874 = vmatmul.mubr.f32.gmra.mxu0 %v712
      %v875 = vpop.f32.mrf.mxu0
      %v876 = vadd.f32 0.0, %v875
      %v877 = vpop.f32.mrf.mxu0
      %878 = vmatprep.mubr.f32.mxu0 0.0
      %879 = vmatmul.mubr.f32.gmra.mxu0 %v715
      %v880 = vpop.f32.mrf.mxu0
      %v881 = vadd.f32 0.0, %v880
      %v882 = vpop.f32.mrf.mxu0
      %883 = vmatprep.mubr.f32.mxu0 0.0
      %884 = vmatmul.mubr.f32.gmra.mxu0 %v718
      %v885 = vpop.f32.mrf.mxu0
      %v886 = vadd.f32 0.0, %v885
      %v887 = vpop.f32.mrf.mxu0
      %888 = vmatprep.mubr.f32.mxu0 0.0
      %889 = vmatmul.mubr.f32.gmra.mxu0 %v721
      %v890 = vpop.f32.mrf.mxu0
      %v891 = vadd.f32 0.0, %v890
      %v892 = vpop.f32.mrf.mxu0
      %893 = vmatprep.mubr.f32.mxu0 0.0
      %894 = vmatmul.mubr.f32.gmra.mxu0 %v724
      %v895 = vpop.f32.mrf.mxu0
      %v896 = vadd.f32 0.0, %v895
      %v897 = vpop.f32.mrf.mxu0
      %898 = vmatprep.mubr.f32.mxu0 0.0
      %899 = vmatmul.mubr.f32.gmra.mxu0 %v727
      %v900 = vpop.f32.mrf.mxu0
      %v901 = vadd.f32 0.0, %v900
      %v902 = vpop.f32.mrf.mxu0
      %903 = vmatprep.mubr.f32.mxu0 0.0
      %904 = vmatmul.mubr.f32.gmra.mxu0 %v730
      %v905 = vpop.f32.mrf.mxu0
      %v906 = vadd.f32 0.0, %v905
      %v907 = vpop.f32.mrf.mxu0
      %908 = vmatprep.mubr.f32.mxu0 0.0
      %909 = vmatmul.mubr.f32.gmra.mxu0 %v733
      %v910 = vpop.f32.mrf.mxu0
      %v911 = vadd.f32 0.0, %v910
      %v912 = vpop.f32.mrf.mxu0
      %913 = vmatprep.mubr.f32.mxu0 0.0
      %914 = vmatmul.mubr.f32.gmra.mxu0 %v736
      %v915 = vpop.f32.mrf.mxu0
      %v916 = vadd.f32 0.0, %v915
      %v917 = vpop.f32.mrf.mxu0
      %918 = vmatprep.mubr.f32.mxu0 0.0
      %919 = vmatmul.mubr.f32.gmra.mxu0 %v739
      %v920 = vpop.f32.mrf.mxu0
      %v921 = vadd.f32 0.0, %v920
      %v922 = vpop.f32.mrf.mxu0
      %923 = vmatprep.mubr.f32.mxu0 0.0
      %924 = vmatmul.mubr.f32.gmra.mxu0 %v742
      %v925 = vpop.f32.mrf.mxu0
      %v926 = vadd.f32 0.0, %v925
      %v927 = vpop.f32.mrf.mxu0
      %928 = vmatprep.mubr.f32.mxu0 0.0
      %929 = vmatmul.mubr.f32.gmra.mxu0 %v745
      %v930 = vpop.f32.mrf.mxu0
      %v931 = vadd.f32 0.0, %v930
      %v932 = vpop.f32.mrf.mxu0
      %933 = vmatprep.mubr.f32.mxu0 0.0
      %934 = vmatmul.mubr.f32.gmra.mxu0 %v748
      %v935 = vpop.f32.mrf.mxu0
      %v936 = vadd.f32 0.0, %v935
      %v937 = vpop.f32.mrf.mxu0
      %938 = vmatprep.mubr.f32.mxu0 0.0
      %939 = vmatmul.mubr.f32.gmra.mxu0 %v751
      %v940 = vpop.f32.mrf.mxu0
      %v941 = vadd.f32 0.0, %v940
      %v942 = vpop.f32.mrf.mxu0
      %943 = vmatprep.mubr.f32.mxu0 0.0
      %944 = vmatmul.mubr.f32.gmra.mxu0 %v754
      %v945 = vpop.f32.mrf.mxu0
      %v946 = vadd.f32 0.0, %v945
      %v947 = vpop.f32.mrf.mxu0
      %948 = vmatprep.mubr.f32.mxu0 0.0
      %949 = vmatmul.mubr.f32.gmra.mxu0 %v757
      %v950 = vpop.f32.mrf.mxu0
      %v951 = vadd.f32 0.0, %v950
      %v952 = vpop.f32.mrf.mxu0
      %953 = vmatprep.mubr.f32.mxu0 0.0
      %954 = vmatmul.mubr.f32.gmra.mxu0 %v760
      %v955 = vpop.f32.mrf.mxu0
      %v956 = vadd.f32 0.0, %v955
      %v957 = vpop.f32.mrf.mxu0
      %958 = vmatprep.mubr.f32.mxu0 0.0
      %959 = vmatmul.mubr.f32.gmra.mxu0 %v763
      %v960 = vpop.f32.mrf.mxu0
      %v961 = vadd.f32 0.0, %v960
      %v962 = vpop.f32.mrf.mxu0
      %963 = vmatprep.mubr.f32.mxu0 0.0
      %964 = vmatmul.mubr.f32.gmra.mxu0 %v766
      %v965 = vpop.f32.mrf.mxu0
      %v966 = vadd.f32 0.0, %v965
      %v967 = vpop.f32.mrf.mxu0
      %968 = vmatprep.mubr.f32.mxu0 0.0
      %969 = vmatmul.mubr.f32.gmra.mxu0 %v769
      %v970 = vpop.f32.mrf.mxu0
      %v971 = vadd.f32 0.0, %v970
      %v972 = vpop.f32.mrf.mxu0
      %973 = vmatprep.mubr.f32.mxu0 0.0
      %974 = vmatmul.mubr.f32.gmra.mxu0 %v772
      %v975 = vpop.f32.mrf.mxu0
      %v976 = vadd.f32 0.0, %v975
      %v977 = vpop.f32.mrf.mxu0
      %978 = vmatprep.mubr.f32.mxu0 0.0
      %979 = vmatmul.mubr.f32.gmra.mxu0 %v775
      %v980 = vpop.f32.mrf.mxu0
      %v981 = vadd.f32 0.0, %v980
      %v982 = vpop.f32.mrf.mxu0
      %983 = vmatprep.mubr.f32.mxu0 0.0
      %984 = vmatmul.mubr.f32.gmra.mxu0 %v778
      %v985 = vpop.f32.mrf.mxu0
      %v986 = vadd.f32 0.0, %v985
      %v987 = vpop.f32.mrf.mxu0
      %988 = vmatprep.mubr.f32.mxu0 0.0
      %989 = vmatmul.mubr.f32.gmra.mxu0 %v781
      %v990 = vpop.f32.mrf.mxu0
      %v991 = vadd.f32 0.0, %v990
      %v992 = vpop.f32.mrf.mxu0
      %993 = vmatprep.mubr.f32.mxu0 0.0
      %994 = vmatmul.mubr.f32.gmra.mxu0 %v784
      %v995 = vpop.f32.mrf.mxu0
      %v996 = vadd.f32 0.0, %v995
      %v997 = vpop.f32.mrf.mxu0
      %998 = vmatprep.mubr.f32.mxu0 0.0
      %999 = vmatmul.mubr.f32.gmra.mxu0 %v787
      %v1000 = vpop.f32.mrf.mxu0
      %v1001 = vadd.f32 0.0, %v1000
      %v1002 = vpop.f32.mrf.mxu0
      %1003 = vmatprep.mubr.f32.mxu0 0.0
      %1004 = vmatmul.mubr.f32.gmra.mxu0 %v790
      %v1005 = vpop.f32.mrf.mxu0
      %v1006 = vadd.f32 0.0, %v1005
      %v1007 = vpop.f32.mrf.mxu0
      %1008 = vmatprep.mubr.f32.mxu0 0.0
      %1009 = vmatmul.mubr.f32.gmra.mxu0 %v793
      %v1010 = vpop.f32.mrf.mxu0
      %v1011 = vadd.f32 0.0, %v1010
      %v1012 = vpop.f32.mrf.mxu0
      %1013 = vmatprep.mubr.f32.mxu0 0.0
      %1014 = vmatmul.mubr.f32.gmra.mxu0 %v796
      %v1015 = vpop.f32.mrf.mxu0
      %v1016 = vadd.f32 0.0, %v1015
      %v1017 = vpop.f32.mrf.mxu0
      %1018 = vmatprep.mubr.f32.mxu0 0.0
      %1019 = vmatmul.mubr.f32.gmra.mxu0 %v799
      %v1020 = vpop.f32.mrf.mxu0
      %v1021 = vadd.f32 0.0, %v1020
      %v1022 = vpop.f32.mrf.mxu0
      %1023 = vmatprep.mubr.f32.mxu0 0.0
      %1024 = vmatmul.mubr.f32.gmra.mxu0 %v802
      %v1025 = vpop.f32.mrf.mxu0
      %v1026 = vadd.f32 0.0, %v1025
      %v1027 = vpop.f32.mrf.mxu0
      %1028 = vdwg.mxu0
      %v1061 = vunpack.c.l.b16 %v422
      %v1062 = vunpack.c.l.b16 %v423
      %v1063 = vunpack.c.l.b16 %v424
      %v1064 = vunpack.c.l.b16 %v425
      %v1065 = vunpack.c.l.b16 %v426
      %v1066 = vunpack.c.l.b16 %v427
      %v1067 = vunpack.c.l.b16 %v428
      %v1068 = vunpack.c.l.b16 %v429
      %v1069 = vunpack.c.l.b16 %v430
      %v1070 = vunpack.c.l.b16 %v431
      %v1071 = vunpack.c.l.b16 %v432
      %v1072 = vunpack.c.l.b16 %v433
      %v1073 = vunpack.c.l.b16 %v434
      %v1074 = vunpack.c.l.b16 %v435
      %v1075 = vunpack.c.l.b16 %v436
      %v1076 = vunpack.c.l.b16 %v437
      %v1077 = vunpack.c.l.b16 %v438
      %v1078 = vunpack.c.l.b16 %v439
      %v1079 = vunpack.c.l.b16 %v440
      %v1080 = vunpack.c.l.b16 %v441
      %v1081 = vunpack.c.l.b16 %v442
      %v1082 = vunpack.c.l.b16 %v443
      %v1083 = vunpack.c.l.b16 %v444
      %v1084 = vunpack.c.l.b16 %v445
      %v1085 = vunpack.c.l.b16 %v446
      %v1086 = vunpack.c.l.b16 %v447
      %v1087 = vunpack.c.l.b16 %v448
      %v1088 = vunpack.c.l.b16 %v449
      %v1089 = vunpack.c.l.b16 %v450
      %v1090 = vunpack.c.l.b16 %v451
      %v1091 = vunpack.c.l.b16 %v452
      %v1092 = vunpack.c.l.b16 %v453
      %v1093 = vpack.c.b16 %v1062, %v1061
      %v1094 = vpack.c.b16 %v1064, %v1063
      %v1095 = vpack.c.b16 %v1066, %v1065
      %v1096 = vpack.c.b16 %v1068, %v1067
      %v1097 = vpack.c.b16 %v1070, %v1069
      %v1098 = vpack.c.b16 %v1072, %v1071
      %v1099 = vpack.c.b16 %v1074, %v1073
      %v1100 = vpack.c.b16 %v1076, %v1075
      %v1101 = vpack.c.b16 %v1078, %v1077
      %v1102 = vpack.c.b16 %v1080, %v1079
      %v1103 = vpack.c.b16 %v1082, %v1081
      %v1104 = vpack.c.b16 %v1084, %v1083
      %v1105 = vpack.c.b16 %v1086, %v1085
      %v1106 = vpack.c.b16 %v1088, %v1087
      %v1107 = vpack.c.b16 %v1090, %v1089
      %v1108 = vpack.c.b16 %v1092, %v1091
      %v1110 = vsel %vm484, %v1093, 0
      %v1113 = vsel %vm484, %v1094, 0
      %v1116 = vsel %vm484, %v1095, 0
      %v1119 = vsel %vm484, %v1096, 0
      %v1122 = vsel %vm484, %v1097, 0
      %v1125 = vsel %vm484, %v1098, 0
      %v1128 = vsel %vm484, %v1099, 0
      %v1131 = vsel %vm484, %v1100, 0
      %v1134 = vsel %vm484, %v1101, 0
      %v1137 = vsel %vm484, %v1102, 0
      %v1140 = vsel %vm484, %v1103, 0
      %v1143 = vsel %vm484, %v1104, 0
      %v1146 = vsel %vm484, %v1105, 0
      %v1149 = vsel %vm484, %v1106, 0
      %v1152 = vsel %vm484, %v1107, 0
      %v1155 = vsel %vm484, %v1108, 0
      %v1158 = vsel %vm497, %v454, 0
      %1160 = vmatprep.subr.bf16.mxu0 0
      %1161 = vmatpush1.bf16.msra.mxu0 0
      %1162 = vmatprep.subr.bf16.mxu0 0
      %1163 = vmatpush1.bf16.msra.mxu0 0
      %1164 = vmatprep.subr.bf16.mxu0 0
      %1165 = vmatpush1.bf16.msra.mxu0 0
      %1166 = vmatprep.subr.bf16.mxu0 0
      %1167 = vmatpush1.bf16.msra.mxu0 0
      %1168 = vmatprep.subr.bf16.mxu0 0
      %1169 = vmatpush1.bf16.msra.mxu0 0
      %1170 = vmatprep.subr.bf16.mxu0 0
      %1171 = vmatpush1.bf16.msra.mxu0 0
      %1172 = vmatprep.subr.bf16.mxu0 0
      %1173 = vmatpush1.bf16.msra.mxu0 0
      %1174 = vmatprep.subr.bf16.mxu0 0
      %1175 = vmatpush1.bf16.msra.mxu0 %v1158
      %1176 = vmatprep.subr.bf16.mxu0 0
      %1177 = vmatpush2.bf16.msra.mxu0 0
      %1178 = vmatprep.subr.bf16.mxu0 0
      %1179 = vmatpush2.bf16.msra.mxu0 0
      %1180 = vmatprep.subr.bf16.mxu0 0
      %1181 = vmatpush2.bf16.msra.mxu0 0
      %1182 = vmatprep.subr.bf16.mxu0 0
      %1183 = vmatpush2.bf16.msra.mxu0 0
      %1184 = vmatprep.subr.bf16.mxu0 0
      %1185 = vmatpush2.bf16.msra.mxu0 0
      %1186 = vmatprep.subr.bf16.mxu0 0
      %1187 = vmatpush2.bf16.msra.mxu0 0
      %1188 = vmatprep.subr.bf16.mxu0 0
      %1189 = vmatpush2.bf16.msra.mxu0 0
      %1190 = vmatprep.subr.bf16.mxu0 0
      %1191 = vmatpush2.bf16.msra.mxu0 0
      %1192 = vmatprep.mubr.bf16.mxu0 0
      %1193 = vmatmul.mubr.bf16.gmra.mxu0 %v1110
      %v1194 = vpop.f32.mrf.mxu0
      %v1195 = vadd.f32 %v871, %v1194
      %v1196 = vpop.f32.mrf.mxu0
      %v1197 = vpop.f32.mrf.mxu0
      %v1198 = vadd.f32 %v876, %v1197
      %v1199 = vpop.f32.mrf.mxu0
      %1200 = vmatprep.mubr.bf16.mxu0 0
      %1201 = vmatmul.mubr.bf16.gmra.mxu0 %v1113
      %v1202 = vpop.f32.mrf.mxu0
      %v1203 = vadd.f32 %v881, %v1202
      %v1204 = vpop.f32.mrf.mxu0
      %v1205 = vpop.f32.mrf.mxu0
      %v1206 = vadd.f32 %v886, %v1205
      %v1207 = vpop.f32.mrf.mxu0
      %1208 = vmatprep.mubr.bf16.mxu0 0
      %1209 = vmatmul.mubr.bf16.gmra.mxu0 %v1116
      %v1210 = vpop.f32.mrf.mxu0
      %v1211 = vadd.f32 %v891, %v1210
      %v1212 = vpop.f32.mrf.mxu0
      %v1213 = vpop.f32.mrf.mxu0
      %v1214 = vadd.f32 %v896, %v1213
      %v1215 = vpop.f32.mrf.mxu0
      %1216 = vmatprep.mubr.bf16.mxu0 0
      %1217 = vmatmul.mubr.bf16.gmra.mxu0 %v1119
      %v1218 = vpop.f32.mrf.mxu0
      %v1219 = vadd.f32 %v901, %v1218
      %v1220 = vpop.f32.mrf.mxu0
      %v1221 = vpop.f32.mrf.mxu0
      %v1222 = vadd.f32 %v906, %v1221
      %v1223 = vpop.f32.mrf.mxu0
      %1224 = vmatprep.mubr.bf16.mxu0 0
      %1225 = vmatmul.mubr.bf16.gmra.mxu0 %v1122
      %v1226 = vpop.f32.mrf.mxu0
      %v1227 = vadd.f32 %v911, %v1226
      %v1228 = vpop.f32.mrf.mxu0
      %v1229 = vpop.f32.mrf.mxu0
      %v1230 = vadd.f32 %v916, %v1229
      %v1231 = vpop.f32.mrf.mxu0
      %1232 = vmatprep.mubr.bf16.mxu0 0
      %1233 = vmatmul.mubr.bf16.gmra.mxu0 %v1125
      %v1234 = vpop.f32.mrf.mxu0
      %v1235 = vadd.f32 %v921, %v1234
      %v1236 = vpop.f32.mrf.mxu0
      %v1237 = vpop.f32.mrf.mxu0
      %v1238 = vadd.f32 %v926, %v1237
      %v1239 = vpop.f32.mrf.mxu0
      %1240 = vmatprep.mubr.bf16.mxu0 0
      %1241 = vmatmul.mubr.bf16.gmra.mxu0 %v1128
      %v1242 = vpop.f32.mrf.mxu0
      %v1243 = vadd.f32 %v931, %v1242
      %v1244 = vpop.f32.mrf.mxu0
      %v1245 = vpop.f32.mrf.mxu0
      %v1246 = vadd.f32 %v936, %v1245
      %v1247 = vpop.f32.mrf.mxu0
      %1248 = vmatprep.mubr.bf16.mxu0 0
      %1249 = vmatmul.mubr.bf16.gmra.mxu0 %v1131
      %v1250 = vpop.f32.mrf.mxu0
      %v1251 = vadd.f32 %v941, %v1250
      %v1252 = vpop.f32.mrf.mxu0
      %v1253 = vpop.f32.mrf.mxu0
      %v1254 = vadd.f32 %v946, %v1253
      %v1255 = vpop.f32.mrf.mxu0
      %1256 = vmatprep.mubr.bf16.mxu0 0
      %1257 = vmatmul.mubr.bf16.gmra.mxu0 %v1134
      %v1258 = vpop.f32.mrf.mxu0
      %v1259 = vadd.f32 %v951, %v1258
      %v1260 = vpop.f32.mrf.mxu0
      %v1261 = vpop.f32.mrf.mxu0
      %v1262 = vadd.f32 %v956, %v1261
      %v1263 = vpop.f32.mrf.mxu0
      %1264 = vmatprep.mubr.bf16.mxu0 0
      %1265 = vmatmul.mubr.bf16.gmra.mxu0 %v1137
      %v1266 = vpop.f32.mrf.mxu0
      %v1267 = vadd.f32 %v961, %v1266
      %v1268 = vpop.f32.mrf.mxu0
      %v1269 = vpop.f32.mrf.mxu0
      %v1270 = vadd.f32 %v966, %v1269
      %v1271 = vpop.f32.mrf.mxu0
      %1272 = vmatprep.mubr.bf16.mxu0 0
      %1273 = vmatmul.mubr.bf16.gmra.mxu0 %v1140
      %v1274 = vpop.f32.mrf.mxu0
      %v1275 = vadd.f32 %v971, %v1274
      %v1276 = vpop.f32.mrf.mxu0
      %v1277 = vpop.f32.mrf.mxu0
      %v1278 = vadd.f32 %v976, %v1277
      %v1279 = vpop.f32.mrf.mxu0
      %1280 = vmatprep.mubr.bf16.mxu0 0
      %1281 = vmatmul.mubr.bf16.gmra.mxu0 %v1143
      %v1282 = vpop.f32.mrf.mxu0
      %v1283 = vadd.f32 %v981, %v1282
      %v1284 = vpop.f32.mrf.mxu0
      %v1285 = vpop.f32.mrf.mxu0
      %v1286 = vadd.f32 %v986, %v1285
      %v1287 = vpop.f32.mrf.mxu0
      %1288 = vmatprep.mubr.bf16.mxu0 0
      %1289 = vmatmul.mubr.bf16.gmra.mxu0 %v1146
      %v1290 = vpop.f32.mrf.mxu0
      %v1291 = vadd.f32 %v991, %v1290
      %v1292 = vpop.f32.mrf.mxu0
      %v1293 = vpop.f32.mrf.mxu0
      %v1294 = vadd.f32 %v996, %v1293
      %v1295 = vpop.f32.mrf.mxu0
      %1296 = vmatprep.mubr.bf16.mxu0 0
      %1297 = vmatmul.mubr.bf16.gmra.mxu0 %v1149
      %v1298 = vpop.f32.mrf.mxu0
      %v1299 = vadd.f32 %v1001, %v1298
      %v1300 = vpop.f32.mrf.mxu0
      %v1301 = vpop.f32.mrf.mxu0
      %v1302 = vadd.f32 %v1006, %v1301
      %v1303 = vpop.f32.mrf.mxu0
      %1304 = vmatprep.mubr.bf16.mxu0 0
      %1305 = vmatmul.mubr.bf16.gmra.mxu0 %v1152
      %v1306 = vpop.f32.mrf.mxu0
      %v1307 = vadd.f32 %v1011, %v1306
      %v1308 = vpop.f32.mrf.mxu0
      %v1309 = vpop.f32.mrf.mxu0
      %v1310 = vadd.f32 %v1016, %v1309
      %v1311 = vpop.f32.mrf.mxu0
      %1312 = vmatprep.mubr.bf16.mxu0 0
      %1313 = vmatmul.mubr.bf16.gmra.mxu0 %v1155
      %v1314 = vpop.f32.mrf.mxu0
      %v1315 = vadd.f32 %v1021, %v1314
      %v1316 = vpop.f32.mrf.mxu0
      %v1317 = vpop.f32.mrf.mxu0
      %v1318 = vadd.f32 %v1026, %v1317
      %v1319 = vpop.f32.mrf.mxu0
      %1320 = vdwg.mxu0
      %v1321 = vld [vmem:[%s7] sm:$0x1]
      %v1323 = vlaneseq
      %v1324 = vshrl.u32 %v1323, 7
      %v1325 = vsub.s32 0, %v1324
      %v1326 = vrot.slane %v1321, %v1325
      %v1328 = vadd.f32 %v1195, %v1326
      %v1329 = vadd.f32 %v1198, %v1326
      %v1330 = vadd.f32 %v1203, %v1326
      %v1331 = vadd.f32 %v1206, %v1326
      %v1332 = vadd.f32 %v1211, %v1326
      %v1333 = vadd.f32 %v1214, %v1326
      %v1334 = vadd.f32 %v1219, %v1326
      %v1335 = vadd.f32 %v1222, %v1326
      %v1336 = vadd.f32 %v1227, %v1326
      %v1337 = vadd.f32 %v1230, %v1326
      %v1338 = vadd.f32 %v1235, %v1326
      %v1339 = vadd.f32 %v1238, %v1326
      %v1340 = vadd.f32 %v1243, %v1326
      %v1341 = vadd.f32 %v1246, %v1326
      %v1342 = vadd.f32 %v1251, %v1326
      %v1343 = vadd.f32 %v1254, %v1326
      %v1344 = vadd.f32 %v1259, %v1326
      %v1345 = vadd.f32 %v1262, %v1326
      %v1346 = vadd.f32 %v1267, %v1326
      %v1347 = vadd.f32 %v1270, %v1326
      %v1348 = vadd.f32 %v1275, %v1326
      %v1349 = vadd.f32 %v1278, %v1326
      %v1350 = vadd.f32 %v1283, %v1326
      %v1351 = vadd.f32 %v1286, %v1326
      %v1352 = vadd.f32 %v1291, %v1326
      %v1353 = vadd.f32 %v1294, %v1326
      %v1354 = vadd.f32 %v1299, %v1326
      %v1355 = vadd.f32 %v1302, %v1326
      %v1356 = vadd.f32 %v1307, %v1326
      %v1357 = vadd.f32 %v1310, %v1326
      %v1358 = vadd.f32 %v1315, %v1326
      %v1359 = vadd.f32 %v1318, %v1326
      %1368 = vrot.lane.b32.xlu0 %v645, 4
      %v1369 = vpop.permute.xlu0 %1368
      %1370 = vrot.lane.b32.xlu0 %v648, 4
      %v1371 = vpop.permute.xlu0 %1370
      %1372 = vrot.lane.b32.xlu0 %v653, 4
      %v1373 = vpop.permute.xlu0 %1372
      %1374 = vrot.lane.b32.xlu0 %v656, 4
      %v1375 = vpop.permute.xlu0 %1374
      %1376 = vrot.lane.b32.xlu0 %v661, 4
      %v1377 = vpop.permute.xlu0 %1376
      %1378 = vrot.lane.b32.xlu0 %v664, 4
      %v1379 = vpop.permute.xlu0 %1378
      %1380 = vrot.lane.b32.xlu0 %v669, 4
      %v1381 = vpop.permute.xlu0 %1380
      %1382 = vrot.lane.b32.xlu0 %v672, 4
      %v1383 = vpop.permute.xlu0 %1382
      %v1392 = vadd.f32 %v536, %v1369
      %v1393 = vadd.f32 %v539, %v1371
      %v1394 = vadd.f32 %v544, %v1373
      %v1395 = vadd.f32 %v547, %v1375
      %v1396 = vadd.f32 %v552, %v1377
      %v1397 = vadd.f32 %v555, %v1379
      %v1398 = vadd.f32 %v560, %v1381
      %v1399 = vadd.f32 %v563, %v1383
      %v1400 = vld [vmem:[%s8] sm:$0x1]
      %v1402 = vlaneseq
      %v1403 = vshrl.u32 %v1402, 7
      %v1404 = vsub.s32 0, %v1403
      %v1405 = vrot.slane %v1400, %v1404
      %1406 = vrot.lane.b32.xlu0 %v1405, 4
      %v1407 = vpop.permute.xlu0 %1406
      %v1409 = vadd.f32 %v1392, %v1407
      %v1410 = vadd.f32 %v1393, %v1407
      %v1411 = vadd.f32 %v1394, %v1407
      %v1412 = vadd.f32 %v1395, %v1407
      %v1413 = vadd.f32 %v1396, %v1407
      %v1414 = vadd.f32 %v1397, %v1407
      %v1415 = vadd.f32 %v1398, %v1407
      %v1416 = vadd.f32 %v1399, %v1407
      %vm1417 = vcmp.gt.f32.partialorder %v1328, 20.0
      %vm1418 = vcmp.gt.f32.partialorder %v1329, 20.0
      %vm1419 = vcmp.gt.f32.partialorder %v1330, 20.0
      %vm1420 = vcmp.gt.f32.partialorder %v1331, 20.0
      %vm1421 = vcmp.gt.f32.partialorder %v1332, 20.0
      %vm1422 = vcmp.gt.f32.partialorder %v1333, 20.0
      %vm1423 = vcmp.gt.f32.partialorder %v1334, 20.0
      %vm1424 = vcmp.gt.f32.partialorder %v1335, 20.0
      %vm1425 = vcmp.gt.f32.partialorder %v1336, 20.0
      %vm1426 = vcmp.gt.f32.partialorder %v1337, 20.0
      %vm1427 = vcmp.gt.f32.partialorder %v1338, 20.0
      %vm1428 = vcmp.gt.f32.partialorder %v1339, 20.0
      %vm1429 = vcmp.gt.f32.partialorder %v1340, 20.0
      %vm1430 = vcmp.gt.f32.partialorder %v1341, 20.0
      %vm1431 = vcmp.gt.f32.partialorder %v1342, 20.0
      %vm1432 = vcmp.gt.f32.partialorder %v1343, 20.0
      %vm1433 = vcmp.gt.f32.partialorder %v1344, 20.0
      %vm1434 = vcmp.gt.f32.partialorder %v1345, 20.0
      %vm1435 = vcmp.gt.f32.partialorder %v1346, 20.0
      %vm1436 = vcmp.gt.f32.partialorder %v1347, 20.0
      %vm1437 = vcmp.gt.f32.partialorder %v1348, 20.0
      %vm1438 = vcmp.gt.f32.partialorder %v1349, 20.0
      %vm1439 = vcmp.gt.f32.partialorder %v1350, 20.0
      %vm1440 = vcmp.gt.f32.partialorder %v1351, 20.0
      %vm1441 = vcmp.gt.f32.partialorder %v1352, 20.0
      %vm1442 = vcmp.gt.f32.partialorder %v1353, 20.0
      %vm1443 = vcmp.gt.f32.partialorder %v1354, 20.0
      %vm1444 = vcmp.gt.f32.partialorder %v1355, 20.0
      %vm1445 = vcmp.gt.f32.partialorder %v1356, 20.0
      %vm1446 = vcmp.gt.f32.partialorder %v1357, 20.0
      %vm1447 = vcmp.gt.f32.partialorder %v1358, 20.0
      %vm1448 = vcmp.gt.f32.partialorder %v1359, 20.0
      %v1449 = vmin.f32 %v1328, 20.0
      %v1450 = vmin.f32 %v1329, 20.0
      %v1451 = vmin.f32 %v1330, 20.0
      %v1452 = vmin.f32 %v1331, 20.0
      %v1453 = vmin.f32 %v1332, 20.0
      %v1454 = vmin.f32 %v1333, 20.0
      %v1455 = vmin.f32 %v1334, 20.0
      %v1456 = vmin.f32 %v1335, 20.0
      %v1457 = vmin.f32 %v1336, 20.0
      %v1458 = vmin.f32 %v1337, 20.0
      %v1459 = vmin.f32 %v1338, 20.0
      %v1460 = vmin.f32 %v1339, 20.0
      %v1461 = vmin.f32 %v1340, 20.0
      %v1462 = vmin.f32 %v1341, 20.0
      %v1463 = vmin.f32 %v1342, 20.0
      %v1464 = vmin.f32 %v1343, 20.0
      %v1465 = vmin.f32 %v1344, 20.0
      %v1466 = vmin.f32 %v1345, 20.0
      %v1467 = vmin.f32 %v1346, 20.0
      %v1468 = vmin.f32 %v1347, 20.0
      %v1469 = vmin.f32 %v1348, 20.0
      %v1470 = vmin.f32 %v1349, 20.0
      %v1471 = vmin.f32 %v1350, 20.0
      %v1472 = vmin.f32 %v1351, 20.0
      %v1473 = vmin.f32 %v1352, 20.0
      %v1474 = vmin.f32 %v1353, 20.0
      %v1475 = vmin.f32 %v1354, 20.0
      %v1476 = vmin.f32 %v1355, 20.0
      %v1477 = vmin.f32 %v1356, 20.0
      %v1478 = vmin.f32 %v1357, 20.0
      %v1479 = vmin.f32 %v1358, 20.0
      %v1480 = vmin.f32 %v1359, 20.0
      %v1481 = vmul.f32 %v1449, 1.442695
      %v1482 = vpow.pop %v1481
      %v1483 = vmul.f32 %v1450, 1.442695
      %v1484 = vpow.pop %v1483
      %v1485 = vmul.f32 %v1451, 1.442695
      %v1486 = vpow.pop %v1485
      %v1487 = vmul.f32 %v1452, 1.442695
      %v1488 = vpow.pop %v1487
      %v1489 = vmul.f32 %v1453, 1.442695
      %v1490 = vpow.pop %v1489
      %v1491 = vmul.f32 %v1454, 1.442695
      %v1492 = vpow.pop %v1491
      %v1493 = vmul.f32 %v1455, 1.442695
      %v1494 = vpow.pop %v1493
      %v1495 = vmul.f32 %v1456, 1.442695
      %v1496 = vpow.pop %v1495
      %v1497 = vmul.f32 %v1457, 1.442695
      %v1498 = vpow.pop %v1497
      %v1499 = vmul.f32 %v1458, 1.442695
      %v1500 = vpow.pop %v1499
      %v1501 = vmul.f32 %v1459, 1.442695
      %v1502 = vpow.pop %v1501
      %v1503 = vmul.f32 %v1460, 1.442695
      %v1504 = vpow.pop %v1503
      %v1505 = vmul.f32 %v1461, 1.442695
      %v1506 = vpow.pop %v1505
      %v1507 = vmul.f32 %v1462, 1.442695
      %v1508 = vpow.pop %v1507
      %v1509 = vmul.f32 %v1463, 1.442695
      %v1510 = vpow.pop %v1509
      %v1511 = vmul.f32 %v1464, 1.442695
      %v1512 = vpow.pop %v1511
      %v1513 = vmul.f32 %v1465, 1.442695
      %v1514 = vpow.pop %v1513
      %v1515 = vmul.f32 %v1466, 1.442695
      %v1516 = vpow.pop %v1515
      %v1517 = vmul.f32 %v1467, 1.442695
      %v1518 = vpow.pop %v1517
      %v1519 = vmul.f32 %v1468, 1.442695
      %v1520 = vpow.pop %v1519
      %v1521 = vmul.f32 %v1469, 1.442695
      %v1522 = vpow.pop %v1521
      %v1523 = vmul.f32 %v1470, 1.442695
      %v1524 = vpow.pop %v1523
      %v1525 = vmul.f32 %v1471, 1.442695
      %v1526 = vpow.pop %v1525
      %v1527 = vmul.f32 %v1472, 1.442695
      %v1528 = vpow.pop %v1527
      %v1529 = vmul.f32 %v1473, 1.442695
      %v1530 = vpow.pop %v1529
      %v1531 = vmul.f32 %v1474, 1.442695
      %v1532 = vpow.pop %v1531
      %v1533 = vmul.f32 %v1475, 1.442695
      %v1534 = vpow.pop %v1533
      %v1535 = vmul.f32 %v1476, 1.442695
      %v1536 = vpow.pop %v1535
      %v1537 = vmul.f32 %v1477, 1.442695
      %v1538 = vpow.pop %v1537
      %v1539 = vmul.f32 %v1478, 1.442695
      %v1540 = vpow.pop %v1539
      %v1541 = vmul.f32 %v1479, 1.442695
      %v1542 = vpow.pop %v1541
      %v1543 = vmul.f32 %v1480, 1.442695
      %v1544 = vpow.pop %v1543
      %v1545 = vadd.f32 %v1482, 1.0
      %v1546 = vlog2.pop %v1545
      %v1547 = vmul.f32 %v1546, 0.6931472
      %v1548 = vmul.f32 -0.5, %v1482
      %v1549 = vadd.f32 %v1548, 1.0
      %v1550 = vmul.f32 %v1549, %v1482
      %v1551 = vand.u32 2147483647, %v1482
      %vm1552 = vcmp.lt.f32.partialorder %v1551, 0.0004427343
      %v1553 = vsel %vm1552, %v1550, %v1547
      %v1554 = vadd.f32 %v1484, 1.0
      %v1555 = vlog2.pop %v1554
      %v1556 = vmul.f32 %v1555, 0.6931472
      %v1557 = vmul.f32 -0.5, %v1484
      %v1558 = vadd.f32 %v1557, 1.0
      %v1559 = vmul.f32 %v1558, %v1484
      %v1560 = vand.u32 2147483647, %v1484
      %vm1561 = vcmp.lt.f32.partialorder %v1560, 0.0004427343
      %v1562 = vsel %vm1561, %v1559, %v1556
      %v1563 = vadd.f32 %v1486, 1.0
      %v1564 = vlog2.pop %v1563
      %v1565 = vmul.f32 %v1564, 0.6931472
      %v1566 = vmul.f32 -0.5, %v1486
      %v1567 = vadd.f32 %v1566, 1.0
      %v1568 = vmul.f32 %v1567, %v1486
      %v1569 = vand.u32 2147483647, %v1486
      %vm1570 = vcmp.lt.f32.partialorder %v1569, 0.0004427343
      %v1571 = vsel %vm1570, %v1568, %v1565
      %v1572 = vadd.f32 %v1488, 1.0
      %v1573 = vlog2.pop %v1572
      %v1574 = vmul.f32 %v1573, 0.6931472
      %v1575 = vmul.f32 -0.5, %v1488
      %v1576 = vadd.f32 %v1575, 1.0
      %v1577 = vmul.f32 %v1576, %v1488
      %v1578 = vand.u32 2147483647, %v1488
      %vm1579 = vcmp.lt.f32.partialorder %v1578, 0.0004427343
      %v1580 = vsel %vm1579, %v1577, %v1574
      %v1581 = vadd.f32 %v1490, 1.0
      %v1582 = vlog2.pop %v1581
      %v1583 = vmul.f32 %v1582, 0.6931472
      %v1584 = vmul.f32 -0.5, %v1490
      %v1585 = vadd.f32 %v1584, 1.0
      %v1586 = vmul.f32 %v1585, %v1490
      %v1587 = vand.u32 2147483647, %v1490
      %vm1588 = vcmp.lt.f32.partialorder %v1587, 0.0004427343
      %v1589 = vsel %vm1588, %v1586, %v1583
      %v1590 = vadd.f32 %v1492, 1.0
      %v1591 = vlog2.pop %v1590
      %v1592 = vmul.f32 %v1591, 0.6931472
      %v1593 = vmul.f32 -0.5, %v1492
      %v1594 = vadd.f32 %v1593, 1.0
      %v1595 = vmul.f32 %v1594, %v1492
      %v1596 = vand.u32 2147483647, %v1492
      %vm1597 = vcmp.lt.f32.partialorder %v1596, 0.0004427343
      %v1598 = vsel %vm1597, %v1595, %v1592
      %v1599 = vadd.f32 %v1494, 1.0
      %v1600 = vlog2.pop %v1599
      %v1601 = vmul.f32 %v1600, 0.6931472
      %v1602 = vmul.f32 -0.5, %v1494
      %v1603 = vadd.f32 %v1602, 1.0
      %v1604 = vmul.f32 %v1603, %v1494
      %v1605 = vand.u32 2147483647, %v1494
      %vm1606 = vcmp.lt.f32.partialorder %v1605, 0.0004427343
      %v1607 = vsel %vm1606, %v1604, %v1601
      %v1608 = vadd.f32 %v1496, 1.0
      %v1609 = vlog2.pop %v1608
      %v1610 = vmul.f32 %v1609, 0.6931472
      %v1611 = vmul.f32 -0.5, %v1496
      %v1612 = vadd.f32 %v1611, 1.0
      %v1613 = vmul.f32 %v1612, %v1496
      %v1614 = vand.u32 2147483647, %v1496
      %vm1615 = vcmp.lt.f32.partialorder %v1614, 0.0004427343
      %v1616 = vsel %vm1615, %v1613, %v1610
      %v1617 = vadd.f32 %v1498, 1.0
      %v1618 = vlog2.pop %v1617
      %v1619 = vmul.f32 %v1618, 0.6931472
      %v1620 = vmul.f32 -0.5, %v1498
      %v1621 = vadd.f32 %v1620, 1.0
      %v1622 = vmul.f32 %v1621, %v1498
      %v1623 = vand.u32 2147483647, %v1498
      %vm1624 = vcmp.lt.f32.partialorder %v1623, 0.0004427343
      %v1625 = vsel %vm1624, %v1622, %v1619
      %v1626 = vadd.f32 %v1500, 1.0
      %v1627 = vlog2.pop %v1626
      %v1628 = vmul.f32 %v1627, 0.6931472
      %v1629 = vmul.f32 -0.5, %v1500
      %v1630 = vadd.f32 %v1629, 1.0
      %v1631 = vmul.f32 %v1630, %v1500
      %v1632 = vand.u32 2147483647, %v1500
      %vm1633 = vcmp.lt.f32.partialorder %v1632, 0.0004427343
      %v1634 = vsel %vm1633, %v1631, %v1628
      %v1635 = vadd.f32 %v1502, 1.0
      %v1636 = vlog2.pop %v1635
      %v1637 = vmul.f32 %v1636, 0.6931472
      %v1638 = vmul.f32 -0.5, %v1502
      %v1639 = vadd.f32 %v1638, 1.0
      %v1640 = vmul.f32 %v1639, %v1502
      %v1641 = vand.u32 2147483647, %v1502
      %vm1642 = vcmp.lt.f32.partialorder %v1641, 0.0004427343
      %v1643 = vsel %vm1642, %v1640, %v1637
      %v1644 = vadd.f32 %v1504, 1.0
      %v1645 = vlog2.pop %v1644
      %v1646 = vmul.f32 %v1645, 0.6931472
      %v1647 = vmul.f32 -0.5, %v1504
      %v1648 = vadd.f32 %v1647, 1.0
      %v1649 = vmul.f32 %v1648, %v1504
      %v1650 = vand.u32 2147483647, %v1504
      %vm1651 = vcmp.lt.f32.partialorder %v1650, 0.0004427343
      %v1652 = vsel %vm1651, %v1649, %v1646
      %v1653 = vadd.f32 %v1506, 1.0
      %v1654 = vlog2.pop %v1653
      %v1655 = vmul.f32 %v1654, 0.6931472
      %v1656 = vmul.f32 -0.5, %v1506
      %v1657 = vadd.f32 %v1656, 1.0
      %v1658 = vmul.f32 %v1657, %v1506
      %v1659 = vand.u32 2147483647, %v1506
      %vm1660 = vcmp.lt.f32.partialorder %v1659, 0.0004427343
      %v1661 = vsel %vm1660, %v1658, %v1655
      %v1662 = vadd.f32 %v1508, 1.0
      %v1663 = vlog2.pop %v1662
      %v1664 = vmul.f32 %v1663, 0.6931472
      %v1665 = vmul.f32 -0.5, %v1508
      %v1666 = vadd.f32 %v1665, 1.0
      %v1667 = vmul.f32 %v1666, %v1508
      %v1668 = vand.u32 2147483647, %v1508
      %vm1669 = vcmp.lt.f32.partialorder %v1668, 0.0004427343
      %v1670 = vsel %vm1669, %v1667, %v1664
      %v1671 = vadd.f32 %v1510, 1.0
      %v1672 = vlog2.pop %v1671
      %v1673 = vmul.f32 %v1672, 0.6931472
      %v1674 = vmul.f32 -0.5, %v1510
      %v1675 = vadd.f32 %v1674, 1.0
      %v1676 = vmul.f32 %v1675, %v1510
      %v1677 = vand.u32 2147483647, %v1510
      %vm1678 = vcmp.lt.f32.partialorder %v1677, 0.0004427343
      %v1679 = vsel %vm1678, %v1676, %v1673
      %v1680 = vadd.f32 %v1512, 1.0
      %v1681 = vlog2.pop %v1680
      %v1682 = vmul.f32 %v1681, 0.6931472
      %v1683 = vmul.f32 -0.5, %v1512
      %v1684 = vadd.f32 %v1683, 1.0
      %v1685 = vmul.f32 %v1684, %v1512
      %v1686 = vand.u32 2147483647, %v1512
      %vm1687 = vcmp.lt.f32.partialorder %v1686, 0.0004427343
      %v1688 = vsel %vm1687, %v1685, %v1682
      %v1689 = vadd.f32 %v1514, 1.0
      %v1690 = vlog2.pop %v1689
      %v1691 = vmul.f32 %v1690, 0.6931472
      %v1692 = vmul.f32 -0.5, %v1514
      %v1693 = vadd.f32 %v1692, 1.0
      %v1694 = vmul.f32 %v1693, %v1514
      %v1695 = vand.u32 2147483647, %v1514
      %vm1696 = vcmp.lt.f32.partialorder %v1695, 0.0004427343
      %v1697 = vsel %vm1696, %v1694, %v1691
      %v1698 = vadd.f32 %v1516, 1.0
      %v1699 = vlog2.pop %v1698
      %v1700 = vmul.f32 %v1699, 0.6931472
      %v1701 = vmul.f32 -0.5, %v1516
      %v1702 = vadd.f32 %v1701, 1.0
      %v1703 = vmul.f32 %v1702, %v1516
      %v1704 = vand.u32 2147483647, %v1516
      %vm1705 = vcmp.lt.f32.partialorder %v1704, 0.0004427343
      %v1706 = vsel %vm1705, %v1703, %v1700
      %v1707 = vadd.f32 %v1518, 1.0
      %v1708 = vlog2.pop %v1707
      %v1709 = vmul.f32 %v1708, 0.6931472
      %v1710 = vmul.f32 -0.5, %v1518
      %v1711 = vadd.f32 %v1710, 1.0
      %v1712 = vmul.f32 %v1711, %v1518
      %v1713 = vand.u32 2147483647, %v1518
      %vm1714 = vcmp.lt.f32.partialorder %v1713, 0.0004427343
      %v1715 = vsel %vm1714, %v1712, %v1709
      %v1716 = vadd.f32 %v1520, 1.0
      %v1717 = vlog2.pop %v1716
      %v1718 = vmul.f32 %v1717, 0.6931472
      %v1719 = vmul.f32 -0.5, %v1520
      %v1720 = vadd.f32 %v1719, 1.0
      %v1721 = vmul.f32 %v1720, %v1520
      %v1722 = vand.u32 2147483647, %v1520
      %vm1723 = vcmp.lt.f32.partialorder %v1722, 0.0004427343
      %v1724 = vsel %vm1723, %v1721, %v1718
      %v1725 = vadd.f32 %v1522, 1.0
      %v1726 = vlog2.pop %v1725
      %v1727 = vmul.f32 %v1726, 0.6931472
      %v1728 = vmul.f32 -0.5, %v1522
      %v1729 = vadd.f32 %v1728, 1.0
      %v1730 = vmul.f32 %v1729, %v1522
      %v1731 = vand.u32 2147483647, %v1522
      %vm1732 = vcmp.lt.f32.partialorder %v1731, 0.0004427343
      %v1733 = vsel %vm1732, %v1730, %v1727
      %v1734 = vadd.f32 %v1524, 1.0
      %v1735 = vlog2.pop %v1734
      %v1736 = vmul.f32 %v1735, 0.6931472
      %v1737 = vmul.f32 -0.5, %v1524
      %v1738 = vadd.f32 %v1737, 1.0
      %v1739 = vmul.f32 %v1738, %v1524
      %v1740 = vand.u32 2147483647, %v1524
      %vm1741 = vcmp.lt.f32.partialorder %v1740, 0.0004427343
      %v1742 = vsel %vm1741, %v1739, %v1736
      %v1743 = vadd.f32 %v1526, 1.0
      %v1744 = vlog2.pop %v1743
      %v1745 = vmul.f32 %v1744, 0.6931472
      %v1746 = vmul.f32 -0.5, %v1526
      %v1747 = vadd.f32 %v1746, 1.0
      %v1748 = vmul.f32 %v1747, %v1526
      %v1749 = vand.u32 2147483647, %v1526
      %vm1750 = vcmp.lt.f32.partialorder %v1749, 0.0004427343
      %v1751 = vsel %vm1750, %v1748, %v1745
      %v1752 = vadd.f32 %v1528, 1.0
      %v1753 = vlog2.pop %v1752
      %v1754 = vmul.f32 %v1753, 0.6931472
      %v1755 = vmul.f32 -0.5, %v1528
      %v1756 = vadd.f32 %v1755, 1.0
      %v1757 = vmul.f32 %v1756, %v1528
      %v1758 = vand.u32 2147483647, %v1528
      %vm1759 = vcmp.lt.f32.partialorder %v1758, 0.0004427343
      %v1760 = vsel %vm1759, %v1757, %v1754
      %v1761 = vadd.f32 %v1530, 1.0
      %v1762 = vlog2.pop %v1761
      %v1763 = vmul.f32 %v1762, 0.6931472
      %v1764 = vmul.f32 -0.5, %v1530
      %v1765 = vadd.f32 %v1764, 1.0
      %v1766 = vmul.f32 %v1765, %v1530
      %v1767 = vand.u32 2147483647, %v1530
      %vm1768 = vcmp.lt.f32.partialorder %v1767, 0.0004427343
      %v1769 = vsel %vm1768, %v1766, %v1763
      %v1770 = vadd.f32 %v1532, 1.0
      %v1771 = vlog2.pop %v1770
      %v1772 = vmul.f32 %v1771, 0.6931472
      %v1773 = vmul.f32 -0.5, %v1532
      %v1774 = vadd.f32 %v1773, 1.0
      %v1775 = vmul.f32 %v1774, %v1532
      %v1776 = vand.u32 2147483647, %v1532
      %vm1777 = vcmp.lt.f32.partialorder %v1776, 0.0004427343
      %v1778 = vsel %vm1777, %v1775, %v1772
      %v1779 = vadd.f32 %v1534, 1.0
      %v1780 = vlog2.pop %v1779
      %v1781 = vmul.f32 %v1780, 0.6931472
      %v1782 = vmul.f32 -0.5, %v1534
      %v1783 = vadd.f32 %v1782, 1.0
      %v1784 = vmul.f32 %v1783, %v1534
      %v1785 = vand.u32 2147483647, %v1534
      %vm1786 = vcmp.lt.f32.partialorder %v1785, 0.0004427343
      %v1787 = vsel %vm1786, %v1784, %v1781
      %v1788 = vadd.f32 %v1536, 1.0
      %v1789 = vlog2.pop %v1788
      %v1790 = vmul.f32 %v1789, 0.6931472
      %v1791 = vmul.f32 -0.5, %v1536
      %v1792 = vadd.f32 %v1791, 1.0
      %v1793 = vmul.f32 %v1792, %v1536
      %v1794 = vand.u32 2147483647, %v1536
      %vm1795 = vcmp.lt.f32.partialorder %v1794, 0.0004427343
      %v1796 = vsel %vm1795, %v1793, %v1790
      %v1797 = vadd.f32 %v1538, 1.0
      %v1798 = vlog2.pop %v1797
      %v1799 = vmul.f32 %v1798, 0.6931472
      %v1800 = vmul.f32 -0.5, %v1538
      %v1801 = vadd.f32 %v1800, 1.0
      %v1802 = vmul.f32 %v1801, %v1538
      %v1803 = vand.u32 2147483647, %v1538
      %vm1804 = vcmp.lt.f32.partialorder %v1803, 0.0004427343
      %v1805 = vsel %vm1804, %v1802, %v1799
      %v1806 = vadd.f32 %v1540, 1.0
      %v1807 = vlog2.pop %v1806
      %v1808 = vmul.f32 %v1807, 0.6931472
      %v1809 = vmul.f32 -0.5, %v1540
      %v1810 = vadd.f32 %v1809, 1.0
      %v1811 = vmul.f32 %v1810, %v1540
      %v1812 = vand.u32 2147483647, %v1540
      %vm1813 = vcmp.lt.f32.partialorder %v1812, 0.0004427343
      %v1814 = vsel %vm1813, %v1811, %v1808
      %v1815 = vadd.f32 %v1542, 1.0
      %v1816 = vlog2.pop %v1815
      %v1817 = vmul.f32 %v1816, 0.6931472
      %v1818 = vmul.f32 -0.5, %v1542
      %v1819 = vadd.f32 %v1818, 1.0
      %v1820 = vmul.f32 %v1819, %v1542
      %v1821 = vand.u32 2147483647, %v1542
      %vm1822 = vcmp.lt.f32.partialorder %v1821, 0.0004427343
      %v1823 = vsel %vm1822, %v1820, %v1817
      %v1824 = vadd.f32 %v1544, 1.0
      %v1825 = vlog2.pop %v1824
      %v1826 = vmul.f32 %v1825, 0.6931472
      %v1827 = vmul.f32 -0.5, %v1544
      %v1828 = vadd.f32 %v1827, 1.0
      %v1829 = vmul.f32 %v1828, %v1544
      %v1830 = vand.u32 2147483647, %v1544
      %vm1831 = vcmp.lt.f32.partialorder %v1830, 0.0004427343
      %v1832 = vsel %vm1831, %v1829, %v1826
      %v1833 = vsel %vm1417, %v1328, %v1553
      %v1834 = vsel %vm1418, %v1329, %v1562
      %v1835 = vsel %vm1419, %v1330, %v1571
      %v1836 = vsel %vm1420, %v1331, %v1580
      %v1837 = vsel %vm1421, %v1332, %v1589
      %v1838 = vsel %vm1422, %v1333, %v1598
      %v1839 = vsel %vm1423, %v1334, %v1607
      %v1840 = vsel %vm1424, %v1335, %v1616
      %v1841 = vsel %vm1425, %v1336, %v1625
      %v1842 = vsel %vm1426, %v1337, %v1634
      %v1843 = vsel %vm1427, %v1338, %v1643
      %v1844 = vsel %vm1428, %v1339, %v1652
      %v1845 = vsel %vm1429, %v1340, %v1661
      %v1846 = vsel %vm1430, %v1341, %v1670
      %v1847 = vsel %vm1431, %v1342, %v1679
      %v1848 = vsel %vm1432, %v1343, %v1688
      %v1849 = vsel %vm1433, %v1344, %v1697
      %v1850 = vsel %vm1434, %v1345, %v1706
      %v1851 = vsel %vm1435, %v1346, %v1715
      %v1852 = vsel %vm1436, %v1347, %v1724
      %v1853 = vsel %vm1437, %v1348, %v1733
      %v1854 = vsel %vm1438, %v1349, %v1742
      %v1855 = vsel %vm1439, %v1350, %v1751
      %v1856 = vsel %vm1440, %v1351, %v1760
      %v1857 = vsel %vm1441, %v1352, %v1769
      %v1858 = vsel %vm1442, %v1353, %v1778
      %v1859 = vsel %vm1443, %v1354, %v1787
      %v1860 = vsel %vm1444, %v1355, %v1796
      %v1861 = vsel %vm1445, %v1356, %v1805
      %v1862 = vsel %vm1446, %v1357, %v1814
      %v1863 = vsel %vm1447, %v1358, %v1823
      %v1864 = vsel %vm1448, %v1359, %v1832
      %v1865 = vtanh.pop %v1833
      %v1866 = vtanh.pop %v1834
      %v1867 = vtanh.pop %v1835
      %v1868 = vtanh.pop %v1836
      %v1869 = vtanh.pop %v1837
      %v1870 = vtanh.pop %v1838
      %v1871 = vtanh.pop %v1839
      %v1872 = vtanh.pop %v1840
      %v1873 = vtanh.pop %v1841
      %v1874 = vtanh.pop %v1842
      %v1875 = vtanh.pop %v1843
      %v1876 = vtanh.pop %v1844
      %v1877 = vtanh.pop %v1845
      %v1878 = vtanh.pop %v1846
      %v1879 = vtanh.pop %v1847
      %v1880 = vtanh.pop %v1848
      %v1881 = vtanh.pop %v1849
      %v1882 = vtanh.pop %v1850
      %v1883 = vtanh.pop %v1851
      %v1884 = vtanh.pop %v1852
      %v1885 = vtanh.pop %v1853
      %v1886 = vtanh.pop %v1854
      %v1887 = vtanh.pop %v1855
      %v1888 = vtanh.pop %v1856
      %v1889 = vtanh.pop %v1857
      %v1890 = vtanh.pop %v1858
      %v1891 = vtanh.pop %v1859
      %v1892 = vtanh.pop %v1860
      %v1893 = vtanh.pop %v1861
      %v1894 = vtanh.pop %v1862
      %v1895 = vtanh.pop %v1863
      %v1896 = vtanh.pop %v1864
      %v1897 = vmul.f32 %v1328, %v1865
      %v1898 = vmul.f32 %v1329, %v1866
      %v1899 = vmul.f32 %v1330, %v1867
      %v1900 = vmul.f32 %v1331, %v1868
      %v1901 = vmul.f32 %v1332, %v1869
      %v1902 = vmul.f32 %v1333, %v1870
      %v1903 = vmul.f32 %v1334, %v1871
      %v1904 = vmul.f32 %v1335, %v1872
      %v1905 = vmul.f32 %v1336, %v1873
      %v1906 = vmul.f32 %v1337, %v1874
      %v1907 = vmul.f32 %v1338, %v1875
      %v1908 = vmul.f32 %v1339, %v1876
      %v1909 = vmul.f32 %v1340, %v1877
      %v1910 = vmul.f32 %v1341, %v1878
      %v1911 = vmul.f32 %v1342, %v1879
      %v1912 = vmul.f32 %v1343, %v1880
      %v1913 = vmul.f32 %v1344, %v1881
      %v1914 = vmul.f32 %v1345, %v1882
      %v1915 = vmul.f32 %v1346, %v1883
      %v1916 = vmul.f32 %v1347, %v1884
      %v1917 = vmul.f32 %v1348, %v1885
      %v1918 = vmul.f32 %v1349, %v1886
      %v1919 = vmul.f32 %v1350, %v1887
      %v1920 = vmul.f32 %v1351, %v1888
      %v1921 = vmul.f32 %v1352, %v1889
      %v1922 = vmul.f32 %v1353, %v1890
      %v1923 = vmul.f32 %v1354, %v1891
      %v1924 = vmul.f32 %v1355, %v1892
      %v1925 = vmul.f32 %v1356, %v1893
      %v1926 = vmul.f32 %v1357, %v1894
      %v1927 = vmul.f32 %v1358, %v1895
      %v1928 = vmul.f32 %v1359, %v1896
      %vm1929 = vcmp.gt.f32.partialorder %v1409, 20.0
      %vm1930 = vcmp.gt.f32.partialorder %v1410, 20.0
      %vm1931 = vcmp.gt.f32.partialorder %v1411, 20.0
      %vm1932 = vcmp.gt.f32.partialorder %v1412, 20.0
      %vm1933 = vcmp.gt.f32.partialorder %v1413, 20.0
      %vm1934 = vcmp.gt.f32.partialorder %v1414, 20.0
      %vm1935 = vcmp.gt.f32.partialorder %v1415, 20.0
      %vm1936 = vcmp.gt.f32.partialorder %v1416, 20.0
      %v1937 = vmin.f32 %v1409, 20.0
      %v1938 = vmin.f32 %v1410, 20.0
      %v1939 = vmin.f32 %v1411, 20.0
      %v1940 = vmin.f32 %v1412, 20.0
      %v1941 = vmin.f32 %v1413, 20.0
      %v1942 = vmin.f32 %v1414, 20.0
      %v1943 = vmin.f32 %v1415, 20.0
      %v1944 = vmin.f32 %v1416, 20.0
      %v1945 = vmul.f32 %v1937, 1.442695
      %v1946 = vpow.pop %v1945
      %v1947 = vmul.f32 %v1938, 1.442695
      %v1948 = vpow.pop %v1947
      %v1949 = vmul.f32 %v1939, 1.442695
      %v1950 = vpow.pop %v1949
      %v1951 = vmul.f32 %v1940, 1.442695
      %v1952 = vpow.pop %v1951
      %v1953 = vmul.f32 %v1941, 1.442695
      %v1954 = vpow.pop %v1953
      %v1955 = vmul.f32 %v1942, 1.442695
      %v1956 = vpow.pop %v1955
      %v1957 = vmul.f32 %v1943, 1.442695
      %v1958 = vpow.pop %v1957
      %v1959 = vmul.f32 %v1944, 1.442695
      %v1960 = vpow.pop %v1959
      %v1961 = vadd.f32 %v1946, 1.0
      %v1962 = vlog2.pop %v1961
      %v1963 = vmul.f32 %v1962, 0.6931472
      %v1964 = vmul.f32 -0.5, %v1946
      %v1965 = vadd.f32 %v1964, 1.0
      %v1966 = vmul.f32 %v1965, %v1946
      %v1967 = vand.u32 2147483647, %v1946
      %vm1968 = vcmp.lt.f32.partialorder %v1967, 0.0004427343
      %v1969 = vsel %vm1968, %v1966, %v1963
      %v1970 = vadd.f32 %v1948, 1.0
      %v1971 = vlog2.pop %v1970
      %v1972 = vmul.f32 %v1971, 0.6931472
      %v1973 = vmul.f32 -0.5, %v1948
      %v1974 = vadd.f32 %v1973, 1.0
      %v1975 = vmul.f32 %v1974, %v1948
      %v1976 = vand.u32 2147483647, %v1948
      %vm1977 = vcmp.lt.f32.partialorder %v1976, 0.0004427343
      %v1978 = vsel %vm1977, %v1975, %v1972
      %v1979 = vadd.f32 %v1950, 1.0
      %v1980 = vlog2.pop %v1979
      %v1981 = vmul.f32 %v1980, 0.6931472
      %v1982 = vmul.f32 -0.5, %v1950
      %v1983 = vadd.f32 %v1982, 1.0
      %v1984 = vmul.f32 %v1983, %v1950
      %v1985 = vand.u32 2147483647, %v1950
      %vm1986 = vcmp.lt.f32.partialorder %v1985, 0.0004427343
      %v1987 = vsel %vm1986, %v1984, %v1981
      %v1988 = vadd.f32 %v1952, 1.0
      %v1989 = vlog2.pop %v1988
      %v1990 = vmul.f32 %v1989, 0.6931472
      %v1991 = vmul.f32 -0.5, %v1952
      %v1992 = vadd.f32 %v1991, 1.0
      %v1993 = vmul.f32 %v1992, %v1952
      %v1994 = vand.u32 2147483647, %v1952
      %vm1995 = vcmp.lt.f32.partialorder %v1994, 0.0004427343
      %v1996 = vsel %vm1995, %v1993, %v1990
      %v1997 = vadd.f32 %v1954, 1.0
      %v1998 = vlog2.pop %v1997
      %v1999 = vmul.f32 %v1998, 0.6931472
      %v2000 = vmul.f32 -0.5, %v1954
      %v2001 = vadd.f32 %v2000, 1.0
      %v2002 = vmul.f32 %v2001, %v1954
      %v2003 = vand.u32 2147483647, %v1954
      %vm2004 = vcmp.lt.f32.partialorder %v2003, 0.0004427343
      %v2005 = vsel %vm2004, %v2002, %v1999
      %v2006 = vadd.f32 %v1956, 1.0
      %v2007 = vlog2.pop %v2006
      %v2008 = vmul.f32 %v2007, 0.6931472
      %v2009 = vmul.f32 -0.5, %v1956
      %v2010 = vadd.f32 %v2009, 1.0
      %v2011 = vmul.f32 %v2010, %v1956
      %v2012 = vand.u32 2147483647, %v1956
      %vm2013 = vcmp.lt.f32.partialorder %v2012, 0.0004427343
      %v2014 = vsel %vm2013, %v2011, %v2008
      %v2015 = vadd.f32 %v1958, 1.0
      %v2016 = vlog2.pop %v2015
      %v2017 = vmul.f32 %v2016, 0.6931472
      %v2018 = vmul.f32 -0.5, %v1958
      %v2019 = vadd.f32 %v2018, 1.0
      %v2020 = vmul.f32 %v2019, %v1958
      %v2021 = vand.u32 2147483647, %v1958
      %vm2022 = vcmp.lt.f32.partialorder %v2021, 0.0004427343
      %v2023 = vsel %vm2022, %v2020, %v2017
      %v2024 = vadd.f32 %v1960, 1.0
      %v2025 = vlog2.pop %v2024
      %v2026 = vmul.f32 %v2025, 0.6931472
      %v2027 = vmul.f32 -0.5, %v1960
      %v2028 = vadd.f32 %v2027, 1.0
      %v2029 = vmul.f32 %v2028, %v1960
      %v2030 = vand.u32 2147483647, %v1960
      %vm2031 = vcmp.lt.f32.partialorder %v2030, 0.0004427343
      %v2032 = vsel %vm2031, %v2029, %v2026
      %v2033 = vsel %vm1929, %v1409, %v1969
      %v2034 = vsel %vm1930, %v1410, %v1978
      %v2035 = vsel %vm1931, %v1411, %v1987
      %v2036 = vsel %vm1932, %v1412, %v1996
      %v2037 = vsel %vm1933, %v1413, %v2005
      %v2038 = vsel %vm1934, %v1414, %v2014
      %v2039 = vsel %vm1935, %v1415, %v2023
      %v2040 = vsel %vm1936, %v1416, %v2032
      %v2041 = vtanh.pop %v2033
      %v2042 = vtanh.pop %v2034
      %v2043 = vtanh.pop %v2035
      %v2044 = vtanh.pop %v2036
      %v2045 = vtanh.pop %v2037
      %v2046 = vtanh.pop %v2038
      %v2047 = vtanh.pop %v2039
      %v2048 = vtanh.pop %v2040
      %v2049 = vmul.f32 %v1409, %v2041
      %v2050 = vmul.f32 %v1410, %v2042
      %v2051 = vmul.f32 %v1411, %v2043
      %v2052 = vmul.f32 %v1412, %v2044
      %v2053 = vmul.f32 %v1413, %v2045
      %v2054 = vmul.f32 %v1414, %v2046
      %v2055 = vmul.f32 %v1415, %v2047
      %v2056 = vmul.f32 %v1416, %v2048
      %v2057 = vpack.c.bf16 %v1898, %v1897
      %v2058 = vpack.c.bf16 %v1900, %v1899
      %v2059 = vpack.c.bf16 %v1902, %v1901
      %v2060 = vpack.c.bf16 %v1904, %v1903
      %v2061 = vpack.c.bf16 %v1906, %v1905
      %v2062 = vpack.c.bf16 %v1908, %v1907
      %v2063 = vpack.c.bf16 %v1910, %v1909
      %v2064 = vpack.c.bf16 %v1912, %v1911
      %v2065 = vpack.c.bf16 %v1914, %v1913
      %v2066 = vpack.c.bf16 %v1916, %v1915
      %v2067 = vpack.c.bf16 %v1918, %v1917
      %v2068 = vpack.c.bf16 %v1920, %v1919
      %v2069 = vpack.c.bf16 %v1922, %v1921
      %v2070 = vpack.c.bf16 %v1924, %v1923
      %v2071 = vpack.c.bf16 %v1926, %v1925
      %v2072 = vpack.c.bf16 %v1928, %v1927
      %v2089 = vunpack.c.l.b16 %v2057
      %v2090 = vunpack.c.h.b16 %v2057
      %v2091 = vunpack.c.l.b16 %v2058
      %v2092 = vunpack.c.h.b16 %v2058
      %v2093 = vunpack.c.l.b16 %v2059
      %v2094 = vunpack.c.h.b16 %v2059
      %v2095 = vunpack.c.l.b16 %v2060
      %v2096 = vunpack.c.h.b16 %v2060
      %v2097 = vunpack.c.l.b16 %v2061
      %v2098 = vunpack.c.h.b16 %v2061
      %v2099 = vunpack.c.l.b16 %v2062
      %v2100 = vunpack.c.h.b16 %v2062
      %v2101 = vunpack.c.l.b16 %v2063
      %v2102 = vunpack.c.h.b16 %v2063
      %v2103 = vunpack.c.l.b16 %v2064
      %v2104 = vunpack.c.h.b16 %v2064
      %v2105 = vunpack.c.l.b16 %v2065
      %v2106 = vunpack.c.h.b16 %v2065
      %v2107 = vunpack.c.l.b16 %v2066
      %v2108 = vunpack.c.h.b16 %v2066
      %v2109 = vunpack.c.l.b16 %v2067
      %v2110 = vunpack.c.h.b16 %v2067
      %v2111 = vunpack.c.l.b16 %v2068
      %v2112 = vunpack.c.h.b16 %v2068
      %v2113 = vunpack.c.l.b16 %v2069
      %v2114 = vunpack.c.h.b16 %v2069
      %v2115 = vunpack.c.l.b16 %v2070
      %v2116 = vunpack.c.h.b16 %v2070
      %v2117 = vunpack.c.l.b16 %v2071
      %v2118 = vunpack.c.h.b16 %v2071
      %v2119 = vunpack.c.l.b16 %v2072
      %v2120 = vunpack.c.h.b16 %v2072
      %v2121 = vpack.c.b16 %v2089, %v2089
      %v2122 = vpack.c.b16 %v2090, %v2090
      %v2123 = vpack.c.b16 %v2091, %v2091
      %v2124 = vpack.c.b16 %v2092, %v2092
      %v2125 = vpack.c.b16 %v2093, %v2093
      %v2126 = vpack.c.b16 %v2094, %v2094
      %v2127 = vpack.c.b16 %v2095, %v2095
      %v2128 = vpack.c.b16 %v2096, %v2096
      %v2129 = vpack.c.b16 %v2097, %v2097
      %v2130 = vpack.c.b16 %v2098, %v2098
      %v2131 = vpack.c.b16 %v2099, %v2099
      %v2132 = vpack.c.b16 %v2100, %v2100
      %v2133 = vpack.c.b16 %v2101, %v2101
      %v2134 = vpack.c.b16 %v2102, %v2102
      %v2135 = vpack.c.b16 %v2103, %v2103
      %v2136 = vpack.c.b16 %v2104, %v2104
      %v2137 = vpack.c.b16 %v2105, %v2105
      %v2138 = vpack.c.b16 %v2106, %v2106
      %v2139 = vpack.c.b16 %v2107, %v2107
      %v2140 = vpack.c.b16 %v2108, %v2108
      %v2141 = vpack.c.b16 %v2109, %v2109
      %v2142 = vpack.c.b16 %v2110, %v2110
      %v2143 = vpack.c.b16 %v2111, %v2111
      %v2144 = vpack.c.b16 %v2112, %v2112
      %v2145 = vpack.c.b16 %v2113, %v2113
      %v2146 = vpack.c.b16 %v2114, %v2114
      %v2147 = vpack.c.b16 %v2115, %v2115
      %v2148 = vpack.c.b16 %v2116, %v2116
      %v2149 = vpack.c.b16 %v2117, %v2117
      %v2150 = vpack.c.b16 %v2118, %v2118
      %v2151 = vpack.c.b16 %v2119, %v2119
      %v2152 = vpack.c.b16 %v2120, %v2120
      %vm2185 = vcmask 27648
      %2186 = vst.msk [vmem:[%s413] sm:$0xf] %vm2185, %v2121
      %2187 = vst.msk [vmem:[%s413 + $0x4] sm:$0xf] %vm2185, %v2122
      %2188 = vst.msk [vmem:[%s413 + $0x8] sm:$0xf] %vm2185, %v2123
      %2189 = vst.msk [vmem:[%s413 + $0xc] sm:$0xf] %vm2185, %v2124
      %2190 = vst.msk [vmem:[%s413 + $0x10] sm:$0xf] %vm2185, %v2125
      %2191 = vst.msk [vmem:[%s413 + $0x14] sm:$0xf] %vm2185, %v2126
      %2192 = vst.msk [vmem:[%s413 + $0x18] sm:$0xf] %vm2185, %v2127
      %2193 = vst.msk [vmem:[%s413 + $0x1c] sm:$0xf] %vm2185, %v2128
      %2194 = vst.msk [vmem:[%s413 + $0x20] sm:$0xf] %vm2185, %v2129
      %2195 = vst.msk [vmem:[%s413 + $0x24] sm:$0xf] %vm2185, %v2130
      %2196 = vst.msk [vmem:[%s413 + $0x28] sm:$0xf] %vm2185, %v2131
      %2197 = vst.msk [vmem:[%s413 + $0x2c] sm:$0xf] %vm2185, %v2132
      %2198 = vst.msk [vmem:[%s413 + $0x30] sm:$0xf] %vm2185, %v2133
      %2199 = vst.msk [vmem:[%s413 + $0x34] sm:$0xf] %vm2185, %v2134
      %2200 = vst.msk [vmem:[%s413 + $0x38] sm:$0xf] %vm2185, %v2135
      %2201 = vst.msk [vmem:[%s413 + $0x3c] sm:$0xf] %vm2185, %v2136
      %2202 = vst.msk [vmem:[%s413 + $0x40] sm:$0xf] %vm2185, %v2137
      %2203 = vst.msk [vmem:[%s413 + $0x44] sm:$0xf] %vm2185, %v2138
      %2204 = vst.msk [vmem:[%s413 + $0x48] sm:$0xf] %vm2185, %v2139
      %2205 = vst.msk [vmem:[%s413 + $0x4c] sm:$0xf] %vm2185, %v2140
      %2206 = vst.msk [vmem:[%s413 + $0x50] sm:$0xf] %vm2185, %v2141
      %2207 = vst.msk [vmem:[%s413 + $0x54] sm:$0xf] %vm2185, %v2142
      %2208 = vst.msk [vmem:[%s413 + $0x58] sm:$0xf] %vm2185, %v2143
      %2209 = vst.msk [vmem:[%s413 + $0x5c] sm:$0xf] %vm2185, %v2144
      %2210 = vst.msk [vmem:[%s413 + $0x60] sm:$0xf] %vm2185, %v2145
      %2211 = vst.msk [vmem:[%s413 + $0x64] sm:$0xf] %vm2185, %v2146
      %2212 = vst.msk [vmem:[%s413 + $0x68] sm:$0xf] %vm2185, %v2147
      %2213 = vst.msk [vmem:[%s413 + $0x6c] sm:$0xf] %vm2185, %v2148
      %2214 = vst.msk [vmem:[%s413 + $0x70] sm:$0xf] %vm2185, %v2149
      %2215 = vst.msk [vmem:[%s413 + $0x74] sm:$0xf] %vm2185, %v2150
      %2216 = vst.msk [vmem:[%s413 + $0x78] sm:$0xf] %vm2185, %v2151
      %2217 = vst.msk [vmem:[%s413 + $0x7c] sm:$0xf] %vm2185, %v2152
      %v2218 = vpack.c.bf16 %v2050, %v2049
      %v2219 = vpack.c.bf16 %v2052, %v2051
      %v2220 = vpack.c.bf16 %v2054, %v2053
      %v2221 = vpack.c.bf16 %v2056, %v2055
      %v2226 = vunpack.c.l.b16 %v2218
      %v2227 = vunpack.c.h.b16 %v2218
      %v2228 = vunpack.c.l.b16 %v2219
      %v2229 = vunpack.c.h.b16 %v2219
      %v2230 = vunpack.c.l.b16 %v2220
      %v2231 = vunpack.c.h.b16 %v2220
      %v2232 = vunpack.c.l.b16 %v2221
      %v2233 = vunpack.c.h.b16 %v2221
      %v2234 = vpack.c.b16 %v2226, %v2226
      %v2235 = vpack.c.b16 %v2227, %v2227
      %v2236 = vpack.c.b16 %v2228, %v2228
      %v2237 = vpack.c.b16 %v2229, %v2229
      %v2238 = vpack.c.b16 %v2230, %v2230
      %v2239 = vpack.c.b16 %v2231, %v2231
      %v2240 = vpack.c.b16 %v2232, %v2232
      %v2241 = vpack.c.b16 %v2233, %v2233
      %2242 = vrot.lane.b32.xlu0 %v2234, 124
      %v2243 = vpop.permute.xlu0 %2242
      %2244 = vrot.lane.b32.xlu0 %v2235, 124
      %v2245 = vpop.permute.xlu0 %2244
      %2246 = vrot.lane.b32.xlu0 %v2236, 124
      %v2247 = vpop.permute.xlu0 %2246
      %2248 = vrot.lane.b32.xlu0 %v2237, 124
      %v2249 = vpop.permute.xlu0 %2248
      %2250 = vrot.lane.b32.xlu0 %v2238, 124
      %v2251 = vpop.permute.xlu0 %2250
      %2252 = vrot.lane.b32.xlu0 %v2239, 124
      %v2253 = vpop.permute.xlu0 %2252
      %2254 = vrot.lane.b32.xlu0 %v2240, 124
      %v2255 = vpop.permute.xlu0 %2254
      %2256 = vrot.lane.b32.xlu0 %v2241, 124
      %v2257 = vpop.permute.xlu0 %2256
      %2266 = vst.msk [vmem:[%s419] sm:$0xf] %vm2185, %v2243
      %2267 = vst.msk [vmem:[%s419 + $0x4] sm:$0xf] %vm2185, %v2245
      %2268 = vst.msk [vmem:[%s419 + $0x8] sm:$0xf] %vm2185, %v2247
      %2269 = vst.msk [vmem:[%s419 + $0xc] sm:$0xf] %vm2185, %v2249
      %2270 = vst.msk [vmem:[%s419 + $0x10] sm:$0xf] %vm2185, %v2251
      %2271 = vst.msk [vmem:[%s419 + $0x14] sm:$0xf] %vm2185, %v2253
      %2272 = vst.msk [vmem:[%s419 + $0x18] sm:$0xf] %vm2185, %v2255
      %2273 = vst.msk [vmem:[%s419 + $0x1c] sm:$0xf] %vm2185, %v2257
      %s2274 = smul.u32 32, %s22
      %p2275 = scmp.lt.s32.totalorder %s2274, 63
      %s2276 = scalar_select %p2275, %s2274, 63
      %s2277 = smul.addr %s2276, 4
      %s2278 = scalar_lea.vmem %s9, %s2277
      %s2279 = smul.u32 8, %s22
      %p2280 = scmp.lt.s32.totalorder %s2279, 15
      %s2281 = scalar_select %p2280, %s2279, 15
      %s2282 = smul.addr %s2281, 4
      %s2283 = scalar_lea.vmem %s10, %s2282
      // Predicated region
      $region57: #{bottleneck_forward.3} parent=55 // pred_check
        %p2284 = pneg %p244
      $region58: #{bottleneck_forward.3} parent=55 // pred_check_branch
        %2286 = sbr.rel (%p2284) target = $region60
      $region59: #{bottleneck_forward.3} parent=55 // pred_region
        %s2287 = smul.u32 32, %s22
      $region60: #{bottleneck_forward.3} parent=55 // pred_fallthru
        _
      // Predicated region
      $region61: #{bottleneck_forward.3} parent=55 // pred_check
        %p2288 = pneg %p270
      $region62: #{bottleneck_forward.3} parent=55 // pred_check_branch
        %2290 = sbr.rel (%p2288) target = $region64
      $region63: #{bottleneck_forward.3} parent=55 // pred_region
        %s2291 = smul.u32 8, %s22
      $region64: #{bottleneck_forward.3} parent=55 // pred_fallthru
        _
    $region56: #{bottleneck_forward.3} parent=5 // pred_fallthru
      _
    %p2292 = scmp.le.s32.totalorder 2, %s17
    // Predicated region
    $region65: #{bottleneck_forward.3} parent=5 // pred_check
      %p2293 = pneg %p2292
    $region66: #{bottleneck_forward.3} parent=5 // pred_check_branch
      %2295 = sbr.rel (%p2293) target = $region68
    $region67: #{bottleneck_forward.3} parent=5 // pred_region
      %s2296 = ssub.s32 %s17, 2
      // Predicated region
      $region69: #{bottleneck_forward.3} parent=67 // pred_check
        %p2297 = pneg %p250
      $region70: #{bottleneck_forward.3} parent=67 // pred_check_branch
        %2299 = sbr.rel (%p2297) target = $region72
      $region71: #{bottleneck_forward.3} parent=67 // pred_region
        %s2300 = smul.u32 32, %s23
        %p2301 = scmp.lt.s32.totalorder %s2300, 63
        %s2302 = scalar_select %p2301, %s2300, 63
        %s2303 = smul.addr %s2302, 4
        %s2304 = scalar_lea.vmem %s9, %s2303
      $region72: #{bottleneck_forward.3} parent=67 // pred_fallthru
        _
      // Predicated region
      $region73: #{bottleneck_forward.3} parent=67 // pred_check
        %p2305 = pneg %p276
      $region74: #{bottleneck_forward.3} parent=67 // pred_check_branch
        %2307 = sbr.rel (%p2305) target = $region76
      $region75: #{bottleneck_forward.3} parent=67 // pred_region
        %s2308 = smul.u32 8, %s23
        %p2309 = scmp.lt.s32.totalorder %s2308, 15
        %s2310 = scalar_select %p2309, %s2308, 15
        %s2311 = smul.addr %s2310, 4
        %s2312 = scalar_lea.vmem %s10, %s2311
      $region76: #{bottleneck_forward.3} parent=67 // pred_fallthru
        _
    $region68: #{bottleneck_forward.3} parent=5 // pred_fallthru
      _
  $region6: #{bottleneck_forward.3} parent=0 // loop_footer
    %s21 = sadd.s32 1, %s17
  $region7: #{bottleneck_forward.3} parent=0 // loop_footer_branch
    %16 = sbr.rel target = $region3
  $region8: #{bottleneck_forward.3} parent=0 // loop_exit
    _

// kernel: bottleneck_forward.4
$region0: #{bottleneck_forward.4}
  #allocation0 [shape = 'u32[]', space=smem, size = 0x4, offset = 0x4, fixed_abs, tag = 'smem constant byte address 0x4 - core index']
  #allocation1 [shape = 'u32[144,128]{1,0:T(1,128)}', space=vmem, size = 0x12000, scoped, tag = 'internal scratch']
  %s0 = inlined_call_operand.vmem [shape: bf16[512,36], index: 0, kind: input, shape index: {}]
  %s1 = inlined_call_operand.vmem [shape: bf16[128,36], index: 1, kind: input, shape index: {}]
  %s2 = inlined_call_operand.vmem [shape: bf16[128,36], index: 2, kind: input, shape index: {}]
  %s3 = inlined_call_operand.vmem [shape: f32[256,64], index: 3, kind: input, shape index: {}]
  %s4 = inlined_call_operand.vmem [shape: bf16[36,4], index: 4, kind: input, shape index: {}]
  %s5 = inlined_call_operand.vmem [shape: bf16[36,8], index: 5, kind: input, shape index: {}]
  %s6 = inlined_call_operand.vmem [shape: bf16[36,4], index: 6, kind: input, shape index: {}]
  %s7 = inlined_call_operand.vmem [shape: f32[1,4], index: 7, kind: input, shape index: {}]
  %s8 = inlined_call_operand.vmem [shape: f32[1,4], index: 8, kind: input, shape index: {}]
  %s9 = inlined_call_operand.vmem [shape: bf16[512,4], index: 9, kind: output, shape index: {0}]
  %s10 = inlined_call_operand.vmem [shape: bf16[128,4], index: 10, kind: output, shape index: {1}]
  %11 = xla_tuple %s9, %s10
  %s12 = sld [smem:[#allocation0]]
  $region77: #{bottleneck_forward.4} parent=0
    _
  %s14 = ssub.s32 1, %s12
  %s15 = scalar_select 0, %s14, %s12
  loop: start=0, step=1, limit=4
  $region2: #{bottleneck_forward.4} parent=0 // loop_pre_header
    _
  $region3: #{bottleneck_forward.4} parent=0 // loop_header
    %s17 = sphi 0, %s21
    %p18 = scmp.ge.s32.totalorder %s17, 4
    %s27 = sphi 0, %s29
    %s30 = sphi 0, %s27
    %s31 = sphi 0, %s30
    %s47 = sphi 0, %s31
    %s53 = sphi 0, %s55
    %s56 = sphi 0, %s53
    %s57 = sphi 0, %s56
    %s73 = sphi 0, %s57
    %s79 = sphi 0, %s81
    %s82 = sphi 0, %s79
    %s83 = sphi 0, %s82
    %s99 = sphi 0, %s83
    %s103 = sphi 0, %s103
    %s105 = sphi 0, %s103
    %s106 = sphi 0, %s105
    %s120 = sphi 0, %s106
    %s124 = sphi 0, %s124
    %s126 = sphi 0, %s124
    %s127 = sphi 0, %s126
    %s141 = sphi 0, %s127
    %s145 = sphi 0, %s145
    %s147 = sphi 0, %s145
    %s148 = sphi 0, %s147
    %s162 = sphi 0, %s148
    %s166 = sphi 0, %s166
    %s168 = sphi 0, %s166
    %s169 = sphi 0, %s168
    %s183 = sphi 0, %s169
    %s187 = sphi 0, %s187
    %s189 = sphi 0, %s187
    %s190 = sphi 0, %s189
    %s204 = sphi 0, %s190
    %s208 = sphi 0, %s208
    %s210 = sphi 0, %s208
    %s211 = sphi 0, %s210
    %s225 = sphi 0, %s211
    %s231 = sphi 0, %s233
    %s234 = sphi 0, %s231
    %s235 = sphi 0, %s234
    %s251 = sphi 0, %s235
    %s257 = sphi 0, %s259
    %s260 = sphi 0, %s257
    %s261 = sphi 0, %s260
    %s277 = sphi 0, %s261
  $region4: #{bottleneck_forward.4} parent=0 // loop_header_branch
    %20 = sbr.rel (%p18) target = $region8
  $region5: #{bottleneck_forward.4} parent=0 // loop_body
    %s22 = ssub.s32 %s17, 1
    %s23 = ssub.s32 %s17, 2
    %s24 = sadd.s32 %s17, 1
    %s25 = ssub.s32 %s17, %s24
    %p26 = scmp.eq.s32.totalorder %s25, 0
    %s28 = sadd.s32 %s27, 1
    %s29 = scalar_select %p26, %s27, %s28
    %p32 = pneg %p26
    %p33 = scmp.eq.s32.totalorder %s17, 1
    %p34 = por %p32, %p33
    %p35 = scmp.ne.s32.totalorder %s27, %s30
    %p36 = scmp.eq.s32.totalorder %s17, 0
    %p37 = por %p35, %p36
    %p38 = scmp.ne.s32.totalorder %s27, %s30
    %p39 = scmp.eq.s32.totalorder %s22, 1
    %p40 = por %p38, %p39
    %p41 = scmp.ne.s32.totalorder %s30, %s31
    %p42 = scmp.eq.s32.totalorder %s22, 0
    %p43 = por %p41, %p42
    %p44 = scmp.ne.s32.totalorder %s30, %s31
    %p45 = scmp.eq.s32.totalorder %s23, 1
    %p46 = por %p44, %p45
    %p48 = scmp.ne.s32.totalorder %s31, %s47
    %p49 = scmp.eq.s32.totalorder %s23, 0
    %p50 = por %p48, %p49
    %s51 = ssub.s32 %s17, %s24
    %p52 = scmp.eq.s32.totalorder %s51, 0
    %s54 = sadd.s32 %s53, 1
    %s55 = scalar_select %p52, %s53, %s54
    %p58 = pneg %p52
    %p59 = scmp.eq.s32.totalorder %s17, 1
    %p60 = por %p58, %p59
    %p61 = scmp.ne.s32.totalorder %s53, %s56
    %p62 = scmp.eq.s32.totalorder %s17, 0
    %p63 = por %p61, %p62
    %p64 = scmp.ne.s32.totalorder %s53, %s56
    %p65 = scmp.eq.s32.totalorder %s22, 1
    %p66 = por %p64, %p65
    %p67 = scmp.ne.s32.totalorder %s56, %s57
    %p68 = scmp.eq.s32.totalorder %s22, 0
    %p69 = por %p67, %p68
    %p70 = scmp.ne.s32.totalorder %s56, %s57
    %p71 = scmp.eq.s32.totalorder %s23, 1
    %p72 = por %p70, %p71
    %p74 = scmp.ne.s32.totalorder %s57, %s73
    %p75 = scmp.eq.s32.totalorder %s23, 0
    %p76 = por %p74, %p75
    %s77 = ssub.s32 %s17, %s24
    %p78 = scmp.eq.s32.totalorder %s77, 0
    %s80 = sadd.s32 %s79, 1
    %s81 = scalar_select %p78, %s79, %s80
    %p84 = pneg %p78
    %p85 = scmp.eq.s32.totalorder %s17, 1
    %p86 = por %p84, %p85
    %p87 = scmp.ne.s32.totalorder %s79, %s82
    %p88 = scmp.eq.s32.totalorder %s17, 0
    %p89 = por %p87, %p88
    %p90 = scmp.ne.s32.totalorder %s79, %s82
    %p91 = scmp.eq.s32.totalorder %s22, 1
    %p92 = por %p90, %p91
    %p93 = scmp.ne.s32.totalorder %s82, %s83
    %p94 = scmp.eq.s32.totalorder %s22, 0
    %p95 = por %p93, %p94
    %p96 = scmp.ne.s32.totalorder %s82, %s83
    %p97 = scmp.eq.s32.totalorder %s23, 1
    %p98 = por %p96, %p97
    %p100 = scmp.ne.s32.totalorder %s83, %s99
    %p101 = scmp.eq.s32.totalorder %s23, 0
    %p102 = por %p100, %p101
    %s104 = sadd.s32 %s103, 1
    %p107 = scmp.eq.s32.totalorder %s17, 1
    %p108 = scmp.ne.s32.totalorder %s103, %s105
    %p109 = scmp.eq.s32.totalorder %s17, 0
    %p110 = por %p108, %p109
    %p111 = scmp.ne.s32.totalorder %s103, %s105
    %p112 = scmp.eq.s32.totalorder %s22, 1
    %p113 = por %p111, %p112
    %p114 = scmp.ne.s32.totalorder %s105, %s106
    %p115 = scmp.eq.s32.totalorder %s22, 0
    %p116 = por %p114, %p115
    %p117 = scmp.ne.s32.totalorder %s105, %s106
    %p118 = scmp.eq.s32.totalorder %s23, 1
    %p119 = por %p117, %p118
    %p121 = scmp.ne.s32.totalorder %s106, %s120
    %p122 = scmp.eq.s32.totalorder %s23, 0
    %p123 = por %p121, %p122
    %s125 = sadd.s32 %s124, 1
    %p128 = scmp.eq.s32.totalorder %s17, 1
    %p129 = scmp.ne.s32.totalorder %s124, %s126
    %p130 = scmp.eq.s32.totalorder %s17, 0
    %p131 = por %p129, %p130
    %p132 = scmp.ne.s32.totalorder %s124, %s126
    %p133 = scmp.eq.s32.totalorder %s22, 1
    %p134 = por %p132, %p133
    %p135 = scmp.ne.s32.totalorder %s126, %s127
    %p136 = scmp.eq.s32.totalorder %s22, 0
    %p137 = por %p135, %p136
    %p138 = scmp.ne.s32.totalorder %s126, %s127
    %p139 = scmp.eq.s32.totalorder %s23, 1
    %p140 = por %p138, %p139
    %p142 = scmp.ne.s32.totalorder %s127, %s141
    %p143 = scmp.eq.s32.totalorder %s23, 0
    %p144 = por %p142, %p143
    %s146 = sadd.s32 %s145, 1
    %p149 = scmp.eq.s32.totalorder %s17, 1
    %p150 = scmp.ne.s32.totalorder %s145, %s147
    %p151 = scmp.eq.s32.totalorder %s17, 0
    %p152 = por %p150, %p151
    %p153 = scmp.ne.s32.totalorder %s145, %s147
    %p154 = scmp.eq.s32.totalorder %s22, 1
    %p155 = por %p153, %p154
    %p156 = scmp.ne.s32.totalorder %s147, %s148
    %p157 = scmp.eq.s32.totalorder %s22, 0
    %p158 = por %p156, %p157
    %p159 = scmp.ne.s32.totalorder %s147, %s148
    %p160 = scmp.eq.s32.totalorder %s23, 1
    %p161 = por %p159, %p160
    %p163 = scmp.ne.s32.totalorder %s148, %s162
    %p164 = scmp.eq.s32.totalorder %s23, 0
    %p165 = por %p163, %p164
    %s167 = sadd.s32 %s166, 1
    %p170 = scmp.eq.s32.totalorder %s17, 1
    %p171 = scmp.ne.s32.totalorder %s166, %s168
    %p172 = scmp.eq.s32.totalorder %s17, 0
    %p173 = por %p171, %p172
    %p174 = scmp.ne.s32.totalorder %s166, %s168
    %p175 = scmp.eq.s32.totalorder %s22, 1
    %p176 = por %p174, %p175
    %p177 = scmp.ne.s32.totalorder %s168, %s169
    %p178 = scmp.eq.s32.totalorder %s22, 0
    %p179 = por %p177, %p178
    %p180 = scmp.ne.s32.totalorder %s168, %s169
    %p181 = scmp.eq.s32.totalorder %s23, 1
    %p182 = por %p180, %p181
    %p184 = scmp.ne.s32.totalorder %s169, %s183
    %p185 = scmp.eq.s32.totalorder %s23, 0
    %p186 = por %p184, %p185
    %s188 = sadd.s32 %s187, 1
    %p191 = scmp.eq.s32.totalorder %s17, 1
    %p192 = scmp.ne.s32.totalorder %s187, %s189
    %p193 = scmp.eq.s32.totalorder %s17, 0
    %p194 = por %p192, %p193
    %p195 = scmp.ne.s32.totalorder %s187, %s189
    %p196 = scmp.eq.s32.totalorder %s22, 1
    %p197 = por %p195, %p196
    %p198 = scmp.ne.s32.totalorder %s189, %s190
    %p199 = scmp.eq.s32.totalorder %s22, 0
    %p200 = por %p198, %p199
    %p201 = scmp.ne.s32.totalorder %s189, %s190
    %p202 = scmp.eq.s32.totalorder %s23, 1
    %p203 = por %p201, %p202
    %p205 = scmp.ne.s32.totalorder %s190, %s204
    %p206 = scmp.eq.s32.totalorder %s23, 0
    %p207 = por %p205, %p206
    %s209 = sadd.s32 %s208, 1
    %p212 = scmp.eq.s32.totalorder %s17, 1
    %p213 = scmp.ne.s32.totalorder %s208, %s210
    %p214 = scmp.eq.s32.totalorder %s17, 0
    %p215 = por %p213, %p214
    %p216 = scmp.ne.s32.totalorder %s208, %s210
    %p217 = scmp.eq.s32.totalorder %s22, 1
    %p218 = por %p216, %p217
    %p219 = scmp.ne.s32.totalorder %s210, %s211
    %p220 = scmp.eq.s32.totalorder %s22, 0
    %p221 = por %p219, %p220
    %p222 = scmp.ne.s32.totalorder %s210, %s211
    %p223 = scmp.eq.s32.totalorder %s23, 1
    %p224 = por %p222, %p223
    %p226 = scmp.ne.s32.totalorder %s211, %s225
    %p227 = scmp.eq.s32.totalorder %s23, 0
    %p228 = por %p226, %p227
    %s229 = ssub.s32 %s17, %s24
    %p230 = scmp.eq.s32.totalorder %s229, 0
    %s232 = sadd.s32 %s231, 1
    %s233 = scalar_select %p230, %s231, %s232
    %p236 = pneg %p230
    %p237 = scmp.eq.s32.totalorder %s17, 1
    %p238 = por %p236, %p237
    %p239 = scmp.ne.s32.totalorder %s231, %s234
    %p240 = scmp.eq.s32.totalorder %s17, 0
    %p241 = por %p239, %p240
    %p242 = scmp.ne.s32.totalorder %s231, %s234
    %p243 = scmp.eq.s32.totalorder %s22, 1
    %p244 = por %p242, %p243
    %p245 = scmp.ne.s32.totalorder %s234, %s235
    %p246 = scmp.eq.s32.totalorder %s22, 0
    %p247 = por %p245, %p246
    %p248 = scmp.ne.s32.totalorder %s234, %s235
    %p249 = scmp.eq.s32.totalorder %s23, 1
    %p250 = por %p248, %p249
    %p252 = scmp.ne.s32.totalorder %s235, %s251
    %p253 = scmp.eq.s32.totalorder %s23, 0
    %p254 = por %p252, %p253
    %s255 = ssub.s32 %s17, %s24
    %p256 = scmp.eq.s32.totalorder %s255, 0
    %s258 = sadd.s32 %s257, 1
    %s259 = scalar_select %p256, %s257, %s258
    %p262 = pneg %p256
    %p263 = scmp.eq.s32.totalorder %s17, 1
    %p264 = por %p262, %p263
    %p265 = scmp.ne.s32.totalorder %s257, %s260
    %p266 = scmp.eq.s32.totalorder %s17, 0
    %p267 = por %p265, %p266
    %p268 = scmp.ne.s32.totalorder %s257, %s260
    %p269 = scmp.eq.s32.totalorder %s22, 1
    %p270 = por %p268, %p269
    %p271 = scmp.ne.s32.totalorder %s260, %s261
    %p272 = scmp.eq.s32.totalorder %s22, 0
    %p273 = por %p271, %p272
    %p274 = scmp.ne.s32.totalorder %s260, %s261
    %p275 = scmp.eq.s32.totalorder %s23, 1
    %p276 = por %p274, %p275
    %p278 = scmp.ne.s32.totalorder %s261, %s277
    %p279 = scmp.eq.s32.totalorder %s23, 0
    %p280 = por %p278, %p279
    %p281 = scmp.le.s32.totalorder 1, %s17
    %p282 = scmp.lt.s32.totalorder %s17, 3
    %p283 = pnand %p281, %p282
    %p284 = pneg %p283
    // Predicated region
    $region9: #{bottleneck_forward.4} parent=5 // pred_check
      _
    $region10: #{bottleneck_forward.4} parent=5 // pred_check_branch
      %286 = sbr.rel (%p283) target = $region12
    $region11: #{bottleneck_forward.4} parent=5 // pred_region
      %s287 = ssub.s32 %s17, 1
      // Predicated region
      $region13: #{bottleneck_forward.4} parent=11 // pred_check
        %p288 = pneg %p116
      $region14: #{bottleneck_forward.4} parent=11 // pred_check_branch
        %290 = sbr.rel (%p288) target = $region16
      $region15: #{bottleneck_forward.4} parent=11 // pred_region
        _
      $region16: #{bottleneck_forward.4} parent=11 // pred_fallthru
        _
      // Predicated region
      $region17: #{bottleneck_forward.4} parent=11 // pred_check
        %p291 = pneg %p137
      $region18: #{bottleneck_forward.4} parent=11 // pred_check_branch
        %293 = sbr.rel (%p291) target = $region20
      $region19: #{bottleneck_forward.4} parent=11 // pred_region
        _
      $region20: #{bottleneck_forward.4} parent=11 // pred_fallthru
        _
      // Predicated region
      $region21: #{bottleneck_forward.4} parent=11 // pred_check
        %p294 = pneg %p158
      $region22: #{bottleneck_forward.4} parent=11 // pred_check_branch
        %296 = sbr.rel (%p294) target = $region24
      $region23: #{bottleneck_forward.4} parent=11 // pred_region
        _
      $region24: #{bottleneck_forward.4} parent=11 // pred_fallthru
        _
      // Predicated region
      $region25: #{bottleneck_forward.4} parent=11 // pred_check
        %p297 = pneg %p179
      $region26: #{bottleneck_forward.4} parent=11 // pred_check_branch
        %299 = sbr.rel (%p297) target = $region28
      $region27: #{bottleneck_forward.4} parent=11 // pred_region
        _
      $region28: #{bottleneck_forward.4} parent=11 // pred_fallthru
        _
      // Predicated region
      $region29: #{bottleneck_forward.4} parent=11 // pred_check
        %p300 = pneg %p200
      $region30: #{bottleneck_forward.4} parent=11 // pred_check_branch
        %302 = sbr.rel (%p300) target = $region32
      $region31: #{bottleneck_forward.4} parent=11 // pred_region
        _
      $region32: #{bottleneck_forward.4} parent=11 // pred_fallthru
        _
      // Predicated region
      $region33: #{bottleneck_forward.4} parent=11 // pred_check
        %p303 = pneg %p221
      $region34: #{bottleneck_forward.4} parent=11 // pred_check_branch
        %305 = sbr.rel (%p303) target = $region36
      $region35: #{bottleneck_forward.4} parent=11 // pred_region
        _
      $region36: #{bottleneck_forward.4} parent=11 // pred_fallthru
        _
    $region12: #{bottleneck_forward.4} parent=5 // pred_fallthru
      _
    %p306 = scmp.lt.s32.totalorder %s17, 2
    // Predicated region
    $region37: #{bottleneck_forward.4} parent=5 // pred_check
      %p307 = pneg %p306
    $region38: #{bottleneck_forward.4} parent=5 // pred_check_branch
      %309 = sbr.rel (%p307) target = $region40
    $region39: #{bottleneck_forward.4} parent=5 // pred_region
      // Predicated region
      $region41: #{bottleneck_forward.4} parent=39 // pred_check
        %p310 = pneg %p37
      $region42: #{bottleneck_forward.4} parent=39 // pred_check_branch
        %312 = sbr.rel (%p310) target = $region44
      $region43: #{bottleneck_forward.4} parent=39 // pred_region
        %s313 = smul.u32 32, %s17
        %p314 = scmp.lt.s32.totalorder %s313, 63
        %s315 = scalar_select %p314, %s313, 63
        %s316 = smul.addr %s315, 4
        %s317 = scalar_lea.vmem %s0, %s316
        %s318 = smul.u32 32, %s17
      $region44: #{bottleneck_forward.4} parent=39 // pred_fallthru
        _
      // Predicated region
      $region45: #{bottleneck_forward.4} parent=39 // pred_check
        %p319 = pneg %p63
      $region46: #{bottleneck_forward.4} parent=39 // pred_check_branch
        %321 = sbr.rel (%p319) target = $region48
      $region47: #{bottleneck_forward.4} parent=39 // pred_region
        %s322 = smul.u32 8, %s17
        %p323 = scmp.lt.s32.totalorder %s322, 15
        %s324 = scalar_select %p323, %s322, 15
        %s325 = smul.addr %s324, 4
        %s326 = scalar_lea.vmem %s1, %s325
        %s327 = smul.u32 8, %s17
      $region48: #{bottleneck_forward.4} parent=39 // pred_fallthru
        _
      // Predicated region
      $region49: #{bottleneck_forward.4} parent=39 // pred_check
        %p328 = pneg %p89
      $region50: #{bottleneck_forward.4} parent=39 // pred_check_branch
        %330 = sbr.rel (%p328) target = $region52
      $region51: #{bottleneck_forward.4} parent=39 // pred_region
        %s331 = smul.u32 8, %s17
        %p332 = scmp.lt.s32.totalorder %s331, 15
        %s333 = scalar_select %p332, %s331, 15
        %s334 = smul.addr %s333, 4
        %s335 = scalar_lea.vmem %s2, %s334
        %s336 = smul.u32 8, %s17
      $region52: #{bottleneck_forward.4} parent=39 // pred_fallthru
        _
    $region40: #{bottleneck_forward.4} parent=5 // pred_fallthru
      _
    %p337 = scmp.le.s32.totalorder 1, %s17
    %p338 = scmp.lt.s32.totalorder %s17, 3
    %p339 = pnand %p337, %p338
    %p340 = pneg %p339
    // Predicated region
    $region53: #{bottleneck_forward.4} parent=5 // pred_check
      _
    $region54: #{bottleneck_forward.4} parent=5 // pred_check_branch
      %342 = sbr.rel (%p339) target = $region56
    $region55: #{bottleneck_forward.4} parent=5 // pred_region
      %s343 = ssub.s32 %s17, 1
      %s344 = smul.u32 32, %s22
      %p345 = scmp.lt.s32.totalorder %s344, 63
      %s346 = scalar_select %p345, %s344, 63
      %s347 = smul.addr %s346, 4
      %s348 = scalar_lea.vmem %s0, %s347
      %p349 = pneg %p43
      %p350 = pneg %p40
      %s351 = smul.u32 8, %s22
      %p352 = scmp.lt.s32.totalorder %s351, 15
      %s353 = scalar_select %p352, %s351, 15
      %s354 = smul.addr %s353, 4
      %s355 = scalar_lea.vmem %s1, %s354
      %p356 = pneg %p69
      %p357 = pneg %p66
      %s358 = smul.u32 8, %s22
      %p359 = scmp.lt.s32.totalorder %s358, 15
      %s360 = scalar_select %p359, %s358, 15
      %s361 = smul.addr %s360, 4
      %s362 = scalar_lea.vmem %s2, %s361
      %p363 = pneg %p95
      %p364 = pneg %p92
      %p365 = pneg %p116
      %p366 = pneg %p113
      %p367 = pneg %p137
      %p368 = pneg %p134
      %p369 = pneg %p158
      %p370 = pneg %p155
      %p371 = pneg %p179
      %p372 = pneg %p176
      %p373 = pneg %p200
      %p374 = pneg %p197
      %p375 = pneg %p221
      %p376 = pneg %p218
      %p377 = pneg %p247
      %p378 = pneg %p244
      %s379 = smul.u32 32, %s22
      %p380 = scmp.lt.s32.totalorder %s379, 63
      %s381 = scalar_select %p380, %s379, 63
      %s382 = smul.addr %s381, 4
      %s383 = scalar_lea.vmem %s9, %s382
      %p384 = pneg %p273
      %p385 = pneg %p270
      %s386 = smul.u32 8, %s22
      %p387 = scmp.lt.s32.totalorder %s386, 15
      %s388 = scalar_select %p387, %s386, 15
      %s389 = smul.addr %s388, 4
      %s390 = scalar_lea.vmem %s10, %s389
      %s391 = smul.u32 32, %s22
      %p392 = scmp.lt.s32.totalorder %s391, 63
      %s393 = scalar_select %p392, %s391, 63
      %s394 = smul.addr %s393, 4
      %s395 = scalar_lea.vmem %s0, %s394
      %s396 = smul.u32 32, %s22
      %s397 = smul.u32 8, %s22
      %p398 = scmp.lt.s32.totalorder %s397, 15
      %s399 = scalar_select %p398, %s397, 15
      %s400 = smul.addr %s399, 4
      %s401 = scalar_lea.vmem %s1, %s400
      %s402 = smul.u32 8, %s22
      %s403 = smul.u32 8, %s22
      %p404 = scmp.lt.s32.totalorder %s403, 15
      %s405 = scalar_select %p404, %s403, 15
      %s406 = smul.addr %s405, 4
      %s407 = scalar_lea.vmem %s2, %s406
      %s408 = smul.u32 8, %s22
      %s409 = smul.u32 32, %s22
      %p410 = scmp.lt.s32.totalorder %s409, 63
      %s411 = scalar_select %p410, %s409, 63
      %s412 = smul.addr %s411, 4
      %s413 = scalar_lea.vmem %s9, %s412
      %s414 = smul.u32 32, %s22
      %s415 = smul.u32 8, %s22
      %p416 = scmp.lt.s32.totalorder %s415, 15
      %s417 = scalar_select %p416, %s415, 15
      %s418 = smul.addr %s417, 4
      %s419 = scalar_lea.vmem %s10, %s418
      %s420 = smul.u32 8, %s22
      %v422 = vld [vmem:[%s395] sm:$0xf]
      %v423 = vld [vmem:[%s395 + $0x4] sm:$0xf]
      %v424 = vld [vmem:[%s395 + $0x8] sm:$0xf]
      %v425 = vld [vmem:[%s395 + $0xc] sm:$0xf]
      %v426 = vld [vmem:[%s395 + $0x10] sm:$0xf]
      %v427 = vld [vmem:[%s395 + $0x14] sm:$0xf]
      %v428 = vld [vmem:[%s395 + $0x18] sm:$0xf]
      %v429 = vld [vmem:[%s395 + $0x1c] sm:$0xf]
      %v430 = vld [vmem:[%s395 + $0x20] sm:$0xf]
      %v431 = vld [vmem:[%s395 + $0x24] sm:$0xf]
      %v432 = vld [vmem:[%s395 + $0x28] sm:$0xf]
      %v433 = vld [vmem:[%s395 + $0x2c] sm:$0xf]
      %v434 = vld [vmem:[%s395 + $0x30] sm:$0xf]
      %v435 = vld [vmem:[%s395 + $0x34] sm:$0xf]
      %v436 = vld [vmem:[%s395 + $0x38] sm:$0xf]
      %v437 = vld [vmem:[%s395 + $0x3c] sm:$0xf]
      %v438 = vld [vmem:[%s395 + $0x40] sm:$0xf]
      %v439 = vld [vmem:[%s395 + $0x44] sm:$0xf]
      %v440 = vld [vmem:[%s395 + $0x48] sm:$0xf]
      %v441 = vld [vmem:[%s395 + $0x4c] sm:$0xf]
      %v442 = vld [vmem:[%s395 + $0x50] sm:$0xf]
      %v443 = vld [vmem:[%s395 + $0x54] sm:$0xf]
      %v444 = vld [vmem:[%s395 + $0x58] sm:$0xf]
      %v445 = vld [vmem:[%s395 + $0x5c] sm:$0xf]
      %v446 = vld [vmem:[%s395 + $0x60] sm:$0xf]
      %v447 = vld [vmem:[%s395 + $0x64] sm:$0xf]
      %v448 = vld [vmem:[%s395 + $0x68] sm:$0xf]
      %v449 = vld [vmem:[%s395 + $0x6c] sm:$0xf]
      %v450 = vld [vmem:[%s395 + $0x70] sm:$0xf]
      %v451 = vld [vmem:[%s395 + $0x74] sm:$0xf]
      %v452 = vld [vmem:[%s395 + $0x78] sm:$0xf]
      %v453 = vld [vmem:[%s395 + $0x7c] sm:$0xf]
      %v454 = vld [vmem:[%s4] sm:$0xf]
      %v455 = vld [vmem:[%s4 + $0x4] sm:$0xf]
      %v456 = vld [vmem:[%s4 + $0x8] sm:$0xf]
      %v457 = vld [vmem:[%s4 + $0xc] sm:$0xf]
      %v458 = vld [vmem:[%s4 + $0x10] sm:$0x3]
      %v459 = vld [vmem:[%s401] sm:$0xf]
      %v460 = vld [vmem:[%s401 + $0x4] sm:$0xf]
      %v461 = vld [vmem:[%s401 + $0x8] sm:$0xf]
      %v462 = vld [vmem:[%s401 + $0xc] sm:$0xf]
      %v463 = vld [vmem:[%s401 + $0x10] sm:$0xf]
      %v464 = vld [vmem:[%s401 + $0x14] sm:$0xf]
      %v465 = vld [vmem:[%s401 + $0x18] sm:$0xf]
      %v466 = vld [vmem:[%s401 + $0x1c] sm:$0xf]
      %v467 = vld [vmem:[%s5] sm:$0xf]
      %v468 = vld [vmem:[%s5 + $0x4] sm:$0xf]
      %v469 = vld [vmem:[%s5 + $0x8] sm:$0xf]
      %v470 = vld [vmem:[%s5 + $0xc] sm:$0xf]
      %v471 = vld [vmem:[%s5 + $0x10] sm:$0x3]
      %v480 = vunpack.c.l.b16 %v459
      %v481 = vunpack.c.l.b16 %v460
      %v482 = vunpack.c.l.b16 %v461
      %v483 = vunpack.c.l.b16 %v462
      %v484 = vunpack.c.l.b16 %v463
      %v485 = vunpack.c.l.b16 %v464
      %v486 = vunpack.c.l.b16 %v465
      %v487 = vunpack.c.l.b16 %v466
      %v488 = vpack.c.b16 %v481, %v480
      %v489 = vpack.c.b16 %v483, %v482
      %v490 = vpack.c.b16 %v485, %v484
      %v491 = vpack.c.b16 %v487, %v486
      %v497 = vunpack.c.l.b16 %v467
      %v498 = vunpack.c.l.b16 %v468
      %v499 = vunpack.c.l.b16 %v469
      %v500 = vunpack.c.l.b16 %v470
      %v501 = vunpack.c.l.b16 %v471
      %v502 = vpack.c.b16 %v498, %v497
      %v503 = vpack.c.b16 %v500, %v499
      %v504 = vpack.c.b16 %v501, %v501
      %vm507 = vcmask 293888
      %v509 = vsel %vm507, %v488, 0
      %v512 = vsel %vm507, %v489, 0
      %v515 = vsel %vm507, %v490, 0
      %v518 = vsel %vm507, %v491, 0
      %vm520 = vcmask 1041408
      %v522 = vsel %vm520, %v504, 0
      %524 = vmatprep.subr.bf16.mxu0 0
      %525 = vmatpush1.bf16.msra.mxu0 0
      %526 = vmatprep.subr.bf16.mxu0 0
      %527 = vmatpush1.bf16.msra.mxu0 0
      %528 = vmatprep.subr.bf16.mxu0 0
      %529 = vmatpush1.bf16.msra.mxu0 0
      %530 = vmatprep.subr.bf16.mxu0 0
      %531 = vmatpush1.bf16.msra.mxu0 0
      %532 = vmatprep.subr.bf16.mxu0 0
      %533 = vmatpush1.bf16.msra.mxu0 0
      %534 = vmatprep.subr.bf16.mxu0 0
      %535 = vmatpush1.bf16.msra.mxu0 %v522
      %536 = vmatprep.subr.bf16.mxu0 0
      %537 = vmatpush1.bf16.msra.mxu0 %v503
      %538 = vmatprep.subr.bf16.mxu0 0
      %539 = vmatpush1.bf16.msra.mxu0 %v502
      %540 = vmatprep.subr.bf16.mxu0 0
      %541 = vmatpush2.bf16.msra.mxu0 0
      %542 = vmatprep.subr.bf16.mxu0 0
      %543 = vmatpush2.bf16.msra.mxu0 0
      %544 = vmatprep.subr.bf16.mxu0 0
      %545 = vmatpush2.bf16.msra.mxu0 0
      %546 = vmatprep.subr.bf16.mxu0 0
      %547 = vmatpush2.bf16.msra.mxu0 0
      %548 = vmatprep.subr.bf16.mxu0 0
      %549 = vmatpush2.bf16.msra.mxu0 0
      %550 = vmatprep.subr.bf16.mxu0 0
      %551 = vmatpush2.bf16.msra.mxu0 0
      %552 = vmatprep.subr.bf16.mxu0 0
      %553 = vmatpush2.bf16.msra.mxu0 0
      %554 = vmatprep.subr.bf16.mxu0 0
      %555 = vmatpush2.bf16.msra.mxu0 0
      %556 = vmatprep.mubr.bf16.mxu0 0
      %557 = vmatmul.mubr.bf16.gmra.mxu0 %v509
      %v558 = vpop.f32.mrf.mxu0
      %v559 = vadd.f32 0.0, %v558
      %v560 = vpop.f32.mrf.mxu0
      %v561 = vpop.f32.mrf.mxu0
      %v562 = vadd.f32 0.0, %v561
      %v563 = vpop.f32.mrf.mxu0
      %564 = vmatprep.mubr.bf16.mxu0 0
      %565 = vmatmul.mubr.bf16.gmra.mxu0 %v512
      %v566 = vpop.f32.mrf.mxu0
      %v567 = vadd.f32 0.0, %v566
      %v568 = vpop.f32.mrf.mxu0
      %v569 = vpop.f32.mrf.mxu0
      %v570 = vadd.f32 0.0, %v569
      %v571 = vpop.f32.mrf.mxu0
      %572 = vmatprep.mubr.bf16.mxu0 0
      %573 = vmatmul.mubr.bf16.gmra.mxu0 %v515
      %v574 = vpop.f32.mrf.mxu0
      %v575 = vadd.f32 0.0, %v574
      %v576 = vpop.f32.mrf.mxu0
      %v577 = vpop.f32.mrf.mxu0
      %v578 = vadd.f32 0.0, %v577
      %v579 = vpop.f32.mrf.mxu0
      %580 = vmatprep.mubr.bf16.mxu0 0
      %581 = vmatmul.mubr.bf16.gmra.mxu0 %v518
      %v582 = vpop.f32.mrf.mxu0
      %v583 = vadd.f32 0.0, %v582
      %v584 = vpop.f32.mrf.mxu0
      %v585 = vpop.f32.mrf.mxu0
      %v586 = vadd.f32 0.0, %v585
      %v587 = vpop.f32.mrf.mxu0
      %588 = vdwg.mxu0
      %v589 = vld [vmem:[%s407] sm:$0xf]
      %v590 = vld [vmem:[%s407 + $0x4] sm:$0xf]
      %v591 = vld [vmem:[%s407 + $0x8] sm:$0xf]
      %v592 = vld [vmem:[%s407 + $0xc] sm:$0xf]
      %v593 = vld [vmem:[%s407 + $0x10] sm:$0xf]
      %v594 = vld [vmem:[%s407 + $0x14] sm:$0xf]
      %v595 = vld [vmem:[%s407 + $0x18] sm:$0xf]
      %v596 = vld [vmem:[%s407 + $0x1c] sm:$0xf]
      %v597 = vld [vmem:[%s6] sm:$0xf]
      %v598 = vld [vmem:[%s6 + $0x4] sm:$0xf]
      %v599 = vld [vmem:[%s6 + $0x8] sm:$0xf]
      %v600 = vld [vmem:[%s6 + $0xc] sm:$0xf]
      %v601 = vld [vmem:[%s6 + $0x10] sm:$0x3]
      %v610 = vunpack.c.l.b16 %v589
      %v611 = vunpack.c.l.b16 %v590
      %v612 = vunpack.c.l.b16 %v591
      %v613 = vunpack.c.l.b16 %v592
      %v614 = vunpack.c.l.b16 %v593
      %v615 = vunpack.c.l.b16 %v594
      %v616 = vunpack.c.l.b16 %v595
      %v617 = vunpack.c.l.b16 %v596
      %v618 = vpack.c.b16 %v611, %v610
      %v619 = vpack.c.b16 %v613, %v612
      %v620 = vpack.c.b16 %v615, %v614
      %v621 = vpack.c.b16 %v617, %v616
      %v627 = vunpack.c.l.b16 %v597
      %v628 = vunpack.c.l.b16 %v598
      %v629 = vunpack.c.l.b16 %v599
      %v630 = vunpack.c.l.b16 %v600
      %v631 = vunpack.c.l.b16 %v601
      %v632 = vpack.c.b16 %v628, %v627
      %v633 = vpack.c.b16 %v630, %v629
      %v634 = vpack.c.b16 %v631, %v631
      %v638 = vsel %vm507, %v618, 0
      %v641 = vsel %vm507, %v619, 0
      %v644 = vsel %vm507, %v620, 0
      %v647 = vsel %vm507, %v621, 0
      %v650 = vsel %vm520, %v634, 0
      %652 = vmatprep.subr.bf16.mxu0 0
      %653 = vmatpush1.bf16.msra.mxu0 0
      %654 = vmatprep.subr.bf16.mxu0 0
      %655 = vmatpush1.bf16.msra.mxu0 0
      %656 = vmatprep.subr.bf16.mxu0 0
      %657 = vmatpush1.bf16.msra.mxu0 0
      %658 = vmatprep.subr.bf16.mxu0 0
      %659 = vmatpush1.bf16.msra.mxu0 0
      %660 = vmatprep.subr.bf16.mxu0 0
      %661 = vmatpush1.bf16.msra.mxu0 0
      %662 = vmatprep.subr.bf16.mxu0 0
      %663 = vmatpush1.bf16.msra.mxu0 %v650
      %664 = vmatprep.subr.bf16.mxu0 0
      %665 = vmatpush1.bf16.msra.mxu0 %v633
      %666 = vmatprep.subr.bf16.mxu0 0
      %667 = vmatpush1.bf16.msra.mxu0 %v632
      %668 = vmatprep.subr.bf16.mxu0 0
      %669 = vmatpush2.bf16.msra.mxu0 0
      %670 = vmatprep.subr.bf16.mxu0 0
      %671 = vmatpush2.bf16.msra.mxu0 0
      %672 = vmatprep.subr.bf16.mxu0 0
      %673 = vmatpush2.bf16.msra.mxu0 0
      %674 = vmatprep.subr.bf16.mxu0 0
      %675 = vmatpush2.bf16.msra.mxu0 0
      %676 = vmatprep.subr.bf16.mxu0 0
      %677 = vmatpush2.bf16.msra.mxu0 0
      %678 = vmatprep.subr.bf16.mxu0 0
      %679 = vmatpush2.bf16.msra.mxu0 0
      %680 = vmatprep.subr.bf16.mxu0 0
      %681 = vmatpush2.bf16.msra.mxu0 0
      %682 = vmatprep.subr.bf16.mxu0 0
      %683 = vmatpush2.bf16.msra.mxu0 0
      %684 = vmatprep.mubr.bf16.mxu0 0
      %685 = vmatmul.mubr.bf16.gmra.mxu0 %v638
      %v686 = vpop.f32.mrf.mxu0
      %v687 = vadd.f32 0.0, %v686
      %v688 = vpop.f32.mrf.mxu0
      %v689 = vpop.f32.mrf.mxu0
      %v690 = vadd.f32 0.0, %v689
      %v691 = vpop.f32.mrf.mxu0
      %692 = vmatprep.mubr.bf16.mxu0 0
      %693 = vmatmul.mubr.bf16.gmra.mxu0 %v641
      %v694 = vpop.f32.mrf.mxu0
      %v695 = vadd.f32 0.0, %v694
      %v696 = vpop.f32.mrf.mxu0
      %v697 = vpop.f32.mrf.mxu0
      %v698 = vadd.f32 0.0, %v697
      %v699 = vpop.f32.mrf.mxu0
      %700 = vmatprep.mubr.bf16.mxu0 0
      %701 = vmatmul.mubr.bf16.gmra.mxu0 %v644
      %v702 = vpop.f32.mrf.mxu0
      %v703 = vadd.f32 0.0, %v702
      %v704 = vpop.f32.mrf.mxu0
      %v705 = vpop.f32.mrf.mxu0
      %v706 = vadd.f32 0.0, %v705
      %v707 = vpop.f32.mrf.mxu0
      %708 = vmatprep.mubr.bf16.mxu0 0
      %709 = vmatmul.mubr.bf16.gmra.mxu0 %v647
      %v710 = vpop.f32.mrf.mxu0
      %v711 = vadd.f32 0.0, %v710
      %v712 = vpop.f32.mrf.mxu0
      %v713 = vpop.f32.mrf.mxu0
      %v714 = vadd.f32 0.0, %v713
      %v715 = vpop.f32.mrf.mxu0
      %716 = vdwg.mxu0
      %v717 = vld [vmem:[%s3] sm:$0xff]
      %v718 = vld [vmem:[%s3 + $0x8] sm:$0xff]
      %v719 = vld [vmem:[%s3 + $0x10] sm:$0xff]
      %v720 = vld [vmem:[%s3 + $0x18] sm:$0xff]
      %v721 = vld [vmem:[%s3 + $0x20] sm:$0xff]
      %v722 = vld [vmem:[%s3 + $0x28] sm:$0xff]
      %v723 = vld [vmem:[%s3 + $0x30] sm:$0xff]
      %v724 = vld [vmem:[%s3 + $0x38] sm:$0xff]
      %v725 = vld [vmem:[%s3 + $0x40] sm:$0xff]
      %v726 = vld [vmem:[%s3 + $0x48] sm:$0xff]
      %v727 = vld [vmem:[%s3 + $0x50] sm:$0xff]
      %v728 = vld [vmem:[%s3 + $0x58] sm:$0xff]
      %v729 = vld [vmem:[%s3 + $0x60] sm:$0xff]
      %v730 = vld [vmem:[%s3 + $0x68] sm:$0xff]
      %v731 = vld [vmem:[%s3 + $0x70] sm:$0xff]
      %v732 = vld [vmem:[%s3 + $0x78] sm:$0xff]
      %v733 = vld [vmem:[%s3 + $0x80] sm:$0xff]
      %v734 = vld [vmem:[%s3 + $0x88] sm:$0xff]
      %v735 = vld [vmem:[%s3 + $0x90] sm:$0xff]
      %v736 = vld [vmem:[%s3 + $0x98] sm:$0xff]
      %v737 = vld [vmem:[%s3 + $0xa0] sm:$0xff]
      %v738 = vld [vmem:[%s3 + $0xa8] sm:$0xff]
      %v739 = vld [vmem:[%s3 + $0xb0] sm:$0xff]
      %v740 = vld [vmem:[%s3 + $0xb8] sm:$0xff]
      %v741 = vld [vmem:[%s3 + $0xc0] sm:$0xff]
      %v742 = vld [vmem:[%s3 + $0xc8] sm:$0xff]
      %v743 = vld [vmem:[%s3 + $0xd0] sm:$0xff]
      %v744 = vld [vmem:[%s3 + $0xd8] sm:$0xff]
      %v745 = vld [vmem:[%s3 + $0xe0] sm:$0xff]
      %v746 = vld [vmem:[%s3 + $0xe8] sm:$0xff]
      %v747 = vld [vmem:[%s3 + $0xf0] sm:$0xff]
      %v748 = vld [vmem:[%s3 + $0xf8] sm:$0xff]
      %vm749 = vcmask 523264
      %v751 = vsel %vm749, %v717, 0
      %v754 = vsel %vm749, %v718, 0
      %v757 = vsel %vm749, %v719, 0
      %v760 = vsel %vm749, %v720, 0
      %v763 = vsel %vm749, %v721, 0
      %v766 = vsel %vm749, %v722, 0
      %v769 = vsel %vm749, %v723, 0
      %v772 = vsel %vm749, %v724, 0
      %v775 = vsel %vm749, %v725, 0
      %v778 = vsel %vm749, %v726, 0
      %v781 = vsel %vm749, %v727, 0
      %v784 = vsel %vm749, %v728, 0
      %v787 = vsel %vm749, %v729, 0
      %v790 = vsel %vm749, %v730, 0
      %v793 = vsel %vm749, %v731, 0
      %v796 = vsel %vm749, %v732, 0
      %v799 = vsel %vm749, %v733, 0
      %v802 = vsel %vm749, %v734, 0
      %v805 = vsel %vm749, %v735, 0
      %v808 = vsel %vm749, %v736, 0
      %v811 = vsel %vm749, %v737, 0
      %v814 = vsel %vm749, %v738, 0
      %v817 = vsel %vm749, %v739, 0
      %v820 = vsel %vm749, %v740, 0
      %v823 = vsel %vm749, %v741, 0
      %v826 = vsel %vm749, %v742, 0
      %v829 = vsel %vm749, %v743, 0
      %v832 = vsel %vm749, %v744, 0
      %v835 = vsel %vm749, %v745, 0
      %v838 = vsel %vm749, %v746, 0
      %v841 = vsel %vm749, %v747, 0
      %v844 = vsel %vm749, %v748, 0
      %846 = vmatprep.subr.mxu0 0.0
      %847 = vmatpush1.msra.mxu0 0.0
      %848 = vmatprep.subr.mxu0 0.0
      %849 = vmatpush1.msra.mxu0 0.0
      %850 = vmatprep.subr.mxu0 0.0
      %851 = vmatpush1.msra.mxu0 0.0
      %852 = vmatprep.subr.mxu0 0.0
      %853 = vmatpush1.msra.mxu0 0.0
      %854 = vmatprep.subr.mxu0 0.0
      %855 = vmatpush1.msra.mxu0 0.0
      %856 = vmatprep.subr.mxu0 0.0
      %857 = vmatpush1.msra.mxu0 0.0
      %858 = vmatprep.subr.mxu0 0.0
      %859 = vmatpush1.msra.mxu0 0.0
      %860 = vmatprep.subr.mxu0 0.0
      %861 = vmatpush1.msra.mxu0 0.0
      %862 = vmatprep.subr.mxu0 0.0
      %863 = vmatpush1.msra.mxu0 %v586
      %864 = vmatprep.subr.mxu0 0.0
      %865 = vmatpush1.msra.mxu0 %v583
      %866 = vmatprep.subr.mxu0 0.0
      %867 = vmatpush1.msra.mxu0 %v578
      %868 = vmatprep.subr.mxu0 0.0
      %869 = vmatpush1.msra.mxu0 %v575
      %870 = vmatprep.subr.mxu0 0.0
      %871 = vmatpush1.msra.mxu0 %v570
      %872 = vmatprep.subr.mxu0 0.0
      %873 = vmatpush1.msra.mxu0 %v567
      %874 = vmatprep.subr.mxu0 0.0
      %875 = vmatpush1.msra.mxu0 %v562
      %876 = vmatprep.subr.mxu0 0.0
      %877 = vmatpush1.msra.mxu0 %v559
      %878 = vmatprep.subr.mxu0 0.0
      %879 = vmatpush2.msra.mxu0 0.0
      %880 = vmatprep.subr.mxu0 0.0
      %881 = vmatpush2.msra.mxu0 0.0
      %882 = vmatprep.subr.mxu0 0.0
      %883 = vmatpush2.msra.mxu0 0.0
      %884 = vmatprep.subr.mxu0 0.0
      %885 = vmatpush2.msra.mxu0 0.0
      %886 = vmatprep.subr.mxu0 0.0
      %887 = vmatpush2.msra.mxu0 0.0
      %888 = vmatprep.subr.mxu0 0.0
      %889 = vmatpush2.msra.mxu0 0.0
      %890 = vmatprep.subr.mxu0 0.0
      %891 = vmatpush2.msra.mxu0 0.0
      %892 = vmatprep.subr.mxu0 0.0
      %893 = vmatpush2.msra.mxu0 0.0
      %894 = vmatprep.subr.mxu0 0.0
      %895 = vmatpush2.msra.mxu0 0.0
      %896 = vmatprep.subr.mxu0 0.0
      %897 = vmatpush2.msra.mxu0 0.0
      %898 = vmatprep.subr.mxu0 0.0
      %899 = vmatpush2.msra.mxu0 0.0
      %900 = vmatprep.subr.mxu0 0.0
      %901 = vmatpush2.msra.mxu0 0.0
      %902 = vmatprep.subr.mxu0 0.0
      %903 = vmatpush2.msra.mxu0 0.0
      %904 = vmatprep.subr.mxu0 0.0
      %905 = vmatpush2.msra.mxu0 0.0
      %906 = vmatprep.subr.mxu0 0.0
      %907 = vmatpush2.msra.mxu0 0.0
      %908 = vmatprep.subr.mxu0 0.0
      %909 = vmatpush2.msra.mxu0 0.0
      %910 = vmatprep.mubr.f32.mxu0 0.0
      %911 = vmatmul.mubr.f32.gmra.mxu0 %v751
      %v912 = vpop.f32.mrf.mxu0
      %v913 = vadd.f32 0.0, %v912
      %v914 = vpop.f32.mrf.mxu0
      %915 = vmatprep.mubr.f32.mxu0 0.0
      %916 = vmatmul.mubr.f32.gmra.mxu0 %v754
      %v917 = vpop.f32.mrf.mxu0
      %v918 = vadd.f32 0.0, %v917
      %v919 = vpop.f32.mrf.mxu0
      %920 = vmatprep.mubr.f32.mxu0 0.0
      %921 = vmatmul.mubr.f32.gmra.mxu0 %v757
      %v922 = vpop.f32.mrf.mxu0
      %v923 = vadd.f32 0.0, %v922
      %v924 = vpop.f32.mrf.mxu0
      %925 = vmatprep.mubr.f32.mxu0 0.0
      %926 = vmatmul.mubr.f32.gmra.mxu0 %v760
      %v927 = vpop.f32.mrf.mxu0
      %v928 = vadd.f32 0.0, %v927
      %v929 = vpop.f32.mrf.mxu0
      %930 = vmatprep.mubr.f32.mxu0 0.0
      %931 = vmatmul.mubr.f32.gmra.mxu0 %v763
      %v932 = vpop.f32.mrf.mxu0
      %v933 = vadd.f32 0.0, %v932
      %v934 = vpop.f32.mrf.mxu0
      %935 = vmatprep.mubr.f32.mxu0 0.0
      %936 = vmatmul.mubr.f32.gmra.mxu0 %v766
      %v937 = vpop.f32.mrf.mxu0
      %v938 = vadd.f32 0.0, %v937
      %v939 = vpop.f32.mrf.mxu0
      %940 = vmatprep.mubr.f32.mxu0 0.0
      %941 = vmatmul.mubr.f32.gmra.mxu0 %v769
      %v942 = vpop.f32.mrf.mxu0
      %v943 = vadd.f32 0.0, %v942
      %v944 = vpop.f32.mrf.mxu0
      %945 = vmatprep.mubr.f32.mxu0 0.0
      %946 = vmatmul.mubr.f32.gmra.mxu0 %v772
      %v947 = vpop.f32.mrf.mxu0
      %v948 = vadd.f32 0.0, %v947
      %v949 = vpop.f32.mrf.mxu0
      %950 = vmatprep.mubr.f32.mxu0 0.0
      %951 = vmatmul.mubr.f32.gmra.mxu0 %v775
      %v952 = vpop.f32.mrf.mxu0
      %v953 = vadd.f32 0.0, %v952
      %v954 = vpop.f32.mrf.mxu0
      %955 = vmatprep.mubr.f32.mxu0 0.0
      %956 = vmatmul.mubr.f32.gmra.mxu0 %v778
      %v957 = vpop.f32.mrf.mxu0
      %v958 = vadd.f32 0.0, %v957
      %v959 = vpop.f32.mrf.mxu0
      %960 = vmatprep.mubr.f32.mxu0 0.0
      %961 = vmatmul.mubr.f32.gmra.mxu0 %v781
      %v962 = vpop.f32.mrf.mxu0
      %v963 = vadd.f32 0.0, %v962
      %v964 = vpop.f32.mrf.mxu0
      %965 = vmatprep.mubr.f32.mxu0 0.0
      %966 = vmatmul.mubr.f32.gmra.mxu0 %v784
      %v967 = vpop.f32.mrf.mxu0
      %v968 = vadd.f32 0.0, %v967
      %v969 = vpop.f32.mrf.mxu0
      %970 = vmatprep.mubr.f32.mxu0 0.0
      %971 = vmatmul.mubr.f32.gmra.mxu0 %v787
      %v972 = vpop.f32.mrf.mxu0
      %v973 = vadd.f32 0.0, %v972
      %v974 = vpop.f32.mrf.mxu0
      %975 = vmatprep.mubr.f32.mxu0 0.0
      %976 = vmatmul.mubr.f32.gmra.mxu0 %v790
      %v977 = vpop.f32.mrf.mxu0
      %v978 = vadd.f32 0.0, %v977
      %v979 = vpop.f32.mrf.mxu0
      %980 = vmatprep.mubr.f32.mxu0 0.0
      %981 = vmatmul.mubr.f32.gmra.mxu0 %v793
      %v982 = vpop.f32.mrf.mxu0
      %v983 = vadd.f32 0.0, %v982
      %v984 = vpop.f32.mrf.mxu0
      %985 = vmatprep.mubr.f32.mxu0 0.0
      %986 = vmatmul.mubr.f32.gmra.mxu0 %v796
      %v987 = vpop.f32.mrf.mxu0
      %v988 = vadd.f32 0.0, %v987
      %v989 = vpop.f32.mrf.mxu0
      %990 = vmatprep.mubr.f32.mxu0 0.0
      %991 = vmatmul.mubr.f32.gmra.mxu0 %v799
      %v992 = vpop.f32.mrf.mxu0
      %v993 = vadd.f32 0.0, %v992
      %v994 = vpop.f32.mrf.mxu0
      %995 = vmatprep.mubr.f32.mxu0 0.0
      %996 = vmatmul.mubr.f32.gmra.mxu0 %v802
      %v997 = vpop.f32.mrf.mxu0
      %v998 = vadd.f32 0.0, %v997
      %v999 = vpop.f32.mrf.mxu0
      %1000 = vmatprep.mubr.f32.mxu0 0.0
      %1001 = vmatmul.mubr.f32.gmra.mxu0 %v805
      %v1002 = vpop.f32.mrf.mxu0
      %v1003 = vadd.f32 0.0, %v1002
      %v1004 = vpop.f32.mrf.mxu0
      %1005 = vmatprep.mubr.f32.mxu0 0.0
      %1006 = vmatmul.mubr.f32.gmra.mxu0 %v808
      %v1007 = vpop.f32.mrf.mxu0
      %v1008 = vadd.f32 0.0, %v1007
      %v1009 = vpop.f32.mrf.mxu0
      %1010 = vmatprep.mubr.f32.mxu0 0.0
      %1011 = vmatmul.mubr.f32.gmra.mxu0 %v811
      %v1012 = vpop.f32.mrf.mxu0
      %v1013 = vadd.f32 0.0, %v1012
      %v1014 = vpop.f32.mrf.mxu0
      %1015 = vmatprep.mubr.f32.mxu0 0.0
      %1016 = vmatmul.mubr.f32.gmra.mxu0 %v814
      %v1017 = vpop.f32.mrf.mxu0
      %v1018 = vadd.f32 0.0, %v1017
      %v1019 = vpop.f32.mrf.mxu0
      %1020 = vmatprep.mubr.f32.mxu0 0.0
      %1021 = vmatmul.mubr.f32.gmra.mxu0 %v817
      %v1022 = vpop.f32.mrf.mxu0
      %v1023 = vadd.f32 0.0, %v1022
      %v1024 = vpop.f32.mrf.mxu0
      %1025 = vmatprep.mubr.f32.mxu0 0.0
      %1026 = vmatmul.mubr.f32.gmra.mxu0 %v820
      %v1027 = vpop.f32.mrf.mxu0
      %v1028 = vadd.f32 0.0, %v1027
      %v1029 = vpop.f32.mrf.mxu0
      %1030 = vmatprep.mubr.f32.mxu0 0.0
      %1031 = vmatmul.mubr.f32.gmra.mxu0 %v823
      %v1032 = vpop.f32.mrf.mxu0
      %v1033 = vadd.f32 0.0, %v1032
      %v1034 = vpop.f32.mrf.mxu0
      %1035 = vmatprep.mubr.f32.mxu0 0.0
      %1036 = vmatmul.mubr.f32.gmra.mxu0 %v826
      %v1037 = vpop.f32.mrf.mxu0
      %v1038 = vadd.f32 0.0, %v1037
      %v1039 = vpop.f32.mrf.mxu0
      %1040 = vmatprep.mubr.f32.mxu0 0.0
      %1041 = vmatmul.mubr.f32.gmra.mxu0 %v829
      %v1042 = vpop.f32.mrf.mxu0
      %v1043 = vadd.f32 0.0, %v1042
      %v1044 = vpop.f32.mrf.mxu0
      %1045 = vmatprep.mubr.f32.mxu0 0.0
      %1046 = vmatmul.mubr.f32.gmra.mxu0 %v832
      %v1047 = vpop.f32.mrf.mxu0
      %v1048 = vadd.f32 0.0, %v1047
      %v1049 = vpop.f32.mrf.mxu0
      %1050 = vmatprep.mubr.f32.mxu0 0.0
      %1051 = vmatmul.mubr.f32.gmra.mxu0 %v835
      %v1052 = vpop.f32.mrf.mxu0
      %v1053 = vadd.f32 0.0, %v1052
      %v1054 = vpop.f32.mrf.mxu0
      %1055 = vmatprep.mubr.f32.mxu0 0.0
      %1056 = vmatmul.mubr.f32.gmra.mxu0 %v838
      %v1057 = vpop.f32.mrf.mxu0
      %v1058 = vadd.f32 0.0, %v1057
      %v1059 = vpop.f32.mrf.mxu0
      %1060 = vmatprep.mubr.f32.mxu0 0.0
      %1061 = vmatmul.mubr.f32.gmra.mxu0 %v841
      %v1062 = vpop.f32.mrf.mxu0
      %v1063 = vadd.f32 0.0, %v1062
      %v1064 = vpop.f32.mrf.mxu0
      %1065 = vmatprep.mubr.f32.mxu0 0.0
      %1066 = vmatmul.mubr.f32.gmra.mxu0 %v844
      %v1067 = vpop.f32.mrf.mxu0
      %v1068 = vadd.f32 0.0, %v1067
      %v1069 = vpop.f32.mrf.mxu0
      %1070 = vdwg.mxu0
      %v1103 = vunpack.c.l.b16 %v422
      %v1104 = vunpack.c.l.b16 %v423
      %v1105 = vunpack.c.l.b16 %v424
      %v1106 = vunpack.c.l.b16 %v425
      %v1107 = vunpack.c.l.b16 %v426
      %v1108 = vunpack.c.l.b16 %v427
      %v1109 = vunpack.c.l.b16 %v428
      %v1110 = vunpack.c.l.b16 %v429
      %v1111 = vunpack.c.l.b16 %v430
      %v1112 = vunpack.c.l.b16 %v431
      %v1113 = vunpack.c.l.b16 %v432
      %v1114 = vunpack.c.l.b16 %v433
      %v1115 = vunpack.c.l.b16 %v434
      %v1116 = vunpack.c.l.b16 %v435
      %v1117 = vunpack.c.l.b16 %v436
      %v1118 = vunpack.c.l.b16 %v437
      %v1119 = vunpack.c.l.b16 %v438
      %v1120 = vunpack.c.l.b16 %v439
      %v1121 = vunpack.c.l.b16 %v440
      %v1122 = vunpack.c.l.b16 %v441
      %v1123 = vunpack.c.l.b16 %v442
      %v1124 = vunpack.c.l.b16 %v443
      %v1125 = vunpack.c.l.b16 %v444
      %v1126 = vunpack.c.l.b16 %v445
      %v1127 = vunpack.c.l.b16 %v446
      %v1128 = vunpack.c.l.b16 %v447
      %v1129 = vunpack.c.l.b16 %v448
      %v1130 = vunpack.c.l.b16 %v449
      %v1131 = vunpack.c.l.b16 %v450
      %v1132 = vunpack.c.l.b16 %v451
      %v1133 = vunpack.c.l.b16 %v452
      %v1134 = vunpack.c.l.b16 %v453
      %v1135 = vpack.c.b16 %v1104, %v1103
      %v1136 = vpack.c.b16 %v1106, %v1105
      %v1137 = vpack.c.b16 %v1108, %v1107
      %v1138 = vpack.c.b16 %v1110, %v1109
      %v1139 = vpack.c.b16 %v1112, %v1111
      %v1140 = vpack.c.b16 %v1114, %v1113
      %v1141 = vpack.c.b16 %v1116, %v1115
      %v1142 = vpack.c.b16 %v1118, %v1117
      %v1143 = vpack.c.b16 %v1120, %v1119
      %v1144 = vpack.c.b16 %v1122, %v1121
      %v1145 = vpack.c.b16 %v1124, %v1123
      %v1146 = vpack.c.b16 %v1126, %v1125
      %v1147 = vpack.c.b16 %v1128, %v1127
      %v1148 = vpack.c.b16 %v1130, %v1129
      %v1149 = vpack.c.b16 %v1132, %v1131
      %v1150 = vpack.c.b16 %v1134, %v1133
      %v1156 = vunpack.c.l.b16 %v454
      %v1157 = vunpack.c.l.b16 %v455
      %v1158 = vunpack.c.l.b16 %v456
      %v1159 = vunpack.c.l.b16 %v457
      %v1160 = vunpack.c.l.b16 %v458
      %v1161 = vpack.c.b16 %v1157, %v1156
      %v1162 = vpack.c.b16 %v1159, %v1158
      %v1163 = vpack.c.b16 %v1160, %v1160
      %v1167 = vsel %vm507, %v1135, 0
      %v1170 = vsel %vm507, %v1136, 0
      %v1173 = vsel %vm507, %v1137, 0
      %v1176 = vsel %vm507, %v1138, 0
      %v1179 = vsel %vm507, %v1139, 0
      %v1182 = vsel %vm507, %v1140, 0
      %v1185 = vsel %vm507, %v1141, 0
      %v1188 = vsel %vm507, %v1142, 0
      %v1191 = vsel %vm507, %v1143, 0
      %v1194 = vsel %vm507, %v1144, 0
      %v1197 = vsel %vm507, %v1145, 0
      %v1200 = vsel %vm507, %v1146, 0
      %v1203 = vsel %vm507, %v1147, 0
      %v1206 = vsel %vm507, %v1148, 0
      %v1209 = vsel %vm507, %v1149, 0
      %v1212 = vsel %vm507, %v1150, 0
      %v1215 = vsel %vm520, %v1163, 0
      %1217 = vmatprep.subr.bf16.mxu0 0
      %1218 = vmatpush1.bf16.msra.mxu0 0
      %1219 = vmatprep.subr.bf16.mxu0 0
      %1220 = vmatpush1.bf16.msra.mxu0 0
      %1221 = vmatprep.subr.bf16.mxu0 0
      %1222 = vmatpush1.bf16.msra.mxu0 0
      %1223 = vmatprep.subr.bf16.mxu0 0
      %1224 = vmatpush1.bf16.msra.mxu0 0
      %1225 = vmatprep.subr.bf16.mxu0 0
      %1226 = vmatpush1.bf16.msra.mxu0 0
      %1227 = vmatprep.subr.bf16.mxu0 0
      %1228 = vmatpush1.bf16.msra.mxu0 %v1215
      %1229 = vmatprep.subr.bf16.mxu0 0
      %1230 = vmatpush1.bf16.msra.mxu0 %v1162
      %1231 = vmatprep.subr.bf16.mxu0 0
      %1232 = vmatpush1.bf16.msra.mxu0 %v1161
      %1233 = vmatprep.subr.bf16.mxu0 0
      %1234 = vmatpush2.bf16.msra.mxu0 0
      %1235 = vmatprep.subr.bf16.mxu0 0
      %1236 = vmatpush2.bf16.msra.mxu0 0
      %1237 = vmatprep.subr.bf16.mxu0 0
      %1238 = vmatpush2.bf16.msra.mxu0 0
      %1239 = vmatprep.subr.bf16.mxu0 0
      %1240 = vmatpush2.bf16.msra.mxu0 0
      %1241 = vmatprep.subr.bf16.mxu0 0
      %1242 = vmatpush2.bf16.msra.mxu0 0
      %1243 = vmatprep.subr.bf16.mxu0 0
      %1244 = vmatpush2.bf16.msra.mxu0 0
      %1245 = vmatprep.subr.bf16.mxu0 0
      %1246 = vmatpush2.bf16.msra.mxu0 0
      %1247 = vmatprep.subr.bf16.mxu0 0
      %1248 = vmatpush2.bf16.msra.mxu0 0
      %1249 = vmatprep.mubr.bf16.mxu0 0
      %1250 = vmatmul.mubr.bf16.gmra.mxu0 %v1167
      %v1251 = vpop.f32.mrf.mxu0
      %v1252 = vadd.f32 %v913, %v1251
      %v1253 = vpop.f32.mrf.mxu0
      %v1254 = vpop.f32.mrf.mxu0
      %v1255 = vadd.f32 %v918, %v1254
      %v1256 = vpop.f32.mrf.mxu0
      %1257 = vmatprep.mubr.bf16.mxu0 0
      %1258 = vmatmul.mubr.bf16.gmra.mxu0 %v1170
      %v1259 = vpop.f32.mrf.mxu0
      %v1260 = vadd.f32 %v923, %v1259
      %v1261 = vpop.f32.mrf.mxu0
      %v1262 = vpop.f32.mrf.mxu0
      %v1263 = vadd.f32 %v928, %v1262
      %v1264 = vpop.f32.mrf.mxu0
      %1265 = vmatprep.mubr.bf16.mxu0 0
      %1266 = vmatmul.mubr.bf16.gmra.mxu0 %v1173
      %v1267 = vpop.f32.mrf.mxu0
      %v1268 = vadd.f32 %v933, %v1267
      %v1269 = vpop.f32.mrf.mxu0
      %v1270 = vpop.f32.mrf.mxu0
      %v1271 = vadd.f32 %v938, %v1270
      %v1272 = vpop.f32.mrf.mxu0
      %1273 = vmatprep.mubr.bf16.mxu0 0
      %1274 = vmatmul.mubr.bf16.gmra.mxu0 %v1176
      %v1275 = vpop.f32.mrf.mxu0
      %v1276 = vadd.f32 %v943, %v1275
      %v1277 = vpop.f32.mrf.mxu0
      %v1278 = vpop.f32.mrf.mxu0
      %v1279 = vadd.f32 %v948, %v1278
      %v1280 = vpop.f32.mrf.mxu0
      %1281 = vmatprep.mubr.bf16.mxu0 0
      %1282 = vmatmul.mubr.bf16.gmra.mxu0 %v1179
      %v1283 = vpop.f32.mrf.mxu0
      %v1284 = vadd.f32 %v953, %v1283
      %v1285 = vpop.f32.mrf.mxu0
      %v1286 = vpop.f32.mrf.mxu0
      %v1287 = vadd.f32 %v958, %v1286
      %v1288 = vpop.f32.mrf.mxu0
      %1289 = vmatprep.mubr.bf16.mxu0 0
      %1290 = vmatmul.mubr.bf16.gmra.mxu0 %v1182
      %v1291 = vpop.f32.mrf.mxu0
      %v1292 = vadd.f32 %v963, %v1291
      %v1293 = vpop.f32.mrf.mxu0
      %v1294 = vpop.f32.mrf.mxu0
      %v1295 = vadd.f32 %v968, %v1294
      %v1296 = vpop.f32.mrf.mxu0
      %1297 = vmatprep.mubr.bf16.mxu0 0
      %1298 = vmatmul.mubr.bf16.gmra.mxu0 %v1185
      %v1299 = vpop.f32.mrf.mxu0
      %v1300 = vadd.f32 %v973, %v1299
      %v1301 = vpop.f32.mrf.mxu0
      %v1302 = vpop.f32.mrf.mxu0
      %v1303 = vadd.f32 %v978, %v1302
      %v1304 = vpop.f32.mrf.mxu0
      %1305 = vmatprep.mubr.bf16.mxu0 0
      %1306 = vmatmul.mubr.bf16.gmra.mxu0 %v1188
      %v1307 = vpop.f32.mrf.mxu0
      %v1308 = vadd.f32 %v983, %v1307
      %v1309 = vpop.f32.mrf.mxu0
      %v1310 = vpop.f32.mrf.mxu0
      %v1311 = vadd.f32 %v988, %v1310
      %v1312 = vpop.f32.mrf.mxu0
      %1313 = vmatprep.mubr.bf16.mxu0 0
      %1314 = vmatmul.mubr.bf16.gmra.mxu0 %v1191
      %v1315 = vpop.f32.mrf.mxu0
      %v1316 = vadd.f32 %v993, %v1315
      %v1317 = vpop.f32.mrf.mxu0
      %v1318 = vpop.f32.mrf.mxu0
      %v1319 = vadd.f32 %v998, %v1318
      %v1320 = vpop.f32.mrf.mxu0
      %1321 = vmatprep.mubr.bf16.mxu0 0
      %1322 = vmatmul.mubr.bf16.gmra.mxu0 %v1194
      %v1323 = vpop.f32.mrf.mxu0
      %v1324 = vadd.f32 %v1003, %v1323
      %v1325 = vpop.f32.mrf.mxu0
      %v1326 = vpop.f32.mrf.mxu0
      %v1327 = vadd.f32 %v1008, %v1326
      %v1328 = vpop.f32.mrf.mxu0
      %1329 = vmatprep.mubr.bf16.mxu0 0
      %1330 = vmatmul.mubr.bf16.gmra.mxu0 %v1197
      %v1331 = vpop.f32.mrf.mxu0
      %v1332 = vadd.f32 %v1013, %v1331
      %v1333 = vpop.f32.mrf.mxu0
      %v1334 = vpop.f32.mrf.mxu0
      %v1335 = vadd.f32 %v1018, %v1334
      %v1336 = vpop.f32.mrf.mxu0
      %1337 = vmatprep.mubr.bf16.mxu0 0
      %1338 = vmatmul.mubr.bf16.gmra.mxu0 %v1200
      %v1339 = vpop.f32.mrf.mxu0
      %v1340 = vadd.f32 %v1023, %v1339
      %v1341 = vpop.f32.mrf.mxu0
      %v1342 = vpop.f32.mrf.mxu0
      %v1343 = vadd.f32 %v1028, %v1342
      %v1344 = vpop.f32.mrf.mxu0
      %1345 = vmatprep.mubr.bf16.mxu0 0
      %1346 = vmatmul.mubr.bf16.gmra.mxu0 %v1203
      %v1347 = vpop.f32.mrf.mxu0
      %v1348 = vadd.f32 %v1033, %v1347
      %v1349 = vpop.f32.mrf.mxu0
      %v1350 = vpop.f32.mrf.mxu0
      %v1351 = vadd.f32 %v1038, %v1350
      %v1352 = vpop.f32.mrf.mxu0
      %1353 = vmatprep.mubr.bf16.mxu0 0
      %1354 = vmatmul.mubr.bf16.gmra.mxu0 %v1206
      %v1355 = vpop.f32.mrf.mxu0
      %v1356 = vadd.f32 %v1043, %v1355
      %v1357 = vpop.f32.mrf.mxu0
      %v1358 = vpop.f32.mrf.mxu0
      %v1359 = vadd.f32 %v1048, %v1358
      %v1360 = vpop.f32.mrf.mxu0
      %1361 = vmatprep.mubr.bf16.mxu0 0
      %1362 = vmatmul.mubr.bf16.gmra.mxu0 %v1209
      %v1363 = vpop.f32.mrf.mxu0
      %v1364 = vadd.f32 %v1053, %v1363
      %v1365 = vpop.f32.mrf.mxu0
      %v1366 = vpop.f32.mrf.mxu0
      %v1367 = vadd.f32 %v1058, %v1366
      %v1368 = vpop.f32.mrf.mxu0
      %1369 = vmatprep.mubr.bf16.mxu0 0
      %1370 = vmatmul.mubr.bf16.gmra.mxu0 %v1212
      %v1371 = vpop.f32.mrf.mxu0
      %v1372 = vadd.f32 %v1063, %v1371
      %v1373 = vpop.f32.mrf.mxu0
      %v1374 = vpop.f32.mrf.mxu0
      %v1375 = vadd.f32 %v1068, %v1374
      %v1376 = vpop.f32.mrf.mxu0
      %1377 = vdwg.mxu0
      %v1378 = vld [vmem:[%s7] sm:$0x1]
      %v1380 = vlaneseq
      %v1381 = vshrl.u32 %v1380, 7
      %v1382 = vsub.s32 0, %v1381
      %v1383 = vrot.slane %v1378, %v1382
      %v1385 = vadd.f32 %v1252, %v1383
      %v1386 = vadd.f32 %v1255, %v1383
      %v1387 = vadd.f32 %v1260, %v1383
      %v1388 = vadd.f32 %v1263, %v1383
      %v1389 = vadd.f32 %v1268, %v1383
      %v1390 = vadd.f32 %v1271, %v1383
      %v1391 = vadd.f32 %v1276, %v1383
      %v1392 = vadd.f32 %v1279, %v1383
      %v1393 = vadd.f32 %v1284, %v1383
      %v1394 = vadd.f32 %v1287, %v1383
      %v1395 = vadd.f32 %v1292, %v1383
      %v1396 = vadd.f32 %v1295, %v1383
      %v1397 = vadd.f32 %v1300, %v1383
      %v1398 = vadd.f32 %v1303, %v1383
      %v1399 = vadd.f32 %v1308, %v1383
      %v1400 = vadd.f32 %v1311, %v1383
      %v1401 = vadd.f32 %v1316, %v1383
      %v1402 = vadd.f32 %v1319, %v1383
      %v1403 = vadd.f32 %v1324, %v1383
      %v1404 = vadd.f32 %v1327, %v1383
      %v1405 = vadd.f32 %v1332, %v1383
      %v1406 = vadd.f32 %v1335, %v1383
      %v1407 = vadd.f32 %v1340, %v1383
      %v1408 = vadd.f32 %v1343, %v1383
      %v1409 = vadd.f32 %v1348, %v1383
      %v1410 = vadd.f32 %v1351, %v1383
      %v1411 = vadd.f32 %v1356, %v1383
      %v1412 = vadd.f32 %v1359, %v1383
      %v1413 = vadd.f32 %v1364, %v1383
      %v1414 = vadd.f32 %v1367, %v1383
      %v1415 = vadd.f32 %v1372, %v1383
      %v1416 = vadd.f32 %v1375, %v1383
      %1425 = vrot.lane.b32.xlu0 %v687, 4
      %v1426 = vpop.permute.xlu0 %1425
      %1427 = vrot.lane.b32.xlu0 %v690, 4
      %v1428 = vpop.permute.xlu0 %1427
      %1429 = vrot.lane.b32.xlu0 %v695, 4
      %v1430 = vpop.permute.xlu0 %1429
      %1431 = vrot.lane.b32.xlu0 %v698, 4
      %v1432 = vpop.permute.xlu0 %1431
      %1433 = vrot.lane.b32.xlu0 %v703, 4
      %v1434 = vpop.permute.xlu0 %1433
      %1435 = vrot.lane.b32.xlu0 %v706, 4
      %v1436 = vpop.permute.xlu0 %1435
      %1437 = vrot.lane.b32.xlu0 %v711, 4
      %v1438 = vpop.permute.xlu0 %1437
      %1439 = vrot.lane.b32.xlu0 %v714, 4
      %v1440 = vpop.permute.xlu0 %1439
      %v1449 = vadd.f32 %v559, %v1426
      %v1450 = vadd.f32 %v562, %v1428
      %v1451 = vadd.f32 %v567, %v1430
      %v1452 = vadd.f32 %v570, %v1432
      %v1453 = vadd.f32 %v575, %v1434
      %v1454 = vadd.f32 %v578, %v1436
      %v1455 = vadd.f32 %v583, %v1438
      %v1456 = vadd.f32 %v586, %v1440
      %v1457 = vld [vmem:[%s8] sm:$0x1]
      %v1459 = vlaneseq
      %v1460 = vshrl.u32 %v1459, 7
      %v1461 = vsub.s32 0, %v1460
      %v1462 = vrot.slane %v1457, %v1461
      %1463 = vrot.lane.b32.xlu0 %v1462, 4
      %v1464 = vpop.permute.xlu0 %1463
      %v1466 = vadd.f32 %v1449, %v1464
      %v1467 = vadd.f32 %v1450, %v1464
      %v1468 = vadd.f32 %v1451, %v1464
      %v1469 = vadd.f32 %v1452, %v1464
      %v1470 = vadd.f32 %v1453, %v1464
      %v1471 = vadd.f32 %v1454, %v1464
      %v1472 = vadd.f32 %v1455, %v1464
      %v1473 = vadd.f32 %v1456, %v1464
      %vm1474 = vcmp.gt.f32.partialorder %v1385, 20.0
      %vm1475 = vcmp.gt.f32.partialorder %v1386, 20.0
      %vm1476 = vcmp.gt.f32.partialorder %v1387, 20.0
      %vm1477 = vcmp.gt.f32.partialorder %v1388, 20.0
      %vm1478 = vcmp.gt.f32.partialorder %v1389, 20.0
      %vm1479 = vcmp.gt.f32.partialorder %v1390, 20.0
      %vm1480 = vcmp.gt.f32.partialorder %v1391, 20.0
      %vm1481 = vcmp.gt.f32.partialorder %v1392, 20.0
      %vm1482 = vcmp.gt.f32.partialorder %v1393, 20.0
      %vm1483 = vcmp.gt.f32.partialorder %v1394, 20.0
      %vm1484 = vcmp.gt.f32.partialorder %v1395, 20.0
      %vm1485 = vcmp.gt.f32.partialorder %v1396, 20.0
      %vm1486 = vcmp.gt.f32.partialorder %v1397, 20.0
      %vm1487 = vcmp.gt.f32.partialorder %v1398, 20.0
      %vm1488 = vcmp.gt.f32.partialorder %v1399, 20.0
      %vm1489 = vcmp.gt.f32.partialorder %v1400, 20.0
      %vm1490 = vcmp.gt.f32.partialorder %v1401, 20.0
      %vm1491 = vcmp.gt.f32.partialorder %v1402, 20.0
      %vm1492 = vcmp.gt.f32.partialorder %v1403, 20.0
      %vm1493 = vcmp.gt.f32.partialorder %v1404, 20.0
      %vm1494 = vcmp.gt.f32.partialorder %v1405, 20.0
      %vm1495 = vcmp.gt.f32.partialorder %v1406, 20.0
      %vm1496 = vcmp.gt.f32.partialorder %v1407, 20.0
      %vm1497 = vcmp.gt.f32.partialorder %v1408, 20.0
      %vm1498 = vcmp.gt.f32.partialorder %v1409, 20.0
      %vm1499 = vcmp.gt.f32.partialorder %v1410, 20.0
      %vm1500 = vcmp.gt.f32.partialorder %v1411, 20.0
      %vm1501 = vcmp.gt.f32.partialorder %v1412, 20.0
      %vm1502 = vcmp.gt.f32.partialorder %v1413, 20.0
      %vm1503 = vcmp.gt.f32.partialorder %v1414, 20.0
      %vm1504 = vcmp.gt.f32.partialorder %v1415, 20.0
      %vm1505 = vcmp.gt.f32.partialorder %v1416, 20.0
      %v1506 = vmin.f32 %v1385, 20.0
      %v1507 = vmin.f32 %v1386, 20.0
      %v1508 = vmin.f32 %v1387, 20.0
      %v1509 = vmin.f32 %v1388, 20.0
      %v1510 = vmin.f32 %v1389, 20.0
      %v1511 = vmin.f32 %v1390, 20.0
      %v1512 = vmin.f32 %v1391, 20.0
      %v1513 = vmin.f32 %v1392, 20.0
      %v1514 = vmin.f32 %v1393, 20.0
      %v1515 = vmin.f32 %v1394, 20.0
      %v1516 = vmin.f32 %v1395, 20.0
      %v1517 = vmin.f32 %v1396, 20.0
      %v1518 = vmin.f32 %v1397, 20.0
      %v1519 = vmin.f32 %v1398, 20.0
      %v1520 = vmin.f32 %v1399, 20.0
      %v1521 = vmin.f32 %v1400, 20.0
      %v1522 = vmin.f32 %v1401, 20.0
      %v1523 = vmin.f32 %v1402, 20.0
      %v1524 = vmin.f32 %v1403, 20.0
      %v1525 = vmin.f32 %v1404, 20.0
      %v1526 = vmin.f32 %v1405, 20.0
      %v1527 = vmin.f32 %v1406, 20.0
      %v1528 = vmin.f32 %v1407, 20.0
      %v1529 = vmin.f32 %v1408, 20.0
      %v1530 = vmin.f32 %v1409, 20.0
      %v1531 = vmin.f32 %v1410, 20.0
      %v1532 = vmin.f32 %v1411, 20.0
      %v1533 = vmin.f32 %v1412, 20.0
      %v1534 = vmin.f32 %v1413, 20.0
      %v1535 = vmin.f32 %v1414, 20.0
      %v1536 = vmin.f32 %v1415, 20.0
      %v1537 = vmin.f32 %v1416, 20.0
      %v1538 = vmul.f32 %v1506, 1.442695
      %v1539 = vpow.pop %v1538
      %v1540 = vmul.f32 %v1507, 1.442695
      %v1541 = vpow.pop %v1540
      %v1542 = vmul.f32 %v1508, 1.442695
      %v1543 = vpow.pop %v1542
      %v1544 = vmul.f32 %v1509, 1.442695
      %v1545 = vpow.pop %v1544
      %v1546 = vmul.f32 %v1510, 1.442695
      %v1547 = vpow.pop %v1546
      %v1548 = vmul.f32 %v1511, 1.442695
      %v1549 = vpow.pop %v1548
      %v1550 = vmul.f32 %v1512, 1.442695
      %v1551 = vpow.pop %v1550
      %v1552 = vmul.f32 %v1513, 1.442695
      %v1553 = vpow.pop %v1552
      %v1554 = vmul.f32 %v1514, 1.442695
      %v1555 = vpow.pop %v1554
      %v1556 = vmul.f32 %v1515, 1.442695
      %v1557 = vpow.pop %v1556
      %v1558 = vmul.f32 %v1516, 1.442695
      %v1559 = vpow.pop %v1558
      %v1560 = vmul.f32 %v1517, 1.442695
      %v1561 = vpow.pop %v1560
      %v1562 = vmul.f32 %v1518, 1.442695
      %v1563 = vpow.pop %v1562
      %v1564 = vmul.f32 %v1519, 1.442695
      %v1565 = vpow.pop %v1564
      %v1566 = vmul.f32 %v1520, 1.442695
      %v1567 = vpow.pop %v1566
      %v1568 = vmul.f32 %v1521, 1.442695
      %v1569 = vpow.pop %v1568
      %v1570 = vmul.f32 %v1522, 1.442695
      %v1571 = vpow.pop %v1570
      %v1572 = vmul.f32 %v1523, 1.442695
      %v1573 = vpow.pop %v1572
      %v1574 = vmul.f32 %v1524, 1.442695
      %v1575 = vpow.pop %v1574
      %v1576 = vmul.f32 %v1525, 1.442695
      %v1577 = vpow.pop %v1576
      %v1578 = vmul.f32 %v1526, 1.442695
      %v1579 = vpow.pop %v1578
      %v1580 = vmul.f32 %v1527, 1.442695
      %v1581 = vpow.pop %v1580
      %v1582 = vmul.f32 %v1528, 1.442695
      %v1583 = vpow.pop %v1582
      %v1584 = vmul.f32 %v1529, 1.442695
      %v1585 = vpow.pop %v1584
      %v1586 = vmul.f32 %v1530, 1.442695
      %v1587 = vpow.pop %v1586
      %v1588 = vmul.f32 %v1531, 1.442695
      %v1589 = vpow.pop %v1588
      %v1590 = vmul.f32 %v1532, 1.442695
      %v1591 = vpow.pop %v1590
      %v1592 = vmul.f32 %v1533, 1.442695
      %v1593 = vpow.pop %v1592
      %v1594 = vmul.f32 %v1534, 1.442695
      %v1595 = vpow.pop %v1594
      %v1596 = vmul.f32 %v1535, 1.442695
      %v1597 = vpow.pop %v1596
      %v1598 = vmul.f32 %v1536, 1.442695
      %v1599 = vpow.pop %v1598
      %v1600 = vmul.f32 %v1537, 1.442695
      %v1601 = vpow.pop %v1600
      %v1602 = vadd.f32 %v1539, 1.0
      %v1603 = vlog2.pop %v1602
      %v1604 = vmul.f32 %v1603, 0.6931472
      %v1605 = vmul.f32 -0.5, %v1539
      %v1606 = vadd.f32 %v1605, 1.0
      %v1607 = vmul.f32 %v1606, %v1539
      %v1608 = vand.u32 2147483647, %v1539
      %vm1609 = vcmp.lt.f32.partialorder %v1608, 0.0004427343
      %v1610 = vsel %vm1609, %v1607, %v1604
      %v1611 = vadd.f32 %v1541, 1.0
      %v1612 = vlog2.pop %v1611
      %v1613 = vmul.f32 %v1612, 0.6931472
      %v1614 = vmul.f32 -0.5, %v1541
      %v1615 = vadd.f32 %v1614, 1.0
      %v1616 = vmul.f32 %v1615, %v1541
      %v1617 = vand.u32 2147483647, %v1541
      %vm1618 = vcmp.lt.f32.partialorder %v1617, 0.0004427343
      %v1619 = vsel %vm1618, %v1616, %v1613
      %v1620 = vadd.f32 %v1543, 1.0
      %v1621 = vlog2.pop %v1620
      %v1622 = vmul.f32 %v1621, 0.6931472
      %v1623 = vmul.f32 -0.5, %v1543
      %v1624 = vadd.f32 %v1623, 1.0
      %v1625 = vmul.f32 %v1624, %v1543
      %v1626 = vand.u32 2147483647, %v1543
      %vm1627 = vcmp.lt.f32.partialorder %v1626, 0.0004427343
      %v1628 = vsel %vm1627, %v1625, %v1622
      %v1629 = vadd.f32 %v1545, 1.0
      %v1630 = vlog2.pop %v1629
      %v1631 = vmul.f32 %v1630, 0.6931472
      %v1632 = vmul.f32 -0.5, %v1545
      %v1633 = vadd.f32 %v1632, 1.0
      %v1634 = vmul.f32 %v1633, %v1545
      %v1635 = vand.u32 2147483647, %v1545
      %vm1636 = vcmp.lt.f32.partialorder %v1635, 0.0004427343
      %v1637 = vsel %vm1636, %v1634, %v1631
      %v1638 = vadd.f32 %v1547, 1.0
      %v1639 = vlog2.pop %v1638
      %v1640 = vmul.f32 %v1639, 0.6931472
      %v1641 = vmul.f32 -0.5, %v1547
      %v1642 = vadd.f32 %v1641, 1.0
      %v1643 = vmul.f32 %v1642, %v1547
      %v1644 = vand.u32 2147483647, %v1547
      %vm1645 = vcmp.lt.f32.partialorder %v1644, 0.0004427343
      %v1646 = vsel %vm1645, %v1643, %v1640
      %v1647 = vadd.f32 %v1549, 1.0
      %v1648 = vlog2.pop %v1647
      %v1649 = vmul.f32 %v1648, 0.6931472
      %v1650 = vmul.f32 -0.5, %v1549
      %v1651 = vadd.f32 %v1650, 1.0
      %v1652 = vmul.f32 %v1651, %v1549
      %v1653 = vand.u32 2147483647, %v1549
      %vm1654 = vcmp.lt.f32.partialorder %v1653, 0.0004427343
      %v1655 = vsel %vm1654, %v1652, %v1649
      %v1656 = vadd.f32 %v1551, 1.0
      %v1657 = vlog2.pop %v1656
      %v1658 = vmul.f32 %v1657, 0.6931472
      %v1659 = vmul.f32 -0.5, %v1551
      %v1660 = vadd.f32 %v1659, 1.0
      %v1661 = vmul.f32 %v1660, %v1551
      %v1662 = vand.u32 2147483647, %v1551
      %vm1663 = vcmp.lt.f32.partialorder %v1662, 0.0004427343
      %v1664 = vsel %vm1663, %v1661, %v1658
      %v1665 = vadd.f32 %v1553, 1.0
      %v1666 = vlog2.pop %v1665
      %v1667 = vmul.f32 %v1666, 0.6931472
      %v1668 = vmul.f32 -0.5, %v1553
      %v1669 = vadd.f32 %v1668, 1.0
      %v1670 = vmul.f32 %v1669, %v1553
      %v1671 = vand.u32 2147483647, %v1553
      %vm1672 = vcmp.lt.f32.partialorder %v1671, 0.0004427343
      %v1673 = vsel %vm1672, %v1670, %v1667
      %v1674 = vadd.f32 %v1555, 1.0
      %v1675 = vlog2.pop %v1674
      %v1676 = vmul.f32 %v1675, 0.6931472
      %v1677 = vmul.f32 -0.5, %v1555
      %v1678 = vadd.f32 %v1677, 1.0
      %v1679 = vmul.f32 %v1678, %v1555
      %v1680 = vand.u32 2147483647, %v1555
      %vm1681 = vcmp.lt.f32.partialorder %v1680, 0.0004427343
      %v1682 = vsel %vm1681, %v1679, %v1676
      %v1683 = vadd.f32 %v1557, 1.0
      %v1684 = vlog2.pop %v1683
      %v1685 = vmul.f32 %v1684, 0.6931472
      %v1686 = vmul.f32 -0.5, %v1557
      %v1687 = vadd.f32 %v1686, 1.0
      %v1688 = vmul.f32 %v1687, %v1557
      %v1689 = vand.u32 2147483647, %v1557
      %vm1690 = vcmp.lt.f32.partialorder %v1689, 0.0004427343
      %v1691 = vsel %vm1690, %v1688, %v1685
      %v1692 = vadd.f32 %v1559, 1.0
      %v1693 = vlog2.pop %v1692
      %v1694 = vmul.f32 %v1693, 0.6931472
      %v1695 = vmul.f32 -0.5, %v1559
      %v1696 = vadd.f32 %v1695, 1.0
      %v1697 = vmul.f32 %v1696, %v1559
      %v1698 = vand.u32 2147483647, %v1559
      %vm1699 = vcmp.lt.f32.partialorder %v1698, 0.0004427343
      %v1700 = vsel %vm1699, %v1697, %v1694
      %v1701 = vadd.f32 %v1561, 1.0
      %v1702 = vlog2.pop %v1701
      %v1703 = vmul.f32 %v1702, 0.6931472
      %v1704 = vmul.f32 -0.5, %v1561
      %v1705 = vadd.f32 %v1704, 1.0
      %v1706 = vmul.f32 %v1705, %v1561
      %v1707 = vand.u32 2147483647, %v1561
      %vm1708 = vcmp.lt.f32.partialorder %v1707, 0.0004427343
      %v1709 = vsel %vm1708, %v1706, %v1703
      %v1710 = vadd.f32 %v1563, 1.0
      %v1711 = vlog2.pop %v1710
      %v1712 = vmul.f32 %v1711, 0.6931472
      %v1713 = vmul.f32 -0.5, %v1563
      %v1714 = vadd.f32 %v1713, 1.0
      %v1715 = vmul.f32 %v1714, %v1563
      %v1716 = vand.u32 2147483647, %v1563
      %vm1717 = vcmp.lt.f32.partialorder %v1716, 0.0004427343
      %v1718 = vsel %vm1717, %v1715, %v1712
      %v1719 = vadd.f32 %v1565, 1.0
      %v1720 = vlog2.pop %v1719
      %v1721 = vmul.f32 %v1720, 0.6931472
      %v1722 = vmul.f32 -0.5, %v1565
      %v1723 = vadd.f32 %v1722, 1.0
      %v1724 = vmul.f32 %v1723, %v1565
      %v1725 = vand.u32 2147483647, %v1565
      %vm1726 = vcmp.lt.f32.partialorder %v1725, 0.0004427343
      %v1727 = vsel %vm1726, %v1724, %v1721
      %v1728 = vadd.f32 %v1567, 1.0
      %v1729 = vlog2.pop %v1728
      %v1730 = vmul.f32 %v1729, 0.6931472
      %v1731 = vmul.f32 -0.5, %v1567
      %v1732 = vadd.f32 %v1731, 1.0
      %v1733 = vmul.f32 %v1732, %v1567
      %v1734 = vand.u32 2147483647, %v1567
      %vm1735 = vcmp.lt.f32.partialorder %v1734, 0.0004427343
      %v1736 = vsel %vm1735, %v1733, %v1730
      %v1737 = vadd.f32 %v1569, 1.0
      %v1738 = vlog2.pop %v1737
      %v1739 = vmul.f32 %v1738, 0.6931472
      %v1740 = vmul.f32 -0.5, %v1569
      %v1741 = vadd.f32 %v1740, 1.0
      %v1742 = vmul.f32 %v1741, %v1569
      %v1743 = vand.u32 2147483647, %v1569
      %vm1744 = vcmp.lt.f32.partialorder %v1743, 0.0004427343
      %v1745 = vsel %vm1744, %v1742, %v1739
      %v1746 = vadd.f32 %v1571, 1.0
      %v1747 = vlog2.pop %v1746
      %v1748 = vmul.f32 %v1747, 0.6931472
      %v1749 = vmul.f32 -0.5, %v1571
      %v1750 = vadd.f32 %v1749, 1.0
      %v1751 = vmul.f32 %v1750, %v1571
      %v1752 = vand.u32 2147483647, %v1571
      %vm1753 = vcmp.lt.f32.partialorder %v1752, 0.0004427343
      %v1754 = vsel %vm1753, %v1751, %v1748
      %v1755 = vadd.f32 %v1573, 1.0
      %v1756 = vlog2.pop %v1755
      %v1757 = vmul.f32 %v1756, 0.6931472
      %v1758 = vmul.f32 -0.5, %v1573
      %v1759 = vadd.f32 %v1758, 1.0
      %v1760 = vmul.f32 %v1759, %v1573
      %v1761 = vand.u32 2147483647, %v1573
      %vm1762 = vcmp.lt.f32.partialorder %v1761, 0.0004427343
      %v1763 = vsel %vm1762, %v1760, %v1757
      %v1764 = vadd.f32 %v1575, 1.0
      %v1765 = vlog2.pop %v1764
      %v1766 = vmul.f32 %v1765, 0.6931472
      %v1767 = vmul.f32 -0.5, %v1575
      %v1768 = vadd.f32 %v1767, 1.0
      %v1769 = vmul.f32 %v1768, %v1575
      %v1770 = vand.u32 2147483647, %v1575
      %vm1771 = vcmp.lt.f32.partialorder %v1770, 0.0004427343
      %v1772 = vsel %vm1771, %v1769, %v1766
      %v1773 = vadd.f32 %v1577, 1.0
      %v1774 = vlog2.pop %v1773
      %v1775 = vmul.f32 %v1774, 0.6931472
      %v1776 = vmul.f32 -0.5, %v1577
      %v1777 = vadd.f32 %v1776, 1.0
      %v1778 = vmul.f32 %v1777, %v1577
      %v1779 = vand.u32 2147483647, %v1577
      %vm1780 = vcmp.lt.f32.partialorder %v1779, 0.0004427343
      %v1781 = vsel %vm1780, %v1778, %v1775
      %v1782 = vadd.f32 %v1579, 1.0
      %v1783 = vlog2.pop %v1782
      %v1784 = vmul.f32 %v1783, 0.6931472
      %v1785 = vmul.f32 -0.5, %v1579
      %v1786 = vadd.f32 %v1785, 1.0
      %v1787 = vmul.f32 %v1786, %v1579
      %v1788 = vand.u32 2147483647, %v1579
      %vm1789 = vcmp.lt.f32.partialorder %v1788, 0.0004427343
      %v1790 = vsel %vm1789, %v1787, %v1784
      %v1791 = vadd.f32 %v1581, 1.0
      %v1792 = vlog2.pop %v1791
      %v1793 = vmul.f32 %v1792, 0.6931472
      %v1794 = vmul.f32 -0.5, %v1581
      %v1795 = vadd.f32 %v1794, 1.0
      %v1796 = vmul.f32 %v1795, %v1581
      %v1797 = vand.u32 2147483647, %v1581
      %vm1798 = vcmp.lt.f32.partialorder %v1797, 0.0004427343
      %v1799 = vsel %vm1798, %v1796, %v1793
      %v1800 = vadd.f32 %v1583, 1.0
      %v1801 = vlog2.pop %v1800
      %v1802 = vmul.f32 %v1801, 0.6931472
      %v1803 = vmul.f32 -0.5, %v1583
      %v1804 = vadd.f32 %v1803, 1.0
      %v1805 = vmul.f32 %v1804, %v1583
      %v1806 = vand.u32 2147483647, %v1583
      %vm1807 = vcmp.lt.f32.partialorder %v1806, 0.0004427343
      %v1808 = vsel %vm1807, %v1805, %v1802
      %v1809 = vadd.f32 %v1585, 1.0
      %v1810 = vlog2.pop %v1809
      %v1811 = vmul.f32 %v1810, 0.6931472
      %v1812 = vmul.f32 -0.5, %v1585
      %v1813 = vadd.f32 %v1812, 1.0
      %v1814 = vmul.f32 %v1813, %v1585
      %v1815 = vand.u32 2147483647, %v1585
      %vm1816 = vcmp.lt.f32.partialorder %v1815, 0.0004427343
      %v1817 = vsel %vm1816, %v1814, %v1811
      %v1818 = vadd.f32 %v1587, 1.0
      %v1819 = vlog2.pop %v1818
      %v1820 = vmul.f32 %v1819, 0.6931472
      %v1821 = vmul.f32 -0.5, %v1587
      %v1822 = vadd.f32 %v1821, 1.0
      %v1823 = vmul.f32 %v1822, %v1587
      %v1824 = vand.u32 2147483647, %v1587
      %vm1825 = vcmp.lt.f32.partialorder %v1824, 0.0004427343
      %v1826 = vsel %vm1825, %v1823, %v1820
      %v1827 = vadd.f32 %v1589, 1.0
      %v1828 = vlog2.pop %v1827
      %v1829 = vmul.f32 %v1828, 0.6931472
      %v1830 = vmul.f32 -0.5, %v1589
      %v1831 = vadd.f32 %v1830, 1.0
      %v1832 = vmul.f32 %v1831, %v1589
      %v1833 = vand.u32 2147483647, %v1589
      %vm1834 = vcmp.lt.f32.partialorder %v1833, 0.0004427343
      %v1835 = vsel %vm1834, %v1832, %v1829
      %v1836 = vadd.f32 %v1591, 1.0
      %v1837 = vlog2.pop %v1836
      %v1838 = vmul.f32 %v1837, 0.6931472
      %v1839 = vmul.f32 -0.5, %v1591
      %v1840 = vadd.f32 %v1839, 1.0
      %v1841 = vmul.f32 %v1840, %v1591
      %v1842 = vand.u32 2147483647, %v1591
      %vm1843 = vcmp.lt.f32.partialorder %v1842, 0.0004427343
      %v1844 = vsel %vm1843, %v1841, %v1838
      %v1845 = vadd.f32 %v1593, 1.0
      %v1846 = vlog2.pop %v1845
      %v1847 = vmul.f32 %v1846, 0.6931472
      %v1848 = vmul.f32 -0.5, %v1593
      %v1849 = vadd.f32 %v1848, 1.0
      %v1850 = vmul.f32 %v1849, %v1593
      %v1851 = vand.u32 2147483647, %v1593
      %vm1852 = vcmp.lt.f32.partialorder %v1851, 0.0004427343
      %v1853 = vsel %vm1852, %v1850, %v1847
      %v1854 = vadd.f32 %v1595, 1.0
      %v1855 = vlog2.pop %v1854
      %v1856 = vmul.f32 %v1855, 0.6931472
      %v1857 = vmul.f32 -0.5, %v1595
      %v1858 = vadd.f32 %v1857, 1.0
      %v1859 = vmul.f32 %v1858, %v1595
      %v1860 = vand.u32 2147483647, %v1595
      %vm1861 = vcmp.lt.f32.partialorder %v1860, 0.0004427343
      %v1862 = vsel %vm1861, %v1859, %v1856
      %v1863 = vadd.f32 %v1597, 1.0
      %v1864 = vlog2.pop %v1863
      %v1865 = vmul.f32 %v1864, 0.6931472
      %v1866 = vmul.f32 -0.5, %v1597
      %v1867 = vadd.f32 %v1866, 1.0
      %v1868 = vmul.f32 %v1867, %v1597
      %v1869 = vand.u32 2147483647, %v1597
      %vm1870 = vcmp.lt.f32.partialorder %v1869, 0.0004427343
      %v1871 = vsel %vm1870, %v1868, %v1865
      %v1872 = vadd.f32 %v1599, 1.0
      %v1873 = vlog2.pop %v1872
      %v1874 = vmul.f32 %v1873, 0.6931472
      %v1875 = vmul.f32 -0.5, %v1599
      %v1876 = vadd.f32 %v1875, 1.0
      %v1877 = vmul.f32 %v1876, %v1599
      %v1878 = vand.u32 2147483647, %v1599
      %vm1879 = vcmp.lt.f32.partialorder %v1878, 0.0004427343
      %v1880 = vsel %vm1879, %v1877, %v1874
      %v1881 = vadd.f32 %v1601, 1.0
      %v1882 = vlog2.pop %v1881
      %v1883 = vmul.f32 %v1882, 0.6931472
      %v1884 = vmul.f32 -0.5, %v1601
      %v1885 = vadd.f32 %v1884, 1.0
      %v1886 = vmul.f32 %v1885, %v1601
      %v1887 = vand.u32 2147483647, %v1601
      %vm1888 = vcmp.lt.f32.partialorder %v1887, 0.0004427343
      %v1889 = vsel %vm1888, %v1886, %v1883
      %v1890 = vsel %vm1474, %v1385, %v1610
      %v1891 = vsel %vm1475, %v1386, %v1619
      %v1892 = vsel %vm1476, %v1387, %v1628
      %v1893 = vsel %vm1477, %v1388, %v1637
      %v1894 = vsel %vm1478, %v1389, %v1646
      %v1895 = vsel %vm1479, %v1390, %v1655
      %v1896 = vsel %vm1480, %v1391, %v1664
      %v1897 = vsel %vm1481, %v1392, %v1673
      %v1898 = vsel %vm1482, %v1393, %v1682
      %v1899 = vsel %vm1483, %v1394, %v1691
      %v1900 = vsel %vm1484, %v1395, %v1700
      %v1901 = vsel %vm1485, %v1396, %v1709
      %v1902 = vsel %vm1486, %v1397, %v1718
      %v1903 = vsel %vm1487, %v1398, %v1727
      %v1904 = vsel %vm1488, %v1399, %v1736
      %v1905 = vsel %vm1489, %v1400, %v1745
      %v1906 = vsel %vm1490, %v1401, %v1754
      %v1907 = vsel %vm1491, %v1402, %v1763
      %v1908 = vsel %vm1492, %v1403, %v1772
      %v1909 = vsel %vm1493, %v1404, %v1781
      %v1910 = vsel %vm1494, %v1405, %v1790
      %v1911 = vsel %vm1495, %v1406, %v1799
      %v1912 = vsel %vm1496, %v1407, %v1808
      %v1913 = vsel %vm1497, %v1408, %v1817
      %v1914 = vsel %vm1498, %v1409, %v1826
      %v1915 = vsel %vm1499, %v1410, %v1835
      %v1916 = vsel %vm1500, %v1411, %v1844
      %v1917 = vsel %vm1501, %v1412, %v1853
      %v1918 = vsel %vm1502, %v1413, %v1862
      %v1919 = vsel %vm1503, %v1414, %v1871
      %v1920 = vsel %vm1504, %v1415, %v1880
      %v1921 = vsel %vm1505, %v1416, %v1889
      %v1922 = vtanh.pop %v1890
      %v1923 = vtanh.pop %v1891
      %v1924 = vtanh.pop %v1892
      %v1925 = vtanh.pop %v1893
      %v1926 = vtanh.pop %v1894
      %v1927 = vtanh.pop %v1895
      %v1928 = vtanh.pop %v1896
      %v1929 = vtanh.pop %v1897
      %v1930 = vtanh.pop %v1898
      %v1931 = vtanh.pop %v1899
      %v1932 = vtanh.pop %v1900
      %v1933 = vtanh.pop %v1901
      %v1934 = vtanh.pop %v1902
      %v1935 = vtanh.pop %v1903
      %v1936 = vtanh.pop %v1904
      %v1937 = vtanh.pop %v1905
      %v1938 = vtanh.pop %v1906
      %v1939 = vtanh.pop %v1907
      %v1940 = vtanh.pop %v1908
      %v1941 = vtanh.pop %v1909
      %v1942 = vtanh.pop %v1910
      %v1943 = vtanh.pop %v1911
      %v1944 = vtanh.pop %v1912
      %v1945 = vtanh.pop %v1913
      %v1946 = vtanh.pop %v1914
      %v1947 = vtanh.pop %v1915
      %v1948 = vtanh.pop %v1916
      %v1949 = vtanh.pop %v1917
      %v1950 = vtanh.pop %v1918
      %v1951 = vtanh.pop %v1919
      %v1952 = vtanh.pop %v1920
      %v1953 = vtanh.pop %v1921
      %v1954 = vmul.f32 %v1385, %v1922
      %v1955 = vmul.f32 %v1386, %v1923
      %v1956 = vmul.f32 %v1387, %v1924
      %v1957 = vmul.f32 %v1388, %v1925
      %v1958 = vmul.f32 %v1389, %v1926
      %v1959 = vmul.f32 %v1390, %v1927
      %v1960 = vmul.f32 %v1391, %v1928
      %v1961 = vmul.f32 %v1392, %v1929
      %v1962 = vmul.f32 %v1393, %v1930
      %v1963 = vmul.f32 %v1394, %v1931
      %v1964 = vmul.f32 %v1395, %v1932
      %v1965 = vmul.f32 %v1396, %v1933
      %v1966 = vmul.f32 %v1397, %v1934
      %v1967 = vmul.f32 %v1398, %v1935
      %v1968 = vmul.f32 %v1399, %v1936
      %v1969 = vmul.f32 %v1400, %v1937
      %v1970 = vmul.f32 %v1401, %v1938
      %v1971 = vmul.f32 %v1402, %v1939
      %v1972 = vmul.f32 %v1403, %v1940
      %v1973 = vmul.f32 %v1404, %v1941
      %v1974 = vmul.f32 %v1405, %v1942
      %v1975 = vmul.f32 %v1406, %v1943
      %v1976 = vmul.f32 %v1407, %v1944
      %v1977 = vmul.f32 %v1408, %v1945
      %v1978 = vmul.f32 %v1409, %v1946
      %v1979 = vmul.f32 %v1410, %v1947
      %v1980 = vmul.f32 %v1411, %v1948
      %v1981 = vmul.f32 %v1412, %v1949
      %v1982 = vmul.f32 %v1413, %v1950
      %v1983 = vmul.f32 %v1414, %v1951
      %v1984 = vmul.f32 %v1415, %v1952
      %v1985 = vmul.f32 %v1416, %v1953
      %vm1986 = vcmp.gt.f32.partialorder %v1466, 20.0
      %vm1987 = vcmp.gt.f32.partialorder %v1467, 20.0
      %vm1988 = vcmp.gt.f32.partialorder %v1468, 20.0
      %vm1989 = vcmp.gt.f32.partialorder %v1469, 20.0
      %vm1990 = vcmp.gt.f32.partialorder %v1470, 20.0
      %vm1991 = vcmp.gt.f32.partialorder %v1471, 20.0
      %vm1992 = vcmp.gt.f32.partialorder %v1472, 20.0
      %vm1993 = vcmp.gt.f32.partialorder %v1473, 20.0
      %v1994 = vmin.f32 %v1466, 20.0
      %v1995 = vmin.f32 %v1467, 20.0
      %v1996 = vmin.f32 %v1468, 20.0
      %v1997 = vmin.f32 %v1469, 20.0
      %v1998 = vmin.f32 %v1470, 20.0
      %v1999 = vmin.f32 %v1471, 20.0
      %v2000 = vmin.f32 %v1472, 20.0
      %v2001 = vmin.f32 %v1473, 20.0
      %v2002 = vmul.f32 %v1994, 1.442695
      %v2003 = vpow.pop %v2002
      %v2004 = vmul.f32 %v1995, 1.442695
      %v2005 = vpow.pop %v2004
      %v2006 = vmul.f32 %v1996, 1.442695
      %v2007 = vpow.pop %v2006
      %v2008 = vmul.f32 %v1997, 1.442695
      %v2009 = vpow.pop %v2008
      %v2010 = vmul.f32 %v1998, 1.442695
      %v2011 = vpow.pop %v2010
      %v2012 = vmul.f32 %v1999, 1.442695
      %v2013 = vpow.pop %v2012
      %v2014 = vmul.f32 %v2000, 1.442695
      %v2015 = vpow.pop %v2014
      %v2016 = vmul.f32 %v2001, 1.442695
      %v2017 = vpow.pop %v2016
      %v2018 = vadd.f32 %v2003, 1.0
      %v2019 = vlog2.pop %v2018
      %v2020 = vmul.f32 %v2019, 0.6931472
      %v2021 = vmul.f32 -0.5, %v2003
      %v2022 = vadd.f32 %v2021, 1.0
      %v2023 = vmul.f32 %v2022, %v2003
      %v2024 = vand.u32 2147483647, %v2003
      %vm2025 = vcmp.lt.f32.partialorder %v2024, 0.0004427343
      %v2026 = vsel %vm2025, %v2023, %v2020
      %v2027 = vadd.f32 %v2005, 1.0
      %v2028 = vlog2.pop %v2027
      %v2029 = vmul.f32 %v2028, 0.6931472
      %v2030 = vmul.f32 -0.5, %v2005
      %v2031 = vadd.f32 %v2030, 1.0
      %v2032 = vmul.f32 %v2031, %v2005
      %v2033 = vand.u32 2147483647, %v2005
      %vm2034 = vcmp.lt.f32.partialorder %v2033, 0.0004427343
      %v2035 = vsel %vm2034, %v2032, %v2029
      %v2036 = vadd.f32 %v2007, 1.0
      %v2037 = vlog2.pop %v2036
      %v2038 = vmul.f32 %v2037, 0.6931472
      %v2039 = vmul.f32 -0.5, %v2007
      %v2040 = vadd.f32 %v2039, 1.0
      %v2041 = vmul.f32 %v2040, %v2007
      %v2042 = vand.u32 2147483647, %v2007
      %vm2043 = vcmp.lt.f32.partialorder %v2042, 0.0004427343
      %v2044 = vsel %vm2043, %v2041, %v2038
      %v2045 = vadd.f32 %v2009, 1.0
      %v2046 = vlog2.pop %v2045
      %v2047 = vmul.f32 %v2046, 0.6931472
      %v2048 = vmul.f32 -0.5, %v2009
      %v2049 = vadd.f32 %v2048, 1.0
      %v2050 = vmul.f32 %v2049, %v2009
      %v2051 = vand.u32 2147483647, %v2009
      %vm2052 = vcmp.lt.f32.partialorder %v2051, 0.0004427343
      %v2053 = vsel %vm2052, %v2050, %v2047
      %v2054 = vadd.f32 %v2011, 1.0
      %v2055 = vlog2.pop %v2054
      %v2056 = vmul.f32 %v2055, 0.6931472
      %v2057 = vmul.f32 -0.5, %v2011
      %v2058 = vadd.f32 %v2057, 1.0
      %v2059 = vmul.f32 %v2058, %v2011
      %v2060 = vand.u32 2147483647, %v2011
      %vm2061 = vcmp.lt.f32.partialorder %v2060, 0.0004427343
      %v2062 = vsel %vm2061, %v2059, %v2056
      %v2063 = vadd.f32 %v2013, 1.0
      %v2064 = vlog2.pop %v2063
      %v2065 = vmul.f32 %v2064, 0.6931472
      %v2066 = vmul.f32 -0.5, %v2013
      %v2067 = vadd.f32 %v2066, 1.0
      %v2068 = vmul.f32 %v2067, %v2013
      %v2069 = vand.u32 2147483647, %v2013
      %vm2070 = vcmp.lt.f32.partialorder %v2069, 0.0004427343
      %v2071 = vsel %vm2070, %v2068, %v2065
      %v2072 = vadd.f32 %v2015, 1.0
      %v2073 = vlog2.pop %v2072
      %v2074 = vmul.f32 %v2073, 0.6931472
      %v2075 = vmul.f32 -0.5, %v2015
      %v2076 = vadd.f32 %v2075, 1.0
      %v2077 = vmul.f32 %v2076, %v2015
      %v2078 = vand.u32 2147483647, %v2015
      %vm2079 = vcmp.lt.f32.partialorder %v2078, 0.0004427343
      %v2080 = vsel %vm2079, %v2077, %v2074
      %v2081 = vadd.f32 %v2017, 1.0
      %v2082 = vlog2.pop %v2081
      %v2083 = vmul.f32 %v2082, 0.6931472
      %v2084 = vmul.f32 -0.5, %v2017
      %v2085 = vadd.f32 %v2084, 1.0
      %v2086 = vmul.f32 %v2085, %v2017
      %v2087 = vand.u32 2147483647, %v2017
      %vm2088 = vcmp.lt.f32.partialorder %v2087, 0.0004427343
      %v2089 = vsel %vm2088, %v2086, %v2083
      %v2090 = vsel %vm1986, %v1466, %v2026
      %v2091 = vsel %vm1987, %v1467, %v2035
      %v2092 = vsel %vm1988, %v1468, %v2044
      %v2093 = vsel %vm1989, %v1469, %v2053
      %v2094 = vsel %vm1990, %v1470, %v2062
      %v2095 = vsel %vm1991, %v1471, %v2071
      %v2096 = vsel %vm1992, %v1472, %v2080
      %v2097 = vsel %vm1993, %v1473, %v2089
      %v2098 = vtanh.pop %v2090
      %v2099 = vtanh.pop %v2091
      %v2100 = vtanh.pop %v2092
      %v2101 = vtanh.pop %v2093
      %v2102 = vtanh.pop %v2094
      %v2103 = vtanh.pop %v2095
      %v2104 = vtanh.pop %v2096
      %v2105 = vtanh.pop %v2097
      %v2106 = vmul.f32 %v1466, %v2098
      %v2107 = vmul.f32 %v1467, %v2099
      %v2108 = vmul.f32 %v1468, %v2100
      %v2109 = vmul.f32 %v1469, %v2101
      %v2110 = vmul.f32 %v1470, %v2102
      %v2111 = vmul.f32 %v1471, %v2103
      %v2112 = vmul.f32 %v1472, %v2104
      %v2113 = vmul.f32 %v1473, %v2105
      %v2114 = vpack.c.bf16 %v1955, %v1954
      %v2115 = vpack.c.bf16 %v1957, %v1956
      %v2116 = vpack.c.bf16 %v1959, %v1958
      %v2117 = vpack.c.bf16 %v1961, %v1960
      %v2118 = vpack.c.bf16 %v1963, %v1962
      %v2119 = vpack.c.bf16 %v1965, %v1964
      %v2120 = vpack.c.bf16 %v1967, %v1966
      %v2121 = vpack.c.bf16 %v1969, %v1968
      %v2122 = vpack.c.bf16 %v1971, %v1970
      %v2123 = vpack.c.bf16 %v1973, %v1972
      %v2124 = vpack.c.bf16 %v1975, %v1974
      %v2125 = vpack.c.bf16 %v1977, %v1976
      %v2126 = vpack.c.bf16 %v1979, %v1978
      %v2127 = vpack.c.bf16 %v1981, %v1980
      %v2128 = vpack.c.bf16 %v1983, %v1982
      %v2129 = vpack.c.bf16 %v1985, %v1984
      %v2146 = vunpack.c.l.b16 %v2114
      %v2147 = vunpack.c.h.b16 %v2114
      %v2148 = vunpack.c.l.b16 %v2115
      %v2149 = vunpack.c.h.b16 %v2115
      %v2150 = vunpack.c.l.b16 %v2116
      %v2151 = vunpack.c.h.b16 %v2116
      %v2152 = vunpack.c.l.b16 %v2117
      %v2153 = vunpack.c.h.b16 %v2117
      %v2154 = vunpack.c.l.b16 %v2118
      %v2155 = vunpack.c.h.b16 %v2118
      %v2156 = vunpack.c.l.b16 %v2119
      %v2157 = vunpack.c.h.b16 %v2119
      %v2158 = vunpack.c.l.b16 %v2120
      %v2159 = vunpack.c.h.b16 %v2120
      %v2160 = vunpack.c.l.b16 %v2121
      %v2161 = vunpack.c.h.b16 %v2121
      %v2162 = vunpack.c.l.b16 %v2122
      %v2163 = vunpack.c.h.b16 %v2122
      %v2164 = vunpack.c.l.b16 %v2123
      %v2165 = vunpack.c.h.b16 %v2123
      %v2166 = vunpack.c.l.b16 %v2124
      %v2167 = vunpack.c.h.b16 %v2124
      %v2168 = vunpack.c.l.b16 %v2125
      %v2169 = vunpack.c.h.b16 %v2125
      %v2170 = vunpack.c.l.b16 %v2126
      %v2171 = vunpack.c.h.b16 %v2126
      %v2172 = vunpack.c.l.b16 %v2127
      %v2173 = vunpack.c.h.b16 %v2127
      %v2174 = vunpack.c.l.b16 %v2128
      %v2175 = vunpack.c.h.b16 %v2128
      %v2176 = vunpack.c.l.b16 %v2129
      %v2177 = vunpack.c.h.b16 %v2129
      %v2178 = vpack.c.b16 %v2146, %v2146
      %v2179 = vpack.c.b16 %v2147, %v2147
      %v2180 = vpack.c.b16 %v2148, %v2148
      %v2181 = vpack.c.b16 %v2149, %v2149
      %v2182 = vpack.c.b16 %v2150, %v2150
      %v2183 = vpack.c.b16 %v2151, %v2151
      %v2184 = vpack.c.b16 %v2152, %v2152
      %v2185 = vpack.c.b16 %v2153, %v2153
      %v2186 = vpack.c.b16 %v2154, %v2154
      %v2187 = vpack.c.b16 %v2155, %v2155
      %v2188 = vpack.c.b16 %v2156, %v2156
      %v2189 = vpack.c.b16 %v2157, %v2157
      %v2190 = vpack.c.b16 %v2158, %v2158
      %v2191 = vpack.c.b16 %v2159, %v2159
      %v2192 = vpack.c.b16 %v2160, %v2160
      %v2193 = vpack.c.b16 %v2161, %v2161
      %v2194 = vpack.c.b16 %v2162, %v2162
      %v2195 = vpack.c.b16 %v2163, %v2163
      %v2196 = vpack.c.b16 %v2164, %v2164
      %v2197 = vpack.c.b16 %v2165, %v2165
      %v2198 = vpack.c.b16 %v2166, %v2166
      %v2199 = vpack.c.b16 %v2167, %v2167
      %v2200 = vpack.c.b16 %v2168, %v2168
      %v2201 = vpack.c.b16 %v2169, %v2169
      %v2202 = vpack.c.b16 %v2170, %v2170
      %v2203 = vpack.c.b16 %v2171, %v2171
      %v2204 = vpack.c.b16 %v2172, %v2172
      %v2205 = vpack.c.b16 %v2173, %v2173
      %v2206 = vpack.c.b16 %v2174, %v2174
      %v2207 = vpack.c.b16 %v2175, %v2175
      %v2208 = vpack.c.b16 %v2176, %v2176
      %v2209 = vpack.c.b16 %v2177, %v2177
      %vm2242 = vcmask 27648
      %2243 = vst.msk [vmem:[%s413] sm:$0xf] %vm2242, %v2178
      %2244 = vst.msk [vmem:[%s413 + $0x4] sm:$0xf] %vm2242, %v2179
      %2245 = vst.msk [vmem:[%s413 + $0x8] sm:$0xf] %vm2242, %v2180
      %2246 = vst.msk [vmem:[%s413 + $0xc] sm:$0xf] %vm2242, %v2181
      %2247 = vst.msk [vmem:[%s413 + $0x10] sm:$0xf] %vm2242, %v2182
      %2248 = vst.msk [vmem:[%s413 + $0x14] sm:$0xf] %vm2242, %v2183
      %2249 = vst.msk [vmem:[%s413 + $0x18] sm:$0xf] %vm2242, %v2184
      %2250 = vst.msk [vmem:[%s413 + $0x1c] sm:$0xf] %vm2242, %v2185
      %2251 = vst.msk [vmem:[%s413 + $0x20] sm:$0xf] %vm2242, %v2186
      %2252 = vst.msk [vmem:[%s413 + $0x24] sm:$0xf] %vm2242, %v2187
      %2253 = vst.msk [vmem:[%s413 + $0x28] sm:$0xf] %vm2242, %v2188
      %2254 = vst.msk [vmem:[%s413 + $0x2c] sm:$0xf] %vm2242, %v2189
      %2255 = vst.msk [vmem:[%s413 + $0x30] sm:$0xf] %vm2242, %v2190
      %2256 = vst.msk [vmem:[%s413 + $0x34] sm:$0xf] %vm2242, %v2191
      %2257 = vst.msk [vmem:[%s413 + $0x38] sm:$0xf] %vm2242, %v2192
      %2258 = vst.msk [vmem:[%s413 + $0x3c] sm:$0xf] %vm2242, %v2193
      %2259 = vst.msk [vmem:[%s413 + $0x40] sm:$0xf] %vm2242, %v2194
      %2260 = vst.msk [vmem:[%s413 + $0x44] sm:$0xf] %vm2242, %v2195
      %2261 = vst.msk [vmem:[%s413 + $0x48] sm:$0xf] %vm2242, %v2196
      %2262 = vst.msk [vmem:[%s413 + $0x4c] sm:$0xf] %vm2242, %v2197
      %2263 = vst.msk [vmem:[%s413 + $0x50] sm:$0xf] %vm2242, %v2198
      %2264 = vst.msk [vmem:[%s413 + $0x54] sm:$0xf] %vm2242, %v2199
      %2265 = vst.msk [vmem:[%s413 + $0x58] sm:$0xf] %vm2242, %v2200
      %2266 = vst.msk [vmem:[%s413 + $0x5c] sm:$0xf] %vm2242, %v2201
      %2267 = vst.msk [vmem:[%s413 + $0x60] sm:$0xf] %vm2242, %v2202
      %2268 = vst.msk [vmem:[%s413 + $0x64] sm:$0xf] %vm2242, %v2203
      %2269 = vst.msk [vmem:[%s413 + $0x68] sm:$0xf] %vm2242, %v2204
      %2270 = vst.msk [vmem:[%s413 + $0x6c] sm:$0xf] %vm2242, %v2205
      %2271 = vst.msk [vmem:[%s413 + $0x70] sm:$0xf] %vm2242, %v2206
      %2272 = vst.msk [vmem:[%s413 + $0x74] sm:$0xf] %vm2242, %v2207
      %2273 = vst.msk [vmem:[%s413 + $0x78] sm:$0xf] %vm2242, %v2208
      %2274 = vst.msk [vmem:[%s413 + $0x7c] sm:$0xf] %vm2242, %v2209
      %v2275 = vpack.c.bf16 %v2107, %v2106
      %v2276 = vpack.c.bf16 %v2109, %v2108
      %v2277 = vpack.c.bf16 %v2111, %v2110
      %v2278 = vpack.c.bf16 %v2113, %v2112
      %v2283 = vunpack.c.l.b16 %v2275
      %v2284 = vunpack.c.h.b16 %v2275
      %v2285 = vunpack.c.l.b16 %v2276
      %v2286 = vunpack.c.h.b16 %v2276
      %v2287 = vunpack.c.l.b16 %v2277
      %v2288 = vunpack.c.h.b16 %v2277
      %v2289 = vunpack.c.l.b16 %v2278
      %v2290 = vunpack.c.h.b16 %v2278
      %v2291 = vpack.c.b16 %v2283, %v2283
      %v2292 = vpack.c.b16 %v2284, %v2284
      %v2293 = vpack.c.b16 %v2285, %v2285
      %v2294 = vpack.c.b16 %v2286, %v2286
      %v2295 = vpack.c.b16 %v2287, %v2287
      %v2296 = vpack.c.b16 %v2288, %v2288
      %v2297 = vpack.c.b16 %v2289, %v2289
      %v2298 = vpack.c.b16 %v2290, %v2290
      %2299 = vrot.lane.b32.xlu0 %v2291, 124
      %v2300 = vpop.permute.xlu0 %2299
      %2301 = vrot.lane.b32.xlu0 %v2292, 124
      %v2302 = vpop.permute.xlu0 %2301
      %2303 = vrot.lane.b32.xlu0 %v2293, 124
      %v2304 = vpop.permute.xlu0 %2303
      %2305 = vrot.lane.b32.xlu0 %v2294, 124
      %v2306 = vpop.permute.xlu0 %2305
      %2307 = vrot.lane.b32.xlu0 %v2295, 124
      %v2308 = vpop.permute.xlu0 %2307
      %2309 = vrot.lane.b32.xlu0 %v2296, 124
      %v2310 = vpop.permute.xlu0 %2309
      %2311 = vrot.lane.b32.xlu0 %v2297, 124
      %v2312 = vpop.permute.xlu0 %2311
      %2313 = vrot.lane.b32.xlu0 %v2298, 124
      %v2314 = vpop.permute.xlu0 %2313
      %2323 = vst.msk [vmem:[%s419] sm:$0xf] %vm2242, %v2300
      %2324 = vst.msk [vmem:[%s419 + $0x4] sm:$0xf] %vm2242, %v2302
      %2325 = vst.msk [vmem:[%s419 + $0x8] sm:$0xf] %vm2242, %v2304
      %2326 = vst.msk [vmem:[%s419 + $0xc] sm:$0xf] %vm2242, %v2306
      %2327 = vst.msk [vmem:[%s419 + $0x10] sm:$0xf] %vm2242, %v2308
      %2328 = vst.msk [vmem:[%s419 + $0x14] sm:$0xf] %vm2242, %v2310
      %2329 = vst.msk [vmem:[%s419 + $0x18] sm:$0xf] %vm2242, %v2312
      %2330 = vst.msk [vmem:[%s419 + $0x1c] sm:$0xf] %vm2242, %v2314
      %s2331 = smul.u32 32, %s22
      %p2332 = scmp.lt.s32.totalorder %s2331, 63
      %s2333 = scalar_select %p2332, %s2331, 63
      %s2334 = smul.addr %s2333, 4
      %s2335 = scalar_lea.vmem %s9, %s2334
      %s2336 = smul.u32 8, %s22
      %p2337 = scmp.lt.s32.totalorder %s2336, 15
      %s2338 = scalar_select %p2337, %s2336, 15
      %s2339 = smul.addr %s2338, 4
      %s2340 = scalar_lea.vmem %s10, %s2339
      // Predicated region
      $region57: #{bottleneck_forward.4} parent=55 // pred_check
        %p2341 = pneg %p244
      $region58: #{bottleneck_forward.4} parent=55 // pred_check_branch
        %2343 = sbr.rel (%p2341) target = $region60
      $region59: #{bottleneck_forward.4} parent=55 // pred_region
        %s2344 = smul.u32 32, %s22
      $region60: #{bottleneck_forward.4} parent=55 // pred_fallthru
        _
      // Predicated region
      $region61: #{bottleneck_forward.4} parent=55 // pred_check
        %p2345 = pneg %p270
      $region62: #{bottleneck_forward.4} parent=55 // pred_check_branch
        %2347 = sbr.rel (%p2345) target = $region64
      $region63: #{bottleneck_forward.4} parent=55 // pred_region
        %s2348 = smul.u32 8, %s22
      $region64: #{bottleneck_forward.4} parent=55 // pred_fallthru
        _
    $region56: #{bottleneck_forward.4} parent=5 // pred_fallthru
      _
    %p2349 = scmp.le.s32.totalorder 2, %s17
    // Predicated region
    $region65: #{bottleneck_forward.4} parent=5 // pred_check
      %p2350 = pneg %p2349
    $region66: #{bottleneck_forward.4} parent=5 // pred_check_branch
      %2352 = sbr.rel (%p2350) target = $region68
    $region67: #{bottleneck_forward.4} parent=5 // pred_region
      %s2353 = ssub.s32 %s17, 2
      // Predicated region
      $region69: #{bottleneck_forward.4} parent=67 // pred_check
        %p2354 = pneg %p250
      $region70: #{bottleneck_forward.4} parent=67 // pred_check_branch
        %2356 = sbr.rel (%p2354) target = $region72
      $region71: #{bottleneck_forward.4} parent=67 // pred_region
        %s2357 = smul.u32 32, %s23
        %p2358 = scmp.lt.s32.totalorder %s2357, 63
        %s2359 = scalar_select %p2358, %s2357, 63
        %s2360 = smul.addr %s2359, 4
        %s2361 = scalar_lea.vmem %s9, %s2360
      $region72: #{bottleneck_forward.4} parent=67 // pred_fallthru
        _
      // Predicated region
      $region73: #{bottleneck_forward.4} parent=67 // pred_check
        %p2362 = pneg %p276
      $region74: #{bottleneck_forward.4} parent=67 // pred_check_branch
        %2364 = sbr.rel (%p2362) target = $region76
      $region75: #{bottleneck_forward.4} parent=67 // pred_region
        %s2365 = smul.u32 8, %s23
        %p2366 = scmp.lt.s32.totalorder %s2365, 15
        %s2367 = scalar_select %p2366, %s2365, 15
        %s2368 = smul.addr %s2367, 4
        %s2369 = scalar_lea.vmem %s10, %s2368
      $region76: #{bottleneck_forward.4} parent=67 // pred_fallthru
        _
    $region68: #{bottleneck_forward.4} parent=5 // pred_fallthru
      _
  $region6: #{bottleneck_forward.4} parent=0 // loop_footer
    %s21 = sadd.s32 1, %s17
  $region7: #{bottleneck_forward.4} parent=0 // loop_footer_branch
    %16 = sbr.rel target = $region3
  $region8: #{bottleneck_forward.4} parent=0 // loop_exit
    _

// kernel: bottleneck_forward.5
$region0: #{bottleneck_forward.5}
  #allocation0 [shape = 'u32[]', space=smem, size = 0x4, offset = 0x4, fixed_abs, tag = 'smem constant byte address 0x4 - core index']
  #allocation1 [shape = 'u32[144,128]{1,0:T(1,128)}', space=vmem, size = 0x12000, scoped, tag = 'internal scratch']
  %s0 = inlined_call_operand.vmem [shape: bf16[512,4], index: 0, kind: input, shape index: {}]
  %s1 = inlined_call_operand.vmem [shape: bf16[128,4], index: 1, kind: input, shape index: {}]
  %s2 = inlined_call_operand.vmem [shape: bf16[128,4], index: 2, kind: input, shape index: {}]
  %s3 = inlined_call_operand.vmem [shape: f32[256,64], index: 3, kind: input, shape index: {}]
  %s4 = inlined_call_operand.vmem [shape: bf16[4,4], index: 4, kind: input, shape index: {}]
  %s5 = inlined_call_operand.vmem [shape: bf16[4,8], index: 5, kind: input, shape index: {}]
  %s6 = inlined_call_operand.vmem [shape: bf16[4,4], index: 6, kind: input, shape index: {}]
  %s7 = inlined_call_operand.vmem [shape: f32[1,4], index: 7, kind: input, shape index: {}]
  %s8 = inlined_call_operand.vmem [shape: f32[1,4], index: 8, kind: input, shape index: {}]
  %s9 = inlined_call_operand.vmem [shape: f32[512,4], index: 9, kind: input, shape index: {}]
  %s10 = inlined_call_operand.vmem [shape: f32[128,4], index: 10, kind: input, shape index: {}]
  %s11 = inlined_call_operand.vmem [shape: f32[512,4], index: 11, kind: output, shape index: {0}]
  %s12 = inlined_call_operand.vmem [shape: f32[128,4], index: 12, kind: output, shape index: {1}]
  %13 = xla_tuple %s11, %s12
  %s14 = sld [smem:[#allocation0]]
  $region85: #{bottleneck_forward.5} parent=0
    _
  %s16 = ssub.s32 1, %s14
  %s17 = scalar_select 0, %s16, %s14
  loop: start=0, step=1, limit=4
  $region2: #{bottleneck_forward.5} parent=0 // loop_pre_header
    _
  $region3: #{bottleneck_forward.5} parent=0 // loop_header
    %s19 = sphi 0, %s23
    %p20 = scmp.ge.s32.totalorder %s19, 4
    %s29 = sphi 0, %s31
    %s32 = sphi 0, %s29
    %s33 = sphi 0, %s32
    %s49 = sphi 0, %s33
    %s55 = sphi 0, %s57
    %s58 = sphi 0, %s55
    %s59 = sphi 0, %s58
    %s75 = sphi 0, %s59
    %s81 = sphi 0, %s83
    %s84 = sphi 0, %s81
    %s85 = sphi 0, %s84
    %s101 = sphi 0, %s85
    %s105 = sphi 0, %s105
    %s107 = sphi 0, %s105
    %s108 = sphi 0, %s107
    %s122 = sphi 0, %s108
    %s126 = sphi 0, %s126
    %s128 = sphi 0, %s126
    %s129 = sphi 0, %s128
    %s143 = sphi 0, %s129
    %s147 = sphi 0, %s147
    %s149 = sphi 0, %s147
    %s150 = sphi 0, %s149
    %s164 = sphi 0, %s150
    %s168 = sphi 0, %s168
    %s170 = sphi 0, %s168
    %s171 = sphi 0, %s170
    %s185 = sphi 0, %s171
    %s189 = sphi 0, %s189
    %s191 = sphi 0, %s189
    %s192 = sphi 0, %s191
    %s206 = sphi 0, %s192
    %s210 = sphi 0, %s210
    %s212 = sphi 0, %s210
    %s213 = sphi 0, %s212
    %s227 = sphi 0, %s213
    %s233 = sphi 0, %s235
    %s236 = sphi 0, %s233
    %s237 = sphi 0, %s236
    %s253 = sphi 0, %s237
    %s259 = sphi 0, %s261
    %s262 = sphi 0, %s259
    %s263 = sphi 0, %s262
    %s279 = sphi 0, %s263
    %s285 = sphi 0, %s287
    %s288 = sphi 0, %s285
    %s289 = sphi 0, %s288
    %s305 = sphi 0, %s289
    %s311 = sphi 0, %s313
    %s314 = sphi 0, %s311
    %s315 = sphi 0, %s314
    %s331 = sphi 0, %s315
  $region4: #{bottleneck_forward.5} parent=0 // loop_header_branch
    %22 = sbr.rel (%p20) target = $region8
  $region5: #{bottleneck_forward.5} parent=0 // loop_body
    %s24 = ssub.s32 %s19, 1
    %s25 = ssub.s32 %s19, 2
    %s26 = sadd.s32 %s19, 1
    %s27 = ssub.s32 %s19, %s26
    %p28 = scmp.eq.s32.totalorder %s27, 0
    %s30 = sadd.s32 %s29, 1
    %s31 = scalar_select %p28, %s29, %s30
    %p34 = pneg %p28
    %p35 = scmp.eq.s32.totalorder %s19, 1
    %p36 = por %p34, %p35
    %p37 = scmp.ne.s32.totalorder %s29, %s32
    %p38 = scmp.eq.s32.totalorder %s19, 0
    %p39 = por %p37, %p38
    %p40 = scmp.ne.s32.totalorder %s29, %s32
    %p41 = scmp.eq.s32.totalorder %s24, 1
    %p42 = por %p40, %p41
    %p43 = scmp.ne.s32.totalorder %s32, %s33
    %p44 = scmp.eq.s32.totalorder %s24, 0
    %p45 = por %p43, %p44
    %p46 = scmp.ne.s32.totalorder %s32, %s33
    %p47 = scmp.eq.s32.totalorder %s25, 1
    %p48 = por %p46, %p47
    %p50 = scmp.ne.s32.totalorder %s33, %s49
    %p51 = scmp.eq.s32.totalorder %s25, 0
    %p52 = por %p50, %p51
    %s53 = ssub.s32 %s19, %s26
    %p54 = scmp.eq.s32.totalorder %s53, 0
    %s56 = sadd.s32 %s55, 1
    %s57 = scalar_select %p54, %s55, %s56
    %p60 = pneg %p54
    %p61 = scmp.eq.s32.totalorder %s19, 1
    %p62 = por %p60, %p61
    %p63 = scmp.ne.s32.totalorder %s55, %s58
    %p64 = scmp.eq.s32.totalorder %s19, 0
    %p65 = por %p63, %p64
    %p66 = scmp.ne.s32.totalorder %s55, %s58
    %p67 = scmp.eq.s32.totalorder %s24, 1
    %p68 = por %p66, %p67
    %p69 = scmp.ne.s32.totalorder %s58, %s59
    %p70 = scmp.eq.s32.totalorder %s24, 0
    %p71 = por %p69, %p70
    %p72 = scmp.ne.s32.totalorder %s58, %s59
    %p73 = scmp.eq.s32.totalorder %s25, 1
    %p74 = por %p72, %p73
    %p76 = scmp.ne.s32.totalorder %s59, %s75
    %p77 = scmp.eq.s32.totalorder %s25, 0
    %p78 = por %p76, %p77
    %s79 = ssub.s32 %s19, %s26
    %p80 = scmp.eq.s32.totalorder %s79, 0
    %s82 = sadd.s32 %s81, 1
    %s83 = scalar_select %p80, %s81, %s82
    %p86 = pneg %p80
    %p87 = scmp.eq.s32.totalorder %s19, 1
    %p88 = por %p86, %p87
    %p89 = scmp.ne.s32.totalorder %s81, %s84
    %p90 = scmp.eq.s32.totalorder %s19, 0
    %p91 = por %p89, %p90
    %p92 = scmp.ne.s32.totalorder %s81, %s84
    %p93 = scmp.eq.s32.totalorder %s24, 1
    %p94 = por %p92, %p93
    %p95 = scmp.ne.s32.totalorder %s84, %s85
    %p96 = scmp.eq.s32.totalorder %s24, 0
    %p97 = por %p95, %p96
    %p98 = scmp.ne.s32.totalorder %s84, %s85
    %p99 = scmp.eq.s32.totalorder %s25, 1
    %p100 = por %p98, %p99
    %p102 = scmp.ne.s32.totalorder %s85, %s101
    %p103 = scmp.eq.s32.totalorder %s25, 0
    %p104 = por %p102, %p103
    %s106 = sadd.s32 %s105, 1
    %p109 = scmp.eq.s32.totalorder %s19, 1
    %p110 = scmp.ne.s32.totalorder %s105, %s107
    %p111 = scmp.eq.s32.totalorder %s19, 0
    %p112 = por %p110, %p111
    %p113 = scmp.ne.s32.totalorder %s105, %s107
    %p114 = scmp.eq.s32.totalorder %s24, 1
    %p115 = por %p113, %p114
    %p116 = scmp.ne.s32.totalorder %s107, %s108
    %p117 = scmp.eq.s32.totalorder %s24, 0
    %p118 = por %p116, %p117
    %p119 = scmp.ne.s32.totalorder %s107, %s108
    %p120 = scmp.eq.s32.totalorder %s25, 1
    %p121 = por %p119, %p120
    %p123 = scmp.ne.s32.totalorder %s108, %s122
    %p124 = scmp.eq.s32.totalorder %s25, 0
    %p125 = por %p123, %p124
    %s127 = sadd.s32 %s126, 1
    %p130 = scmp.eq.s32.totalorder %s19, 1
    %p131 = scmp.ne.s32.totalorder %s126, %s128
    %p132 = scmp.eq.s32.totalorder %s19, 0
    %p133 = por %p131, %p132
    %p134 = scmp.ne.s32.totalorder %s126, %s128
    %p135 = scmp.eq.s32.totalorder %s24, 1
    %p136 = por %p134, %p135
    %p137 = scmp.ne.s32.totalorder %s128, %s129
    %p138 = scmp.eq.s32.totalorder %s24, 0
    %p139 = por %p137, %p138
    %p140 = scmp.ne.s32.totalorder %s128, %s129
    %p141 = scmp.eq.s32.totalorder %s25, 1
    %p142 = por %p140, %p141
    %p144 = scmp.ne.s32.totalorder %s129, %s143
    %p145 = scmp.eq.s32.totalorder %s25, 0
    %p146 = por %p144, %p145
    %s148 = sadd.s32 %s147, 1
    %p151 = scmp.eq.s32.totalorder %s19, 1
    %p152 = scmp.ne.s32.totalorder %s147, %s149
    %p153 = scmp.eq.s32.totalorder %s19, 0
    %p154 = por %p152, %p153
    %p155 = scmp.ne.s32.totalorder %s147, %s149
    %p156 = scmp.eq.s32.totalorder %s24, 1
    %p157 = por %p155, %p156
    %p158 = scmp.ne.s32.totalorder %s149, %s150
    %p159 = scmp.eq.s32.totalorder %s24, 0
    %p160 = por %p158, %p159
    %p161 = scmp.ne.s32.totalorder %s149, %s150
    %p162 = scmp.eq.s32.totalorder %s25, 1
    %p163 = por %p161, %p162
    %p165 = scmp.ne.s32.totalorder %s150, %s164
    %p166 = scmp.eq.s32.totalorder %s25, 0
    %p167 = por %p165, %p166
    %s169 = sadd.s32 %s168, 1
    %p172 = scmp.eq.s32.totalorder %s19, 1
    %p173 = scmp.ne.s32.totalorder %s168, %s170
    %p174 = scmp.eq.s32.totalorder %s19, 0
    %p175 = por %p173, %p174
    %p176 = scmp.ne.s32.totalorder %s168, %s170
    %p177 = scmp.eq.s32.totalorder %s24, 1
    %p178 = por %p176, %p177
    %p179 = scmp.ne.s32.totalorder %s170, %s171
    %p180 = scmp.eq.s32.totalorder %s24, 0
    %p181 = por %p179, %p180
    %p182 = scmp.ne.s32.totalorder %s170, %s171
    %p183 = scmp.eq.s32.totalorder %s25, 1
    %p184 = por %p182, %p183
    %p186 = scmp.ne.s32.totalorder %s171, %s185
    %p187 = scmp.eq.s32.totalorder %s25, 0
    %p188 = por %p186, %p187
    %s190 = sadd.s32 %s189, 1
    %p193 = scmp.eq.s32.totalorder %s19, 1
    %p194 = scmp.ne.s32.totalorder %s189, %s191
    %p195 = scmp.eq.s32.totalorder %s19, 0
    %p196 = por %p194, %p195
    %p197 = scmp.ne.s32.totalorder %s189, %s191
    %p198 = scmp.eq.s32.totalorder %s24, 1
    %p199 = por %p197, %p198
    %p200 = scmp.ne.s32.totalorder %s191, %s192
    %p201 = scmp.eq.s32.totalorder %s24, 0
    %p202 = por %p200, %p201
    %p203 = scmp.ne.s32.totalorder %s191, %s192
    %p204 = scmp.eq.s32.totalorder %s25, 1
    %p205 = por %p203, %p204
    %p207 = scmp.ne.s32.totalorder %s192, %s206
    %p208 = scmp.eq.s32.totalorder %s25, 0
    %p209 = por %p207, %p208
    %s211 = sadd.s32 %s210, 1
    %p214 = scmp.eq.s32.totalorder %s19, 1
    %p215 = scmp.ne.s32.totalorder %s210, %s212
    %p216 = scmp.eq.s32.totalorder %s19, 0
    %p217 = por %p215, %p216
    %p218 = scmp.ne.s32.totalorder %s210, %s212
    %p219 = scmp.eq.s32.totalorder %s24, 1
    %p220 = por %p218, %p219
    %p221 = scmp.ne.s32.totalorder %s212, %s213
    %p222 = scmp.eq.s32.totalorder %s24, 0
    %p223 = por %p221, %p222
    %p224 = scmp.ne.s32.totalorder %s212, %s213
    %p225 = scmp.eq.s32.totalorder %s25, 1
    %p226 = por %p224, %p225
    %p228 = scmp.ne.s32.totalorder %s213, %s227
    %p229 = scmp.eq.s32.totalorder %s25, 0
    %p230 = por %p228, %p229
    %s231 = ssub.s32 %s19, %s26
    %p232 = scmp.eq.s32.totalorder %s231, 0
    %s234 = sadd.s32 %s233, 1
    %s235 = scalar_select %p232, %s233, %s234
    %p238 = pneg %p232
    %p239 = scmp.eq.s32.totalorder %s19, 1
    %p240 = por %p238, %p239
    %p241 = scmp.ne.s32.totalorder %s233, %s236
    %p242 = scmp.eq.s32.totalorder %s19, 0
    %p243 = por %p241, %p242
    %p244 = scmp.ne.s32.totalorder %s233, %s236
    %p245 = scmp.eq.s32.totalorder %s24, 1
    %p246 = por %p244, %p245
    %p247 = scmp.ne.s32.totalorder %s236, %s237
    %p248 = scmp.eq.s32.totalorder %s24, 0
    %p249 = por %p247, %p248
    %p250 = scmp.ne.s32.totalorder %s236, %s237
    %p251 = scmp.eq.s32.totalorder %s25, 1
    %p252 = por %p250, %p251
    %p254 = scmp.ne.s32.totalorder %s237, %s253
    %p255 = scmp.eq.s32.totalorder %s25, 0
    %p256 = por %p254, %p255
    %s257 = ssub.s32 %s19, %s26
    %p258 = scmp.eq.s32.totalorder %s257, 0
    %s260 = sadd.s32 %s259, 1
    %s261 = scalar_select %p258, %s259, %s260
    %p264 = pneg %p258
    %p265 = scmp.eq.s32.totalorder %s19, 1
    %p266 = por %p264, %p265
    %p267 = scmp.ne.s32.totalorder %s259, %s262
    %p268 = scmp.eq.s32.totalorder %s19, 0
    %p269 = por %p267, %p268
    %p270 = scmp.ne.s32.totalorder %s259, %s262
    %p271 = scmp.eq.s32.totalorder %s24, 1
    %p272 = por %p270, %p271
    %p273 = scmp.ne.s32.totalorder %s262, %s263
    %p274 = scmp.eq.s32.totalorder %s24, 0
    %p275 = por %p273, %p274
    %p276 = scmp.ne.s32.totalorder %s262, %s263
    %p277 = scmp.eq.s32.totalorder %s25, 1
    %p278 = por %p276, %p277
    %p280 = scmp.ne.s32.totalorder %s263, %s279
    %p281 = scmp.eq.s32.totalorder %s25, 0
    %p282 = por %p280, %p281
    %s283 = ssub.s32 %s19, %s26
    %p284 = scmp.eq.s32.totalorder %s283, 0
    %s286 = sadd.s32 %s285, 1
    %s287 = scalar_select %p284, %s285, %s286
    %p290 = pneg %p284
    %p291 = scmp.eq.s32.totalorder %s19, 1
    %p292 = por %p290, %p291
    %p293 = scmp.ne.s32.totalorder %s285, %s288
    %p294 = scmp.eq.s32.totalorder %s19, 0
    %p295 = por %p293, %p294
    %p296 = scmp.ne.s32.totalorder %s285, %s288
    %p297 = scmp.eq.s32.totalorder %s24, 1
    %p298 = por %p296, %p297
    %p299 = scmp.ne.s32.totalorder %s288, %s289
    %p300 = scmp.eq.s32.totalorder %s24, 0
    %p301 = por %p299, %p300
    %p302 = scmp.ne.s32.totalorder %s288, %s289
    %p303 = scmp.eq.s32.totalorder %s25, 1
    %p304 = por %p302, %p303
    %p306 = scmp.ne.s32.totalorder %s289, %s305
    %p307 = scmp.eq.s32.totalorder %s25, 0
    %p308 = por %p306, %p307
    %s309 = ssub.s32 %s19, %s26
    %p310 = scmp.eq.s32.totalorder %s309, 0
    %s312 = sadd.s32 %s311, 1
    %s313 = scalar_select %p310, %s311, %s312
    %p316 = pneg %p310
    %p317 = scmp.eq.s32.totalorder %s19, 1
    %p318 = por %p316, %p317
    %p319 = scmp.ne.s32.totalorder %s311, %s314
    %p320 = scmp.eq.s32.totalorder %s19, 0
    %p321 = por %p319, %p320
    %p322 = scmp.ne.s32.totalorder %s311, %s314
    %p323 = scmp.eq.s32.totalorder %s24, 1
    %p324 = por %p322, %p323
    %p325 = scmp.ne.s32.totalorder %s314, %s315
    %p326 = scmp.eq.s32.totalorder %s24, 0
    %p327 = por %p325, %p326
    %p328 = scmp.ne.s32.totalorder %s314, %s315
    %p329 = scmp.eq.s32.totalorder %s25, 1
    %p330 = por %p328, %p329
    %p332 = scmp.ne.s32.totalorder %s315, %s331
    %p333 = scmp.eq.s32.totalorder %s25, 0
    %p334 = por %p332, %p333
    %p335 = scmp.le.s32.totalorder 1, %s19
    %p336 = scmp.lt.s32.totalorder %s19, 3
    %p337 = pnand %p335, %p336
    %p338 = pneg %p337
    // Predicated region
    $region9: #{bottleneck_forward.5} parent=5 // pred_check
      _
    $region10: #{bottleneck_forward.5} parent=5 // pred_check_branch
      %340 = sbr.rel (%p337) target = $region12
    $region11: #{bottleneck_forward.5} parent=5 // pred_region
      %s341 = ssub.s32 %s19, 1
      // Predicated region
      $region13: #{bottleneck_forward.5} parent=11 // pred_check
        %p342 = pneg %p118
      $region14: #{bottleneck_forward.5} parent=11 // pred_check_branch
        %344 = sbr.rel (%p342) target = $region16
      $region15: #{bottleneck_forward.5} parent=11 // pred_region
        _
      $region16: #{bottleneck_forward.5} parent=11 // pred_fallthru
        _
      // Predicated region
      $region17: #{bottleneck_forward.5} parent=11 // pred_check
        %p345 = pneg %p139
      $region18: #{bottleneck_forward.5} parent=11 // pred_check_branch
        %347 = sbr.rel (%p345) target = $region20
      $region19: #{bottleneck_forward.5} parent=11 // pred_region
        _
      $region20: #{bottleneck_forward.5} parent=11 // pred_fallthru
        _
      // Predicated region
      $region21: #{bottleneck_forward.5} parent=11 // pred_check
        %p348 = pneg %p160
      $region22: #{bottleneck_forward.5} parent=11 // pred_check_branch
        %350 = sbr.rel (%p348) target = $region24
      $region23: #{bottleneck_forward.5} parent=11 // pred_region
        _
      $region24: #{bottleneck_forward.5} parent=11 // pred_fallthru
        _
      // Predicated region
      $region25: #{bottleneck_forward.5} parent=11 // pred_check
        %p351 = pneg %p181
      $region26: #{bottleneck_forward.5} parent=11 // pred_check_branch
        %353 = sbr.rel (%p351) target = $region28
      $region27: #{bottleneck_forward.5} parent=11 // pred_region
        _
      $region28: #{bottleneck_forward.5} parent=11 // pred_fallthru
        _
      // Predicated region
      $region29: #{bottleneck_forward.5} parent=11 // pred_check
        %p354 = pneg %p202
      $region30: #{bottleneck_forward.5} parent=11 // pred_check_branch
        %356 = sbr.rel (%p354) target = $region32
      $region31: #{bottleneck_forward.5} parent=11 // pred_region
        _
      $region32: #{bottleneck_forward.5} parent=11 // pred_fallthru
        _
      // Predicated region
      $region33: #{bottleneck_forward.5} parent=11 // pred_check
        %p357 = pneg %p223
      $region34: #{bottleneck_forward.5} parent=11 // pred_check_branch
        %359 = sbr.rel (%p357) target = $region36
      $region35: #{bottleneck_forward.5} parent=11 // pred_region
        _
      $region36: #{bottleneck_forward.5} parent=11 // pred_fallthru
        _
    $region12: #{bottleneck_forward.5} parent=5 // pred_fallthru
      _
    %p360 = scmp.lt.s32.totalorder %s19, 2
    // Predicated region
    $region37: #{bottleneck_forward.5} parent=5 // pred_check
      %p361 = pneg %p360
    $region38: #{bottleneck_forward.5} parent=5 // pred_check_branch
      %363 = sbr.rel (%p361) target = $region40
    $region39: #{bottleneck_forward.5} parent=5 // pred_region
      // Predicated region
      $region41: #{bottleneck_forward.5} parent=39 // pred_check
        %p364 = pneg %p39
      $region42: #{bottleneck_forward.5} parent=39 // pred_check_branch
        %366 = sbr.rel (%p364) target = $region44
      $region43: #{bottleneck_forward.5} parent=39 // pred_region
        %s367 = smul.u32 32, %s19
        %p368 = scmp.lt.s32.totalorder %s367, 63
        %s369 = scalar_select %p368, %s367, 63
        %s370 = smul.addr %s369, 4
        %s371 = scalar_lea.vmem %s0, %s370
        %s372 = smul.u32 32, %s19
      $region44: #{bottleneck_forward.5} parent=39 // pred_fallthru
        _
      // Predicated region
      $region45: #{bottleneck_forward.5} parent=39 // pred_check
        %p373 = pneg %p65
      $region46: #{bottleneck_forward.5} parent=39 // pred_check_branch
        %375 = sbr.rel (%p373) target = $region48
      $region47: #{bottleneck_forward.5} parent=39 // pred_region
        %s376 = smul.u32 8, %s19
        %p377 = scmp.lt.s32.totalorder %s376, 15
        %s378 = scalar_select %p377, %s376, 15
        %s379 = smul.addr %s378, 4
        %s380 = scalar_lea.vmem %s1, %s379
        %s381 = smul.u32 8, %s19
      $region48: #{bottleneck_forward.5} parent=39 // pred_fallthru
        _
      // Predicated region
      $region49: #{bottleneck_forward.5} parent=39 // pred_check
        %p382 = pneg %p91
      $region50: #{bottleneck_forward.5} parent=39 // pred_check_branch
        %384 = sbr.rel (%p382) target = $region52
      $region51: #{bottleneck_forward.5} parent=39 // pred_region
        %s385 = smul.u32 8, %s19
        %p386 = scmp.lt.s32.totalorder %s385, 15
        %s387 = scalar_select %p386, %s385, 15
        %s388 = smul.addr %s387, 4
        %s389 = scalar_lea.vmem %s2, %s388
        %s390 = smul.u32 8, %s19
      $region52: #{bottleneck_forward.5} parent=39 // pred_fallthru
        _
      // Predicated region
      $region53: #{bottleneck_forward.5} parent=39 // pred_check
        %p391 = pneg %p243
      $region54: #{bottleneck_forward.5} parent=39 // pred_check_branch
        %393 = sbr.rel (%p391) target = $region56
      $region55: #{bottleneck_forward.5} parent=39 // pred_region
        %s394 = smul.u32 32, %s19
        %p395 = scmp.lt.s32.totalorder %s394, 63
        %s396 = scalar_select %p395, %s394, 63
        %s397 = smul.addr %s396, 8
        %s398 = scalar_lea.vmem %s9, %s397
        %s399 = smul.u32 32, %s19
      $region56: #{bottleneck_forward.5} parent=39 // pred_fallthru
        _
      // Predicated region
      $region57: #{bottleneck_forward.5} parent=39 // pred_check
        %p400 = pneg %p269
      $region58: #{bottleneck_forward.5} parent=39 // pred_check_branch
        %402 = sbr.rel (%p400) target = $region60
      $region59: #{bottleneck_forward.5} parent=39 // pred_region
        %s403 = smul.u32 8, %s19
        %p404 = scmp.lt.s32.totalorder %s403, 15
        %s405 = scalar_select %p404, %s403, 15
        %s406 = smul.addr %s405, 8
        %s407 = scalar_lea.vmem %s10, %s406
        %s408 = smul.u32 8, %s19
      $region60: #{bottleneck_forward.5} parent=39 // pred_fallthru
        _
    $region40: #{bottleneck_forward.5} parent=5 // pred_fallthru
      _
    %p409 = scmp.le.s32.totalorder 1, %s19
    %p410 = scmp.lt.s32.totalorder %s19, 3
    %p411 = pnand %p409, %p410
    %p412 = pneg %p411
    // Predicated region
    $region61: #{bottleneck_forward.5} parent=5 // pred_check
      _
    $region62: #{bottleneck_forward.5} parent=5 // pred_check_branch
      %414 = sbr.rel (%p411) target = $region64
    $region63: #{bottleneck_forward.5} parent=5 // pred_region
      %s415 = ssub.s32 %s19, 1
      %s416 = smul.u32 32, %s24
      %p417 = scmp.lt.s32.totalorder %s416, 63
      %s418 = scalar_select %p417, %s416, 63
      %s419 = smul.addr %s418, 4
      %s420 = scalar_lea.vmem %s0, %s419
      %p421 = pneg %p45
      %p422 = pneg %p42
      %s423 = smul.u32 8, %s24
      %p424 = scmp.lt.s32.totalorder %s423, 15
      %s425 = scalar_select %p424, %s423, 15
      %s426 = smul.addr %s425, 4
      %s427 = scalar_lea.vmem %s1, %s426
      %p428 = pneg %p71
      %p429 = pneg %p68
      %s430 = smul.u32 8, %s24
      %p431 = scmp.lt.s32.totalorder %s430, 15
      %s432 = scalar_select %p431, %s430, 15
      %s433 = smul.addr %s432, 4
      %s434 = scalar_lea.vmem %s2, %s433
      %p435 = pneg %p97
      %p436 = pneg %p94
      %p437 = pneg %p118
      %p438 = pneg %p115
      %p439 = pneg %p139
      %p440 = pneg %p136
      %p441 = pneg %p160
      %p442 = pneg %p157
      %p443 = pneg %p181
      %p444 = pneg %p178
      %p445 = pneg %p202
      %p446 = pneg %p199
      %p447 = pneg %p223
      %p448 = pneg %p220
      %s449 = smul.u32 32, %s24
      %p450 = scmp.lt.s32.totalorder %s449, 63
      %s451 = scalar_select %p450, %s449, 63
      %s452 = smul.addr %s451, 8
      %s453 = scalar_lea.vmem %s9, %s452
      %p454 = pneg %p249
      %p455 = pneg %p246
      %s456 = smul.u32 8, %s24
      %p457 = scmp.lt.s32.totalorder %s456, 15
      %s458 = scalar_select %p457, %s456, 15
      %s459 = smul.addr %s458, 8
      %s460 = scalar_lea.vmem %s10, %s459
      %p461 = pneg %p275
      %p462 = pneg %p272
      %p463 = pneg %p301
      %p464 = pneg %p298
      %s465 = smul.u32 32, %s24
      %p466 = scmp.lt.s32.totalorder %s465, 63
      %s467 = scalar_select %p466, %s465, 63
      %s468 = smul.addr %s467, 8
      %s469 = scalar_lea.vmem %s11, %s468
      %p470 = pneg %p327
      %p471 = pneg %p324
      %s472 = smul.u32 8, %s24
      %p473 = scmp.lt.s32.totalorder %s472, 15
      %s474 = scalar_select %p473, %s472, 15
      %s475 = smul.addr %s474, 8
      %s476 = scalar_lea.vmem %s12, %s475
      %s477 = smul.u32 32, %s24
      %p478 = scmp.lt.s32.totalorder %s477, 63
      %s479 = scalar_select %p478, %s477, 63
      %s480 = smul.addr %s479, 4
      %s481 = scalar_lea.vmem %s0, %s480
      %s482 = smul.u32 32, %s24
      %s483 = smul.u32 8, %s24
      %p484 = scmp.lt.s32.totalorder %s483, 15
      %s485 = scalar_select %p484, %s483, 15
      %s486 = smul.addr %s485, 4
      %s487 = scalar_lea.vmem %s1, %s486
      %s488 = smul.u32 8, %s24
      %s489 = smul.u32 8, %s24
      %p490 = scmp.lt.s32.totalorder %s489, 15
      %s491 = scalar_select %p490, %s489, 15
      %s492 = smul.addr %s491, 4
      %s493 = scalar_lea.vmem %s2, %s492
      %s494 = smul.u32 8, %s24
      %s495 = smul.u32 32, %s24
      %p496 = scmp.lt.s32.totalorder %s495, 63
      %s497 = scalar_select %p496, %s495, 63
      %s498 = smul.addr %s497, 8
      %s499 = scalar_lea.vmem %s9, %s498
      %s500 = smul.u32 32, %s24
      %s501 = smul.u32 8, %s24
      %p502 = scmp.lt.s32.totalorder %s501, 15
      %s503 = scalar_select %p502, %s501, 15
      %s504 = smul.addr %s503, 8
      %s505 = scalar_lea.vmem %s10, %s504
      %s506 = smul.u32 8, %s24
      %s507 = smul.u32 32, %s24
      %p508 = scmp.lt.s32.totalorder %s507, 63
      %s509 = scalar_select %p508, %s507, 63
      %s510 = smul.addr %s509, 8
      %s511 = scalar_lea.vmem %s11, %s510
      %s512 = smul.u32 32, %s24
      %s513 = smul.u32 8, %s24
      %p514 = scmp.lt.s32.totalorder %s513, 15
      %s515 = scalar_select %p514, %s513, 15
      %s516 = smul.addr %s515, 8
      %s517 = scalar_lea.vmem %s12, %s516
      %s518 = smul.u32 8, %s24
      %v520 = vld [vmem:[%s481] sm:$0xf]
      %v521 = vld [vmem:[%s481 + $0x4] sm:$0xf]
      %v522 = vld [vmem:[%s481 + $0x8] sm:$0xf]
      %v523 = vld [vmem:[%s481 + $0xc] sm:$0xf]
      %v524 = vld [vmem:[%s481 + $0x10] sm:$0xf]
      %v525 = vld [vmem:[%s481 + $0x14] sm:$0xf]
      %v526 = vld [vmem:[%s481 + $0x18] sm:$0xf]
      %v527 = vld [vmem:[%s481 + $0x1c] sm:$0xf]
      %v528 = vld [vmem:[%s481 + $0x20] sm:$0xf]
      %v529 = vld [vmem:[%s481 + $0x24] sm:$0xf]
      %v530 = vld [vmem:[%s481 + $0x28] sm:$0xf]
      %v531 = vld [vmem:[%s481 + $0x2c] sm:$0xf]
      %v532 = vld [vmem:[%s481 + $0x30] sm:$0xf]
      %v533 = vld [vmem:[%s481 + $0x34] sm:$0xf]
      %v534 = vld [vmem:[%s481 + $0x38] sm:$0xf]
      %v535 = vld [vmem:[%s481 + $0x3c] sm:$0xf]
      %v536 = vld [vmem:[%s481 + $0x40] sm:$0xf]
      %v537 = vld [vmem:[%s481 + $0x44] sm:$0xf]
      %v538 = vld [vmem:[%s481 + $0x48] sm:$0xf]
      %v539 = vld [vmem:[%s481 + $0x4c] sm:$0xf]
      %v540 = vld [vmem:[%s481 + $0x50] sm:$0xf]
      %v541 = vld [vmem:[%s481 + $0x54] sm:$0xf]
      %v542 = vld [vmem:[%s481 + $0x58] sm:$0xf]
      %v543 = vld [vmem:[%s481 + $0x5c] sm:$0xf]
      %v544 = vld [vmem:[%s481 + $0x60] sm:$0xf]
      %v545 = vld [vmem:[%s481 + $0x64] sm:$0xf]
      %v546 = vld [vmem:[%s481 + $0x68] sm:$0xf]
      %v547 = vld [vmem:[%s481 + $0x6c] sm:$0xf]
      %v548 = vld [vmem:[%s481 + $0x70] sm:$0xf]
      %v549 = vld [vmem:[%s481 + $0x74] sm:$0xf]
      %v550 = vld [vmem:[%s481 + $0x78] sm:$0xf]
      %v551 = vld [vmem:[%s481 + $0x7c] sm:$0xf]
      %v552 = vld [vmem:[%s4] sm:$0x3]
      %v553 = vld [vmem:[%s487] sm:$0xf]
      %v554 = vld [vmem:[%s487 + $0x4] sm:$0xf]
      %v555 = vld [vmem:[%s487 + $0x8] sm:$0xf]
      %v556 = vld [vmem:[%s487 + $0xc] sm:$0xf]
      %v557 = vld [vmem:[%s487 + $0x10] sm:$0xf]
      %v558 = vld [vmem:[%s487 + $0x14] sm:$0xf]
      %v559 = vld [vmem:[%s487 + $0x18] sm:$0xf]
      %v560 = vld [vmem:[%s487 + $0x1c] sm:$0xf]
      %v561 = vld [vmem:[%s5] sm:$0x3]
      %v570 = vunpack.c.l.b16 %v553
      %v571 = vunpack.c.l.b16 %v554
      %v572 = vunpack.c.l.b16 %v555
      %v573 = vunpack.c.l.b16 %v556
      %v574 = vunpack.c.l.b16 %v557
      %v575 = vunpack.c.l.b16 %v558
      %v576 = vunpack.c.l.b16 %v559
      %v577 = vunpack.c.l.b16 %v560
      %v578 = vpack.c.b16 %v571, %v570
      %v579 = vpack.c.b16 %v573, %v572
      %v580 = vpack.c.b16 %v575, %v574
      %v581 = vpack.c.b16 %v577, %v576
      %vm582 = vcmask 31744
      %v584 = vsel %vm582, %v578, 0
      %v587 = vsel %vm582, %v579, 0
      %v590 = vsel %vm582, %v580, 0
      %v593 = vsel %vm582, %v581, 0
      %vm595 = vcmask 1041408
      %v597 = vsel %vm595, %v561, 0
      %599 = vmatprep.subr.bf16.mxu0 0
      %600 = vmatpush1.bf16.msra.mxu0 0
      %601 = vmatprep.subr.bf16.mxu0 0
      %602 = vmatpush1.bf16.msra.mxu0 0
      %603 = vmatprep.subr.bf16.mxu0 0
      %604 = vmatpush1.bf16.msra.mxu0 0
      %605 = vmatprep.subr.bf16.mxu0 0
      %606 = vmatpush1.bf16.msra.mxu0 0
      %607 = vmatprep.subr.bf16.mxu0 0
      %608 = vmatpush1.bf16.msra.mxu0 0
      %609 = vmatprep.subr.bf16.mxu0 0
      %610 = vmatpush1.bf16.msra.mxu0 0
      %611 = vmatprep.subr.bf16.mxu0 0
      %612 = vmatpush1.bf16.msra.mxu0 0
      %613 = vmatprep.subr.bf16.mxu0 0
      %614 = vmatpush1.bf16.msra.mxu0 %v597
      %615 = vmatprep.subr.bf16.mxu0 0
      %616 = vmatpush2.bf16.msra.mxu0 0
      %617 = vmatprep.subr.bf16.mxu0 0
      %618 = vmatpush2.bf16.msra.mxu0 0
      %619 = vmatprep.subr.bf16.mxu0 0
      %620 = vmatpush2.bf16.msra.mxu0 0
      %621 = vmatprep.subr.bf16.mxu0 0
      %622 = vmatpush2.bf16.msra.mxu0 0
      %623 = vmatprep.subr.bf16.mxu0 0
      %624 = vmatpush2.bf16.msra.mxu0 0
      %625 = vmatprep.subr.bf16.mxu0 0
      %626 = vmatpush2.bf16.msra.mxu0 0
      %627 = vmatprep.subr.bf16.mxu0 0
      %628 = vmatpush2.bf16.msra.mxu0 0
      %629 = vmatprep.subr.bf16.mxu0 0
      %630 = vmatpush2.bf16.msra.mxu0 0
      %631 = vmatprep.mubr.bf16.mxu0 0
      %632 = vmatmul.mubr.bf16.gmra.mxu0 %v584
      %v633 = vpop.f32.mrf.mxu0
      %v634 = vadd.f32 0.0, %v633
      %v635 = vpop.f32.mrf.mxu0
      %v636 = vpop.f32.mrf.mxu0
      %v637 = vadd.f32 0.0, %v636
      %v638 = vpop.f32.mrf.mxu0
      %639 = vmatprep.mubr.bf16.mxu0 0
      %640 = vmatmul.mubr.bf16.gmra.mxu0 %v587
      %v641 = vpop.f32.mrf.mxu0
      %v642 = vadd.f32 0.0, %v641
      %v643 = vpop.f32.mrf.mxu0
      %v644 = vpop.f32.mrf.mxu0
      %v645 = vadd.f32 0.0, %v644
      %v646 = vpop.f32.mrf.mxu0
      %647 = vmatprep.mubr.bf16.mxu0 0
      %648 = vmatmul.mubr.bf16.gmra.mxu0 %v590
      %v649 = vpop.f32.mrf.mxu0
      %v650 = vadd.f32 0.0, %v649
      %v651 = vpop.f32.mrf.mxu0
      %v652 = vpop.f32.mrf.mxu0
      %v653 = vadd.f32 0.0, %v652
      %v654 = vpop.f32.mrf.mxu0
      %655 = vmatprep.mubr.bf16.mxu0 0
      %656 = vmatmul.mubr.bf16.gmra.mxu0 %v593
      %v657 = vpop.f32.mrf.mxu0
      %v658 = vadd.f32 0.0, %v657
      %v659 = vpop.f32.mrf.mxu0
      %v660 = vpop.f32.mrf.mxu0
      %v661 = vadd.f32 0.0, %v660
      %v662 = vpop.f32.mrf.mxu0
      %663 = vdwg.mxu0
      %v664 = vld [vmem:[%s493] sm:$0xf]
      %v665 = vld [vmem:[%s493 + $0x4] sm:$0xf]
      %v666 = vld [vmem:[%s493 + $0x8] sm:$0xf]
      %v667 = vld [vmem:[%s493 + $0xc] sm:$0xf]
      %v668 = vld [vmem:[%s493 + $0x10] sm:$0xf]
      %v669 = vld [vmem:[%s493 + $0x14] sm:$0xf]
      %v670 = vld [vmem:[%s493 + $0x18] sm:$0xf]
      %v671 = vld [vmem:[%s493 + $0x1c] sm:$0xf]
      %v672 = vld [vmem:[%s6] sm:$0x3]
      %v681 = vunpack.c.l.b16 %v664
      %v682 = vunpack.c.l.b16 %v665
      %v683 = vunpack.c.l.b16 %v666
      %v684 = vunpack.c.l.b16 %v667
      %v685 = vunpack.c.l.b16 %v668
      %v686 = vunpack.c.l.b16 %v669
      %v687 = vunpack.c.l.b16 %v670
      %v688 = vunpack.c.l.b16 %v671
      %v689 = vpack.c.b16 %v682, %v681
      %v690 = vpack.c.b16 %v684, %v683
      %v691 = vpack.c.b16 %v686, %v685
      %v692 = vpack.c.b16 %v688, %v687
      %v694 = vsel %vm582, %v689, 0
      %v697 = vsel %vm582, %v690, 0
      %v700 = vsel %vm582, %v691, 0
      %v703 = vsel %vm582, %v692, 0
      %v706 = vsel %vm595, %v672, 0
      %708 = vmatprep.subr.bf16.mxu0 0
      %709 = vmatpush1.bf16.msra.mxu0 0
      %710 = vmatprep.subr.bf16.mxu0 0
      %711 = vmatpush1.bf16.msra.mxu0 0
      %712 = vmatprep.subr.bf16.mxu0 0
      %713 = vmatpush1.bf16.msra.mxu0 0
      %714 = vmatprep.subr.bf16.mxu0 0
      %715 = vmatpush1.bf16.msra.mxu0 0
      %716 = vmatprep.subr.bf16.mxu0 0
      %717 = vmatpush1.bf16.msra.mxu0 0
      %718 = vmatprep.subr.bf16.mxu0 0
      %719 = vmatpush1.bf16.msra.mxu0 0
      %720 = vmatprep.subr.bf16.mxu0 0
      %721 = vmatpush1.bf16.msra.mxu0 0
      %722 = vmatprep.subr.bf16.mxu0 0
      %723 = vmatpush1.bf16.msra.mxu0 %v706
      %724 = vmatprep.subr.bf16.mxu0 0
      %725 = vmatpush2.bf16.msra.mxu0 0
      %726 = vmatprep.subr.bf16.mxu0 0
      %727 = vmatpush2.bf16.msra.mxu0 0
      %728 = vmatprep.subr.bf16.mxu0 0
      %729 = vmatpush2.bf16.msra.mxu0 0
      %730 = vmatprep.subr.bf16.mxu0 0
      %731 = vmatpush2.bf16.msra.mxu0 0
      %732 = vmatprep.subr.bf16.mxu0 0
      %733 = vmatpush2.bf16.msra.mxu0 0
      %734 = vmatprep.subr.bf16.mxu0 0
      %735 = vmatpush2.bf16.msra.mxu0 0
      %736 = vmatprep.subr.bf16.mxu0 0
      %737 = vmatpush2.bf16.msra.mxu0 0
      %738 = vmatprep.subr.bf16.mxu0 0
      %739 = vmatpush2.bf16.msra.mxu0 0
      %740 = vmatprep.mubr.bf16.mxu0 0
      %741 = vmatmul.mubr.bf16.gmra.mxu0 %v694
      %v742 = vpop.f32.mrf.mxu0
      %v743 = vadd.f32 0.0, %v742
      %v744 = vpop.f32.mrf.mxu0
      %v745 = vpop.f32.mrf.mxu0
      %v746 = vadd.f32 0.0, %v745
      %v747 = vpop.f32.mrf.mxu0
      %748 = vmatprep.mubr.bf16.mxu0 0
      %749 = vmatmul.mubr.bf16.gmra.mxu0 %v697
      %v750 = vpop.f32.mrf.mxu0
      %v751 = vadd.f32 0.0, %v750
      %v752 = vpop.f32.mrf.mxu0
      %v753 = vpop.f32.mrf.mxu0
      %v754 = vadd.f32 0.0, %v753
      %v755 = vpop.f32.mrf.mxu0
      %756 = vmatprep.mubr.bf16.mxu0 0
      %757 = vmatmul.mubr.bf16.gmra.mxu0 %v700
      %v758 = vpop.f32.mrf.mxu0
      %v759 = vadd.f32 0.0, %v758
      %v760 = vpop.f32.mrf.mxu0
      %v761 = vpop.f32.mrf.mxu0
      %v762 = vadd.f32 0.0, %v761
      %v763 = vpop.f32.mrf.mxu0
      %764 = vmatprep.mubr.bf16.mxu0 0
      %765 = vmatmul.mubr.bf16.gmra.mxu0 %v703
      %v766 = vpop.f32.mrf.mxu0
      %v767 = vadd.f32 0.0, %v766
      %v768 = vpop.f32.mrf.mxu0
      %v769 = vpop.f32.mrf.mxu0
      %v770 = vadd.f32 0.0, %v769
      %v771 = vpop.f32.mrf.mxu0
      %772 = vdwg.mxu0
      %v773 = vld [vmem:[%s3] sm:$0xff]
      %v774 = vld [vmem:[%s3 + $0x8] sm:$0xff]
      %v775 = vld [vmem:[%s3 + $0x10] sm:$0xff]
      %v776 = vld [vmem:[%s3 + $0x18] sm:$0xff]
      %v777 = vld [vmem:[%s3 + $0x20] sm:$0xff]
      %v778 = vld [vmem:[%s3 + $0x28] sm:$0xff]
      %v779 = vld [vmem:[%s3 + $0x30] sm:$0xff]
      %v780 = vld [vmem:[%s3 + $0x38] sm:$0xff]
      %v781 = vld [vmem:[%s3 + $0x40] sm:$0xff]
      %v782 = vld [vmem:[%s3 + $0x48] sm:$0xff]
      %v783 = vld [vmem:[%s3 + $0x50] sm:$0xff]
      %v784 = vld [vmem:[%s3 + $0x58] sm:$0xff]
      %v785 = vld [vmem:[%s3 + $0x60] sm:$0xff]
      %v786 = vld [vmem:[%s3 + $0x68] sm:$0xff]
      %v787 = vld [vmem:[%s3 + $0x70] sm:$0xff]
      %v788 = vld [vmem:[%s3 + $0x78] sm:$0xff]
      %v789 = vld [vmem:[%s3 + $0x80] sm:$0xff]
      %v790 = vld [vmem:[%s3 + $0x88] sm:$0xff]
      %v791 = vld [vmem:[%s3 + $0x90] sm:$0xff]
      %v792 = vld [vmem:[%s3 + $0x98] sm:$0xff]
      %v793 = vld [vmem:[%s3 + $0xa0] sm:$0xff]
      %v794 = vld [vmem:[%s3 + $0xa8] sm:$0xff]
      %v795 = vld [vmem:[%s3 + $0xb0] sm:$0xff]
      %v796 = vld [vmem:[%s3 + $0xb8] sm:$0xff]
      %v797 = vld [vmem:[%s3 + $0xc0] sm:$0xff]
      %v798 = vld [vmem:[%s3 + $0xc8] sm:$0xff]
      %v799 = vld [vmem:[%s3 + $0xd0] sm:$0xff]
      %v800 = vld [vmem:[%s3 + $0xd8] sm:$0xff]
      %v801 = vld [vmem:[%s3 + $0xe0] sm:$0xff]
      %v802 = vld [vmem:[%s3 + $0xe8] sm:$0xff]
      %v803 = vld [vmem:[%s3 + $0xf0] sm:$0xff]
      %v804 = vld [vmem:[%s3 + $0xf8] sm:$0xff]
      %vm805 = vcmask 523264
      %v807 = vsel %vm805, %v773, 0
      %v810 = vsel %vm805, %v774, 0
      %v813 = vsel %vm805, %v775, 0
      %v816 = vsel %vm805, %v776, 0
      %v819 = vsel %vm805, %v777, 0
      %v822 = vsel %vm805, %v778, 0
      %v825 = vsel %vm805, %v779, 0
      %v828 = vsel %vm805, %v780, 0
      %v831 = vsel %vm805, %v781, 0
      %v834 = vsel %vm805, %v782, 0
      %v837 = vsel %vm805, %v783, 0
      %v840 = vsel %vm805, %v784, 0
      %v843 = vsel %vm805, %v785, 0
      %v846 = vsel %vm805, %v786, 0
      %v849 = vsel %vm805, %v787, 0
      %v852 = vsel %vm805, %v788, 0
      %v855 = vsel %vm805, %v789, 0
      %v858 = vsel %vm805, %v790, 0
      %v861 = vsel %vm805, %v791, 0
      %v864 = vsel %vm805, %v792, 0
      %v867 = vsel %vm805, %v793, 0
      %v870 = vsel %vm805, %v794, 0
      %v873 = vsel %vm805, %v795, 0
      %v876 = vsel %vm805, %v796, 0
      %v879 = vsel %vm805, %v797, 0
      %v882 = vsel %vm805, %v798, 0
      %v885 = vsel %vm805, %v799, 0
      %v888 = vsel %vm805, %v800, 0
      %v891 = vsel %vm805, %v801, 0
      %v894 = vsel %vm805, %v802, 0
      %v897 = vsel %vm805, %v803, 0
      %v900 = vsel %vm805, %v804, 0
      %902 = vmatprep.subr.mxu0 0.0
      %903 = vmatpush1.msra.mxu0 0.0
      %904 = vmatprep.subr.mxu0 0.0
      %905 = vmatpush1.msra.mxu0 0.0
      %906 = vmatprep.subr.mxu0 0.0
      %907 = vmatpush1.msra.mxu0 0.0
      %908 = vmatprep.subr.mxu0 0.0
      %909 = vmatpush1.msra.mxu0 0.0
      %910 = vmatprep.subr.mxu0 0.0
      %911 = vmatpush1.msra.mxu0 0.0
      %912 = vmatprep.subr.mxu0 0.0
      %913 = vmatpush1.msra.mxu0 0.0
      %914 = vmatprep.subr.mxu0 0.0
      %915 = vmatpush1.msra.mxu0 0.0
      %916 = vmatprep.subr.mxu0 0.0
      %917 = vmatpush1.msra.mxu0 0.0
      %918 = vmatprep.subr.mxu0 0.0
      %919 = vmatpush1.msra.mxu0 %v661
      %920 = vmatprep.subr.mxu0 0.0
      %921 = vmatpush1.msra.mxu0 %v658
      %922 = vmatprep.subr.mxu0 0.0
      %923 = vmatpush1.msra.mxu0 %v653
      %924 = vmatprep.subr.mxu0 0.0
      %925 = vmatpush1.msra.mxu0 %v650
      %926 = vmatprep.subr.mxu0 0.0
      %927 = vmatpush1.msra.mxu0 %v645
      %928 = vmatprep.subr.mxu0 0.0
      %929 = vmatpush1.msra.mxu0 %v642
      %930 = vmatprep.subr.mxu0 0.0
      %931 = vmatpush1.msra.mxu0 %v637
      %932 = vmatprep.subr.mxu0 0.0
      %933 = vmatpush1.msra.mxu0 %v634
      %934 = vmatprep.subr.mxu0 0.0
      %935 = vmatpush2.msra.mxu0 0.0
      %936 = vmatprep.subr.mxu0 0.0
      %937 = vmatpush2.msra.mxu0 0.0
      %938 = vmatprep.subr.mxu0 0.0
      %939 = vmatpush2.msra.mxu0 0.0
      %940 = vmatprep.subr.mxu0 0.0
      %941 = vmatpush2.msra.mxu0 0.0
      %942 = vmatprep.subr.mxu0 0.0
      %943 = vmatpush2.msra.mxu0 0.0
      %944 = vmatprep.subr.mxu0 0.0
      %945 = vmatpush2.msra.mxu0 0.0
      %946 = vmatprep.subr.mxu0 0.0
      %947 = vmatpush2.msra.mxu0 0.0
      %948 = vmatprep.subr.mxu0 0.0
      %949 = vmatpush2.msra.mxu0 0.0
      %950 = vmatprep.subr.mxu0 0.0
      %951 = vmatpush2.msra.mxu0 0.0
      %952 = vmatprep.subr.mxu0 0.0
      %953 = vmatpush2.msra.mxu0 0.0
      %954 = vmatprep.subr.mxu0 0.0
      %955 = vmatpush2.msra.mxu0 0.0
      %956 = vmatprep.subr.mxu0 0.0
      %957 = vmatpush2.msra.mxu0 0.0
      %958 = vmatprep.subr.mxu0 0.0
      %959 = vmatpush2.msra.mxu0 0.0
      %960 = vmatprep.subr.mxu0 0.0
      %961 = vmatpush2.msra.mxu0 0.0
      %962 = vmatprep.subr.mxu0 0.0
      %963 = vmatpush2.msra.mxu0 0.0
      %964 = vmatprep.subr.mxu0 0.0
      %965 = vmatpush2.msra.mxu0 0.0
      %966 = vmatprep.mubr.f32.mxu0 0.0
      %967 = vmatmul.mubr.f32.gmra.mxu0 %v807
      %v968 = vpop.f32.mrf.mxu0
      %v969 = vadd.f32 0.0, %v968
      %v970 = vpop.f32.mrf.mxu0
      %971 = vmatprep.mubr.f32.mxu0 0.0
      %972 = vmatmul.mubr.f32.gmra.mxu0 %v810
      %v973 = vpop.f32.mrf.mxu0
      %v974 = vadd.f32 0.0, %v973
      %v975 = vpop.f32.mrf.mxu0
      %976 = vmatprep.mubr.f32.mxu0 0.0
      %977 = vmatmul.mubr.f32.gmra.mxu0 %v813
      %v978 = vpop.f32.mrf.mxu0
      %v979 = vadd.f32 0.0, %v978
      %v980 = vpop.f32.mrf.mxu0
      %981 = vmatprep.mubr.f32.mxu0 0.0
      %982 = vmatmul.mubr.f32.gmra.mxu0 %v816
      %v983 = vpop.f32.mrf.mxu0
      %v984 = vadd.f32 0.0, %v983
      %v985 = vpop.f32.mrf.mxu0
      %986 = vmatprep.mubr.f32.mxu0 0.0
      %987 = vmatmul.mubr.f32.gmra.mxu0 %v819
      %v988 = vpop.f32.mrf.mxu0
      %v989 = vadd.f32 0.0, %v988
      %v990 = vpop.f32.mrf.mxu0
      %991 = vmatprep.mubr.f32.mxu0 0.0
      %992 = vmatmul.mubr.f32.gmra.mxu0 %v822
      %v993 = vpop.f32.mrf.mxu0
      %v994 = vadd.f32 0.0, %v993
      %v995 = vpop.f32.mrf.mxu0
      %996 = vmatprep.mubr.f32.mxu0 0.0
      %997 = vmatmul.mubr.f32.gmra.mxu0 %v825
      %v998 = vpop.f32.mrf.mxu0
      %v999 = vadd.f32 0.0, %v998
      %v1000 = vpop.f32.mrf.mxu0
      %1001 = vmatprep.mubr.f32.mxu0 0.0
      %1002 = vmatmul.mubr.f32.gmra.mxu0 %v828
      %v1003 = vpop.f32.mrf.mxu0
      %v1004 = vadd.f32 0.0, %v1003
      %v1005 = vpop.f32.mrf.mxu0
      %1006 = vmatprep.mubr.f32.mxu0 0.0
      %1007 = vmatmul.mubr.f32.gmra.mxu0 %v831
      %v1008 = vpop.f32.mrf.mxu0
      %v1009 = vadd.f32 0.0, %v1008
      %v1010 = vpop.f32.mrf.mxu0
      %1011 = vmatprep.mubr.f32.mxu0 0.0
      %1012 = vmatmul.mubr.f32.gmra.mxu0 %v834
      %v1013 = vpop.f32.mrf.mxu0
      %v1014 = vadd.f32 0.0, %v1013
      %v1015 = vpop.f32.mrf.mxu0
      %1016 = vmatprep.mubr.f32.mxu0 0.0
      %1017 = vmatmul.mubr.f32.gmra.mxu0 %v837
      %v1018 = vpop.f32.mrf.mxu0
      %v1019 = vadd.f32 0.0, %v1018
      %v1020 = vpop.f32.mrf.mxu0
      %1021 = vmatprep.mubr.f32.mxu0 0.0
      %1022 = vmatmul.mubr.f32.gmra.mxu0 %v840
      %v1023 = vpop.f32.mrf.mxu0
      %v1024 = vadd.f32 0.0, %v1023
      %v1025 = vpop.f32.mrf.mxu0
      %1026 = vmatprep.mubr.f32.mxu0 0.0
      %1027 = vmatmul.mubr.f32.gmra.mxu0 %v843
      %v1028 = vpop.f32.mrf.mxu0
      %v1029 = vadd.f32 0.0, %v1028
      %v1030 = vpop.f32.mrf.mxu0
      %1031 = vmatprep.mubr.f32.mxu0 0.0
      %1032 = vmatmul.mubr.f32.gmra.mxu0 %v846
      %v1033 = vpop.f32.mrf.mxu0
      %v1034 = vadd.f32 0.0, %v1033
      %v1035 = vpop.f32.mrf.mxu0
      %1036 = vmatprep.mubr.f32.mxu0 0.0
      %1037 = vmatmul.mubr.f32.gmra.mxu0 %v849
      %v1038 = vpop.f32.mrf.mxu0
      %v1039 = vadd.f32 0.0, %v1038
      %v1040 = vpop.f32.mrf.mxu0
      %1041 = vmatprep.mubr.f32.mxu0 0.0
      %1042 = vmatmul.mubr.f32.gmra.mxu0 %v852
      %v1043 = vpop.f32.mrf.mxu0
      %v1044 = vadd.f32 0.0, %v1043
      %v1045 = vpop.f32.mrf.mxu0
      %1046 = vmatprep.mubr.f32.mxu0 0.0
      %1047 = vmatmul.mubr.f32.gmra.mxu0 %v855
      %v1048 = vpop.f32.mrf.mxu0
      %v1049 = vadd.f32 0.0, %v1048
      %v1050 = vpop.f32.mrf.mxu0
      %1051 = vmatprep.mubr.f32.mxu0 0.0
      %1052 = vmatmul.mubr.f32.gmra.mxu0 %v858
      %v1053 = vpop.f32.mrf.mxu0
      %v1054 = vadd.f32 0.0, %v1053
      %v1055 = vpop.f32.mrf.mxu0
      %1056 = vmatprep.mubr.f32.mxu0 0.0
      %1057 = vmatmul.mubr.f32.gmra.mxu0 %v861
      %v1058 = vpop.f32.mrf.mxu0
      %v1059 = vadd.f32 0.0, %v1058
      %v1060 = vpop.f32.mrf.mxu0
      %1061 = vmatprep.mubr.f32.mxu0 0.0
      %1062 = vmatmul.mubr.f32.gmra.mxu0 %v864
      %v1063 = vpop.f32.mrf.mxu0
      %v1064 = vadd.f32 0.0, %v1063
      %v1065 = vpop.f32.mrf.mxu0
      %1066 = vmatprep.mubr.f32.mxu0 0.0
      %1067 = vmatmul.mubr.f32.gmra.mxu0 %v867
      %v1068 = vpop.f32.mrf.mxu0
      %v1069 = vadd.f32 0.0, %v1068
      %v1070 = vpop.f32.mrf.mxu0
      %1071 = vmatprep.mubr.f32.mxu0 0.0
      %1072 = vmatmul.mubr.f32.gmra.mxu0 %v870
      %v1073 = vpop.f32.mrf.mxu0
      %v1074 = vadd.f32 0.0, %v1073
      %v1075 = vpop.f32.mrf.mxu0
      %1076 = vmatprep.mubr.f32.mxu0 0.0
      %1077 = vmatmul.mubr.f32.gmra.mxu0 %v873
      %v1078 = vpop.f32.mrf.mxu0
      %v1079 = vadd.f32 0.0, %v1078
      %v1080 = vpop.f32.mrf.mxu0
      %1081 = vmatprep.mubr.f32.mxu0 0.0
      %1082 = vmatmul.mubr.f32.gmra.mxu0 %v876
      %v1083 = vpop.f32.mrf.mxu0
      %v1084 = vadd.f32 0.0, %v1083
      %v1085 = vpop.f32.mrf.mxu0
      %1086 = vmatprep.mubr.f32.mxu0 0.0
      %1087 = vmatmul.mubr.f32.gmra.mxu0 %v879
      %v1088 = vpop.f32.mrf.mxu0
      %v1089 = vadd.f32 0.0, %v1088
      %v1090 = vpop.f32.mrf.mxu0
      %1091 = vmatprep.mubr.f32.mxu0 0.0
      %1092 = vmatmul.mubr.f32.gmra.mxu0 %v882
      %v1093 = vpop.f32.mrf.mxu0
      %v1094 = vadd.f32 0.0, %v1093
      %v1095 = vpop.f32.mrf.mxu0
      %1096 = vmatprep.mubr.f32.mxu0 0.0
      %1097 = vmatmul.mubr.f32.gmra.mxu0 %v885
      %v1098 = vpop.f32.mrf.mxu0
      %v1099 = vadd.f32 0.0, %v1098
      %v1100 = vpop.f32.mrf.mxu0
      %1101 = vmatprep.mubr.f32.mxu0 0.0
      %1102 = vmatmul.mubr.f32.gmra.mxu0 %v888
      %v1103 = vpop.f32.mrf.mxu0
      %v1104 = vadd.f32 0.0, %v1103
      %v1105 = vpop.f32.mrf.mxu0
      %1106 = vmatprep.mubr.f32.mxu0 0.0
      %1107 = vmatmul.mubr.f32.gmra.mxu0 %v891
      %v1108 = vpop.f32.mrf.mxu0
      %v1109 = vadd.f32 0.0, %v1108
      %v1110 = vpop.f32.mrf.mxu0
      %1111 = vmatprep.mubr.f32.mxu0 0.0
      %1112 = vmatmul.mubr.f32.gmra.mxu0 %v894
      %v1113 = vpop.f32.mrf.mxu0
      %v1114 = vadd.f32 0.0, %v1113
      %v1115 = vpop.f32.mrf.mxu0
      %1116 = vmatprep.mubr.f32.mxu0 0.0
      %1117 = vmatmul.mubr.f32.gmra.mxu0 %v897
      %v1118 = vpop.f32.mrf.mxu0
      %v1119 = vadd.f32 0.0, %v1118
      %v1120 = vpop.f32.mrf.mxu0
      %1121 = vmatprep.mubr.f32.mxu0 0.0
      %1122 = vmatmul.mubr.f32.gmra.mxu0 %v900
      %v1123 = vpop.f32.mrf.mxu0
      %v1124 = vadd.f32 0.0, %v1123
      %v1125 = vpop.f32.mrf.mxu0
      %1126 = vdwg.mxu0
      %v1159 = vunpack.c.l.b16 %v520
      %v1160 = vunpack.c.l.b16 %v521
      %v1161 = vunpack.c.l.b16 %v522
      %v1162 = vunpack.c.l.b16 %v523
      %v1163 = vunpack.c.l.b16 %v524
      %v1164 = vunpack.c.l.b16 %v525
      %v1165 = vunpack.c.l.b16 %v526
      %v1166 = vunpack.c.l.b16 %v527
      %v1167 = vunpack.c.l.b16 %v528
      %v1168 = vunpack.c.l.b16 %v529
      %v1169 = vunpack.c.l.b16 %v530
      %v1170 = vunpack.c.l.b16 %v531
      %v1171 = vunpack.c.l.b16 %v532
      %v1172 = vunpack.c.l.b16 %v533
      %v1173 = vunpack.c.l.b16 %v534
      %v1174 = vunpack.c.l.b16 %v535
      %v1175 = vunpack.c.l.b16 %v536
      %v1176 = vunpack.c.l.b16 %v537
      %v1177 = vunpack.c.l.b16 %v538
      %v1178 = vunpack.c.l.b16 %v539
      %v1179 = vunpack.c.l.b16 %v540
      %v1180 = vunpack.c.l.b16 %v541
      %v1181 = vunpack.c.l.b16 %v542
      %v1182 = vunpack.c.l.b16 %v543
      %v1183 = vunpack.c.l.b16 %v544
      %v1184 = vunpack.c.l.b16 %v545
      %v1185 = vunpack.c.l.b16 %v546
      %v1186 = vunpack.c.l.b16 %v547
      %v1187 = vunpack.c.l.b16 %v548
      %v1188 = vunpack.c.l.b16 %v549
      %v1189 = vunpack.c.l.b16 %v550
      %v1190 = vunpack.c.l.b16 %v551
      %v1191 = vpack.c.b16 %v1160, %v1159
      %v1192 = vpack.c.b16 %v1162, %v1161
      %v1193 = vpack.c.b16 %v1164, %v1163
      %v1194 = vpack.c.b16 %v1166, %v1165
      %v1195 = vpack.c.b16 %v1168, %v1167
      %v1196 = vpack.c.b16 %v1170, %v1169
      %v1197 = vpack.c.b16 %v1172, %v1171
      %v1198 = vpack.c.b16 %v1174, %v1173
      %v1199 = vpack.c.b16 %v1176, %v1175
      %v1200 = vpack.c.b16 %v1178, %v1177
      %v1201 = vpack.c.b16 %v1180, %v1179
      %v1202 = vpack.c.b16 %v1182, %v1181
      %v1203 = vpack.c.b16 %v1184, %v1183
      %v1204 = vpack.c.b16 %v1186, %v1185
      %v1205 = vpack.c.b16 %v1188, %v1187
      %v1206 = vpack.c.b16 %v1190, %v1189
      %v1208 = vsel %vm582, %v1191, 0
      %v1211 = vsel %vm582, %v1192, 0
      %v1214 = vsel %vm582, %v1193, 0
      %v1217 = vsel %vm582, %v1194, 0
      %v1220 = vsel %vm582, %v1195, 0
      %v1223 = vsel %vm582, %v1196, 0
      %v1226 = vsel %vm582, %v1197, 0
      %v1229 = vsel %vm582, %v1198, 0
      %v1232 = vsel %vm582, %v1199, 0
      %v1235 = vsel %vm582, %v1200, 0
      %v1238 = vsel %vm582, %v1201, 0
      %v1241 = vsel %vm582, %v1202, 0
      %v1244 = vsel %vm582, %v1203, 0
      %v1247 = vsel %vm582, %v1204, 0
      %v1250 = vsel %vm582, %v1205, 0
      %v1253 = vsel %vm582, %v1206, 0
      %v1256 = vsel %vm595, %v552, 0
      %1258 = vmatprep.subr.bf16.mxu0 0
      %1259 = vmatpush1.bf16.msra.mxu0 0
      %1260 = vmatprep.subr.bf16.mxu0 0
      %1261 = vmatpush1.bf16.msra.mxu0 0
      %1262 = vmatprep.subr.bf16.mxu0 0
      %1263 = vmatpush1.bf16.msra.mxu0 0
      %1264 = vmatprep.subr.bf16.mxu0 0
      %1265 = vmatpush1.bf16.msra.mxu0 0
      %1266 = vmatprep.subr.bf16.mxu0 0
      %1267 = vmatpush1.bf16.msra.mxu0 0
      %1268 = vmatprep.subr.bf16.mxu0 0
      %1269 = vmatpush1.bf16.msra.mxu0 0
      %1270 = vmatprep.subr.bf16.mxu0 0
      %1271 = vmatpush1.bf16.msra.mxu0 0
      %1272 = vmatprep.subr.bf16.mxu0 0
      %1273 = vmatpush1.bf16.msra.mxu0 %v1256
      %1274 = vmatprep.subr.bf16.mxu0 0
      %1275 = vmatpush2.bf16.msra.mxu0 0
      %1276 = vmatprep.subr.bf16.mxu0 0
      %1277 = vmatpush2.bf16.msra.mxu0 0
      %1278 = vmatprep.subr.bf16.mxu0 0
      %1279 = vmatpush2.bf16.msra.mxu0 0
      %1280 = vmatprep.subr.bf16.mxu0 0
      %1281 = vmatpush2.bf16.msra.mxu0 0
      %1282 = vmatprep.subr.bf16.mxu0 0
      %1283 = vmatpush2.bf16.msra.mxu0 0
      %1284 = vmatprep.subr.bf16.mxu0 0
      %1285 = vmatpush2.bf16.msra.mxu0 0
      %1286 = vmatprep.subr.bf16.mxu0 0
      %1287 = vmatpush2.bf16.msra.mxu0 0
      %1288 = vmatprep.subr.bf16.mxu0 0
      %1289 = vmatpush2.bf16.msra.mxu0 0
      %1290 = vmatprep.mubr.bf16.mxu0 0
      %1291 = vmatmul.mubr.bf16.gmra.mxu0 %v1208
      %v1292 = vpop.f32.mrf.mxu0
      %v1293 = vadd.f32 %v969, %v1292
      %v1294 = vpop.f32.mrf.mxu0
      %v1295 = vpop.f32.mrf.mxu0
      %v1296 = vadd.f32 %v974, %v1295
      %v1297 = vpop.f32.mrf.mxu0
      %1298 = vmatprep.mubr.bf16.mxu0 0
      %1299 = vmatmul.mubr.bf16.gmra.mxu0 %v1211
      %v1300 = vpop.f32.mrf.mxu0
      %v1301 = vadd.f32 %v979, %v1300
      %v1302 = vpop.f32.mrf.mxu0
      %v1303 = vpop.f32.mrf.mxu0
      %v1304 = vadd.f32 %v984, %v1303
      %v1305 = vpop.f32.mrf.mxu0
      %1306 = vmatprep.mubr.bf16.mxu0 0
      %1307 = vmatmul.mubr.bf16.gmra.mxu0 %v1214
      %v1308 = vpop.f32.mrf.mxu0
      %v1309 = vadd.f32 %v989, %v1308
      %v1310 = vpop.f32.mrf.mxu0
      %v1311 = vpop.f32.mrf.mxu0
      %v1312 = vadd.f32 %v994, %v1311
      %v1313 = vpop.f32.mrf.mxu0
      %1314 = vmatprep.mubr.bf16.mxu0 0
      %1315 = vmatmul.mubr.bf16.gmra.mxu0 %v1217
      %v1316 = vpop.f32.mrf.mxu0
      %v1317 = vadd.f32 %v999, %v1316
      %v1318 = vpop.f32.mrf.mxu0
      %v1319 = vpop.f32.mrf.mxu0
      %v1320 = vadd.f32 %v1004, %v1319
      %v1321 = vpop.f32.mrf.mxu0
      %1322 = vmatprep.mubr.bf16.mxu0 0
      %1323 = vmatmul.mubr.bf16.gmra.mxu0 %v1220
      %v1324 = vpop.f32.mrf.mxu0
      %v1325 = vadd.f32 %v1009, %v1324
      %v1326 = vpop.f32.mrf.mxu0
      %v1327 = vpop.f32.mrf.mxu0
      %v1328 = vadd.f32 %v1014, %v1327
      %v1329 = vpop.f32.mrf.mxu0
      %1330 = vmatprep.mubr.bf16.mxu0 0
      %1331 = vmatmul.mubr.bf16.gmra.mxu0 %v1223
      %v1332 = vpop.f32.mrf.mxu0
      %v1333 = vadd.f32 %v1019, %v1332
      %v1334 = vpop.f32.mrf.mxu0
      %v1335 = vpop.f32.mrf.mxu0
      %v1336 = vadd.f32 %v1024, %v1335
      %v1337 = vpop.f32.mrf.mxu0
      %1338 = vmatprep.mubr.bf16.mxu0 0
      %1339 = vmatmul.mubr.bf16.gmra.mxu0 %v1226
      %v1340 = vpop.f32.mrf.mxu0
      %v1341 = vadd.f32 %v1029, %v1340
      %v1342 = vpop.f32.mrf.mxu0
      %v1343 = vpop.f32.mrf.mxu0
      %v1344 = vadd.f32 %v1034, %v1343
      %v1345 = vpop.f32.mrf.mxu0
      %1346 = vmatprep.mubr.bf16.mxu0 0
      %1347 = vmatmul.mubr.bf16.gmra.mxu0 %v1229
      %v1348 = vpop.f32.mrf.mxu0
      %v1349 = vadd.f32 %v1039, %v1348
      %v1350 = vpop.f32.mrf.mxu0
      %v1351 = vpop.f32.mrf.mxu0
      %v1352 = vadd.f32 %v1044, %v1351
      %v1353 = vpop.f32.mrf.mxu0
      %1354 = vmatprep.mubr.bf16.mxu0 0
      %1355 = vmatmul.mubr.bf16.gmra.mxu0 %v1232
      %v1356 = vpop.f32.mrf.mxu0
      %v1357 = vadd.f32 %v1049, %v1356
      %v1358 = vpop.f32.mrf.mxu0
      %v1359 = vpop.f32.mrf.mxu0
      %v1360 = vadd.f32 %v1054, %v1359
      %v1361 = vpop.f32.mrf.mxu0
      %1362 = vmatprep.mubr.bf16.mxu0 0
      %1363 = vmatmul.mubr.bf16.gmra.mxu0 %v1235
      %v1364 = vpop.f32.mrf.mxu0
      %v1365 = vadd.f32 %v1059, %v1364
      %v1366 = vpop.f32.mrf.mxu0
      %v1367 = vpop.f32.mrf.mxu0
      %v1368 = vadd.f32 %v1064, %v1367
      %v1369 = vpop.f32.mrf.mxu0
      %1370 = vmatprep.mubr.bf16.mxu0 0
      %1371 = vmatmul.mubr.bf16.gmra.mxu0 %v1238
      %v1372 = vpop.f32.mrf.mxu0
      %v1373 = vadd.f32 %v1069, %v1372
      %v1374 = vpop.f32.mrf.mxu0
      %v1375 = vpop.f32.mrf.mxu0
      %v1376 = vadd.f32 %v1074, %v1375
      %v1377 = vpop.f32.mrf.mxu0
      %1378 = vmatprep.mubr.bf16.mxu0 0
      %1379 = vmatmul.mubr.bf16.gmra.mxu0 %v1241
      %v1380 = vpop.f32.mrf.mxu0
      %v1381 = vadd.f32 %v1079, %v1380
      %v1382 = vpop.f32.mrf.mxu0
      %v1383 = vpop.f32.mrf.mxu0
      %v1384 = vadd.f32 %v1084, %v1383
      %v1385 = vpop.f32.mrf.mxu0
      %1386 = vmatprep.mubr.bf16.mxu0 0
      %1387 = vmatmul.mubr.bf16.gmra.mxu0 %v1244
      %v1388 = vpop.f32.mrf.mxu0
      %v1389 = vadd.f32 %v1089, %v1388
      %v1390 = vpop.f32.mrf.mxu0
      %v1391 = vpop.f32.mrf.mxu0
      %v1392 = vadd.f32 %v1094, %v1391
      %v1393 = vpop.f32.mrf.mxu0
      %1394 = vmatprep.mubr.bf16.mxu0 0
      %1395 = vmatmul.mubr.bf16.gmra.mxu0 %v1247
      %v1396 = vpop.f32.mrf.mxu0
      %v1397 = vadd.f32 %v1099, %v1396
      %v1398 = vpop.f32.mrf.mxu0
      %v1399 = vpop.f32.mrf.mxu0
      %v1400 = vadd.f32 %v1104, %v1399
      %v1401 = vpop.f32.mrf.mxu0
      %1402 = vmatprep.mubr.bf16.mxu0 0
      %1403 = vmatmul.mubr.bf16.gmra.mxu0 %v1250
      %v1404 = vpop.f32.mrf.mxu0
      %v1405 = vadd.f32 %v1109, %v1404
      %v1406 = vpop.f32.mrf.mxu0
      %v1407 = vpop.f32.mrf.mxu0
      %v1408 = vadd.f32 %v1114, %v1407
      %v1409 = vpop.f32.mrf.mxu0
      %1410 = vmatprep.mubr.bf16.mxu0 0
      %1411 = vmatmul.mubr.bf16.gmra.mxu0 %v1253
      %v1412 = vpop.f32.mrf.mxu0
      %v1413 = vadd.f32 %v1119, %v1412
      %v1414 = vpop.f32.mrf.mxu0
      %v1415 = vpop.f32.mrf.mxu0
      %v1416 = vadd.f32 %v1124, %v1415
      %v1417 = vpop.f32.mrf.mxu0
      %1418 = vdwg.mxu0
      %v1419 = vld [vmem:[%s7] sm:$0x1]
      %v1421 = vlaneseq
      %v1422 = vshrl.u32 %v1421, 7
      %v1423 = vsub.s32 0, %v1422
      %v1424 = vrot.slane %v1419, %v1423
      %v1426 = vadd.f32 %v1293, %v1424
      %v1427 = vadd.f32 %v1296, %v1424
      %v1428 = vadd.f32 %v1301, %v1424
      %v1429 = vadd.f32 %v1304, %v1424
      %v1430 = vadd.f32 %v1309, %v1424
      %v1431 = vadd.f32 %v1312, %v1424
      %v1432 = vadd.f32 %v1317, %v1424
      %v1433 = vadd.f32 %v1320, %v1424
      %v1434 = vadd.f32 %v1325, %v1424
      %v1435 = vadd.f32 %v1328, %v1424
      %v1436 = vadd.f32 %v1333, %v1424
      %v1437 = vadd.f32 %v1336, %v1424
      %v1438 = vadd.f32 %v1341, %v1424
      %v1439 = vadd.f32 %v1344, %v1424
      %v1440 = vadd.f32 %v1349, %v1424
      %v1441 = vadd.f32 %v1352, %v1424
      %v1442 = vadd.f32 %v1357, %v1424
      %v1443 = vadd.f32 %v1360, %v1424
      %v1444 = vadd.f32 %v1365, %v1424
      %v1445 = vadd.f32 %v1368, %v1424
      %v1446 = vadd.f32 %v1373, %v1424
      %v1447 = vadd.f32 %v1376, %v1424
      %v1448 = vadd.f32 %v1381, %v1424
      %v1449 = vadd.f32 %v1384, %v1424
      %v1450 = vadd.f32 %v1389, %v1424
      %v1451 = vadd.f32 %v1392, %v1424
      %v1452 = vadd.f32 %v1397, %v1424
      %v1453 = vadd.f32 %v1400, %v1424
      %v1454 = vadd.f32 %v1405, %v1424
      %v1455 = vadd.f32 %v1408, %v1424
      %v1456 = vadd.f32 %v1413, %v1424
      %v1457 = vadd.f32 %v1416, %v1424
      %1466 = vrot.lane.b32.xlu0 %v743, 4
      %v1467 = vpop.permute.xlu0 %1466
      %1468 = vrot.lane.b32.xlu0 %v746, 4
      %v1469 = vpop.permute.xlu0 %1468
      %1470 = vrot.lane.b32.xlu0 %v751, 4
      %v1471 = vpop.permute.xlu0 %1470
      %1472 = vrot.lane.b32.xlu0 %v754, 4
      %v1473 = vpop.permute.xlu0 %1472
      %1474 = vrot.lane.b32.xlu0 %v759, 4
      %v1475 = vpop.permute.xlu0 %1474
      %1476 = vrot.lane.b32.xlu0 %v762, 4
      %v1477 = vpop.permute.xlu0 %1476
      %1478 = vrot.lane.b32.xlu0 %v767, 4
      %v1479 = vpop.permute.xlu0 %1478
      %1480 = vrot.lane.b32.xlu0 %v770, 4
      %v1481 = vpop.permute.xlu0 %1480
      %v1490 = vadd.f32 %v634, %v1467
      %v1491 = vadd.f32 %v637, %v1469
      %v1492 = vadd.f32 %v642, %v1471
      %v1493 = vadd.f32 %v645, %v1473
      %v1494 = vadd.f32 %v650, %v1475
      %v1495 = vadd.f32 %v653, %v1477
      %v1496 = vadd.f32 %v658, %v1479
      %v1497 = vadd.f32 %v661, %v1481
      %v1498 = vld [vmem:[%s8] sm:$0x1]
      %v1500 = vlaneseq
      %v1501 = vshrl.u32 %v1500, 7
      %v1502 = vsub.s32 0, %v1501
      %v1503 = vrot.slane %v1498, %v1502
      %1504 = vrot.lane.b32.xlu0 %v1503, 4
      %v1505 = vpop.permute.xlu0 %1504
      %v1507 = vadd.f32 %v1490, %v1505
      %v1508 = vadd.f32 %v1491, %v1505
      %v1509 = vadd.f32 %v1492, %v1505
      %v1510 = vadd.f32 %v1493, %v1505
      %v1511 = vadd.f32 %v1494, %v1505
      %v1512 = vadd.f32 %v1495, %v1505
      %v1513 = vadd.f32 %v1496, %v1505
      %v1514 = vadd.f32 %v1497, %v1505
      %v1515 = vld [vmem:[%s499] sm:$0xff]
      %v1516 = vld [vmem:[%s499 + $0x8] sm:$0xff]
      %v1517 = vld [vmem:[%s499 + $0x10] sm:$0xff]
      %v1518 = vld [vmem:[%s499 + $0x18] sm:$0xff]
      %v1519 = vld [vmem:[%s499 + $0x20] sm:$0xff]
      %v1520 = vld [vmem:[%s499 + $0x28] sm:$0xff]
      %v1521 = vld [vmem:[%s499 + $0x30] sm:$0xff]
      %v1522 = vld [vmem:[%s499 + $0x38] sm:$0xff]
      %v1523 = vld [vmem:[%s499 + $0x40] sm:$0xff]
      %v1524 = vld [vmem:[%s499 + $0x48] sm:$0xff]
      %v1525 = vld [vmem:[%s499 + $0x50] sm:$0xff]
      %v1526 = vld [vmem:[%s499 + $0x58] sm:$0xff]
      %v1527 = vld [vmem:[%s499 + $0x60] sm:$0xff]
      %v1528 = vld [vmem:[%s499 + $0x68] sm:$0xff]
      %v1529 = vld [vmem:[%s499 + $0x70] sm:$0xff]
      %v1530 = vld [vmem:[%s499 + $0x78] sm:$0xff]
      %v1531 = vld [vmem:[%s499 + $0x80] sm:$0xff]
      %v1532 = vld [vmem:[%s499 + $0x88] sm:$0xff]
      %v1533 = vld [vmem:[%s499 + $0x90] sm:$0xff]
      %v1534 = vld [vmem:[%s499 + $0x98] sm:$0xff]
      %v1535 = vld [vmem:[%s499 + $0xa0] sm:$0xff]
      %v1536 = vld [vmem:[%s499 + $0xa8] sm:$0xff]
      %v1537 = vld [vmem:[%s499 + $0xb0] sm:$0xff]
      %v1538 = vld [vmem:[%s499 + $0xb8] sm:$0xff]
      %v1539 = vld [vmem:[%s499 + $0xc0] sm:$0xff]
      %v1540 = vld [vmem:[%s499 + $0xc8] sm:$0xff]
      %v1541 = vld [vmem:[%s499 + $0xd0] sm:$0xff]
      %v1542 = vld [vmem:[%s499 + $0xd8] sm:$0xff]
      %v1543 = vld [vmem:[%s499 + $0xe0] sm:$0xff]
      %v1544 = vld [vmem:[%s499 + $0xe8] sm:$0xff]
      %v1545 = vld [vmem:[%s499 + $0xf0] sm:$0xff]
      %v1546 = vld [vmem:[%s499 + $0xf8] sm:$0xff]
      %v1547 = vadd.f32 %v1426, %v1515
      %v1548 = vadd.f32 %v1427, %v1516
      %v1549 = vadd.f32 %v1428, %v1517
      %v1550 = vadd.f32 %v1429, %v1518
      %v1551 = vadd.f32 %v1430, %v1519
      %v1552 = vadd.f32 %v1431, %v1520
      %v1553 = vadd.f32 %v1432, %v1521
      %v1554 = vadd.f32 %v1433, %v1522
      %v1555 = vadd.f32 %v1434, %v1523
      %v1556 = vadd.f32 %v1435, %v1524
      %v1557 = vadd.f32 %v1436, %v1525
      %v1558 = vadd.f32 %v1437, %v1526
      %v1559 = vadd.f32 %v1438, %v1527
      %v1560 = vadd.f32 %v1439, %v1528
      %v1561 = vadd.f32 %v1440, %v1529
      %v1562 = vadd.f32 %v1441, %v1530
      %v1563 = vadd.f32 %v1442, %v1531
      %v1564 = vadd.f32 %v1443, %v1532
      %v1565 = vadd.f32 %v1444, %v1533
      %v1566 = vadd.f32 %v1445, %v1534
      %v1567 = vadd.f32 %v1446, %v1535
      %v1568 = vadd.f32 %v1447, %v1536
      %v1569 = vadd.f32 %v1448, %v1537
      %v1570 = vadd.f32 %v1449, %v1538
      %v1571 = vadd.f32 %v1450, %v1539
      %v1572 = vadd.f32 %v1451, %v1540
      %v1573 = vadd.f32 %v1452, %v1541
      %v1574 = vadd.f32 %v1453, %v1542
      %v1575 = vadd.f32 %v1454, %v1543
      %v1576 = vadd.f32 %v1455, %v1544
      %v1577 = vadd.f32 %v1456, %v1545
      %v1578 = vadd.f32 %v1457, %v1546
      %v1579 = vld [vmem:[%s505] sm:$0xff]
      %v1580 = vld [vmem:[%s505 + $0x8] sm:$0xff]
      %v1581 = vld [vmem:[%s505 + $0x10] sm:$0xff]
      %v1582 = vld [vmem:[%s505 + $0x18] sm:$0xff]
      %v1583 = vld [vmem:[%s505 + $0x20] sm:$0xff]
      %v1584 = vld [vmem:[%s505 + $0x28] sm:$0xff]
      %v1585 = vld [vmem:[%s505 + $0x30] sm:$0xff]
      %v1586 = vld [vmem:[%s505 + $0x38] sm:$0xff]
      %1595 = vrot.lane.b32.xlu0 %v1579, 4
      %v1596 = vpop.permute.xlu0 %1595
      %1597 = vrot.lane.b32.xlu0 %v1580, 4
      %v1598 = vpop.permute.xlu0 %1597
      %1599 = vrot.lane.b32.xlu0 %v1581, 4
      %v1600 = vpop.permute.xlu0 %1599
      %1601 = vrot.lane.b32.xlu0 %v1582, 4
      %v1602 = vpop.permute.xlu0 %1601
      %1603 = vrot.lane.b32.xlu0 %v1583, 4
      %v1604 = vpop.permute.xlu0 %1603
      %1605 = vrot.lane.b32.xlu0 %v1584, 4
      %v1606 = vpop.permute.xlu0 %1605
      %1607 = vrot.lane.b32.xlu0 %v1585, 4
      %v1608 = vpop.permute.xlu0 %1607
      %1609 = vrot.lane.b32.xlu0 %v1586, 4
      %v1610 = vpop.permute.xlu0 %1609
      %v1619 = vadd.f32 %v1507, %v1596
      %v1620 = vadd.f32 %v1508, %v1598
      %v1621 = vadd.f32 %v1509, %v1600
      %v1622 = vadd.f32 %v1510, %v1602
      %v1623 = vadd.f32 %v1511, %v1604
      %v1624 = vadd.f32 %v1512, %v1606
      %v1625 = vadd.f32 %v1513, %v1608
      %v1626 = vadd.f32 %v1514, %v1610
      %vm1627 = vcmp.gt.f32.partialorder %v1547, 20.0
      %vm1628 = vcmp.gt.f32.partialorder %v1548, 20.0
      %vm1629 = vcmp.gt.f32.partialorder %v1549, 20.0
      %vm1630 = vcmp.gt.f32.partialorder %v1550, 20.0
      %vm1631 = vcmp.gt.f32.partialorder %v1551, 20.0
      %vm1632 = vcmp.gt.f32.partialorder %v1552, 20.0
      %vm1633 = vcmp.gt.f32.partialorder %v1553, 20.0
      %vm1634 = vcmp.gt.f32.partialorder %v1554, 20.0
      %vm1635 = vcmp.gt.f32.partialorder %v1555, 20.0
      %vm1636 = vcmp.gt.f32.partialorder %v1556, 20.0
      %vm1637 = vcmp.gt.f32.partialorder %v1557, 20.0
      %vm1638 = vcmp.gt.f32.partialorder %v1558, 20.0
      %vm1639 = vcmp.gt.f32.partialorder %v1559, 20.0
      %vm1640 = vcmp.gt.f32.partialorder %v1560, 20.0
      %vm1641 = vcmp.gt.f32.partialorder %v1561, 20.0
      %vm1642 = vcmp.gt.f32.partialorder %v1562, 20.0
      %vm1643 = vcmp.gt.f32.partialorder %v1563, 20.0
      %vm1644 = vcmp.gt.f32.partialorder %v1564, 20.0
      %vm1645 = vcmp.gt.f32.partialorder %v1565, 20.0
      %vm1646 = vcmp.gt.f32.partialorder %v1566, 20.0
      %vm1647 = vcmp.gt.f32.partialorder %v1567, 20.0
      %vm1648 = vcmp.gt.f32.partialorder %v1568, 20.0
      %vm1649 = vcmp.gt.f32.partialorder %v1569, 20.0
      %vm1650 = vcmp.gt.f32.partialorder %v1570, 20.0
      %vm1651 = vcmp.gt.f32.partialorder %v1571, 20.0
      %vm1652 = vcmp.gt.f32.partialorder %v1572, 20.0
      %vm1653 = vcmp.gt.f32.partialorder %v1573, 20.0
      %vm1654 = vcmp.gt.f32.partialorder %v1574, 20.0
      %vm1655 = vcmp.gt.f32.partialorder %v1575, 20.0
      %vm1656 = vcmp.gt.f32.partialorder %v1576, 20.0
      %vm1657 = vcmp.gt.f32.partialorder %v1577, 20.0
      %vm1658 = vcmp.gt.f32.partialorder %v1578, 20.0
      %v1659 = vmin.f32 %v1547, 20.0
      %v1660 = vmin.f32 %v1548, 20.0
      %v1661 = vmin.f32 %v1549, 20.0
      %v1662 = vmin.f32 %v1550, 20.0
      %v1663 = vmin.f32 %v1551, 20.0
      %v1664 = vmin.f32 %v1552, 20.0
      %v1665 = vmin.f32 %v1553, 20.0
      %v1666 = vmin.f32 %v1554, 20.0
      %v1667 = vmin.f32 %v1555, 20.0
      %v1668 = vmin.f32 %v1556, 20.0
      %v1669 = vmin.f32 %v1557, 20.0
      %v1670 = vmin.f32 %v1558, 20.0
      %v1671 = vmin.f32 %v1559, 20.0
      %v1672 = vmin.f32 %v1560, 20.0
      %v1673 = vmin.f32 %v1561, 20.0
      %v1674 = vmin.f32 %v1562, 20.0
      %v1675 = vmin.f32 %v1563, 20.0
      %v1676 = vmin.f32 %v1564, 20.0
      %v1677 = vmin.f32 %v1565, 20.0
      %v1678 = vmin.f32 %v1566, 20.0
      %v1679 = vmin.f32 %v1567, 20.0
      %v1680 = vmin.f32 %v1568, 20.0
      %v1681 = vmin.f32 %v1569, 20.0
      %v1682 = vmin.f32 %v1570, 20.0
      %v1683 = vmin.f32 %v1571, 20.0
      %v1684 = vmin.f32 %v1572, 20.0
      %v1685 = vmin.f32 %v1573, 20.0
      %v1686 = vmin.f32 %v1574, 20.0
      %v1687 = vmin.f32 %v1575, 20.0
      %v1688 = vmin.f32 %v1576, 20.0
      %v1689 = vmin.f32 %v1577, 20.0
      %v1690 = vmin.f32 %v1578, 20.0
      %v1691 = vmul.f32 %v1659, 1.442695
      %v1692 = vpow.pop %v1691
      %v1693 = vmul.f32 %v1660, 1.442695
      %v1694 = vpow.pop %v1693
      %v1695 = vmul.f32 %v1661, 1.442695
      %v1696 = vpow.pop %v1695
      %v1697 = vmul.f32 %v1662, 1.442695
      %v1698 = vpow.pop %v1697
      %v1699 = vmul.f32 %v1663, 1.442695
      %v1700 = vpow.pop %v1699
      %v1701 = vmul.f32 %v1664, 1.442695
      %v1702 = vpow.pop %v1701
      %v1703 = vmul.f32 %v1665, 1.442695
      %v1704 = vpow.pop %v1703
      %v1705 = vmul.f32 %v1666, 1.442695
      %v1706 = vpow.pop %v1705
      %v1707 = vmul.f32 %v1667, 1.442695
      %v1708 = vpow.pop %v1707
      %v1709 = vmul.f32 %v1668, 1.442695
      %v1710 = vpow.pop %v1709
      %v1711 = vmul.f32 %v1669, 1.442695
      %v1712 = vpow.pop %v1711
      %v1713 = vmul.f32 %v1670, 1.442695
      %v1714 = vpow.pop %v1713
      %v1715 = vmul.f32 %v1671, 1.442695
      %v1716 = vpow.pop %v1715
      %v1717 = vmul.f32 %v1672, 1.442695
      %v1718 = vpow.pop %v1717
      %v1719 = vmul.f32 %v1673, 1.442695
      %v1720 = vpow.pop %v1719
      %v1721 = vmul.f32 %v1674, 1.442695
      %v1722 = vpow.pop %v1721
      %v1723 = vmul.f32 %v1675, 1.442695
      %v1724 = vpow.pop %v1723
      %v1725 = vmul.f32 %v1676, 1.442695
      %v1726 = vpow.pop %v1725
      %v1727 = vmul.f32 %v1677, 1.442695
      %v1728 = vpow.pop %v1727
      %v1729 = vmul.f32 %v1678, 1.442695
      %v1730 = vpow.pop %v1729
      %v1731 = vmul.f32 %v1679, 1.442695
      %v1732 = vpow.pop %v1731
      %v1733 = vmul.f32 %v1680, 1.442695
      %v1734 = vpow.pop %v1733
      %v1735 = vmul.f32 %v1681, 1.442695
      %v1736 = vpow.pop %v1735
      %v1737 = vmul.f32 %v1682, 1.442695
      %v1738 = vpow.pop %v1737
      %v1739 = vmul.f32 %v1683, 1.442695
      %v1740 = vpow.pop %v1739
      %v1741 = vmul.f32 %v1684, 1.442695
      %v1742 = vpow.pop %v1741
      %v1743 = vmul.f32 %v1685, 1.442695
      %v1744 = vpow.pop %v1743
      %v1745 = vmul.f32 %v1686, 1.442695
      %v1746 = vpow.pop %v1745
      %v1747 = vmul.f32 %v1687, 1.442695
      %v1748 = vpow.pop %v1747
      %v1749 = vmul.f32 %v1688, 1.442695
      %v1750 = vpow.pop %v1749
      %v1751 = vmul.f32 %v1689, 1.442695
      %v1752 = vpow.pop %v1751
      %v1753 = vmul.f32 %v1690, 1.442695
      %v1754 = vpow.pop %v1753
      %v1755 = vadd.f32 %v1692, 1.0
      %v1756 = vlog2.pop %v1755
      %v1757 = vmul.f32 %v1756, 0.6931472
      %v1758 = vmul.f32 -0.5, %v1692
      %v1759 = vadd.f32 %v1758, 1.0
      %v1760 = vmul.f32 %v1759, %v1692
      %v1761 = vand.u32 2147483647, %v1692
      %vm1762 = vcmp.lt.f32.partialorder %v1761, 0.0004427343
      %v1763 = vsel %vm1762, %v1760, %v1757
      %v1764 = vadd.f32 %v1694, 1.0
      %v1765 = vlog2.pop %v1764
      %v1766 = vmul.f32 %v1765, 0.6931472
      %v1767 = vmul.f32 -0.5, %v1694
      %v1768 = vadd.f32 %v1767, 1.0
      %v1769 = vmul.f32 %v1768, %v1694
      %v1770 = vand.u32 2147483647, %v1694
      %vm1771 = vcmp.lt.f32.partialorder %v1770, 0.0004427343
      %v1772 = vsel %vm1771, %v1769, %v1766
      %v1773 = vadd.f32 %v1696, 1.0
      %v1774 = vlog2.pop %v1773
      %v1775 = vmul.f32 %v1774, 0.6931472
      %v1776 = vmul.f32 -0.5, %v1696
      %v1777 = vadd.f32 %v1776, 1.0
      %v1778 = vmul.f32 %v1777, %v1696
      %v1779 = vand.u32 2147483647, %v1696
      %vm1780 = vcmp.lt.f32.partialorder %v1779, 0.0004427343
      %v1781 = vsel %vm1780, %v1778, %v1775
      %v1782 = vadd.f32 %v1698, 1.0
      %v1783 = vlog2.pop %v1782
      %v1784 = vmul.f32 %v1783, 0.6931472
      %v1785 = vmul.f32 -0.5, %v1698
      %v1786 = vadd.f32 %v1785, 1.0
      %v1787 = vmul.f32 %v1786, %v1698
      %v1788 = vand.u32 2147483647, %v1698
      %vm1789 = vcmp.lt.f32.partialorder %v1788, 0.0004427343
      %v1790 = vsel %vm1789, %v1787, %v1784
      %v1791 = vadd.f32 %v1700, 1.0
      %v1792 = vlog2.pop %v1791
      %v1793 = vmul.f32 %v1792, 0.6931472
      %v1794 = vmul.f32 -0.5, %v1700
      %v1795 = vadd.f32 %v1794, 1.0
      %v1796 = vmul.f32 %v1795, %v1700
      %v1797 = vand.u32 2147483647, %v1700
      %vm1798 = vcmp.lt.f32.partialorder %v1797, 0.0004427343
      %v1799 = vsel %vm1798, %v1796, %v1793
      %v1800 = vadd.f32 %v1702, 1.0
      %v1801 = vlog2.pop %v1800
      %v1802 = vmul.f32 %v1801, 0.6931472
      %v1803 = vmul.f32 -0.5, %v1702
      %v1804 = vadd.f32 %v1803, 1.0
      %v1805 = vmul.f32 %v1804, %v1702
      %v1806 = vand.u32 2147483647, %v1702
      %vm1807 = vcmp.lt.f32.partialorder %v1806, 0.0004427343
      %v1808 = vsel %vm1807, %v1805, %v1802
      %v1809 = vadd.f32 %v1704, 1.0
      %v1810 = vlog2.pop %v1809
      %v1811 = vmul.f32 %v1810, 0.6931472
      %v1812 = vmul.f32 -0.5, %v1704
      %v1813 = vadd.f32 %v1812, 1.0
      %v1814 = vmul.f32 %v1813, %v1704
      %v1815 = vand.u32 2147483647, %v1704
      %vm1816 = vcmp.lt.f32.partialorder %v1815, 0.0004427343
      %v1817 = vsel %vm1816, %v1814, %v1811
      %v1818 = vadd.f32 %v1706, 1.0
      %v1819 = vlog2.pop %v1818
      %v1820 = vmul.f32 %v1819, 0.6931472
      %v1821 = vmul.f32 -0.5, %v1706
      %v1822 = vadd.f32 %v1821, 1.0
      %v1823 = vmul.f32 %v1822, %v1706
      %v1824 = vand.u32 2147483647, %v1706
      %vm1825 = vcmp.lt.f32.partialorder %v1824, 0.0004427343
      %v1826 = vsel %vm1825, %v1823, %v1820
      %v1827 = vadd.f32 %v1708, 1.0
      %v1828 = vlog2.pop %v1827
      %v1829 = vmul.f32 %v1828, 0.6931472
      %v1830 = vmul.f32 -0.5, %v1708
      %v1831 = vadd.f32 %v1830, 1.0
      %v1832 = vmul.f32 %v1831, %v1708
      %v1833 = vand.u32 2147483647, %v1708
      %vm1834 = vcmp.lt.f32.partialorder %v1833, 0.0004427343
      %v1835 = vsel %vm1834, %v1832, %v1829
      %v1836 = vadd.f32 %v1710, 1.0
      %v1837 = vlog2.pop %v1836
      %v1838 = vmul.f32 %v1837, 0.6931472
      %v1839 = vmul.f32 -0.5, %v1710
      %v1840 = vadd.f32 %v1839, 1.0
      %v1841 = vmul.f32 %v1840, %v1710
      %v1842 = vand.u32 2147483647, %v1710
      %vm1843 = vcmp.lt.f32.partialorder %v1842, 0.0004427343
      %v1844 = vsel %vm1843, %v1841, %v1838
      %v1845 = vadd.f32 %v1712, 1.0
      %v1846 = vlog2.pop %v1845
      %v1847 = vmul.f32 %v1846, 0.6931472
      %v1848 = vmul.f32 -0.5, %v1712
      %v1849 = vadd.f32 %v1848, 1.0
      %v1850 = vmul.f32 %v1849, %v1712
      %v1851 = vand.u32 2147483647, %v1712
      %vm1852 = vcmp.lt.f32.partialorder %v1851, 0.0004427343
      %v1853 = vsel %vm1852, %v1850, %v1847
      %v1854 = vadd.f32 %v1714, 1.0
      %v1855 = vlog2.pop %v1854
      %v1856 = vmul.f32 %v1855, 0.6931472
      %v1857 = vmul.f32 -0.5, %v1714
      %v1858 = vadd.f32 %v1857, 1.0
      %v1859 = vmul.f32 %v1858, %v1714
      %v1860 = vand.u32 2147483647, %v1714
      %vm1861 = vcmp.lt.f32.partialorder %v1860, 0.0004427343
      %v1862 = vsel %vm1861, %v1859, %v1856
      %v1863 = vadd.f32 %v1716, 1.0
      %v1864 = vlog2.pop %v1863
      %v1865 = vmul.f32 %v1864, 0.6931472
      %v1866 = vmul.f32 -0.5, %v1716
      %v1867 = vadd.f32 %v1866, 1.0
      %v1868 = vmul.f32 %v1867, %v1716
      %v1869 = vand.u32 2147483647, %v1716
      %vm1870 = vcmp.lt.f32.partialorder %v1869, 0.0004427343
      %v1871 = vsel %vm1870, %v1868, %v1865
      %v1872 = vadd.f32 %v1718, 1.0
      %v1873 = vlog2.pop %v1872
      %v1874 = vmul.f32 %v1873, 0.6931472
      %v1875 = vmul.f32 -0.5, %v1718
      %v1876 = vadd.f32 %v1875, 1.0
      %v1877 = vmul.f32 %v1876, %v1718
      %v1878 = vand.u32 2147483647, %v1718
      %vm1879 = vcmp.lt.f32.partialorder %v1878, 0.0004427343
      %v1880 = vsel %vm1879, %v1877, %v1874
      %v1881 = vadd.f32 %v1720, 1.0
      %v1882 = vlog2.pop %v1881
      %v1883 = vmul.f32 %v1882, 0.6931472
      %v1884 = vmul.f32 -0.5, %v1720
      %v1885 = vadd.f32 %v1884, 1.0
      %v1886 = vmul.f32 %v1885, %v1720
      %v1887 = vand.u32 2147483647, %v1720
      %vm1888 = vcmp.lt.f32.partialorder %v1887, 0.0004427343
      %v1889 = vsel %vm1888, %v1886, %v1883
      %v1890 = vadd.f32 %v1722, 1.0
      %v1891 = vlog2.pop %v1890
      %v1892 = vmul.f32 %v1891, 0.6931472
      %v1893 = vmul.f32 -0.5, %v1722
      %v1894 = vadd.f32 %v1893, 1.0
      %v1895 = vmul.f32 %v1894, %v1722
      %v1896 = vand.u32 2147483647, %v1722
      %vm1897 = vcmp.lt.f32.partialorder %v1896, 0.0004427343
      %v1898 = vsel %vm1897, %v1895, %v1892
      %v1899 = vadd.f32 %v1724, 1.0
      %v1900 = vlog2.pop %v1899
      %v1901 = vmul.f32 %v1900, 0.6931472
      %v1902 = vmul.f32 -0.5, %v1724
      %v1903 = vadd.f32 %v1902, 1.0
      %v1904 = vmul.f32 %v1903, %v1724
      %v1905 = vand.u32 2147483647, %v1724
      %vm1906 = vcmp.lt.f32.partialorder %v1905, 0.0004427343
      %v1907 = vsel %vm1906, %v1904, %v1901
      %v1908 = vadd.f32 %v1726, 1.0
      %v1909 = vlog2.pop %v1908
      %v1910 = vmul.f32 %v1909, 0.6931472
      %v1911 = vmul.f32 -0.5, %v1726
      %v1912 = vadd.f32 %v1911, 1.0
      %v1913 = vmul.f32 %v1912, %v1726
      %v1914 = vand.u32 2147483647, %v1726
      %vm1915 = vcmp.lt.f32.partialorder %v1914, 0.0004427343
      %v1916 = vsel %vm1915, %v1913, %v1910
      %v1917 = vadd.f32 %v1728, 1.0
      %v1918 = vlog2.pop %v1917
      %v1919 = vmul.f32 %v1918, 0.6931472
      %v1920 = vmul.f32 -0.5, %v1728
      %v1921 = vadd.f32 %v1920, 1.0
      %v1922 = vmul.f32 %v1921, %v1728
      %v1923 = vand.u32 2147483647, %v1728
      %vm1924 = vcmp.lt.f32.partialorder %v1923, 0.0004427343
      %v1925 = vsel %vm1924, %v1922, %v1919
      %v1926 = vadd.f32 %v1730, 1.0
      %v1927 = vlog2.pop %v1926
      %v1928 = vmul.f32 %v1927, 0.6931472
      %v1929 = vmul.f32 -0.5, %v1730
      %v1930 = vadd.f32 %v1929, 1.0
      %v1931 = vmul.f32 %v1930, %v1730
      %v1932 = vand.u32 2147483647, %v1730
      %vm1933 = vcmp.lt.f32.partialorder %v1932, 0.0004427343
      %v1934 = vsel %vm1933, %v1931, %v1928
      %v1935 = vadd.f32 %v1732, 1.0
      %v1936 = vlog2.pop %v1935
      %v1937 = vmul.f32 %v1936, 0.6931472
      %v1938 = vmul.f32 -0.5, %v1732
      %v1939 = vadd.f32 %v1938, 1.0
      %v1940 = vmul.f32 %v1939, %v1732
      %v1941 = vand.u32 2147483647, %v1732
      %vm1942 = vcmp.lt.f32.partialorder %v1941, 0.0004427343
      %v1943 = vsel %vm1942, %v1940, %v1937
      %v1944 = vadd.f32 %v1734, 1.0
      %v1945 = vlog2.pop %v1944
      %v1946 = vmul.f32 %v1945, 0.6931472
      %v1947 = vmul.f32 -0.5, %v1734
      %v1948 = vadd.f32 %v1947, 1.0
      %v1949 = vmul.f32 %v1948, %v1734
      %v1950 = vand.u32 2147483647, %v1734
      %vm1951 = vcmp.lt.f32.partialorder %v1950, 0.0004427343
      %v1952 = vsel %vm1951, %v1949, %v1946
      %v1953 = vadd.f32 %v1736, 1.0
      %v1954 = vlog2.pop %v1953
      %v1955 = vmul.f32 %v1954, 0.6931472
      %v1956 = vmul.f32 -0.5, %v1736
      %v1957 = vadd.f32 %v1956, 1.0
      %v1958 = vmul.f32 %v1957, %v1736
      %v1959 = vand.u32 2147483647, %v1736
      %vm1960 = vcmp.lt.f32.partialorder %v1959, 0.0004427343
      %v1961 = vsel %vm1960, %v1958, %v1955
      %v1962 = vadd.f32 %v1738, 1.0
      %v1963 = vlog2.pop %v1962
      %v1964 = vmul.f32 %v1963, 0.6931472
      %v1965 = vmul.f32 -0.5, %v1738
      %v1966 = vadd.f32 %v1965, 1.0
      %v1967 = vmul.f32 %v1966, %v1738
      %v1968 = vand.u32 2147483647, %v1738
      %vm1969 = vcmp.lt.f32.partialorder %v1968, 0.0004427343
      %v1970 = vsel %vm1969, %v1967, %v1964
      %v1971 = vadd.f32 %v1740, 1.0
      %v1972 = vlog2.pop %v1971
      %v1973 = vmul.f32 %v1972, 0.6931472
      %v1974 = vmul.f32 -0.5, %v1740
      %v1975 = vadd.f32 %v1974, 1.0
      %v1976 = vmul.f32 %v1975, %v1740
      %v1977 = vand.u32 2147483647, %v1740
      %vm1978 = vcmp.lt.f32.partialorder %v1977, 0.0004427343
      %v1979 = vsel %vm1978, %v1976, %v1973
      %v1980 = vadd.f32 %v1742, 1.0
      %v1981 = vlog2.pop %v1980
      %v1982 = vmul.f32 %v1981, 0.6931472
      %v1983 = vmul.f32 -0.5, %v1742
      %v1984 = vadd.f32 %v1983, 1.0
      %v1985 = vmul.f32 %v1984, %v1742
      %v1986 = vand.u32 2147483647, %v1742
      %vm1987 = vcmp.lt.f32.partialorder %v1986, 0.0004427343
      %v1988 = vsel %vm1987, %v1985, %v1982
      %v1989 = vadd.f32 %v1744, 1.0
      %v1990 = vlog2.pop %v1989
      %v1991 = vmul.f32 %v1990, 0.6931472
      %v1992 = vmul.f32 -0.5, %v1744
      %v1993 = vadd.f32 %v1992, 1.0
      %v1994 = vmul.f32 %v1993, %v1744
      %v1995 = vand.u32 2147483647, %v1744
      %vm1996 = vcmp.lt.f32.partialorder %v1995, 0.0004427343
      %v1997 = vsel %vm1996, %v1994, %v1991
      %v1998 = vadd.f32 %v1746, 1.0
      %v1999 = vlog2.pop %v1998
      %v2000 = vmul.f32 %v1999, 0.6931472
      %v2001 = vmul.f32 -0.5, %v1746
      %v2002 = vadd.f32 %v2001, 1.0
      %v2003 = vmul.f32 %v2002, %v1746
      %v2004 = vand.u32 2147483647, %v1746
      %vm2005 = vcmp.lt.f32.partialorder %v2004, 0.0004427343
      %v2006 = vsel %vm2005, %v2003, %v2000
      %v2007 = vadd.f32 %v1748, 1.0
      %v2008 = vlog2.pop %v2007
      %v2009 = vmul.f32 %v2008, 0.6931472
      %v2010 = vmul.f32 -0.5, %v1748
      %v2011 = vadd.f32 %v2010, 1.0
      %v2012 = vmul.f32 %v2011, %v1748
      %v2013 = vand.u32 2147483647, %v1748
      %vm2014 = vcmp.lt.f32.partialorder %v2013, 0.0004427343
      %v2015 = vsel %vm2014, %v2012, %v2009
      %v2016 = vadd.f32 %v1750, 1.0
      %v2017 = vlog2.pop %v2016
      %v2018 = vmul.f32 %v2017, 0.6931472
      %v2019 = vmul.f32 -0.5, %v1750
      %v2020 = vadd.f32 %v2019, 1.0
      %v2021 = vmul.f32 %v2020, %v1750
      %v2022 = vand.u32 2147483647, %v1750
      %vm2023 = vcmp.lt.f32.partialorder %v2022, 0.0004427343
      %v2024 = vsel %vm2023, %v2021, %v2018
      %v2025 = vadd.f32 %v1752, 1.0
      %v2026 = vlog2.pop %v2025
      %v2027 = vmul.f32 %v2026, 0.6931472
      %v2028 = vmul.f32 -0.5, %v1752
      %v2029 = vadd.f32 %v2028, 1.0
      %v2030 = vmul.f32 %v2029, %v1752
      %v2031 = vand.u32 2147483647, %v1752
      %vm2032 = vcmp.lt.f32.partialorder %v2031, 0.0004427343
      %v2033 = vsel %vm2032, %v2030, %v2027
      %v2034 = vadd.f32 %v1754, 1.0
      %v2035 = vlog2.pop %v2034
      %v2036 = vmul.f32 %v2035, 0.6931472
      %v2037 = vmul.f32 -0.5, %v1754
      %v2038 = vadd.f32 %v2037, 1.0
      %v2039 = vmul.f32 %v2038, %v1754
      %v2040 = vand.u32 2147483647, %v1754
      %vm2041 = vcmp.lt.f32.partialorder %v2040, 0.0004427343
      %v2042 = vsel %vm2041, %v2039, %v2036
      %v2043 = vsel %vm1627, %v1547, %v1763
      %v2044 = vsel %vm1628, %v1548, %v1772
      %v2045 = vsel %vm1629, %v1549, %v1781
      %v2046 = vsel %vm1630, %v1550, %v1790
      %v2047 = vsel %vm1631, %v1551, %v1799
      %v2048 = vsel %vm1632, %v1552, %v1808
      %v2049 = vsel %vm1633, %v1553, %v1817
      %v2050 = vsel %vm1634, %v1554, %v1826
      %v2051 = vsel %vm1635, %v1555, %v1835
      %v2052 = vsel %vm1636, %v1556, %v1844
      %v2053 = vsel %vm1637, %v1557, %v1853
      %v2054 = vsel %vm1638, %v1558, %v1862
      %v2055 = vsel %vm1639, %v1559, %v1871
      %v2056 = vsel %vm1640, %v1560, %v1880
      %v2057 = vsel %vm1641, %v1561, %v1889
      %v2058 = vsel %vm1642, %v1562, %v1898
      %v2059 = vsel %vm1643, %v1563, %v1907
      %v2060 = vsel %vm1644, %v1564, %v1916
      %v2061 = vsel %vm1645, %v1565, %v1925
      %v2062 = vsel %vm1646, %v1566, %v1934
      %v2063 = vsel %vm1647, %v1567, %v1943
      %v2064 = vsel %vm1648, %v1568, %v1952
      %v2065 = vsel %vm1649, %v1569, %v1961
      %v2066 = vsel %vm1650, %v1570, %v1970
      %v2067 = vsel %vm1651, %v1571, %v1979
      %v2068 = vsel %vm1652, %v1572, %v1988
      %v2069 = vsel %vm1653, %v1573, %v1997
      %v2070 = vsel %vm1654, %v1574, %v2006
      %v2071 = vsel %vm1655, %v1575, %v2015
      %v2072 = vsel %vm1656, %v1576, %v2024
      %v2073 = vsel %vm1657, %v1577, %v2033
      %v2074 = vsel %vm1658, %v1578, %v2042
      %v2075 = vtanh.pop %v2043
      %v2076 = vtanh.pop %v2044
      %v2077 = vtanh.pop %v2045
      %v2078 = vtanh.pop %v2046
      %v2079 = vtanh.pop %v2047
      %v2080 = vtanh.pop %v2048
      %v2081 = vtanh.pop %v2049
      %v2082 = vtanh.pop %v2050
      %v2083 = vtanh.pop %v2051
      %v2084 = vtanh.pop %v2052
      %v2085 = vtanh.pop %v2053
      %v2086 = vtanh.pop %v2054
      %v2087 = vtanh.pop %v2055
      %v2088 = vtanh.pop %v2056
      %v2089 = vtanh.pop %v2057
      %v2090 = vtanh.pop %v2058
      %v2091 = vtanh.pop %v2059
      %v2092 = vtanh.pop %v2060
      %v2093 = vtanh.pop %v2061
      %v2094 = vtanh.pop %v2062
      %v2095 = vtanh.pop %v2063
      %v2096 = vtanh.pop %v2064
      %v2097 = vtanh.pop %v2065
      %v2098 = vtanh.pop %v2066
      %v2099 = vtanh.pop %v2067
      %v2100 = vtanh.pop %v2068
      %v2101 = vtanh.pop %v2069
      %v2102 = vtanh.pop %v2070
      %v2103 = vtanh.pop %v2071
      %v2104 = vtanh.pop %v2072
      %v2105 = vtanh.pop %v2073
      %v2106 = vtanh.pop %v2074
      %v2107 = vmul.f32 %v1547, %v2075
      %v2108 = vmul.f32 %v1548, %v2076
      %v2109 = vmul.f32 %v1549, %v2077
      %v2110 = vmul.f32 %v1550, %v2078
      %v2111 = vmul.f32 %v1551, %v2079
      %v2112 = vmul.f32 %v1552, %v2080
      %v2113 = vmul.f32 %v1553, %v2081
      %v2114 = vmul.f32 %v1554, %v2082
      %v2115 = vmul.f32 %v1555, %v2083
      %v2116 = vmul.f32 %v1556, %v2084
      %v2117 = vmul.f32 %v1557, %v2085
      %v2118 = vmul.f32 %v1558, %v2086
      %v2119 = vmul.f32 %v1559, %v2087
      %v2120 = vmul.f32 %v1560, %v2088
      %v2121 = vmul.f32 %v1561, %v2089
      %v2122 = vmul.f32 %v1562, %v2090
      %v2123 = vmul.f32 %v1563, %v2091
      %v2124 = vmul.f32 %v1564, %v2092
      %v2125 = vmul.f32 %v1565, %v2093
      %v2126 = vmul.f32 %v1566, %v2094
      %v2127 = vmul.f32 %v1567, %v2095
      %v2128 = vmul.f32 %v1568, %v2096
      %v2129 = vmul.f32 %v1569, %v2097
      %v2130 = vmul.f32 %v1570, %v2098
      %v2131 = vmul.f32 %v1571, %v2099
      %v2132 = vmul.f32 %v1572, %v2100
      %v2133 = vmul.f32 %v1573, %v2101
      %v2134 = vmul.f32 %v1574, %v2102
      %v2135 = vmul.f32 %v1575, %v2103
      %v2136 = vmul.f32 %v1576, %v2104
      %v2137 = vmul.f32 %v1577, %v2105
      %v2138 = vmul.f32 %v1578, %v2106
      %vm2139 = vcmp.gt.f32.partialorder %v1619, 20.0
      %vm2140 = vcmp.gt.f32.partialorder %v1620, 20.0
      %vm2141 = vcmp.gt.f32.partialorder %v1621, 20.0
      %vm2142 = vcmp.gt.f32.partialorder %v1622, 20.0
      %vm2143 = vcmp.gt.f32.partialorder %v1623, 20.0
      %vm2144 = vcmp.gt.f32.partialorder %v1624, 20.0
      %vm2145 = vcmp.gt.f32.partialorder %v1625, 20.0
      %vm2146 = vcmp.gt.f32.partialorder %v1626, 20.0
      %v2147 = vmin.f32 %v1619, 20.0
      %v2148 = vmin.f32 %v1620, 20.0
      %v2149 = vmin.f32 %v1621, 20.0
      %v2150 = vmin.f32 %v1622, 20.0
      %v2151 = vmin.f32 %v1623, 20.0
      %v2152 = vmin.f32 %v1624, 20.0
      %v2153 = vmin.f32 %v1625, 20.0
      %v2154 = vmin.f32 %v1626, 20.0
      %v2155 = vmul.f32 %v2147, 1.442695
      %v2156 = vpow.pop %v2155
      %v2157 = vmul.f32 %v2148, 1.442695
      %v2158 = vpow.pop %v2157
      %v2159 = vmul.f32 %v2149, 1.442695
      %v2160 = vpow.pop %v2159
      %v2161 = vmul.f32 %v2150, 1.442695
      %v2162 = vpow.pop %v2161
      %v2163 = vmul.f32 %v2151, 1.442695
      %v2164 = vpow.pop %v2163
      %v2165 = vmul.f32 %v2152, 1.442695
      %v2166 = vpow.pop %v2165
      %v2167 = vmul.f32 %v2153, 1.442695
      %v2168 = vpow.pop %v2167
      %v2169 = vmul.f32 %v2154, 1.442695
      %v2170 = vpow.pop %v2169
      %v2171 = vadd.f32 %v2156, 1.0
      %v2172 = vlog2.pop %v2171
      %v2173 = vmul.f32 %v2172, 0.6931472
      %v2174 = vmul.f32 -0.5, %v2156
      %v2175 = vadd.f32 %v2174, 1.0
      %v2176 = vmul.f32 %v2175, %v2156
      %v2177 = vand.u32 2147483647, %v2156
      %vm2178 = vcmp.lt.f32.partialorder %v2177, 0.0004427343
      %v2179 = vsel %vm2178, %v2176, %v2173
      %v2180 = vadd.f32 %v2158, 1.0
      %v2181 = vlog2.pop %v2180
      %v2182 = vmul.f32 %v2181, 0.6931472
      %v2183 = vmul.f32 -0.5, %v2158
      %v2184 = vadd.f32 %v2183, 1.0
      %v2185 = vmul.f32 %v2184, %v2158
      %v2186 = vand.u32 2147483647, %v2158
      %vm2187 = vcmp.lt.f32.partialorder %v2186, 0.0004427343
      %v2188 = vsel %vm2187, %v2185, %v2182
      %v2189 = vadd.f32 %v2160, 1.0
      %v2190 = vlog2.pop %v2189
      %v2191 = vmul.f32 %v2190, 0.6931472
      %v2192 = vmul.f32 -0.5, %v2160
      %v2193 = vadd.f32 %v2192, 1.0
      %v2194 = vmul.f32 %v2193, %v2160
      %v2195 = vand.u32 2147483647, %v2160
      %vm2196 = vcmp.lt.f32.partialorder %v2195, 0.0004427343
      %v2197 = vsel %vm2196, %v2194, %v2191
      %v2198 = vadd.f32 %v2162, 1.0
      %v2199 = vlog2.pop %v2198
      %v2200 = vmul.f32 %v2199, 0.6931472
      %v2201 = vmul.f32 -0.5, %v2162
      %v2202 = vadd.f32 %v2201, 1.0
      %v2203 = vmul.f32 %v2202, %v2162
      %v2204 = vand.u32 2147483647, %v2162
      %vm2205 = vcmp.lt.f32.partialorder %v2204, 0.0004427343
      %v2206 = vsel %vm2205, %v2203, %v2200
      %v2207 = vadd.f32 %v2164, 1.0
      %v2208 = vlog2.pop %v2207
      %v2209 = vmul.f32 %v2208, 0.6931472
      %v2210 = vmul.f32 -0.5, %v2164
      %v2211 = vadd.f32 %v2210, 1.0
      %v2212 = vmul.f32 %v2211, %v2164
      %v2213 = vand.u32 2147483647, %v2164
      %vm2214 = vcmp.lt.f32.partialorder %v2213, 0.0004427343
      %v2215 = vsel %vm2214, %v2212, %v2209
      %v2216 = vadd.f32 %v2166, 1.0
      %v2217 = vlog2.pop %v2216
      %v2218 = vmul.f32 %v2217, 0.6931472
      %v2219 = vmul.f32 -0.5, %v2166
      %v2220 = vadd.f32 %v2219, 1.0
      %v2221 = vmul.f32 %v2220, %v2166
      %v2222 = vand.u32 2147483647, %v2166
      %vm2223 = vcmp.lt.f32.partialorder %v2222, 0.0004427343
      %v2224 = vsel %vm2223, %v2221, %v2218
      %v2225 = vadd.f32 %v2168, 1.0
      %v2226 = vlog2.pop %v2225
      %v2227 = vmul.f32 %v2226, 0.6931472
      %v2228 = vmul.f32 -0.5, %v2168
      %v2229 = vadd.f32 %v2228, 1.0
      %v2230 = vmul.f32 %v2229, %v2168
      %v2231 = vand.u32 2147483647, %v2168
      %vm2232 = vcmp.lt.f32.partialorder %v2231, 0.0004427343
      %v2233 = vsel %vm2232, %v2230, %v2227
      %v2234 = vadd.f32 %v2170, 1.0
      %v2235 = vlog2.pop %v2234
      %v2236 = vmul.f32 %v2235, 0.6931472
      %v2237 = vmul.f32 -0.5, %v2170
      %v2238 = vadd.f32 %v2237, 1.0
      %v2239 = vmul.f32 %v2238, %v2170
      %v2240 = vand.u32 2147483647, %v2170
      %vm2241 = vcmp.lt.f32.partialorder %v2240, 0.0004427343
      %v2242 = vsel %vm2241, %v2239, %v2236
      %v2243 = vsel %vm2139, %v1619, %v2179
      %v2244 = vsel %vm2140, %v1620, %v2188
      %v2245 = vsel %vm2141, %v1621, %v2197
      %v2246 = vsel %vm2142, %v1622, %v2206
      %v2247 = vsel %vm2143, %v1623, %v2215
      %v2248 = vsel %vm2144, %v1624, %v2224
      %v2249 = vsel %vm2145, %v1625, %v2233
      %v2250 = vsel %vm2146, %v1626, %v2242
      %v2251 = vtanh.pop %v2243
      %v2252 = vtanh.pop %v2244
      %v2253 = vtanh.pop %v2245
      %v2254 = vtanh.pop %v2246
      %v2255 = vtanh.pop %v2247
      %v2256 = vtanh.pop %v2248
      %v2257 = vtanh.pop %v2249
      %v2258 = vtanh.pop %v2250
      %v2259 = vmul.f32 %v1619, %v2251
      %v2260 = vmul.f32 %v1620, %v2252
      %v2261 = vmul.f32 %v1621, %v2253
      %v2262 = vmul.f32 %v1622, %v2254
      %v2263 = vmul.f32 %v1623, %v2255
      %v2264 = vmul.f32 %v1624, %v2256
      %v2265 = vmul.f32 %v1625, %v2257
      %v2266 = vmul.f32 %v1626, %v2258
      %2267 = vst.msk [vmem:[%s511] sm:$0xff] %vm582, %v2107
      %2268 = vst.msk [vmem:[%s511 + $0x8] sm:$0xff] %vm582, %v2108
      %2269 = vst.msk [vmem:[%s511 + $0x10] sm:$0xff] %vm582, %v2109
      %2270 = vst.msk [vmem:[%s511 + $0x18] sm:$0xff] %vm582, %v2110
      %2271 = vst.msk [vmem:[%s511 + $0x20] sm:$0xff] %vm582, %v2111
      %2272 = vst.msk [vmem:[%s511 + $0x28] sm:$0xff] %vm582, %v2112
      %2273 = vst.msk [vmem:[%s511 + $0x30] sm:$0xff] %vm582, %v2113
      %2274 = vst.msk [vmem:[%s511 + $0x38] sm:$0xff] %vm582, %v2114
      %2275 = vst.msk [vmem:[%s511 + $0x40] sm:$0xff] %vm582, %v2115
      %2276 = vst.msk [vmem:[%s511 + $0x48] sm:$0xff] %vm582, %v2116
      %2277 = vst.msk [vmem:[%s511 + $0x50] sm:$0xff] %vm582, %v2117
      %2278 = vst.msk [vmem:[%s511 + $0x58] sm:$0xff] %vm582, %v2118
      %2279 = vst.msk [vmem:[%s511 + $0x60] sm:$0xff] %vm582, %v2119
      %2280 = vst.msk [vmem:[%s511 + $0x68] sm:$0xff] %vm582, %v2120
      %2281 = vst.msk [vmem:[%s511 + $0x70] sm:$0xff] %vm582, %v2121
      %2282 = vst.msk [vmem:[%s511 + $0x78] sm:$0xff] %vm582, %v2122
      %2283 = vst.msk [vmem:[%s511 + $0x80] sm:$0xff] %vm582, %v2123
      %2284 = vst.msk [vmem:[%s511 + $0x88] sm:$0xff] %vm582, %v2124
      %2285 = vst.msk [vmem:[%s511 + $0x90] sm:$0xff] %vm582, %v2125
      %2286 = vst.msk [vmem:[%s511 + $0x98] sm:$0xff] %vm582, %v2126
      %2287 = vst.msk [vmem:[%s511 + $0xa0] sm:$0xff] %vm582, %v2127
      %2288 = vst.msk [vmem:[%s511 + $0xa8] sm:$0xff] %vm582, %v2128
      %2289 = vst.msk [vmem:[%s511 + $0xb0] sm:$0xff] %vm582, %v2129
      %2290 = vst.msk [vmem:[%s511 + $0xb8] sm:$0xff] %vm582, %v2130
      %2291 = vst.msk [vmem:[%s511 + $0xc0] sm:$0xff] %vm582, %v2131
      %2292 = vst.msk [vmem:[%s511 + $0xc8] sm:$0xff] %vm582, %v2132
      %2293 = vst.msk [vmem:[%s511 + $0xd0] sm:$0xff] %vm582, %v2133
      %2294 = vst.msk [vmem:[%s511 + $0xd8] sm:$0xff] %vm582, %v2134
      %2295 = vst.msk [vmem:[%s511 + $0xe0] sm:$0xff] %vm582, %v2135
      %2296 = vst.msk [vmem:[%s511 + $0xe8] sm:$0xff] %vm582, %v2136
      %2297 = vst.msk [vmem:[%s511 + $0xf0] sm:$0xff] %vm582, %v2137
      %2298 = vst.msk [vmem:[%s511 + $0xf8] sm:$0xff] %vm582, %v2138
      %2307 = vrot.lane.b32.xlu0 %v2259, 124
      %v2308 = vpop.permute.xlu0 %2307
      %2309 = vrot.lane.b32.xlu0 %v2260, 124
      %v2310 = vpop.permute.xlu0 %2309
      %2311 = vrot.lane.b32.xlu0 %v2261, 124
      %v2312 = vpop.permute.xlu0 %2311
      %2313 = vrot.lane.b32.xlu0 %v2262, 124
      %v2314 = vpop.permute.xlu0 %2313
      %2315 = vrot.lane.b32.xlu0 %v2263, 124
      %v2316 = vpop.permute.xlu0 %2315
      %2317 = vrot.lane.b32.xlu0 %v2264, 124
      %v2318 = vpop.permute.xlu0 %2317
      %2319 = vrot.lane.b32.xlu0 %v2265, 124
      %v2320 = vpop.permute.xlu0 %2319
      %2321 = vrot.lane.b32.xlu0 %v2266, 124
      %v2322 = vpop.permute.xlu0 %2321
      %2331 = vst.msk [vmem:[%s517] sm:$0xff] %vm582, %v2308
      %2332 = vst.msk [vmem:[%s517 + $0x8] sm:$0xff] %vm582, %v2310
      %2333 = vst.msk [vmem:[%s517 + $0x10] sm:$0xff] %vm582, %v2312
      %2334 = vst.msk [vmem:[%s517 + $0x18] sm:$0xff] %vm582, %v2314
      %2335 = vst.msk [vmem:[%s517 + $0x20] sm:$0xff] %vm582, %v2316
      %2336 = vst.msk [vmem:[%s517 + $0x28] sm:$0xff] %vm582, %v2318
      %2337 = vst.msk [vmem:[%s517 + $0x30] sm:$0xff] %vm582, %v2320
      %2338 = vst.msk [vmem:[%s517 + $0x38] sm:$0xff] %vm582, %v2322
      %s2339 = smul.u32 32, %s24
      %p2340 = scmp.lt.s32.totalorder %s2339, 63
      %s2341 = scalar_select %p2340, %s2339, 63
      %s2342 = smul.addr %s2341, 8
      %s2343 = scalar_lea.vmem %s11, %s2342
      %s2344 = smul.u32 8, %s24
      %p2345 = scmp.lt.s32.totalorder %s2344, 15
      %s2346 = scalar_select %p2345, %s2344, 15
      %s2347 = smul.addr %s2346, 8
      %s2348 = scalar_lea.vmem %s12, %s2347
      // Predicated region
      $region65: #{bottleneck_forward.5} parent=63 // pred_check
        %p2349 = pneg %p298
      $region66: #{bottleneck_forward.5} parent=63 // pred_check_branch
        %2351 = sbr.rel (%p2349) target = $region68
      $region67: #{bottleneck_forward.5} parent=63 // pred_region
        %s2352 = smul.u32 32, %s24
      $region68: #{bottleneck_forward.5} parent=63 // pred_fallthru
        _
      // Predicated region
      $region69: #{bottleneck_forward.5} parent=63 // pred_check
        %p2353 = pneg %p324
      $region70: #{bottleneck_forward.5} parent=63 // pred_check_branch
        %2355 = sbr.rel (%p2353) target = $region72
      $region71: #{bottleneck_forward.5} parent=63 // pred_region
        %s2356 = smul.u32 8, %s24
      $region72: #{bottleneck_forward.5} parent=63 // pred_fallthru
        _
    $region64: #{bottleneck_forward.5} parent=5 // pred_fallthru
      _
    %p2357 = scmp.le.s32.totalorder 2, %s19
    // Predicated region
    $region73: #{bottleneck_forward.5} parent=5 // pred_check
      %p2358 = pneg %p2357
    $region74: #{bottleneck_forward.5} parent=5 // pred_check_branch
      %2360 = sbr.rel (%p2358) target = $region76
    $region75: #{bottleneck_forward.5} parent=5 // pred_region
      %s2361 = ssub.s32 %s19, 2
      // Predicated region
      $region77: #{bottleneck_forward.5} parent=75 // pred_check
        %p2362 = pneg %p304
      $region78: #{bottleneck_forward.5} parent=75 // pred_check_branch
        %2364 = sbr.rel (%p2362) target = $region80
      $region79: #{bottleneck_forward.5} parent=75 // pred_region
        %s2365 = smul.u32 32, %s25
        %p2366 = scmp.lt.s32.totalorder %s2365, 63
        %s2367 = scalar_select %p2366, %s2365, 63
        %s2368 = smul.addr %s2367, 8
        %s2369 = scalar_lea.vmem %s11, %s2368
      $region80: #{bottleneck_forward.5} parent=75 // pred_fallthru
        _
      // Predicated region
      $region81: #{bottleneck_forward.5} parent=75 // pred_check
        %p2370 = pneg %p330
      $region82: #{bottleneck_forward.5} parent=75 // pred_check_branch
        %2372 = sbr.rel (%p2370) target = $region84
      $region83: #{bottleneck_forward.5} parent=75 // pred_region
        %s2373 = smul.u32 8, %s25
        %p2374 = scmp.lt.s32.totalorder %s2373, 15
        %s2375 = scalar_select %p2374, %s2373, 15
        %s2376 = smul.addr %s2375, 8
        %s2377 = scalar_lea.vmem %s12, %s2376
      $region84: #{bottleneck_forward.5} parent=75 // pred_fallthru
        _
    $region76: #{bottleneck_forward.5} parent=5 // pred_fallthru
      _
  $region6: #{bottleneck_forward.5} parent=0 // loop_footer
    %s23 = sadd.s32 1, %s19
  $region7: #{bottleneck_forward.5} parent=0 // loop_footer_branch
    %18 = sbr.rel target = $region3
  $region8: #{bottleneck_forward.5} parent=0 // loop_exit
    _

</llo_original>
